<compile_context>
chip_gen: v6e
topology: v6e:2x2x1
jax: 0.10.0
libtpu: 0.0.40
codegen_flags: <defaults>
</compile_context>

<pallas_src>
import math

import jax
import jax.numpy as jnp
from jax import lax
from jax.experimental import pallas as pl
from jax.experimental.pallas import tpu as pltpu


# ----------------------------------------------------------------------------
# Fused Pallas kernel (factory closed over static shapes)
# ----------------------------------------------------------------------------
def make_fused_trajgru_kernel(S, B, H, P, O, num_layers):
    """S=obs_len, B=batch, H=hidden, P=pred_len, O=output_size."""

    def kernel(*refs):
        # ---- parse flat ref list -------------------------------------------
        # inputs: x2d, then per layer 10 refs, then w1t3, b1, w2t, b2
        # outputs: out_ref (last)
        idx = 0
        x2d_ref = refs[idx]; idx += 1
        layer_refs = []
        for _ in range(num_layers):
            layer_refs.append(refs[idx: idx + 10]); idx += 10
        w1t3_ref = refs[idx]; idx += 1          # (S, H, P*H)
        b1_ref = refs[idx]; idx += 1            # (1, P*H)
        w2t_ref = refs[idx]; idx += 1           # (H, O)
        b2_ref = refs[idx]; idx += 1            # (1, O)
        out_ref = refs[idx]                     # (B*P, O)

        # ---- GRU stack, time loop fully unrolled ---------------------------
        # `seq` is the layer input for all timesteps, timestep-major:
        #   seq[t*B + i, :] = x[t, i, :]
        seq = x2d_ref[...]                      # (S*B, Din_l)
        for l in range(num_layers):
            (wih_r, wih_z, wih_n, whh_r, whh_z, whh_n,
             bi_r, bi_z, bi_n, bhn) = layer_refs[l]

            # Input projection for ALL timesteps at once (hoisted out of the
            # sequential recurrence).  b_ih (+ b_hh for r/z) already folded in.
            gi_r = jnp.dot(seq, wih_r[...],
                           preferred_element_type=jnp.float32) + bi_r[...]
            gi_z = jnp.dot(seq, wih_z[...],
                           preferred_element_type=jnp.float32) + bi_z[...]
            gi_n = jnp.dot(seq, wih_n[...],
                           preferred_element_type=jnp.float32) + bi_n[...]

            whr = whh_r[...]
            whz = whh_z[...]
            whn = whh_n[...]
            bhn_b = jnp.broadcast_to(bhn[...], (B, H))   # hoisted broadcast

            h = jnp.zeros((B, H), jnp.float32)
            outs = []
            for t in range(S):                  # unrolled sequential recurrence
                lo = t * B
                r = jax.nn.sigmoid(
                    gi_r[lo:lo + B, :]
                    + jnp.dot(h, whr, preferred_element_type=jnp.float32))
                z = jax.nn.sigmoid(
                    gi_z[lo:lo + B, :]
                    + jnp.dot(h, whz, preferred_element_type=jnp.float32))
                g = jnp.tanh(
                    gi_n[lo:lo + B, :]
                    + r * (jnp.dot(h, whn, preferred_element_type=jnp.float32)
                           + bhn_b))
                h = (1.0 - z) * g + z * h
                outs.append(h)
            seq = jnp.concatenate(outs, axis=0)          # (S*B, H)

        # ---- linear1 ---------------------------------------------------------
        # PyTorch: flat2 = x.view(b, s*h) on contiguous (s,b,h) output, so
        #   flat2[j, m*H + k] = seq[j*S + m, k]
        # => y1[j] = b1 + sum_m seq[j*S+m, :] @ W1^T[m*H:(m+1)*H, :]
        y1 = jnp.broadcast_to(b1_ref[...], (B, P * H))
        for m in range(S):
            rows = jnp.concatenate(
                [seq[j * S + m: j * S + m + 1, :] for j in range(B)], axis=0)  # (B, H)
            y1 = y1 + jnp.dot(rows, w1t3_ref[m],
                              preferred_element_type=jnp.float32)

        # ---- linear2 on raw reshape (B, P*H) -> (B*P, H) ---------------------
        # Fused across the whole batch: one (B*P, H) @ (H, O) matmul and one
        # full-tile store (row order j*P + p matches out_ref / final view).
        chunks_all = jnp.concatenate(
            [y1[j:j + 1, p * H:(p + 1) * H]
             for j in range(B) for p in range(P)], axis=0)                      # (B*P, H)
        y2 = jnp.dot(chunks_all, w2t_ref[...],
                     preferred_element_type=jnp.float32) + b2_ref[...]          # (B*P, O)
        out_ref[...] = y2.astype(out_ref.dtype)

    return kernel


# ----------------------------------------------------------------------------
# One-time parameter preparation (transpose / gate-split / bias folding)
# ----------------------------------------------------------------------------
def prepare_params(params, obs_len, pred_len, input_size, hidden_size,
                   output_size, num_layers):
    H = hidden_size
    flat = []
    for l in range(num_layers):
        p = params["gru"][l]
        w_ih, w_hh, b_ih, b_hh = p["w_ih"], p["w_hh"], p["b_ih"], p["b_hh"]
        # gate order in PyTorch nn.GRU: [r | z | n]
        for g in range(3):
            flat.append(jnp.transpose(w_ih[g * H:(g + 1) * H, :]))   # (Din_l, H)
        for g in range(3):
            flat.append(jnp.transpose(w_hh[g * H:(g + 1) * H, :]))   # (H, H)
        flat.append((b_ih[0:H] + b_hh[0:H]).reshape(1, H))           # r: folded
        flat.append((b_ih[H:2 * H] + b_hh[H:2 * H]).reshape(1, H))   # z: folded
        flat.append(b_ih[2 * H:3 * H].reshape(1, H))                 # n: input bias
        flat.append(b_hh[2 * H:3 * H].reshape(1, H))                 # n: hidden bias
    # linear1: W1 (P*H, S*H) -> W1^T (S*H, P*H) -> (S, H, P*H)
    flat.append(jnp.transpose(params["linear1"]["w"])
                .reshape(obs_len, H, pred_len * H))
    flat.append(params["linear1"]["b"].reshape(1, pred_len * H))
    # linear2: W2 (O, H) -> (H, O)
    flat.append(jnp.transpose(params["linear2"]["w"]))
    flat.append(params["linear2"]["b"].reshape(1, output_size))
    return flat


# ----------------------------------------------------------------------------
# Forward wrapper (single fused pallas_call)
# ----------------------------------------------------------------------------
def traj_gru_forward(x, prepared, *, pred_len, hidden_size, output_size,
                     num_layers):
    """x: (obs_len, batch, input_size) -> (pred_len, batch, output_size)."""
    S, B, Din = x.shape
    kernel = make_fused_trajgru_kernel(S, B, hidden_size, pred_len,
                                       output_size, num_layers)
    x2d = jnp.reshape(x, (S * B, Din))          # trivial leading-dim merge
    out = pl.pallas_call(
        kernel,
        out_shape=jax.ShapeDtypeStruct((B * pred_len, output_size),
                                       jnp.float32),
    )(x2d, *prepared)
    # PyTorch: reshape(b, pred_len, -1) then view(pred_len, b, -1) == raw reshape.
    return jnp.reshape(out, (pred_len, B, output_size))


# ----------------------------------------------------------------------------
# Pure-JAX reference (correctness check)
# ----------------------------------------------------------------------------
def gru_layer_ref(x, w_ih, w_hh, b_ih, b_hh):
    S, B, _ = x.shape
    H = w_hh.shape[1]

    def step(h, x_t):
        gi = x_t @ w_ih.T + b_ih
        gh = h @ w_hh.T + b_hh
        i_r, i_z, i_n = gi[:, :H], gi[:, H:2 * H], gi[:, 2 * H:]
        h_r, h_z, h_n = gh[:, :H], gh[:, H:2 * H], gh[:, 2 * H:]
        r = jax.nn.sigmoid(i_r + h_r)
        z = jax.nn.sigmoid(i_z + h_z)
        n = jnp.tanh(i_n + r * h_n)
        h_new = (1.0 - z) * n + z * h
        return h_new, h_new

    _, ys = lax.scan(step, jnp.zeros((B, H), jnp.float32), x)
    return ys


def traj_gru_ref(x, params, pred_len, hidden_size, output_size, num_layers):
    h = x
    for l in range(num_layers):
        p = params["gru"][l]
        h = gru_layer_ref(h, p["w_ih"], p["w_hh"], p["b_ih"], p["b_hh"])
    s, b, hs = h.shape
    y = jnp.reshape(h, (b, s * hs))
    y = y @ params["linear1"]["w"].T + params["linear1"]["b"]
    y = jnp.reshape(y, (b * pred_len, hidden_size))
    y = y @ params["linear2"]["w"].T + params["linear2"]["b"]
    return jnp.reshape(y, (pred_len, b, output_size))


# ----------------------------------------------------------------------------
# Deterministic parameter init (PyTorch-style uniform bounds)
# ----------------------------------------------------------------------------
def init_params(key, obs_len, pred_len, input_size, hidden_size, output_size,
                num_layers):
    params = {"gru": []}
    k_gru = 1.0 / math.sqrt(hidden_size)
    for l in range(num_layers):
        din = input_size if l == 0 else hidden_size
        key, k1, k2, k3, k4 = jax.random.split(key, 5)
        params["gru"].append({
            "w_ih": jax.random.uniform(k1, (3 * hidden_size, din), jnp.float32, -k_gru, k_gru),
            "w_hh": jax.random.uniform(k2, (3 * hidden_size, hidden_size), jnp.float32, -k_gru, k_gru),
            "b_ih": jax.random.uniform(k3, (3 * hidden_size,), jnp.float32, -k_gru, k_gru),
            "b_hh": jax.random.uniform(k4, (3 * hidden_size,), jnp.float32, -k_gru, k_gru),
        })

    d1_in = obs_len * hidden_size
    d1_out = pred_len * hidden_size
    k1b = 1.0 / math.sqrt(d1_in)
    key, ka, kb = jax.random.split(key, 3)
    params["linear1"] = {
        "w": jax.random.uniform(ka, (d1_out, d1_in), jnp.float32, -k1b, k1b),
        "b": jax.random.uniform(kb, (d1_out,), jnp.float32, -k1b, k1b),
    }

    k2b = 1.0 / math.sqrt(hidden_size)
    key, ka, kb = jax.random.split(key, 3)
    params["linear2"] = {
        "w": jax.random.uniform(ka, (output_size, hidden_size), jnp.float32, -k2b, k2b),
        "b": jax.random.uniform(kb, (output_size,), jnp.float32, -k2b, k2b),
    }
    return params


# ----------------------------------------------------------------------------
if __name__ == "__main__":
    OBS_LEN = 8
    PRED_LEN = 4
    INPUT_SIZE = 4
    HIDDEN_SIZE = 32
    OUTPUT_SIZE = 2
    NUM_LAYERS = 2
    BATCH = 2

    key = jax.random.PRNGKey(0)
    key, kx, kp = jax.random.split(key, 3)
    x = jax.random.normal(kx, (OBS_LEN, BATCH, INPUT_SIZE), jnp.float32)
    params = init_params(kp, OBS_LEN, PRED_LEN, INPUT_SIZE, HIDDEN_SIZE,
                         OUTPUT_SIZE, NUM_LAYERS)

    # One-time parameter layout preparation (transpose / gate split / bias fold).
    prepared = prepare_params(params, OBS_LEN, PRED_LEN, INPUT_SIZE,
                              HIDDEN_SIZE, OUTPUT_SIZE, NUM_LAYERS)
    prepared = jax.block_until_ready(prepared)

    out = jax.block_until_ready(
        traj_gru_forward(x, prepared, pred_len=PRED_LEN,
                         hidden_size=HIDDEN_SIZE, output_size=OUTPUT_SIZE,
                         num_layers=NUM_LAYERS))

    ref = jax.block_until_ready(
        traj_gru_ref(x, params, PRED_LEN, HIDDEN_SIZE, OUTPUT_SIZE,
                     NUM_LAYERS))

    assert out.shape == (PRED_LEN, BATCH, OUTPUT_SIZE), out.shape
    assert jnp.allclose(out, ref, atol=1e-4, rtol=1e-4), \
        float(jnp.max(jnp.abs(out - ref)))

    print("KERNEL_OK")
</pallas_src>

<mosaic_0001>
module attributes {stable_mosaic.version = 11 : i64} {
  func.func @kernel(%arg0: memref<16x4xf32, #tpu.memory_space<vmem>>, %arg1: memref<4x32xf32, #tpu.memory_space<vmem>>, %arg2: memref<4x32xf32, #tpu.memory_space<vmem>>, %arg3: memref<4x32xf32, #tpu.memory_space<vmem>>, %arg4: memref<32x32xf32, #tpu.memory_space<vmem>>, %arg5: memref<32x32xf32, #tpu.memory_space<vmem>>, %arg6: memref<32x32xf32, #tpu.memory_space<vmem>>, %arg7: memref<1x32xf32, #tpu.memory_space<vmem>>, %arg8: memref<1x32xf32, #tpu.memory_space<vmem>>, %arg9: memref<1x32xf32, #tpu.memory_space<vmem>>, %arg10: memref<1x32xf32, #tpu.memory_space<vmem>>, %arg11: memref<32x32xf32, #tpu.memory_space<vmem>>, %arg12: memref<32x32xf32, #tpu.memory_space<vmem>>, %arg13: memref<32x32xf32, #tpu.memory_space<vmem>>, %arg14: memref<32x32xf32, #tpu.memory_space<vmem>>, %arg15: memref<32x32xf32, #tpu.memory_space<vmem>>, %arg16: memref<32x32xf32, #tpu.memory_space<vmem>>, %arg17: memref<1x32xf32, #tpu.memory_space<vmem>>, %arg18: memref<1x32xf32, #tpu.memory_space<vmem>>, %arg19: memref<1x32xf32, #tpu.memory_space<vmem>>, %arg20: memref<1x32xf32, #tpu.memory_space<vmem>>, %arg21: memref<8x32x128xf32, #tpu.memory_space<vmem>>, %arg22: memref<1x128xf32, #tpu.memory_space<vmem>>, %arg23: memref<32x2xf32, #tpu.memory_space<vmem>>, %arg24: memref<1x2xf32, #tpu.memory_space<vmem>>, %arg25: memref<8x2xf32, #tpu.memory_space<vmem>>) attributes {dimension_semantics = [], scalar_prefetch = 0 : i64, scratch_operands = 0 : i64, tpu.core_type = #tpu.core_type<tc>} {
    %c0 = arith.constant 0 : index
    %c0_0 = arith.constant 0 : index
    %0 = vector.load %arg0[%c0, %c0_0] : memref<16x4xf32, #tpu.memory_space<vmem>>, vector<16x4xf32>
    %c0_1 = arith.constant 0 : index
    %c0_2 = arith.constant 0 : index
    %1 = vector.load %arg1[%c0_1, %c0_2] : memref<4x32xf32, #tpu.memory_space<vmem>>, vector<4x32xf32>
    %cst = arith.constant dense<0.000000e+00> : vector<16x32xf32>
    %2 = tpu.matmul %0, %1, %cst {dimension_numbers = #tpu.dot_dimension_numbers<[1], [0], [0], [1], [0, 0, 1, 1], [], []>} : vector<16x4xf32>, vector<4x32xf32>, vector<16x32xf32> -> vector<16x32xf32>
    %c0_3 = arith.constant 0 : index
    %c0_4 = arith.constant 0 : index
    %3 = vector.load %arg7[%c0_3, %c0_4] : memref<1x32xf32, #tpu.memory_space<vmem>>, vector<1x32xf32>
    %4 = vector.broadcast %3 : vector<1x32xf32> to vector<16x32xf32>
    %5 = arith.addf %2, %4 : vector<16x32xf32>
    %c0_5 = arith.constant 0 : index
    %c0_6 = arith.constant 0 : index
    %6 = vector.load %arg2[%c0_5, %c0_6] : memref<4x32xf32, #tpu.memory_space<vmem>>, vector<4x32xf32>
    %cst_7 = arith.constant dense<0.000000e+00> : vector<16x32xf32>
    %7 = tpu.matmul %0, %6, %cst_7 {dimension_numbers = #tpu.dot_dimension_numbers<[1], [0], [0], [1], [0, 0, 1, 1], [], []>} : vector<16x4xf32>, vector<4x32xf32>, vector<16x32xf32> -> vector<16x32xf32>
    %c0_8 = arith.constant 0 : index
    %c0_9 = arith.constant 0 : index
    %8 = vector.load %arg8[%c0_8, %c0_9] : memref<1x32xf32, #tpu.memory_space<vmem>>, vector<1x32xf32>
    %9 = vector.broadcast %8 : vector<1x32xf32> to vector<16x32xf32>
    %10 = arith.addf %7, %9 : vector<16x32xf32>
    %c0_10 = arith.constant 0 : index
    %c0_11 = arith.constant 0 : index
    %11 = vector.load %arg3[%c0_10, %c0_11] : memref<4x32xf32, #tpu.memory_space<vmem>>, vector<4x32xf32>
    %cst_12 = arith.constant dense<0.000000e+00> : vector<16x32xf32>
    %12 = tpu.matmul %0, %11, %cst_12 {dimension_numbers = #tpu.dot_dimension_numbers<[1], [0], [0], [1], [0, 0, 1, 1], [], []>} : vector<16x4xf32>, vector<4x32xf32>, vector<16x32xf32> -> vector<16x32xf32>
    %c0_13 = arith.constant 0 : index
    %c0_14 = arith.constant 0 : index
    %13 = vector.load %arg9[%c0_13, %c0_14] : memref<1x32xf32, #tpu.memory_space<vmem>>, vector<1x32xf32>
    %14 = vector.broadcast %13 : vector<1x32xf32> to vector<16x32xf32>
    %15 = arith.addf %12, %14 : vector<16x32xf32>
    %c0_15 = arith.constant 0 : index
    %c0_16 = arith.constant 0 : index
    %16 = vector.load %arg4[%c0_15, %c0_16] : memref<32x32xf32, #tpu.memory_space<vmem>>, vector<32x32xf32>
    %c0_17 = arith.constant 0 : index
    %c0_18 = arith.constant 0 : index
    %17 = vector.load %arg5[%c0_17, %c0_18] : memref<32x32xf32, #tpu.memory_space<vmem>>, vector<32x32xf32>
    %c0_19 = arith.constant 0 : index
    %c0_20 = arith.constant 0 : index
    %18 = vector.load %arg6[%c0_19, %c0_20] : memref<32x32xf32, #tpu.memory_space<vmem>>, vector<32x32xf32>
    %c0_21 = arith.constant 0 : index
    %c0_22 = arith.constant 0 : index
    %19 = vector.load %arg10[%c0_21, %c0_22] : memref<1x32xf32, #tpu.memory_space<vmem>>, vector<1x32xf32>
    %20 = vector.shape_cast %19 : vector<1x32xf32> to vector<1x32xf32>
    %21 = vector.broadcast %20 : vector<1x32xf32> to vector<2x32xf32>
    %cst_23 = arith.constant 0.000000e+00 : f32
    %22 = vector.broadcast %cst_23 : f32 to vector<2x32xf32>
    %23 = vector.extract_strided_slice %5 {offsets = [0, 0], sizes = [2, 32], strides = [1, 1]} : vector<16x32xf32> to vector<2x32xf32>
    %cst_24 = arith.constant dense<0.000000e+00> : vector<2x32xf32>
    %24 = tpu.matmul %22, %16, %cst_24 {dimension_numbers = #tpu.dot_dimension_numbers<[1], [0], [0], [1], [0, 0, 1, 1], [], []>} : vector<2x32xf32>, vector<32x32xf32>, vector<2x32xf32> -> vector<2x32xf32>
    %25 = arith.addf %23, %24 : vector<2x32xf32>
    %26 = arith.negf %25 : vector<2x32xf32>
    %27 = math.exp %26 : vector<2x32xf32>
    %cst_25 = arith.constant 1.000000e+00 : f32
    %28 = vector.broadcast %cst_25 : f32 to vector<2x32xf32>
    %29 = arith.addf %28, %27 : vector<2x32xf32>
    %30 = arith.divf %28, %29 : vector<2x32xf32>
    %31 = vector.extract_strided_slice %10 {offsets = [0, 0], sizes = [2, 32], strides = [1, 1]} : vector<16x32xf32> to vector<2x32xf32>
    %cst_26 = arith.constant dense<0.000000e+00> : vector<2x32xf32>
    %32 = tpu.matmul %22, %17, %cst_26 {dimension_numbers = #tpu.dot_dimension_numbers<[1], [0], [0], [1], [0, 0, 1, 1], [], []>} : vector<2x32xf32>, vector<32x32xf32>, vector<2x32xf32> -> vector<2x32xf32>
    %33 = arith.addf %31, %32 : vector<2x32xf32>
    %34 = arith.negf %33 : vector<2x32xf32>
    %35 = math.exp %34 : vector<2x32xf32>
    %cst_27 = arith.constant 1.000000e+00 : f32
    %36 = vector.broadcast %cst_27 : f32 to vector<2x32xf32>
    %37 = arith.addf %36, %35 : vector<2x32xf32>
    %38 = arith.divf %36, %37 : vector<2x32xf32>
    %39 = vector.extract_strided_slice %15 {offsets = [0, 0], sizes = [2, 32], strides = [1, 1]} : vector<16x32xf32> to vector<2x32xf32>
    %cst_28 = arith.constant dense<0.000000e+00> : vector<2x32xf32>
    %40 = tpu.matmul %22, %18, %cst_28 {dimension_numbers = #tpu.dot_dimension_numbers<[1], [0], [0], [1], [0, 0, 1, 1], [], []>} : vector<2x32xf32>, vector<32x32xf32>, vector<2x32xf32> -> vector<2x32xf32>
    %41 = arith.addf %40, %21 : vector<2x32xf32>
    %42 = arith.mulf %30, %41 : vector<2x32xf32>
    %43 = arith.addf %39, %42 : vector<2x32xf32>
    %44 = math.tanh %43 : vector<2x32xf32>
    %cst_29 = arith.constant 1.000000e+00 : f32
    %45 = vector.broadcast %cst_29 : f32 to vector<2x32xf32>
    %46 = arith.subf %45, %38 : vector<2x32xf32>
    %47 = arith.mulf %46, %44 : vector<2x32xf32>
    %48 = arith.mulf %38, %22 : vector<2x32xf32>
    %49 = arith.addf %47, %48 : vector<2x32xf32>
    %50 = vector.extract_strided_slice %5 {offsets = [2, 0], sizes = [2, 32], strides = [1, 1]} : vector<16x32xf32> to vector<2x32xf32>
    %cst_30 = arith.constant dense<0.000000e+00> : vector<2x32xf32>
    %51 = tpu.matmul %49, %16, %cst_30 {dimension_numbers = #tpu.dot_dimension_numbers<[1], [0], [0], [1], [0, 0, 1, 1], [], []>} : vector<2x32xf32>, vector<32x32xf32>, vector<2x32xf32> -> vector<2x32xf32>
    %52 = arith.addf %50, %51 : vector<2x32xf32>
    %53 = arith.negf %52 : vector<2x32xf32>
    %54 = math.exp %53 : vector<2x32xf32>
    %cst_31 = arith.constant 1.000000e+00 : f32
    %55 = vector.broadcast %cst_31 : f32 to vector<2x32xf32>
    %56 = arith.addf %55, %54 : vector<2x32xf32>
    %57 = arith.divf %55, %56 : vector<2x32xf32>
    %58 = vector.extract_strided_slice %10 {offsets = [2, 0], sizes = [2, 32], strides = [1, 1]} : vector<16x32xf32> to vector<2x32xf32>
    %cst_32 = arith.constant dense<0.000000e+00> : vector<2x32xf32>
    %59 = tpu.matmul %49, %17, %cst_32 {dimension_numbers = #tpu.dot_dimension_numbers<[1], [0], [0], [1], [0, 0, 1, 1], [], []>} : vector<2x32xf32>, vector<32x32xf32>, vector<2x32xf32> -> vector<2x32xf32>
    %60 = arith.addf %58, %59 : vector<2x32xf32>
    %61 = arith.negf %60 : vector<2x32xf32>
    %62 = math.exp %61 : vector<2x32xf32>
    %cst_33 = arith.constant 1.000000e+00 : f32
    %63 = vector.broadcast %cst_33 : f32 to vector<2x32xf32>
    %64 = arith.addf %63, %62 : vector<2x32xf32>
    %65 = arith.divf %63, %64 : vector<2x32xf32>
    %66 = vector.extract_strided_slice %15 {offsets = [2, 0], sizes = [2, 32], strides = [1, 1]} : vector<16x32xf32> to vector<2x32xf32>
    %cst_34 = arith.constant dense<0.000000e+00> : vector<2x32xf32>
    %67 = tpu.matmul %49, %18, %cst_34 {dimension_numbers = #tpu.dot_dimension_numbers<[1], [0], [0], [1], [0, 0, 1, 1], [], []>} : vector<2x32xf32>, vector<32x32xf32>, vector<2x32xf32> -> vector<2x32xf32>
    %68 = arith.addf %67, %21 : vector<2x32xf32>
    %69 = arith.mulf %57, %68 : vector<2x32xf32>
    %70 = arith.addf %66, %69 : vector<2x32xf32>
    %71 = math.tanh %70 : vector<2x32xf32>
    %cst_35 = arith.constant 1.000000e+00 : f32
    %72 = vector.broadcast %cst_35 : f32 to vector<2x32xf32>
    %73 = arith.subf %72, %65 : vector<2x32xf32>
    %74 = arith.mulf %73, %71 : vector<2x32xf32>
    %75 = arith.mulf %65, %49 : vector<2x32xf32>
    %76 = arith.addf %74, %75 : vector<2x32xf32>
    %77 = vector.extract_strided_slice %5 {offsets = [4, 0], sizes = [2, 32], strides = [1, 1]} : vector<16x32xf32> to vector<2x32xf32>
    %cst_36 = arith.constant dense<0.000000e+00> : vector<2x32xf32>
    %78 = tpu.matmul %76, %16, %cst_36 {dimension_numbers = #tpu.dot_dimension_numbers<[1], [0], [0], [1], [0, 0, 1, 1], [], []>} : vector<2x32xf32>, vector<32x32xf32>, vector<2x32xf32> -> vector<2x32xf32>
    %79 = arith.addf %77, %78 : vector<2x32xf32>
    %80 = arith.negf %79 : vector<2x32xf32>
    %81 = math.exp %80 : vector<2x32xf32>
    %cst_37 = arith.constant 1.000000e+00 : f32
    %82 = vector.broadcast %cst_37 : f32 to vector<2x32xf32>
    %83 = arith.addf %82, %81 : vector<2x32xf32>
    %84 = arith.divf %82, %83 : vector<2x32xf32>
    %85 = vector.extract_strided_slice %10 {offsets = [4, 0], sizes = [2, 32], strides = [1, 1]} : vector<16x32xf32> to vector<2x32xf32>
    %cst_38 = arith.constant dense<0.000000e+00> : vector<2x32xf32>
    %86 = tpu.matmul %76, %17, %cst_38 {dimension_numbers = #tpu.dot_dimension_numbers<[1], [0], [0], [1], [0, 0, 1, 1], [], []>} : vector<2x32xf32>, vector<32x32xf32>, vector<2x32xf32> -> vector<2x32xf32>
    %87 = arith.addf %85, %86 : vector<2x32xf32>
    %88 = arith.negf %87 : vector<2x32xf32>
    %89 = math.exp %88 : vector<2x32xf32>
    %cst_39 = arith.constant 1.000000e+00 : f32
    %90 = vector.broadcast %cst_39 : f32 to vector<2x32xf32>
    %91 = arith.addf %90, %89 : vector<2x32xf32>
    %92 = arith.divf %90, %91 : vector<2x32xf32>
    %93 = vector.extract_strided_slice %15 {offsets = [4, 0], sizes = [2, 32], strides = [1, 1]} : vector<16x32xf32> to vector<2x32xf32>
    %cst_40 = arith.constant dense<0.000000e+00> : vector<2x32xf32>
    %94 = tpu.matmul %76, %18, %cst_40 {dimension_numbers = #tpu.dot_dimension_numbers<[1], [0], [0], [1], [0, 0, 1, 1], [], []>} : vector<2x32xf32>, vector<32x32xf32>, vector<2x32xf32> -> vector<2x32xf32>
    %95 = arith.addf %94, %21 : vector<2x32xf32>
    %96 = arith.mulf %84, %95 : vector<2x32xf32>
    %97 = arith.addf %93, %96 : vector<2x32xf32>
    %98 = math.tanh %97 : vector<2x32xf32>
    %cst_41 = arith.constant 1.000000e+00 : f32
    %99 = vector.broadcast %cst_41 : f32 to vector<2x32xf32>
    %100 = arith.subf %99, %92 : vector<2x32xf32>
    %101 = arith.mulf %100, %98 : vector<2x32xf32>
    %102 = arith.mulf %92, %76 : vector<2x32xf32>
    %103 = arith.addf %101, %102 : vector<2x32xf32>
    %104 = vector.extract_strided_slice %5 {offsets = [6, 0], sizes = [2, 32], strides = [1, 1]} : vector<16x32xf32> to vector<2x32xf32>
    %cst_42 = arith.constant dense<0.000000e+00> : vector<2x32xf32>
    %105 = tpu.matmul %103, %16, %cst_42 {dimension_numbers = #tpu.dot_dimension_numbers<[1], [0], [0], [1], [0, 0, 1, 1], [], []>} : vector<2x32xf32>, vector<32x32xf32>, vector<2x32xf32> -> vector<2x32xf32>
    %106 = arith.addf %104, %105 : vector<2x32xf32>
    %107 = arith.negf %106 : vector<2x32xf32>
    %108 = math.exp %107 : vector<2x32xf32>
    %cst_43 = arith.constant 1.000000e+00 : f32
    %109 = vector.broadcast %cst_43 : f32 to vector<2x32xf32>
    %110 = arith.addf %109, %108 : vector<2x32xf32>
    %111 = arith.divf %109, %110 : vector<2x32xf32>
    %112 = vector.extract_strided_slice %10 {offsets = [6, 0], sizes = [2, 32], strides = [1, 1]} : vector<16x32xf32> to vector<2x32xf32>
    %cst_44 = arith.constant dense<0.000000e+00> : vector<2x32xf32>
    %113 = tpu.matmul %103, %17, %cst_44 {dimension_numbers = #tpu.dot_dimension_numbers<[1], [0], [0], [1], [0, 0, 1, 1], [], []>} : vector<2x32xf32>, vector<32x32xf32>, vector<2x32xf32> -> vector<2x32xf32>
    %114 = arith.addf %112, %113 : vector<2x32xf32>
    %115 = arith.negf %114 : vector<2x32xf32>
    %116 = math.exp %115 : vector<2x32xf32>
    %cst_45 = arith.constant 1.000000e+00 : f32
    %117 = vector.broadcast %cst_45 : f32 to vector<2x32xf32>
    %118 = arith.addf %117, %116 : vector<2x32xf32>
    %119 = arith.divf %117, %118 : vector<2x32xf32>
    %120 = vector.extract_strided_slice %15 {offsets = [6, 0], sizes = [2, 32], strides = [1, 1]} : vector<16x32xf32> to vector<2x32xf32>
    %cst_46 = arith.constant dense<0.000000e+00> : vector<2x32xf32>
    %121 = tpu.matmul %103, %18, %cst_46 {dimension_numbers = #tpu.dot_dimension_numbers<[1], [0], [0], [1], [0, 0, 1, 1], [], []>} : vector<2x32xf32>, vector<32x32xf32>, vector<2x32xf32> -> vector<2x32xf32>
    %122 = arith.addf %121, %21 : vector<2x32xf32>
    %123 = arith.mulf %111, %122 : vector<2x32xf32>
    %124 = arith.addf %120, %123 : vector<2x32xf32>
    %125 = math.tanh %124 : vector<2x32xf32>
    %cst_47 = arith.constant 1.000000e+00 : f32
    %126 = vector.broadcast %cst_47 : f32 to vector<2x32xf32>
    %127 = arith.subf %126, %119 : vector<2x32xf32>
    %128 = arith.mulf %127, %125 : vector<2x32xf32>
    %129 = arith.mulf %119, %103 : vector<2x32xf32>
    %130 = arith.addf %128, %129 : vector<2x32xf32>
    %131 = vector.extract_strided_slice %5 {offsets = [8, 0], sizes = [2, 32], strides = [1, 1]} : vector<16x32xf32> to vector<2x32xf32>
    %cst_48 = arith.constant dense<0.000000e+00> : vector<2x32xf32>
    %132 = tpu.matmul %130, %16, %cst_48 {dimension_numbers = #tpu.dot_dimension_numbers<[1], [0], [0], [1], [0, 0, 1, 1], [], []>} : vector<2x32xf32>, vector<32x32xf32>, vector<2x32xf32> -> vector<2x32xf32>
    %133 = arith.addf %131, %132 : vector<2x32xf32>
    %134 = arith.negf %133 : vector<2x32xf32>
    %135 = math.exp %134 : vector<2x32xf32>
    %cst_49 = arith.constant 1.000000e+00 : f32
    %136 = vector.broadcast %cst_49 : f32 to vector<2x32xf32>
    %137 = arith.addf %136, %135 : vector<2x32xf32>
    %138 = arith.divf %136, %137 : vector<2x32xf32>
    %139 = vector.extract_strided_slice %10 {offsets = [8, 0], sizes = [2, 32], strides = [1, 1]} : vector<16x32xf32> to vector<2x32xf32>
    %cst_50 = arith.constant dense<0.000000e+00> : vector<2x32xf32>
    %140 = tpu.matmul %130, %17, %cst_50 {dimension_numbers = #tpu.dot_dimension_numbers<[1], [0], [0], [1], [0, 0, 1, 1], [], []>} : vector<2x32xf32>, vector<32x32xf32>, vector<2x32xf32> -> vector<2x32xf32>
    %141 = arith.addf %139, %140 : vector<2x32xf32>
    %142 = arith.negf %141 : vector<2x32xf32>
    %143 = math.exp %142 : vector<2x32xf32>
    %cst_51 = arith.constant 1.000000e+00 : f32
    %144 = vector.broadcast %cst_51 : f32 to vector<2x32xf32>
    %145 = arith.addf %144, %143 : vector<2x32xf32>
    %146 = arith.divf %144, %145 : vector<2x32xf32>
    %147 = vector.extract_strided_slice %15 {offsets = [8, 0], sizes = [2, 32], strides = [1, 1]} : vector<16x32xf32> to vector<2x32xf32>
    %cst_52 = arith.constant dense<0.000000e+00> : vector<2x32xf32>
    %148 = tpu.matmul %130, %18, %cst_52 {dimension_numbers = #tpu.dot_dimension_numbers<[1], [0], [0], [1], [0, 0, 1, 1], [], []>} : vector<2x32xf32>, vector<32x32xf32>, vector<2x32xf32> -> vector<2x32xf32>
    %149 = arith.addf %148, %21 : vector<2x32xf32>
    %150 = arith.mulf %138, %149 : vector<2x32xf32>
    %151 = arith.addf %147, %150 : vector<2x32xf32>
    %152 = math.tanh %151 : vector<2x32xf32>
    %cst_53 = arith.constant 1.000000e+00 : f32
    %153 = vector.broadcast %cst_53 : f32 to vector<2x32xf32>
    %154 = arith.subf %153, %146 : vector<2x32xf32>
    %155 = arith.mulf %154, %152 : vector<2x32xf32>
    %156 = arith.mulf %146, %130 : vector<2x32xf32>
    %157 = arith.addf %155, %156 : vector<2x32xf32>
    %158 = vector.extract_strided_slice %5 {offsets = [10, 0], sizes = [2, 32], strides = [1, 1]} : vector<16x32xf32> to vector<2x32xf32>
    %cst_54 = arith.constant dense<0.000000e+00> : vector<2x32xf32>
    %159 = tpu.matmul %157, %16, %cst_54 {dimension_numbers = #tpu.dot_dimension_numbers<[1], [0], [0], [1], [0, 0, 1, 1], [], []>} : vector<2x32xf32>, vector<32x32xf32>, vector<2x32xf32> -> vector<2x32xf32>
    %160 = arith.addf %158, %159 : vector<2x32xf32>
    %161 = arith.negf %160 : vector<2x32xf32>
    %162 = math.exp %161 : vector<2x32xf32>
    %cst_55 = arith.constant 1.000000e+00 : f32
    %163 = vector.broadcast %cst_55 : f32 to vector<2x32xf32>
    %164 = arith.addf %163, %162 : vector<2x32xf32>
    %165 = arith.divf %163, %164 : vector<2x32xf32>
    %166 = vector.extract_strided_slice %10 {offsets = [10, 0], sizes = [2, 32], strides = [1, 1]} : vector<16x32xf32> to vector<2x32xf32>
    %cst_56 = arith.constant dense<0.000000e+00> : vector<2x32xf32>
    %167 = tpu.matmul %157, %17, %cst_56 {dimension_numbers = #tpu.dot_dimension_numbers<[1], [0], [0], [1], [0, 0, 1, 1], [], []>} : vector<2x32xf32>, vector<32x32xf32>, vector<2x32xf32> -> vector<2x32xf32>
    %168 = arith.addf %166, %167 : vector<2x32xf32>
    %169 = arith.negf %168 : vector<2x32xf32>
    %170 = math.exp %169 : vector<2x32xf32>
    %cst_57 = arith.constant 1.000000e+00 : f32
    %171 = vector.broadcast %cst_57 : f32 to vector<2x32xf32>
    %172 = arith.addf %171, %170 : vector<2x32xf32>
    %173 = arith.divf %171, %172 : vector<2x32xf32>
    %174 = vector.extract_strided_slice %15 {offsets = [10, 0], sizes = [2, 32], strides = [1, 1]} : vector<16x32xf32> to vector<2x32xf32>
    %cst_58 = arith.constant dense<0.000000e+00> : vector<2x32xf32>
    %175 = tpu.matmul %157, %18, %cst_58 {dimension_numbers = #tpu.dot_dimension_numbers<[1], [0], [0], [1], [0, 0, 1, 1], [], []>} : vector<2x32xf32>, vector<32x32xf32>, vector<2x32xf32> -> vector<2x32xf32>
    %176 = arith.addf %175, %21 : vector<2x32xf32>
    %177 = arith.mulf %165, %176 : vector<2x32xf32>
    %178 = arith.addf %174, %177 : vector<2x32xf32>
    %179 = math.tanh %178 : vector<2x32xf32>
    %cst_59 = arith.constant 1.000000e+00 : f32
    %180 = vector.broadcast %cst_59 : f32 to vector<2x32xf32>
    %181 = arith.subf %180, %173 : vector<2x32xf32>
    %182 = arith.mulf %181, %179 : vector<2x32xf32>
    %183 = arith.mulf %173, %157 : vector<2x32xf32>
    %184 = arith.addf %182, %183 : vector<2x32xf32>
    %185 = vector.extract_strided_slice %5 {offsets = [12, 0], sizes = [2, 32], strides = [1, 1]} : vector<16x32xf32> to vector<2x32xf32>
    %cst_60 = arith.constant dense<0.000000e+00> : vector<2x32xf32>
    %186 = tpu.matmul %184, %16, %cst_60 {dimension_numbers = #tpu.dot_dimension_numbers<[1], [0], [0], [1], [0, 0, 1, 1], [], []>} : vector<2x32xf32>, vector<32x32xf32>, vector<2x32xf32> -> vector<2x32xf32>
    %187 = arith.addf %185, %186 : vector<2x32xf32>
    %188 = arith.negf %187 : vector<2x32xf32>
    %189 = math.exp %188 : vector<2x32xf32>
    %cst_61 = arith.constant 1.000000e+00 : f32
    %190 = vector.broadcast %cst_61 : f32 to vector<2x32xf32>
    %191 = arith.addf %190, %189 : vector<2x32xf32>
    %192 = arith.divf %190, %191 : vector<2x32xf32>
    %193 = vector.extract_strided_slice %10 {offsets = [12, 0], sizes = [2, 32], strides = [1, 1]} : vector<16x32xf32> to vector<2x32xf32>
    %cst_62 = arith.constant dense<0.000000e+00> : vector<2x32xf32>
    %194 = tpu.matmul %184, %17, %cst_62 {dimension_numbers = #tpu.dot_dimension_numbers<[1], [0], [0], [1], [0, 0, 1, 1], [], []>} : vector<2x32xf32>, vector<32x32xf32>, vector<2x32xf32> -> vector<2x32xf32>
    %195 = arith.addf %193, %194 : vector<2x32xf32>
    %196 = arith.negf %195 : vector<2x32xf32>
    %197 = math.exp %196 : vector<2x32xf32>
    %cst_63 = arith.constant 1.000000e+00 : f32
    %198 = vector.broadcast %cst_63 : f32 to vector<2x32xf32>
    %199 = arith.addf %198, %197 : vector<2x32xf32>
    %200 = arith.divf %198, %199 : vector<2x32xf32>
    %201 = vector.extract_strided_slice %15 {offsets = [12, 0], sizes = [2, 32], strides = [1, 1]} : vector<16x32xf32> to vector<2x32xf32>
    %cst_64 = arith.constant dense<0.000000e+00> : vector<2x32xf32>
    %202 = tpu.matmul %184, %18, %cst_64 {dimension_numbers = #tpu.dot_dimension_numbers<[1], [0], [0], [1], [0, 0, 1, 1], [], []>} : vector<2x32xf32>, vector<32x32xf32>, vector<2x32xf32> -> vector<2x32xf32>
    %203 = arith.addf %202, %21 : vector<2x32xf32>
    %204 = arith.mulf %192, %203 : vector<2x32xf32>
    %205 = arith.addf %201, %204 : vector<2x32xf32>
    %206 = math.tanh %205 : vector<2x32xf32>
    %cst_65 = arith.constant 1.000000e+00 : f32
    %207 = vector.broadcast %cst_65 : f32 to vector<2x32xf32>
    %208 = arith.subf %207, %200 : vector<2x32xf32>
    %209 = arith.mulf %208, %206 : vector<2x32xf32>
    %210 = arith.mulf %200, %184 : vector<2x32xf32>
    %211 = arith.addf %209, %210 : vector<2x32xf32>
    %212 = vector.extract_strided_slice %5 {offsets = [14, 0], sizes = [2, 32], strides = [1, 1]} : vector<16x32xf32> to vector<2x32xf32>
    %cst_66 = arith.constant dense<0.000000e+00> : vector<2x32xf32>
    %213 = tpu.matmul %211, %16, %cst_66 {dimension_numbers = #tpu.dot_dimension_numbers<[1], [0], [0], [1], [0, 0, 1, 1], [], []>} : vector<2x32xf32>, vector<32x32xf32>, vector<2x32xf32> -> vector<2x32xf32>
    %214 = arith.addf %212, %213 : vector<2x32xf32>
    %215 = arith.negf %214 : vector<2x32xf32>
    %216 = math.exp %215 : vector<2x32xf32>
    %cst_67 = arith.constant 1.000000e+00 : f32
    %217 = vector.broadcast %cst_67 : f32 to vector<2x32xf32>
    %218 = arith.addf %217, %216 : vector<2x32xf32>
    %219 = arith.divf %217, %218 : vector<2x32xf32>
    %220 = vector.extract_strided_slice %10 {offsets = [14, 0], sizes = [2, 32], strides = [1, 1]} : vector<16x32xf32> to vector<2x32xf32>
    %cst_68 = arith.constant dense<0.000000e+00> : vector<2x32xf32>
    %221 = tpu.matmul %211, %17, %cst_68 {dimension_numbers = #tpu.dot_dimension_numbers<[1], [0], [0], [1], [0, 0, 1, 1], [], []>} : vector<2x32xf32>, vector<32x32xf32>, vector<2x32xf32> -> vector<2x32xf32>
    %222 = arith.addf %220, %221 : vector<2x32xf32>
    %223 = arith.negf %222 : vector<2x32xf32>
    %224 = math.exp %223 : vector<2x32xf32>
    %cst_69 = arith.constant 1.000000e+00 : f32
    %225 = vector.broadcast %cst_69 : f32 to vector<2x32xf32>
    %226 = arith.addf %225, %224 : vector<2x32xf32>
    %227 = arith.divf %225, %226 : vector<2x32xf32>
    %228 = vector.extract_strided_slice %15 {offsets = [14, 0], sizes = [2, 32], strides = [1, 1]} : vector<16x32xf32> to vector<2x32xf32>
    %cst_70 = arith.constant dense<0.000000e+00> : vector<2x32xf32>
    %229 = tpu.matmul %211, %18, %cst_70 {dimension_numbers = #tpu.dot_dimension_numbers<[1], [0], [0], [1], [0, 0, 1, 1], [], []>} : vector<2x32xf32>, vector<32x32xf32>, vector<2x32xf32> -> vector<2x32xf32>
    %230 = arith.addf %229, %21 : vector<2x32xf32>
    %231 = arith.mulf %219, %230 : vector<2x32xf32>
    %232 = arith.addf %228, %231 : vector<2x32xf32>
    %233 = math.tanh %232 : vector<2x32xf32>
    %cst_71 = arith.constant 1.000000e+00 : f32
    %234 = vector.broadcast %cst_71 : f32 to vector<2x32xf32>
    %235 = arith.subf %234, %227 : vector<2x32xf32>
    %236 = arith.mulf %235, %233 : vector<2x32xf32>
    %237 = arith.mulf %227, %211 : vector<2x32xf32>
    %238 = arith.addf %236, %237 : vector<2x32xf32>
    %239 = tpu.concatenate %49, %76, %103, %130, %157, %184, %211, %238 in 0 : vector<2x32xf32>, vector<2x32xf32>, vector<2x32xf32>, vector<2x32xf32>, vector<2x32xf32>, vector<2x32xf32>, vector<2x32xf32>, vector<2x32xf32> -> vector<16x32xf32>
    %c0_72 = arith.constant 0 : index
    %c0_73 = arith.constant 0 : index
    %240 = vector.load %arg11[%c0_72, %c0_73] : memref<32x32xf32, #tpu.memory_space<vmem>>, vector<32x32xf32>
    %cst_74 = arith.constant dense<0.000000e+00> : vector<16x32xf32>
    %241 = tpu.matmul %239, %240, %cst_74 {dimension_numbers = #tpu.dot_dimension_numbers<[1], [0], [0], [1], [0, 0, 1, 1], [], []>} : vector<16x32xf32>, vector<32x32xf32>, vector<16x32xf32> -> vector<16x32xf32>
    %c0_75 = arith.constant 0 : index
    %c0_76 = arith.constant 0 : index
    %242 = vector.load %arg17[%c0_75, %c0_76] : memref<1x32xf32, #tpu.memory_space<vmem>>, vector<1x32xf32>
    %243 = vector.broadcast %242 : vector<1x32xf32> to vector<16x32xf32>
    %244 = arith.addf %241, %243 : vector<16x32xf32>
    %c0_77 = arith.constant 0 : index
    %c0_78 = arith.constant 0 : index
    %245 = vector.load %arg12[%c0_77, %c0_78] : memref<32x32xf32, #tpu.memory_space<vmem>>, vector<32x32xf32>
    %cst_79 = arith.constant dense<0.000000e+00> : vector<16x32xf32>
    %246 = tpu.matmul %239, %245, %cst_79 {dimension_numbers = #tpu.dot_dimension_numbers<[1], [0], [0], [1], [0, 0, 1, 1], [], []>} : vector<16x32xf32>, vector<32x32xf32>, vector<16x32xf32> -> vector<16x32xf32>
    %c0_80 = arith.constant 0 : index
    %c0_81 = arith.constant 0 : index
    %247 = vector.load %arg18[%c0_80, %c0_81] : memref<1x32xf32, #tpu.memory_space<vmem>>, vector<1x32xf32>
    %248 = vector.broadcast %247 : vector<1x32xf32> to vector<16x32xf32>
    %249 = arith.addf %246, %248 : vector<16x32xf32>
    %c0_82 = arith.constant 0 : index
    %c0_83 = arith.constant 0 : index
    %250 = vector.load %arg13[%c0_82, %c0_83] : memref<32x32xf32, #tpu.memory_space<vmem>>, vector<32x32xf32>
    %cst_84 = arith.constant dense<0.000000e+00> : vector<16x32xf32>
    %251 = tpu.matmul %239, %250, %cst_84 {dimension_numbers = #tpu.dot_dimension_numbers<[1], [0], [0], [1], [0, 0, 1, 1], [], []>} : vector<16x32xf32>, vector<32x32xf32>, vector<16x32xf32> -> vector<16x32xf32>
    %c0_85 = arith.constant 0 : index
    %c0_86 = arith.constant 0 : index
    %252 = vector.load %arg19[%c0_85, %c0_86] : memref<1x32xf32, #tpu.memory_space<vmem>>, vector<1x32xf32>
    %253 = vector.broadcast %252 : vector<1x32xf32> to vector<16x32xf32>
    %254 = arith.addf %251, %253 : vector<16x32xf32>
    %c0_87 = arith.constant 0 : index
    %c0_88 = arith.constant 0 : index
    %255 = vector.load %arg14[%c0_87, %c0_88] : memref<32x32xf32, #tpu.memory_space<vmem>>, vector<32x32xf32>
    %c0_89 = arith.constant 0 : index
    %c0_90 = arith.constant 0 : index
    %256 = vector.load %arg15[%c0_89, %c0_90] : memref<32x32xf32, #tpu.memory_space<vmem>>, vector<32x32xf32>
    %c0_91 = arith.constant 0 : index
    %c0_92 = arith.constant 0 : index
    %257 = vector.load %arg16[%c0_91, %c0_92] : memref<32x32xf32, #tpu.memory_space<vmem>>, vector<32x32xf32>
    %c0_93 = arith.constant 0 : index
    %c0_94 = arith.constant 0 : index
    %258 = vector.load %arg20[%c0_93, %c0_94] : memref<1x32xf32, #tpu.memory_space<vmem>>, vector<1x32xf32>
    %259 = vector.shape_cast %258 : vector<1x32xf32> to vector<1x32xf32>
    %260 = vector.broadcast %259 : vector<1x32xf32> to vector<2x32xf32>
    %cst_95 = arith.constant 0.000000e+00 : f32
    %261 = vector.broadcast %cst_95 : f32 to vector<2x32xf32>
    %262 = vector.extract_strided_slice %244 {offsets = [0, 0], sizes = [2, 32], strides = [1, 1]} : vector<16x32xf32> to vector<2x32xf32>
    %cst_96 = arith.constant dense<0.000000e+00> : vector<2x32xf32>
    %263 = tpu.matmul %261, %255, %cst_96 {dimension_numbers = #tpu.dot_dimension_numbers<[1], [0], [0], [1], [0, 0, 1, 1], [], []>} : vector<2x32xf32>, vector<32x32xf32>, vector<2x32xf32> -> vector<2x32xf32>
    %264 = arith.addf %262, %263 : vector<2x32xf32>
    %265 = arith.negf %264 : vector<2x32xf32>
    %266 = math.exp %265 : vector<2x32xf32>
    %cst_97 = arith.constant 1.000000e+00 : f32
    %267 = vector.broadcast %cst_97 : f32 to vector<2x32xf32>
    %268 = arith.addf %267, %266 : vector<2x32xf32>
    %269 = arith.divf %267, %268 : vector<2x32xf32>
    %270 = vector.extract_strided_slice %249 {offsets = [0, 0], sizes = [2, 32], strides = [1, 1]} : vector<16x32xf32> to vector<2x32xf32>
    %cst_98 = arith.constant dense<0.000000e+00> : vector<2x32xf32>
    %271 = tpu.matmul %261, %256, %cst_98 {dimension_numbers = #tpu.dot_dimension_numbers<[1], [0], [0], [1], [0, 0, 1, 1], [], []>} : vector<2x32xf32>, vector<32x32xf32>, vector<2x32xf32> -> vector<2x32xf32>
    %272 = arith.addf %270, %271 : vector<2x32xf32>
    %273 = arith.negf %272 : vector<2x32xf32>
    %274 = math.exp %273 : vector<2x32xf32>
    %cst_99 = arith.constant 1.000000e+00 : f32
    %275 = vector.broadcast %cst_99 : f32 to vector<2x32xf32>
    %276 = arith.addf %275, %274 : vector<2x32xf32>
    %277 = arith.divf %275, %276 : vector<2x32xf32>
    %278 = vector.extract_strided_slice %254 {offsets = [0, 0], sizes = [2, 32], strides = [1, 1]} : vector<16x32xf32> to vector<2x32xf32>
    %cst_100 = arith.constant dense<0.000000e+00> : vector<2x32xf32>
    %279 = tpu.matmul %261, %257, %cst_100 {dimension_numbers = #tpu.dot_dimension_numbers<[1], [0], [0], [1], [0, 0, 1, 1], [], []>} : vector<2x32xf32>, vector<32x32xf32>, vector<2x32xf32> -> vector<2x32xf32>
    %280 = arith.addf %279, %260 : vector<2x32xf32>
    %281 = arith.mulf %269, %280 : vector<2x32xf32>
    %282 = arith.addf %278, %281 : vector<2x32xf32>
    %283 = math.tanh %282 : vector<2x32xf32>
    %cst_101 = arith.constant 1.000000e+00 : f32
    %284 = vector.broadcast %cst_101 : f32 to vector<2x32xf32>
    %285 = arith.subf %284, %277 : vector<2x32xf32>
    %286 = arith.mulf %285, %283 : vector<2x32xf32>
    %287 = arith.mulf %277, %261 : vector<2x32xf32>
    %288 = arith.addf %286, %287 : vector<2x32xf32>
    %289 = vector.extract_strided_slice %244 {offsets = [2, 0], sizes = [2, 32], strides = [1, 1]} : vector<16x32xf32> to vector<2x32xf32>
    %cst_102 = arith.constant dense<0.000000e+00> : vector<2x32xf32>
    %290 = tpu.matmul %288, %255, %cst_102 {dimension_numbers = #tpu.dot_dimension_numbers<[1], [0], [0], [1], [0, 0, 1, 1], [], []>} : vector<2x32xf32>, vector<32x32xf32>, vector<2x32xf32> -> vector<2x32xf32>
    %291 = arith.addf %289, %290 : vector<2x32xf32>
    %292 = arith.negf %291 : vector<2x32xf32>
    %293 = math.exp %292 : vector<2x32xf32>
    %cst_103 = arith.constant 1.000000e+00 : f32
    %294 = vector.broadcast %cst_103 : f32 to vector<2x32xf32>
    %295 = arith.addf %294, %293 : vector<2x32xf32>
    %296 = arith.divf %294, %295 : vector<2x32xf32>
    %297 = vector.extract_strided_slice %249 {offsets = [2, 0], sizes = [2, 32], strides = [1, 1]} : vector<16x32xf32> to vector<2x32xf32>
    %cst_104 = arith.constant dense<0.000000e+00> : vector<2x32xf32>
    %298 = tpu.matmul %288, %256, %cst_104 {dimension_numbers = #tpu.dot_dimension_numbers<[1], [0], [0], [1], [0, 0, 1, 1], [], []>} : vector<2x32xf32>, vector<32x32xf32>, vector<2x32xf32> -> vector<2x32xf32>
    %299 = arith.addf %297, %298 : vector<2x32xf32>
    %300 = arith.negf %299 : vector<2x32xf32>
    %301 = math.exp %300 : vector<2x32xf32>
    %cst_105 = arith.constant 1.000000e+00 : f32
    %302 = vector.broadcast %cst_105 : f32 to vector<2x32xf32>
    %303 = arith.addf %302, %301 : vector<2x32xf32>
    %304 = arith.divf %302, %303 : vector<2x32xf32>
    %305 = vector.extract_strided_slice %254 {offsets = [2, 0], sizes = [2, 32], strides = [1, 1]} : vector<16x32xf32> to vector<2x32xf32>
    %cst_106 = arith.constant dense<0.000000e+00> : vector<2x32xf32>
    %306 = tpu.matmul %288, %257, %cst_106 {dimension_numbers = #tpu.dot_dimension_numbers<[1], [0], [0], [1], [0, 0, 1, 1], [], []>} : vector<2x32xf32>, vector<32x32xf32>, vector<2x32xf32> -> vector<2x32xf32>
    %307 = arith.addf %306, %260 : vector<2x32xf32>
    %308 = arith.mulf %296, %307 : vector<2x32xf32>
    %309 = arith.addf %305, %308 : vector<2x32xf32>
    %310 = math.tanh %309 : vector<2x32xf32>
    %cst_107 = arith.constant 1.000000e+00 : f32
    %311 = vector.broadcast %cst_107 : f32 to vector<2x32xf32>
    %312 = arith.subf %311, %304 : vector<2x32xf32>
    %313 = arith.mulf %312, %310 : vector<2x32xf32>
    %314 = arith.mulf %304, %288 : vector<2x32xf32>
    %315 = arith.addf %313, %314 : vector<2x32xf32>
    %316 = vector.extract_strided_slice %244 {offsets = [4, 0], sizes = [2, 32], strides = [1, 1]} : vector<16x32xf32> to vector<2x32xf32>
    %cst_108 = arith.constant dense<0.000000e+00> : vector<2x32xf32>
    %317 = tpu.matmul %315, %255, %cst_108 {dimension_numbers = #tpu.dot_dimension_numbers<[1], [0], [0], [1], [0, 0, 1, 1], [], []>} : vector<2x32xf32>, vector<32x32xf32>, vector<2x32xf32> -> vector<2x32xf32>
    %318 = arith.addf %316, %317 : vector<2x32xf32>
    %319 = arith.negf %318 : vector<2x32xf32>
    %320 = math.exp %319 : vector<2x32xf32>
    %cst_109 = arith.constant 1.000000e+00 : f32
    %321 = vector.broadcast %cst_109 : f32 to vector<2x32xf32>
    %322 = arith.addf %321, %320 : vector<2x32xf32>
    %323 = arith.divf %321, %322 : vector<2x32xf32>
    %324 = vector.extract_strided_slice %249 {offsets = [4, 0], sizes = [2, 32], strides = [1, 1]} : vector<16x32xf32> to vector<2x32xf32>
    %cst_110 = arith.constant dense<0.000000e+00> : vector<2x32xf32>
    %325 = tpu.matmul %315, %256, %cst_110 {dimension_numbers = #tpu.dot_dimension_numbers<[1], [0], [0], [1], [0, 0, 1, 1], [], []>} : vector<2x32xf32>, vector<32x32xf32>, vector<2x32xf32> -> vector<2x32xf32>
    %326 = arith.addf %324, %325 : vector<2x32xf32>
    %327 = arith.negf %326 : vector<2x32xf32>
    %328 = math.exp %327 : vector<2x32xf32>
    %cst_111 = arith.constant 1.000000e+00 : f32
    %329 = vector.broadcast %cst_111 : f32 to vector<2x32xf32>
    %330 = arith.addf %329, %328 : vector<2x32xf32>
    %331 = arith.divf %329, %330 : vector<2x32xf32>
    %332 = vector.extract_strided_slice %254 {offsets = [4, 0], sizes = [2, 32], strides = [1, 1]} : vector<16x32xf32> to vector<2x32xf32>
    %cst_112 = arith.constant dense<0.000000e+00> : vector<2x32xf32>
    %333 = tpu.matmul %315, %257, %cst_112 {dimension_numbers = #tpu.dot_dimension_numbers<[1], [0], [0], [1], [0, 0, 1, 1], [], []>} : vector<2x32xf32>, vector<32x32xf32>, vector<2x32xf32> -> vector<2x32xf32>
    %334 = arith.addf %333, %260 : vector<2x32xf32>
    %335 = arith.mulf %323, %334 : vector<2x32xf32>
    %336 = arith.addf %332, %335 : vector<2x32xf32>
    %337 = math.tanh %336 : vector<2x32xf32>
    %cst_113 = arith.constant 1.000000e+00 : f32
    %338 = vector.broadcast %cst_113 : f32 to vector<2x32xf32>
    %339 = arith.subf %338, %331 : vector<2x32xf32>
    %340 = arith.mulf %339, %337 : vector<2x32xf32>
    %341 = arith.mulf %331, %315 : vector<2x32xf32>
    %342 = arith.addf %340, %341 : vector<2x32xf32>
    %343 = vector.extract_strided_slice %244 {offsets = [6, 0], sizes = [2, 32], strides = [1, 1]} : vector<16x32xf32> to vector<2x32xf32>
    %cst_114 = arith.constant dense<0.000000e+00> : vector<2x32xf32>
    %344 = tpu.matmul %342, %255, %cst_114 {dimension_numbers = #tpu.dot_dimension_numbers<[1], [0], [0], [1], [0, 0, 1, 1], [], []>} : vector<2x32xf32>, vector<32x32xf32>, vector<2x32xf32> -> vector<2x32xf32>
    %345 = arith.addf %343, %344 : vector<2x32xf32>
    %346 = arith.negf %345 : vector<2x32xf32>
    %347 = math.exp %346 : vector<2x32xf32>
    %cst_115 = arith.constant 1.000000e+00 : f32
    %348 = vector.broadcast %cst_115 : f32 to vector<2x32xf32>
    %349 = arith.addf %348, %347 : vector<2x32xf32>
    %350 = arith.divf %348, %349 : vector<2x32xf32>
    %351 = vector.extract_strided_slice %249 {offsets = [6, 0], sizes = [2, 32], strides = [1, 1]} : vector<16x32xf32> to vector<2x32xf32>
    %cst_116 = arith.constant dense<0.000000e+00> : vector<2x32xf32>
    %352 = tpu.matmul %342, %256, %cst_116 {dimension_numbers = #tpu.dot_dimension_numbers<[1], [0], [0], [1], [0, 0, 1, 1], [], []>} : vector<2x32xf32>, vector<32x32xf32>, vector<2x32xf32> -> vector<2x32xf32>
    %353 = arith.addf %351, %352 : vector<2x32xf32>
    %354 = arith.negf %353 : vector<2x32xf32>
    %355 = math.exp %354 : vector<2x32xf32>
    %cst_117 = arith.constant 1.000000e+00 : f32
    %356 = vector.broadcast %cst_117 : f32 to vector<2x32xf32>
    %357 = arith.addf %356, %355 : vector<2x32xf32>
    %358 = arith.divf %356, %357 : vector<2x32xf32>
    %359 = vector.extract_strided_slice %254 {offsets = [6, 0], sizes = [2, 32], strides = [1, 1]} : vector<16x32xf32> to vector<2x32xf32>
    %cst_118 = arith.constant dense<0.000000e+00> : vector<2x32xf32>
    %360 = tpu.matmul %342, %257, %cst_118 {dimension_numbers = #tpu.dot_dimension_numbers<[1], [0], [0], [1], [0, 0, 1, 1], [], []>} : vector<2x32xf32>, vector<32x32xf32>, vector<2x32xf32> -> vector<2x32xf32>
    %361 = arith.addf %360, %260 : vector<2x32xf32>
    %362 = arith.mulf %350, %361 : vector<2x32xf32>
    %363 = arith.addf %359, %362 : vector<2x32xf32>
    %364 = math.tanh %363 : vector<2x32xf32>
    %cst_119 = arith.constant 1.000000e+00 : f32
    %365 = vector.broadcast %cst_119 : f32 to vector<2x32xf32>
    %366 = arith.subf %365, %358 : vector<2x32xf32>
    %367 = arith.mulf %366, %364 : vector<2x32xf32>
    %368 = arith.mulf %358, %342 : vector<2x32xf32>
    %369 = arith.addf %367, %368 : vector<2x32xf32>
    %370 = vector.extract_strided_slice %244 {offsets = [8, 0], sizes = [2, 32], strides = [1, 1]} : vector<16x32xf32> to vector<2x32xf32>
    %cst_120 = arith.constant dense<0.000000e+00> : vector<2x32xf32>
    %371 = tpu.matmul %369, %255, %cst_120 {dimension_numbers = #tpu.dot_dimension_numbers<[1], [0], [0], [1], [0, 0, 1, 1], [], []>} : vector<2x32xf32>, vector<32x32xf32>, vector<2x32xf32> -> vector<2x32xf32>
    %372 = arith.addf %370, %371 : vector<2x32xf32>
    %373 = arith.negf %372 : vector<2x32xf32>
    %374 = math.exp %373 : vector<2x32xf32>
    %cst_121 = arith.constant 1.000000e+00 : f32
    %375 = vector.broadcast %cst_121 : f32 to vector<2x32xf32>
    %376 = arith.addf %375, %374 : vector<2x32xf32>
    %377 = arith.divf %375, %376 : vector<2x32xf32>
    %378 = vector.extract_strided_slice %249 {offsets = [8, 0], sizes = [2, 32], strides = [1, 1]} : vector<16x32xf32> to vector<2x32xf32>
    %cst_122 = arith.constant dense<0.000000e+00> : vector<2x32xf32>
    %379 = tpu.matmul %369, %256, %cst_122 {dimension_numbers = #tpu.dot_dimension_numbers<[1], [0], [0], [1], [0, 0, 1, 1], [], []>} : vector<2x32xf32>, vector<32x32xf32>, vector<2x32xf32> -> vector<2x32xf32>
    %380 = arith.addf %378, %379 : vector<2x32xf32>
    %381 = arith.negf %380 : vector<2x32xf32>
    %382 = math.exp %381 : vector<2x32xf32>
    %cst_123 = arith.constant 1.000000e+00 : f32
    %383 = vector.broadcast %cst_123 : f32 to vector<2x32xf32>
    %384 = arith.addf %383, %382 : vector<2x32xf32>
    %385 = arith.divf %383, %384 : vector<2x32xf32>
    %386 = vector.extract_strided_slice %254 {offsets = [8, 0], sizes = [2, 32], strides = [1, 1]} : vector<16x32xf32> to vector<2x32xf32>
    %cst_124 = arith.constant dense<0.000000e+00> : vector<2x32xf32>
    %387 = tpu.matmul %369, %257, %cst_124 {dimension_numbers = #tpu.dot_dimension_numbers<[1], [0], [0], [1], [0, 0, 1, 1], [], []>} : vector<2x32xf32>, vector<32x32xf32>, vector<2x32xf32> -> vector<2x32xf32>
    %388 = arith.addf %387, %260 : vector<2x32xf32>
    %389 = arith.mulf %377, %388 : vector<2x32xf32>
    %390 = arith.addf %386, %389 : vector<2x32xf32>
    %391 = math.tanh %390 : vector<2x32xf32>
    %cst_125 = arith.constant 1.000000e+00 : f32
    %392 = vector.broadcast %cst_125 : f32 to vector<2x32xf32>
    %393 = arith.subf %392, %385 : vector<2x32xf32>
    %394 = arith.mulf %393, %391 : vector<2x32xf32>
    %395 = arith.mulf %385, %369 : vector<2x32xf32>
    %396 = arith.addf %394, %395 : vector<2x32xf32>
    %397 = vector.extract_strided_slice %244 {offsets = [10, 0], sizes = [2, 32], strides = [1, 1]} : vector<16x32xf32> to vector<2x32xf32>
    %cst_126 = arith.constant dense<0.000000e+00> : vector<2x32xf32>
    %398 = tpu.matmul %396, %255, %cst_126 {dimension_numbers = #tpu.dot_dimension_numbers<[1], [0], [0], [1], [0, 0, 1, 1], [], []>} : vector<2x32xf32>, vector<32x32xf32>, vector<2x32xf32> -> vector<2x32xf32>
    %399 = arith.addf %397, %398 : vector<2x32xf32>
    %400 = arith.negf %399 : vector<2x32xf32>
    %401 = math.exp %400 : vector<2x32xf32>
    %cst_127 = arith.constant 1.000000e+00 : f32
    %402 = vector.broadcast %cst_127 : f32 to vector<2x32xf32>
    %403 = arith.addf %402, %401 : vector<2x32xf32>
    %404 = arith.divf %402, %403 : vector<2x32xf32>
    %405 = vector.extract_strided_slice %249 {offsets = [10, 0], sizes = [2, 32], strides = [1, 1]} : vector<16x32xf32> to vector<2x32xf32>
    %cst_128 = arith.constant dense<0.000000e+00> : vector<2x32xf32>
    %406 = tpu.matmul %396, %256, %cst_128 {dimension_numbers = #tpu.dot_dimension_numbers<[1], [0], [0], [1], [0, 0, 1, 1], [], []>} : vector<2x32xf32>, vector<32x32xf32>, vector<2x32xf32> -> vector<2x32xf32>
    %407 = arith.addf %405, %406 : vector<2x32xf32>
    %408 = arith.negf %407 : vector<2x32xf32>
    %409 = math.exp %408 : vector<2x32xf32>
    %cst_129 = arith.constant 1.000000e+00 : f32
    %410 = vector.broadcast %cst_129 : f32 to vector<2x32xf32>
    %411 = arith.addf %410, %409 : vector<2x32xf32>
    %412 = arith.divf %410, %411 : vector<2x32xf32>
    %413 = vector.extract_strided_slice %254 {offsets = [10, 0], sizes = [2, 32], strides = [1, 1]} : vector<16x32xf32> to vector<2x32xf32>
    %cst_130 = arith.constant dense<0.000000e+00> : vector<2x32xf32>
    %414 = tpu.matmul %396, %257, %cst_130 {dimension_numbers = #tpu.dot_dimension_numbers<[1], [0], [0], [1], [0, 0, 1, 1], [], []>} : vector<2x32xf32>, vector<32x32xf32>, vector<2x32xf32> -> vector<2x32xf32>
    %415 = arith.addf %414, %260 : vector<2x32xf32>
    %416 = arith.mulf %404, %415 : vector<2x32xf32>
    %417 = arith.addf %413, %416 : vector<2x32xf32>
    %418 = math.tanh %417 : vector<2x32xf32>
    %cst_131 = arith.constant 1.000000e+00 : f32
    %419 = vector.broadcast %cst_131 : f32 to vector<2x32xf32>
    %420 = arith.subf %419, %412 : vector<2x32xf32>
    %421 = arith.mulf %420, %418 : vector<2x32xf32>
    %422 = arith.mulf %412, %396 : vector<2x32xf32>
    %423 = arith.addf %421, %422 : vector<2x32xf32>
    %424 = vector.extract_strided_slice %244 {offsets = [12, 0], sizes = [2, 32], strides = [1, 1]} : vector<16x32xf32> to vector<2x32xf32>
    %cst_132 = arith.constant dense<0.000000e+00> : vector<2x32xf32>
    %425 = tpu.matmul %423, %255, %cst_132 {dimension_numbers = #tpu.dot_dimension_numbers<[1], [0], [0], [1], [0, 0, 1, 1], [], []>} : vector<2x32xf32>, vector<32x32xf32>, vector<2x32xf32> -> vector<2x32xf32>
    %426 = arith.addf %424, %425 : vector<2x32xf32>
    %427 = arith.negf %426 : vector<2x32xf32>
    %428 = math.exp %427 : vector<2x32xf32>
    %cst_133 = arith.constant 1.000000e+00 : f32
    %429 = vector.broadcast %cst_133 : f32 to vector<2x32xf32>
    %430 = arith.addf %429, %428 : vector<2x32xf32>
    %431 = arith.divf %429, %430 : vector<2x32xf32>
    %432 = vector.extract_strided_slice %249 {offsets = [12, 0], sizes = [2, 32], strides = [1, 1]} : vector<16x32xf32> to vector<2x32xf32>
    %cst_134 = arith.constant dense<0.000000e+00> : vector<2x32xf32>
    %433 = tpu.matmul %423, %256, %cst_134 {dimension_numbers = #tpu.dot_dimension_numbers<[1], [0], [0], [1], [0, 0, 1, 1], [], []>} : vector<2x32xf32>, vector<32x32xf32>, vector<2x32xf32> -> vector<2x32xf32>
    %434 = arith.addf %432, %433 : vector<2x32xf32>
    %435 = arith.negf %434 : vector<2x32xf32>
    %436 = math.exp %435 : vector<2x32xf32>
    %cst_135 = arith.constant 1.000000e+00 : f32
    %437 = vector.broadcast %cst_135 : f32 to vector<2x32xf32>
    %438 = arith.addf %437, %436 : vector<2x32xf32>
    %439 = arith.divf %437, %438 : vector<2x32xf32>
    %440 = vector.extract_strided_slice %254 {offsets = [12, 0], sizes = [2, 32], strides = [1, 1]} : vector<16x32xf32> to vector<2x32xf32>
    %cst_136 = arith.constant dense<0.000000e+00> : vector<2x32xf32>
    %441 = tpu.matmul %423, %257, %cst_136 {dimension_numbers = #tpu.dot_dimension_numbers<[1], [0], [0], [1], [0, 0, 1, 1], [], []>} : vector<2x32xf32>, vector<32x32xf32>, vector<2x32xf32> -> vector<2x32xf32>
    %442 = arith.addf %441, %260 : vector<2x32xf32>
    %443 = arith.mulf %431, %442 : vector<2x32xf32>
    %444 = arith.addf %440, %443 : vector<2x32xf32>
    %445 = math.tanh %444 : vector<2x32xf32>
    %cst_137 = arith.constant 1.000000e+00 : f32
    %446 = vector.broadcast %cst_137 : f32 to vector<2x32xf32>
    %447 = arith.subf %446, %439 : vector<2x32xf32>
    %448 = arith.mulf %447, %445 : vector<2x32xf32>
    %449 = arith.mulf %439, %423 : vector<2x32xf32>
    %450 = arith.addf %448, %449 : vector<2x32xf32>
    %451 = vector.extract_strided_slice %244 {offsets = [14, 0], sizes = [2, 32], strides = [1, 1]} : vector<16x32xf32> to vector<2x32xf32>
    %cst_138 = arith.constant dense<0.000000e+00> : vector<2x32xf32>
    %452 = tpu.matmul %450, %255, %cst_138 {dimension_numbers = #tpu.dot_dimension_numbers<[1], [0], [0], [1], [0, 0, 1, 1], [], []>} : vector<2x32xf32>, vector<32x32xf32>, vector<2x32xf32> -> vector<2x32xf32>
    %453 = arith.addf %451, %452 : vector<2x32xf32>
    %454 = arith.negf %453 : vector<2x32xf32>
    %455 = math.exp %454 : vector<2x32xf32>
    %cst_139 = arith.constant 1.000000e+00 : f32
    %456 = vector.broadcast %cst_139 : f32 to vector<2x32xf32>
    %457 = arith.addf %456, %455 : vector<2x32xf32>
    %458 = arith.divf %456, %457 : vector<2x32xf32>
    %459 = vector.extract_strided_slice %249 {offsets = [14, 0], sizes = [2, 32], strides = [1, 1]} : vector<16x32xf32> to vector<2x32xf32>
    %cst_140 = arith.constant dense<0.000000e+00> : vector<2x32xf32>
    %460 = tpu.matmul %450, %256, %cst_140 {dimension_numbers = #tpu.dot_dimension_numbers<[1], [0], [0], [1], [0, 0, 1, 1], [], []>} : vector<2x32xf32>, vector<32x32xf32>, vector<2x32xf32> -> vector<2x32xf32>
    %461 = arith.addf %459, %460 : vector<2x32xf32>
    %462 = arith.negf %461 : vector<2x32xf32>
    %463 = math.exp %462 : vector<2x32xf32>
    %cst_141 = arith.constant 1.000000e+00 : f32
    %464 = vector.broadcast %cst_141 : f32 to vector<2x32xf32>
    %465 = arith.addf %464, %463 : vector<2x32xf32>
    %466 = arith.divf %464, %465 : vector<2x32xf32>
    %467 = vector.extract_strided_slice %254 {offsets = [14, 0], sizes = [2, 32], strides = [1, 1]} : vector<16x32xf32> to vector<2x32xf32>
    %cst_142 = arith.constant dense<0.000000e+00> : vector<2x32xf32>
    %468 = tpu.matmul %450, %257, %cst_142 {dimension_numbers = #tpu.dot_dimension_numbers<[1], [0], [0], [1], [0, 0, 1, 1], [], []>} : vector<2x32xf32>, vector<32x32xf32>, vector<2x32xf32> -> vector<2x32xf32>
    %469 = arith.addf %468, %260 : vector<2x32xf32>
    %470 = arith.mulf %458, %469 : vector<2x32xf32>
    %471 = arith.addf %467, %470 : vector<2x32xf32>
    %472 = math.tanh %471 : vector<2x32xf32>
    %cst_143 = arith.constant 1.000000e+00 : f32
    %473 = vector.broadcast %cst_143 : f32 to vector<2x32xf32>
    %474 = arith.subf %473, %466 : vector<2x32xf32>
    %475 = arith.mulf %474, %472 : vector<2x32xf32>
    %476 = arith.mulf %466, %450 : vector<2x32xf32>
    %477 = arith.addf %475, %476 : vector<2x32xf32>
    %478 = tpu.concatenate %288, %315, %342, %369, %396, %423, %450, %477 in 0 : vector<2x32xf32>, vector<2x32xf32>, vector<2x32xf32>, vector<2x32xf32>, vector<2x32xf32>, vector<2x32xf32>, vector<2x32xf32>, vector<2x32xf32> -> vector<16x32xf32>
    %c0_144 = arith.constant 0 : index
    %c0_145 = arith.constant 0 : index
    %479 = vector.load %arg22[%c0_144, %c0_145] : memref<1x128xf32, #tpu.memory_space<vmem>>, vector<1x128xf32>
    %480 = vector.shape_cast %479 : vector<1x128xf32> to vector<1x128xf32>
    %481 = vector.broadcast %480 : vector<1x128xf32> to vector<2x128xf32>
    %482 = vector.extract_strided_slice %478 {offsets = [0, 0], sizes = [1, 32], strides = [1, 1]} : vector<16x32xf32> to vector<1x32xf32>
    %483 = vector.extract_strided_slice %478 {offsets = [8, 0], sizes = [1, 32], strides = [1, 1]} : vector<16x32xf32> to vector<1x32xf32>
    %484 = tpu.concatenate %482, %483 in 0 : vector<1x32xf32>, vector<1x32xf32> -> vector<2x32xf32>
    %c0_146 = arith.constant 0 : index
    %c0_147 = arith.constant 0 : index
    %c0_148 = arith.constant 0 : index
    %485 = vector.load %arg21[%c0_146, %c0_147, %c0_148] : memref<8x32x128xf32, #tpu.memory_space<vmem>>, vector<1x32x128xf32>
    %486 = vector.shape_cast %485 : vector<1x32x128xf32> to vector<32x128xf32>
    %cst_149 = arith.constant dense<0.000000e+00> : vector<2x128xf32>
    %487 = tpu.matmul %484, %486, %cst_149 {dimension_numbers = #tpu.dot_dimension_numbers<[1], [0], [0], [1], [0, 0, 1, 1], [], []>} : vector<2x32xf32>, vector<32x128xf32>, vector<2x128xf32> -> vector<2x128xf32>
    %488 = arith.addf %481, %487 : vector<2x128xf32>
    %489 = vector.extract_strided_slice %478 {offsets = [1, 0], sizes = [1, 32], strides = [1, 1]} : vector<16x32xf32> to vector<1x32xf32>
    %490 = vector.extract_strided_slice %478 {offsets = [9, 0], sizes = [1, 32], strides = [1, 1]} : vector<16x32xf32> to vector<1x32xf32>
    %491 = tpu.concatenate %489, %490 in 0 : vector<1x32xf32>, vector<1x32xf32> -> vector<2x32xf32>
    %c1 = arith.constant 1 : index
    %c0_150 = arith.constant 0 : index
    %c0_151 = arith.constant 0 : index
    %492 = vector.load %arg21[%c1, %c0_150, %c0_151] : memref<8x32x128xf32, #tpu.memory_space<vmem>>, vector<1x32x128xf32>
    %493 = vector.shape_cast %492 : vector<1x32x128xf32> to vector<32x128xf32>
    %cst_152 = arith.constant dense<0.000000e+00> : vector<2x128xf32>
    %494 = tpu.matmul %491, %493, %cst_152 {dimension_numbers = #tpu.dot_dimension_numbers<[1], [0], [0], [1], [0, 0, 1, 1], [], []>} : vector<2x32xf32>, vector<32x128xf32>, vector<2x128xf32> -> vector<2x128xf32>
    %495 = arith.addf %488, %494 : vector<2x128xf32>
    %496 = vector.extract_strided_slice %478 {offsets = [2, 0], sizes = [1, 32], strides = [1, 1]} : vector<16x32xf32> to vector<1x32xf32>
    %497 = vector.extract_strided_slice %478 {offsets = [10, 0], sizes = [1, 32], strides = [1, 1]} : vector<16x32xf32> to vector<1x32xf32>
    %498 = tpu.concatenate %496, %497 in 0 : vector<1x32xf32>, vector<1x32xf32> -> vector<2x32xf32>
    %c2 = arith.constant 2 : index
    %c0_153 = arith.constant 0 : index
    %c0_154 = arith.constant 0 : index
    %499 = vector.load %arg21[%c2, %c0_153, %c0_154] : memref<8x32x128xf32, #tpu.memory_space<vmem>>, vector<1x32x128xf32>
    %500 = vector.shape_cast %499 : vector<1x32x128xf32> to vector<32x128xf32>
    %cst_155 = arith.constant dense<0.000000e+00> : vector<2x128xf32>
    %501 = tpu.matmul %498, %500, %cst_155 {dimension_numbers = #tpu.dot_dimension_numbers<[1], [0], [0], [1], [0, 0, 1, 1], [], []>} : vector<2x32xf32>, vector<32x128xf32>, vector<2x128xf32> -> vector<2x128xf32>
    %502 = arith.addf %495, %501 : vector<2x128xf32>
    %503 = vector.extract_strided_slice %478 {offsets = [3, 0], sizes = [1, 32], strides = [1, 1]} : vector<16x32xf32> to vector<1x32xf32>
    %504 = vector.extract_strided_slice %478 {offsets = [11, 0], sizes = [1, 32], strides = [1, 1]} : vector<16x32xf32> to vector<1x32xf32>
    %505 = tpu.concatenate %503, %504 in 0 : vector<1x32xf32>, vector<1x32xf32> -> vector<2x32xf32>
    %c3 = arith.constant 3 : index
    %c0_156 = arith.constant 0 : index
    %c0_157 = arith.constant 0 : index
    %506 = vector.load %arg21[%c3, %c0_156, %c0_157] : memref<8x32x128xf32, #tpu.memory_space<vmem>>, vector<1x32x128xf32>
    %507 = vector.shape_cast %506 : vector<1x32x128xf32> to vector<32x128xf32>
    %cst_158 = arith.constant dense<0.000000e+00> : vector<2x128xf32>
    %508 = tpu.matmul %505, %507, %cst_158 {dimension_numbers = #tpu.dot_dimension_numbers<[1], [0], [0], [1], [0, 0, 1, 1], [], []>} : vector<2x32xf32>, vector<32x128xf32>, vector<2x128xf32> -> vector<2x128xf32>
    %509 = arith.addf %502, %508 : vector<2x128xf32>
    %510 = vector.extract_strided_slice %478 {offsets = [4, 0], sizes = [1, 32], strides = [1, 1]} : vector<16x32xf32> to vector<1x32xf32>
    %511 = vector.extract_strided_slice %478 {offsets = [12, 0], sizes = [1, 32], strides = [1, 1]} : vector<16x32xf32> to vector<1x32xf32>
    %512 = tpu.concatenate %510, %511 in 0 : vector<1x32xf32>, vector<1x32xf32> -> vector<2x32xf32>
    %c4 = arith.constant 4 : index
    %c0_159 = arith.constant 0 : index
    %c0_160 = arith.constant 0 : index
    %513 = vector.load %arg21[%c4, %c0_159, %c0_160] : memref<8x32x128xf32, #tpu.memory_space<vmem>>, vector<1x32x128xf32>
    %514 = vector.shape_cast %513 : vector<1x32x128xf32> to vector<32x128xf32>
    %cst_161 = arith.constant dense<0.000000e+00> : vector<2x128xf32>
    %515 = tpu.matmul %512, %514, %cst_161 {dimension_numbers = #tpu.dot_dimension_numbers<[1], [0], [0], [1], [0, 0, 1, 1], [], []>} : vector<2x32xf32>, vector<32x128xf32>, vector<2x128xf32> -> vector<2x128xf32>
    %516 = arith.addf %509, %515 : vector<2x128xf32>
    %517 = vector.extract_strided_slice %478 {offsets = [5, 0], sizes = [1, 32], strides = [1, 1]} : vector<16x32xf32> to vector<1x32xf32>
    %518 = vector.extract_strided_slice %478 {offsets = [13, 0], sizes = [1, 32], strides = [1, 1]} : vector<16x32xf32> to vector<1x32xf32>
    %519 = tpu.concatenate %517, %518 in 0 : vector<1x32xf32>, vector<1x32xf32> -> vector<2x32xf32>
    %c5 = arith.constant 5 : index
    %c0_162 = arith.constant 0 : index
    %c0_163 = arith.constant 0 : index
    %520 = vector.load %arg21[%c5, %c0_162, %c0_163] : memref<8x32x128xf32, #tpu.memory_space<vmem>>, vector<1x32x128xf32>
    %521 = vector.shape_cast %520 : vector<1x32x128xf32> to vector<32x128xf32>
    %cst_164 = arith.constant dense<0.000000e+00> : vector<2x128xf32>
    %522 = tpu.matmul %519, %521, %cst_164 {dimension_numbers = #tpu.dot_dimension_numbers<[1], [0], [0], [1], [0, 0, 1, 1], [], []>} : vector<2x32xf32>, vector<32x128xf32>, vector<2x128xf32> -> vector<2x128xf32>
    %523 = arith.addf %516, %522 : vector<2x128xf32>
    %524 = vector.extract_strided_slice %478 {offsets = [6, 0], sizes = [1, 32], strides = [1, 1]} : vector<16x32xf32> to vector<1x32xf32>
    %525 = vector.extract_strided_slice %478 {offsets = [14, 0], sizes = [1, 32], strides = [1, 1]} : vector<16x32xf32> to vector<1x32xf32>
    %526 = tpu.concatenate %524, %525 in 0 : vector<1x32xf32>, vector<1x32xf32> -> vector<2x32xf32>
    %c6 = arith.constant 6 : index
    %c0_165 = arith.constant 0 : index
    %c0_166 = arith.constant 0 : index
    %527 = vector.load %arg21[%c6, %c0_165, %c0_166] : memref<8x32x128xf32, #tpu.memory_space<vmem>>, vector<1x32x128xf32>
    %528 = vector.shape_cast %527 : vector<1x32x128xf32> to vector<32x128xf32>
    %cst_167 = arith.constant dense<0.000000e+00> : vector<2x128xf32>
    %529 = tpu.matmul %526, %528, %cst_167 {dimension_numbers = #tpu.dot_dimension_numbers<[1], [0], [0], [1], [0, 0, 1, 1], [], []>} : vector<2x32xf32>, vector<32x128xf32>, vector<2x128xf32> -> vector<2x128xf32>
    %530 = arith.addf %523, %529 : vector<2x128xf32>
    %531 = vector.extract_strided_slice %478 {offsets = [7, 0], sizes = [1, 32], strides = [1, 1]} : vector<16x32xf32> to vector<1x32xf32>
    %532 = vector.extract_strided_slice %478 {offsets = [15, 0], sizes = [1, 32], strides = [1, 1]} : vector<16x32xf32> to vector<1x32xf32>
    %533 = tpu.concatenate %531, %532 in 0 : vector<1x32xf32>, vector<1x32xf32> -> vector<2x32xf32>
    %c7 = arith.constant 7 : index
    %c0_168 = arith.constant 0 : index
    %c0_169 = arith.constant 0 : index
    %534 = vector.load %arg21[%c7, %c0_168, %c0_169] : memref<8x32x128xf32, #tpu.memory_space<vmem>>, vector<1x32x128xf32>
    %535 = vector.shape_cast %534 : vector<1x32x128xf32> to vector<32x128xf32>
    %cst_170 = arith.constant dense<0.000000e+00> : vector<2x128xf32>
    %536 = tpu.matmul %533, %535, %cst_170 {dimension_numbers = #tpu.dot_dimension_numbers<[1], [0], [0], [1], [0, 0, 1, 1], [], []>} : vector<2x32xf32>, vector<32x128xf32>, vector<2x128xf32> -> vector<2x128xf32>
    %537 = arith.addf %530, %536 : vector<2x128xf32>
    %538 = vector.extract_strided_slice %537 {offsets = [0, 0], sizes = [1, 32], strides = [1, 1]} : vector<2x128xf32> to vector<1x32xf32>
    %539 = vector.extract_strided_slice %537 {offsets = [0, 32], sizes = [1, 32], strides = [1, 1]} : vector<2x128xf32> to vector<1x32xf32>
    %540 = vector.extract_strided_slice %537 {offsets = [0, 64], sizes = [1, 32], strides = [1, 1]} : vector<2x128xf32> to vector<1x32xf32>
    %541 = vector.extract_strided_slice %537 {offsets = [0, 96], sizes = [1, 32], strides = [1, 1]} : vector<2x128xf32> to vector<1x32xf32>
    %542 = vector.extract_strided_slice %537 {offsets = [1, 0], sizes = [1, 32], strides = [1, 1]} : vector<2x128xf32> to vector<1x32xf32>
    %543 = vector.extract_strided_slice %537 {offsets = [1, 32], sizes = [1, 32], strides = [1, 1]} : vector<2x128xf32> to vector<1x32xf32>
    %544 = vector.extract_strided_slice %537 {offsets = [1, 64], sizes = [1, 32], strides = [1, 1]} : vector<2x128xf32> to vector<1x32xf32>
    %545 = vector.extract_strided_slice %537 {offsets = [1, 96], sizes = [1, 32], strides = [1, 1]} : vector<2x128xf32> to vector<1x32xf32>
    %546 = tpu.concatenate %538, %539, %540, %541, %542, %543, %544, %545 in 0 : vector<1x32xf32>, vector<1x32xf32>, vector<1x32xf32>, vector<1x32xf32>, vector<1x32xf32>, vector<1x32xf32>, vector<1x32xf32>, vector<1x32xf32> -> vector<8x32xf32>
    %c0_171 = arith.constant 0 : index
    %c0_172 = arith.constant 0 : index
    %547 = vector.load %arg23[%c0_171, %c0_172] : memref<32x2xf32, #tpu.memory_space<vmem>>, vector<32x2xf32>
    %cst_173 = arith.constant dense<0.000000e+00> : vector<8x2xf32>
    %548 = tpu.matmul %546, %547, %cst_173 {dimension_numbers = #tpu.dot_dimension_numbers<[1], [0], [0], [1], [0, 0, 1, 1], [], []>} : vector<8x32xf32>, vector<32x2xf32>, vector<8x2xf32> -> vector<8x2xf32>
    %c0_174 = arith.constant 0 : index
    %c0_175 = arith.constant 0 : index
    %549 = vector.load %arg24[%c0_174, %c0_175] : memref<1x2xf32, #tpu.memory_space<vmem>>, vector<1x2xf32>
    %550 = vector.broadcast %549 : vector<1x2xf32> to vector<8x2xf32>
    %551 = arith.addf %548, %550 : vector<8x2xf32>
    %c0_176 = arith.constant 0 : index
    %c0_177 = arith.constant 0 : index
    %552 = vector.load %arg25[%c0_176, %c0_177] : memref<8x2xf32, #tpu.memory_space<vmem>>, vector<8x2xf32>
    tpu.vector_store %arg25[%c0_176, %c0_177], %551 {strides = array<i32>} : memref<8x2xf32, #tpu.memory_space<vmem>>, vector<8x2xf32>,
    return
  }
}

</mosaic_0001>

<llo_original>
// kernel: tpu_custom_call.1
$region0: #{tpu_custom_call.1}
  #allocation0 [shape = 'u32[]', space=smem, size = 0x4, offset = 0x4, fixed_abs, tag = 'smem constant byte address 0x4 - core index']
  #allocation1 [shape = 'u32[144,128]{1,0:T(1,128)}', space=vmem, size = 0x12000, scoped, tag = 'internal scratch']
  %s0 = inlined_call_operand.vmem [shape: f32[16,4], index: 0, kind: input, shape index: {}]
  %s1 = inlined_call_operand.hbm [shape: f32[4,32], index: 1, kind: input, shape index: {}]
  %s2 = inlined_call_operand.hbm [shape: f32[4,32], index: 2, kind: input, shape index: {}]
  %s3 = inlined_call_operand.hbm [shape: f32[4,32], index: 3, kind: input, shape index: {}]
  %s4 = inlined_call_operand.vmem [shape: f32[32,32], index: 4, kind: input, shape index: {}]
  %s5 = inlined_call_operand.hbm [shape: f32[32,32], index: 5, kind: input, shape index: {}]
  %s6 = inlined_call_operand.vmem [shape: f32[32,32], index: 6, kind: input, shape index: {}]
  %s7 = inlined_call_operand.hbm [shape: f32[1,32], index: 7, kind: input, shape index: {}]
  %s8 = inlined_call_operand.vmem [shape: f32[1,32], index: 8, kind: input, shape index: {}]
  %s9 = inlined_call_operand.vmem [shape: f32[1,32], index: 9, kind: input, shape index: {}]
  %s10 = inlined_call_operand.vmem [shape: f32[1,32], index: 10, kind: input, shape index: {}]
  %s11 = inlined_call_operand.hbm [shape: f32[32,32], index: 11, kind: input, shape index: {}]
  %s12 = inlined_call_operand.hbm [shape: f32[32,32], index: 12, kind: input, shape index: {}]
  %s13 = inlined_call_operand.hbm [shape: f32[32,32], index: 13, kind: input, shape index: {}]
  %s14 = inlined_call_operand.hbm [shape: f32[32,32], index: 14, kind: input, shape index: {}]
  %s15 = inlined_call_operand.hbm [shape: f32[32,32], index: 15, kind: input, shape index: {}]
  %s16 = inlined_call_operand.hbm [shape: f32[32,32], index: 16, kind: input, shape index: {}]
  %s17 = inlined_call_operand.vmem [shape: f32[1,32], index: 17, kind: input, shape index: {}]
  %s18 = inlined_call_operand.vmem [shape: f32[1,32], index: 18, kind: input, shape index: {}]
  %s19 = inlined_call_operand.vmem [shape: f32[1,32], index: 19, kind: input, shape index: {}]
  %s20 = inlined_call_operand.vmem [shape: f32[1,32], index: 20, kind: input, shape index: {}]
  %s21 = inlined_call_operand.hbm [shape: f32[8,32,128], index: 21, kind: input, shape index: {}]
  %s22 = inlined_call_operand.vmem [shape: f32[1,128], index: 22, kind: input, shape index: {}]
  %s23 = inlined_call_operand.vmem [shape: f32[32,2], index: 23, kind: input, shape index: {}]
  %s24 = inlined_call_operand.vmem [shape: f32[1,2], index: 24, kind: input, shape index: {}]
  %s25 = inlined_call_operand.vmem [shape: f32[8,2], index: 25, kind: output, shape index: {}]
  %s26 = sld [smem:[#allocation0]]
  $region158: #{tpu_custom_call.1} parent=0
    _
  %s28 = ssub.s32 1, %s26
  %s29 = scalar_select 0, %s28, %s26
  $region1: #{tpu_custom_call.1} parent=0
    #allocation2 [shape = 'u8[2048]{0}', space=vmem, size = 0x800, scoped, tag = 'input window, operand 1, single buffered']
    #allocation3 [shape = 's32[1]{0}', space=sflag, size = 0x4, scoped, tag = 'scoped memory for tpu_custom_call.1']
    #allocation4 [shape = 'u8[2048]{0}', space=vmem, size = 0x800, scoped, tag = 'input window, operand 2, single buffered']
    #allocation5 [shape = 's32[1]{0}', space=sflag, size = 0x4, scoped, tag = 'scoped memory for tpu_custom_call.1']
    #allocation6 [shape = 'u8[2048]{0}', space=vmem, size = 0x800, scoped, tag = 'input window, operand 3, single buffered']
    #allocation7 [shape = 'u8[16384]{0}', space=vmem, size = 0x4000, scoped, tag = 'input window, operand 5, single buffered']
    #allocation8 [shape = 's32[1]{0}', space=sflag, size = 0x4, scoped, tag = 'scoped memory for tpu_custom_call.1']
    #allocation9 [shape = 'u8[512]{0}', space=vmem, size = 0x400, scoped, tag = 'input window, operand 7, single buffered']
    #allocation10 [shape = 'u8[16384]{0}', space=vmem, size = 0x4000, scoped, tag = 'input window, operand 11, single buffered']
    #allocation11 [shape = 's32[1]{0}', space=sflag, size = 0x4, scoped, tag = 'scoped memory for tpu_custom_call.1']
    #allocation12 [shape = 'u8[16384]{0}', space=vmem, size = 0x4000, scoped, tag = 'input window, operand 12, single buffered']
    #allocation13 [shape = 'u8[16384]{0}', space=vmem, size = 0x4000, scoped, tag = 'input window, operand 13, single buffered']
    #allocation14 [shape = 's32[1]{0}', space=sflag, size = 0x4, scoped, tag = 'scoped memory for tpu_custom_call.1']
    #allocation15 [shape = 'u8[16384]{0}', space=vmem, size = 0x4000, scoped, tag = 'input window, operand 14, single buffered']
    #allocation16 [shape = 'u8[16384]{0}', space=vmem, size = 0x4000, scoped, tag = 'input window, operand 15, single buffered']
    #allocation17 [shape = 's32[1]{0}', space=sflag, size = 0x4, scoped, tag = 'scoped memory for tpu_custom_call.1']
    #allocation18 [shape = 'u8[16384]{0}', space=vmem, size = 0x4000, scoped, tag = 'input window, operand 16, single buffered']
    #allocation19 [shape = 'u8[131072]{0}', space=vmem, size = 0x20000, scoped, tag = 'input window, operand 21, single buffered']
    #allocation20 [shape = 's32[1]{0}', space=sflag, size = 0x4, scoped, tag = 'scoped memory for tpu_custom_call.1']
    %30 = vsyncpa [#allocation3], 0
    %31 = vsyncpa [#allocation5], 0
    %32 = vsyncpa [#allocation8], 0
    %33 = vsyncpa [#allocation11], 0
    %34 = vsyncpa [#allocation14], 0
    %35 = vsyncpa [#allocation17], 0
    %36 = vsyncpa [#allocation20], 0
    // Predicated region
    $region2: #{tpu_custom_call.1} parent=1 // pred_check
      _
    $region3: #{tpu_custom_call.1} parent=1 // pred_check_branch
      %38 = sbr.rel (0) target = $region5
    $region4: #{tpu_custom_call.1} parent=1 // pred_region
      _
    $region5: #{tpu_custom_call.1} parent=1 // pred_fallthru
      _
    // Predicated region
    $region6: #{tpu_custom_call.1} parent=1 // pred_check
      _
    $region7: #{tpu_custom_call.1} parent=1 // pred_check_branch
      %40 = sbr.rel (0) target = $region9
    $region8: #{tpu_custom_call.1} parent=1 // pred_region
      %s42 = ssub.s32 64, 64
      %43 = vsyncadd [#allocation3], %s42
      %s45 = sshll.u32 [#allocation2], 4
      %s46 = int_to_ptr.vmem [resolvable:$true] %s45
      %48 = dma.hbm_to_vmem [thread:$0]  %s1, 64, %s46, [#allocation3]
    $region9: #{tpu_custom_call.1} parent=1 // pred_fallthru
      _
    // Predicated region
    $region10: #{tpu_custom_call.1} parent=1 // pred_check
      _
    $region11: #{tpu_custom_call.1} parent=1 // pred_check_branch
      %50 = sbr.rel (0) target = $region13
    $region12: #{tpu_custom_call.1} parent=1 // pred_region
      %s52 = ssub.s32 64, 64
      %53 = vsyncadd [#allocation5], %s52
      %s55 = sshll.u32 [#allocation4], 4
      %s56 = int_to_ptr.vmem [resolvable:$true] %s55
      %58 = dma.hbm_to_vmem [thread:$0]  %s2, 64, %s56, [#allocation5]
    $region13: #{tpu_custom_call.1} parent=1 // pred_fallthru
      _
    // Predicated region
    $region14: #{tpu_custom_call.1} parent=1 // pred_check
      _
    $region15: #{tpu_custom_call.1} parent=1 // pred_check_branch
      %60 = sbr.rel (0) target = $region17
    $region16: #{tpu_custom_call.1} parent=1 // pred_region
      %s62 = ssub.s32 64, 64
      %63 = vsyncadd [#allocation5], %s62
      %s65 = sshll.u32 [#allocation6], 4
      %s66 = int_to_ptr.vmem [resolvable:$true] %s65
      %68 = dma.hbm_to_vmem [thread:$0]  %s3, 64, %s66, [#allocation5]
    $region17: #{tpu_custom_call.1} parent=1 // pred_fallthru
      _
    // Predicated region
    $region18: #{tpu_custom_call.1} parent=1 // pred_check
      _
    $region19: #{tpu_custom_call.1} parent=1 // pred_check_branch
      %70 = sbr.rel (0) target = $region21
    $region20: #{tpu_custom_call.1} parent=1 // pred_region
      _
    $region21: #{tpu_custom_call.1} parent=1 // pred_fallthru
      _
    // Predicated region
    $region22: #{tpu_custom_call.1} parent=1 // pred_check
      _
    $region23: #{tpu_custom_call.1} parent=1 // pred_check_branch
      %72 = sbr.rel (0) target = $region25
    $region24: #{tpu_custom_call.1} parent=1 // pred_region
      %s74 = ssub.s32 512, 512
      %75 = vsyncadd [#allocation8], %s74
      %s76 = sshll.u32 [#allocation7], 4
      %s77 = int_to_ptr.vmem [resolvable:$true] %s76
      %82 = dma.hbm_to_vmem [thread:$0]  %s5, 512, %s77, [#allocation8], 128, 128, 8
    $region25: #{tpu_custom_call.1} parent=1 // pred_fallthru
      _
    // Predicated region
    $region26: #{tpu_custom_call.1} parent=1 // pred_check
      _
    $region27: #{tpu_custom_call.1} parent=1 // pred_check_branch
      %84 = sbr.rel (0) target = $region29
    $region28: #{tpu_custom_call.1} parent=1 // pred_region
      _
    $region29: #{tpu_custom_call.1} parent=1 // pred_fallthru
      _
    // Predicated region
    $region30: #{tpu_custom_call.1} parent=1 // pred_check
      _
    $region31: #{tpu_custom_call.1} parent=1 // pred_check_branch
      %86 = sbr.rel (0) target = $region33
    $region32: #{tpu_custom_call.1} parent=1 // pred_region
      %s88 = ssub.s32 16, 16
      %89 = vsyncadd [#allocation8], %s88
      %s91 = sshll.u32 [#allocation9], 4
      %s92 = int_to_ptr.vmem [resolvable:$true] %s91
      %94 = dma.hbm_to_vmem [thread:$0]  %s7, 16, %s92, [#allocation8]
    $region33: #{tpu_custom_call.1} parent=1 // pred_fallthru
      _
    // Predicated region
    $region34: #{tpu_custom_call.1} parent=1 // pred_check
      _
    $region35: #{tpu_custom_call.1} parent=1 // pred_check_branch
      %96 = sbr.rel (0) target = $region37
    $region36: #{tpu_custom_call.1} parent=1 // pred_region
      _
    $region37: #{tpu_custom_call.1} parent=1 // pred_fallthru
      _
    // Predicated region
    $region38: #{tpu_custom_call.1} parent=1 // pred_check
      _
    $region39: #{tpu_custom_call.1} parent=1 // pred_check_branch
      %98 = sbr.rel (0) target = $region41
    $region40: #{tpu_custom_call.1} parent=1 // pred_region
      _
    $region41: #{tpu_custom_call.1} parent=1 // pred_fallthru
      _
    // Predicated region
    $region42: #{tpu_custom_call.1} parent=1 // pred_check
      _
    $region43: #{tpu_custom_call.1} parent=1 // pred_check_branch
      %100 = sbr.rel (0) target = $region45
    $region44: #{tpu_custom_call.1} parent=1 // pred_region
      _
    $region45: #{tpu_custom_call.1} parent=1 // pred_fallthru
      _
    // Predicated region
    $region46: #{tpu_custom_call.1} parent=1 // pred_check
      _
    $region47: #{tpu_custom_call.1} parent=1 // pred_check_branch
      %102 = sbr.rel (0) target = $region49
    $region48: #{tpu_custom_call.1} parent=1 // pred_region
      %s104 = ssub.s32 512, 512
      %105 = vsyncadd [#allocation11], %s104
      %s106 = sshll.u32 [#allocation10], 4
      %s107 = int_to_ptr.vmem [resolvable:$true] %s106
      %112 = dma.hbm_to_vmem [thread:$0]  %s11, 512, %s107, [#allocation11], 128, 128, 8
    $region49: #{tpu_custom_call.1} parent=1 // pred_fallthru
      _
    // Predicated region
    $region50: #{tpu_custom_call.1} parent=1 // pred_check
      _
    $region51: #{tpu_custom_call.1} parent=1 // pred_check_branch
      %114 = sbr.rel (0) target = $region53
    $region52: #{tpu_custom_call.1} parent=1 // pred_region
      %s116 = ssub.s32 512, 512
      %117 = vsyncadd [#allocation11], %s116
      %s118 = sshll.u32 [#allocation12], 4
      %s119 = int_to_ptr.vmem [resolvable:$true] %s118
      %124 = dma.hbm_to_vmem [thread:$0]  %s12, 512, %s119, [#allocation11], 128, 128, 8
    $region53: #{tpu_custom_call.1} parent=1 // pred_fallthru
      _
    // Predicated region
    $region54: #{tpu_custom_call.1} parent=1 // pred_check
      _
    $region55: #{tpu_custom_call.1} parent=1 // pred_check_branch
      %126 = sbr.rel (0) target = $region57
    $region56: #{tpu_custom_call.1} parent=1 // pred_region
      %s128 = ssub.s32 512, 512
      %129 = vsyncadd [#allocation14], %s128
      %s130 = sshll.u32 [#allocation13], 4
      %s131 = int_to_ptr.vmem [resolvable:$true] %s130
      %136 = dma.hbm_to_vmem [thread:$0]  %s13, 512, %s131, [#allocation14], 128, 128, 8
    $region57: #{tpu_custom_call.1} parent=1 // pred_fallthru
      _
    // Predicated region
    $region58: #{tpu_custom_call.1} parent=1 // pred_check
      _
    $region59: #{tpu_custom_call.1} parent=1 // pred_check_branch
      %138 = sbr.rel (0) target = $region61
    $region60: #{tpu_custom_call.1} parent=1 // pred_region
      %s140 = ssub.s32 512, 512
      %141 = vsyncadd [#allocation14], %s140
      %s142 = sshll.u32 [#allocation15], 4
      %s143 = int_to_ptr.vmem [resolvable:$true] %s142
      %148 = dma.hbm_to_vmem [thread:$0]  %s14, 512, %s143, [#allocation14], 128, 128, 8
    $region61: #{tpu_custom_call.1} parent=1 // pred_fallthru
      _
    // Predicated region
    $region62: #{tpu_custom_call.1} parent=1 // pred_check
      _
    $region63: #{tpu_custom_call.1} parent=1 // pred_check_branch
      %150 = sbr.rel (0) target = $region65
    $region64: #{tpu_custom_call.1} parent=1 // pred_region
      %s152 = ssub.s32 512, 512
      %153 = vsyncadd [#allocation17], %s152
      %s154 = sshll.u32 [#allocation16], 4
      %s155 = int_to_ptr.vmem [resolvable:$true] %s154
      %160 = dma.hbm_to_vmem [thread:$0]  %s15, 512, %s155, [#allocation17], 128, 128, 8
    $region65: #{tpu_custom_call.1} parent=1 // pred_fallthru
      _
    // Predicated region
    $region66: #{tpu_custom_call.1} parent=1 // pred_check
      _
    $region67: #{tpu_custom_call.1} parent=1 // pred_check_branch
      %162 = sbr.rel (0) target = $region69
    $region68: #{tpu_custom_call.1} parent=1 // pred_region
      %s164 = ssub.s32 512, 512
      %165 = vsyncadd [#allocation17], %s164
      %s166 = sshll.u32 [#allocation18], 4
      %s167 = int_to_ptr.vmem [resolvable:$true] %s166
      %172 = dma.hbm_to_vmem [thread:$0]  %s16, 512, %s167, [#allocation17], 128, 128, 8
    $region69: #{tpu_custom_call.1} parent=1 // pred_fallthru
      _
    // Predicated region
    $region70: #{tpu_custom_call.1} parent=1 // pred_check
      _
    $region71: #{tpu_custom_call.1} parent=1 // pred_check_branch
      %174 = sbr.rel (0) target = $region73
    $region72: #{tpu_custom_call.1} parent=1 // pred_region
      _
    $region73: #{tpu_custom_call.1} parent=1 // pred_fallthru
      _
    // Predicated region
    $region74: #{tpu_custom_call.1} parent=1 // pred_check
      _
    $region75: #{tpu_custom_call.1} parent=1 // pred_check_branch
      %176 = sbr.rel (0) target = $region77
    $region76: #{tpu_custom_call.1} parent=1 // pred_region
      _
    $region77: #{tpu_custom_call.1} parent=1 // pred_fallthru
      _
    // Predicated region
    $region78: #{tpu_custom_call.1} parent=1 // pred_check
      _
    $region79: #{tpu_custom_call.1} parent=1 // pred_check_branch
      %178 = sbr.rel (0) target = $region81
    $region80: #{tpu_custom_call.1} parent=1 // pred_region
      _
    $region81: #{tpu_custom_call.1} parent=1 // pred_fallthru
      _
    // Predicated region
    $region82: #{tpu_custom_call.1} parent=1 // pred_check
      _
    $region83: #{tpu_custom_call.1} parent=1 // pred_check_branch
      %180 = sbr.rel (0) target = $region85
    $region84: #{tpu_custom_call.1} parent=1 // pred_region
      _
    $region85: #{tpu_custom_call.1} parent=1 // pred_fallthru
      _
    // Predicated region
    $region86: #{tpu_custom_call.1} parent=1 // pred_check
      _
    $region87: #{tpu_custom_call.1} parent=1 // pred_check_branch
      %182 = sbr.rel (0) target = $region89
    $region88: #{tpu_custom_call.1} parent=1 // pred_region
      %s184 = ssub.s32 4096, 4096
      %185 = vsyncadd [#allocation20], %s184
      %s186 = sshll.u32 [#allocation19], 4
      %s187 = int_to_ptr.vmem [resolvable:$true] %s186
      %192 = dma.hbm_to_vmem [thread:$0]  %s21, 4096, %s187, [#allocation20], 128, 128, 8
    $region89: #{tpu_custom_call.1} parent=1 // pred_fallthru
      _
    // Predicated region
    $region90: #{tpu_custom_call.1} parent=1 // pred_check
      _
    $region91: #{tpu_custom_call.1} parent=1 // pred_check_branch
      %194 = sbr.rel (0) target = $region93
    $region92: #{tpu_custom_call.1} parent=1 // pred_region
      _
    $region93: #{tpu_custom_call.1} parent=1 // pred_fallthru
      _
    // Predicated region
    $region94: #{tpu_custom_call.1} parent=1 // pred_check
      _
    $region95: #{tpu_custom_call.1} parent=1 // pred_check_branch
      %196 = sbr.rel (0) target = $region97
    $region96: #{tpu_custom_call.1} parent=1 // pred_region
      _
    $region97: #{tpu_custom_call.1} parent=1 // pred_fallthru
      _
    // Predicated region
    $region98: #{tpu_custom_call.1} parent=1 // pred_check
      _
    $region99: #{tpu_custom_call.1} parent=1 // pred_check_branch
      %198 = sbr.rel (0) target = $region101
    $region100: #{tpu_custom_call.1} parent=1 // pred_region
      _
    $region101: #{tpu_custom_call.1} parent=1 // pred_fallthru
      _
    // Predicated region
    $region102: #{tpu_custom_call.1} parent=1 // pred_check
      _
    $region103: #{tpu_custom_call.1} parent=1 // pred_check_branch
      %200 = sbr.rel (0) target = $region105
    $region104: #{tpu_custom_call.1} parent=1 // pred_region
      %201 = dma.done [#allocation3], 64
    $region105: #{tpu_custom_call.1} parent=1 // pred_fallthru
      _
    // Predicated region
    $region106: #{tpu_custom_call.1} parent=1 // pred_check
      _
    $region107: #{tpu_custom_call.1} parent=1 // pred_check_branch
      %203 = sbr.rel (0) target = $region109
    $region108: #{tpu_custom_call.1} parent=1 // pred_region
      %204 = dma.done [#allocation5], 64
    $region109: #{tpu_custom_call.1} parent=1 // pred_fallthru
      _
    // Predicated region
    $region110: #{tpu_custom_call.1} parent=1 // pred_check
      _
    $region111: #{tpu_custom_call.1} parent=1 // pred_check_branch
      %206 = sbr.rel (0) target = $region113
    $region112: #{tpu_custom_call.1} parent=1 // pred_region
      %207 = dma.done [#allocation5], 64
    $region113: #{tpu_custom_call.1} parent=1 // pred_fallthru
      _
    // Predicated region
    $region114: #{tpu_custom_call.1} parent=1 // pred_check
      _
    $region115: #{tpu_custom_call.1} parent=1 // pred_check_branch
      %209 = sbr.rel (0) target = $region117
    $region116: #{tpu_custom_call.1} parent=1 // pred_region
      %210 = dma.done [#allocation8], 512
    $region117: #{tpu_custom_call.1} parent=1 // pred_fallthru
      _
    // Predicated region
    $region118: #{tpu_custom_call.1} parent=1 // pred_check
      _
    $region119: #{tpu_custom_call.1} parent=1 // pred_check_branch
      %212 = sbr.rel (0) target = $region121
    $region120: #{tpu_custom_call.1} parent=1 // pred_region
      %213 = dma.done [#allocation8], 16
    $region121: #{tpu_custom_call.1} parent=1 // pred_fallthru
      _
    // Predicated region
    $region122: #{tpu_custom_call.1} parent=1 // pred_check
      _
    $region123: #{tpu_custom_call.1} parent=1 // pred_check_branch
      %215 = sbr.rel (0) target = $region125
    $region124: #{tpu_custom_call.1} parent=1 // pred_region
      %216 = dma.done [#allocation11], 512
    $region125: #{tpu_custom_call.1} parent=1 // pred_fallthru
      _
    // Predicated region
    $region126: #{tpu_custom_call.1} parent=1 // pred_check
      _
    $region127: #{tpu_custom_call.1} parent=1 // pred_check_branch
      %218 = sbr.rel (0) target = $region129
    $region128: #{tpu_custom_call.1} parent=1 // pred_region
      %219 = dma.done [#allocation11], 512
    $region129: #{tpu_custom_call.1} parent=1 // pred_fallthru
      _
    // Predicated region
    $region130: #{tpu_custom_call.1} parent=1 // pred_check
      _
    $region131: #{tpu_custom_call.1} parent=1 // pred_check_branch
      %221 = sbr.rel (0) target = $region133
    $region132: #{tpu_custom_call.1} parent=1 // pred_region
      %222 = dma.done [#allocation14], 512
    $region133: #{tpu_custom_call.1} parent=1 // pred_fallthru
      _
    // Predicated region
    $region134: #{tpu_custom_call.1} parent=1 // pred_check
      _
    $region135: #{tpu_custom_call.1} parent=1 // pred_check_branch
      %224 = sbr.rel (0) target = $region137
    $region136: #{tpu_custom_call.1} parent=1 // pred_region
      %225 = dma.done [#allocation14], 512
    $region137: #{tpu_custom_call.1} parent=1 // pred_fallthru
      _
    // Predicated region
    $region138: #{tpu_custom_call.1} parent=1 // pred_check
      _
    $region139: #{tpu_custom_call.1} parent=1 // pred_check_branch
      %227 = sbr.rel (0) target = $region141
    $region140: #{tpu_custom_call.1} parent=1 // pred_region
      %228 = dma.done [#allocation17], 512
    $region141: #{tpu_custom_call.1} parent=1 // pred_fallthru
      _
    // Predicated region
    $region142: #{tpu_custom_call.1} parent=1 // pred_check
      _
    $region143: #{tpu_custom_call.1} parent=1 // pred_check_branch
      %230 = sbr.rel (0) target = $region145
    $region144: #{tpu_custom_call.1} parent=1 // pred_region
      %231 = dma.done [#allocation17], 512
    $region145: #{tpu_custom_call.1} parent=1 // pred_fallthru
      _
    // Predicated region
    $region146: #{tpu_custom_call.1} parent=1 // pred_check
      _
    $region147: #{tpu_custom_call.1} parent=1 // pred_check_branch
      %233 = sbr.rel (0) target = $region149
    $region148: #{tpu_custom_call.1} parent=1 // pred_region
      %234 = dma.done [#allocation20], 4096
    $region149: #{tpu_custom_call.1} parent=1 // pred_fallthru
      _
    %v235 = vld [vmem:[%s0] sm:$0xff]
    %v236 = vld [vmem:[%s0 + $0x8] sm:$0xff]
    %v237 = vld [vmem:[#allocation2] sm:$0xf]
    %v238 = vld [vmem:[#allocation9] sm:$0x1]
    %v240 = vlaneseq
    %v241 = vshrl.u32 %v240, 7
    %v242 = vsub.s32 0, %v241
    %v243 = vrot.slane %v238, %v242
    %vm245 = vcmask 31744
    %v247 = vsel %vm245, %v235, 0
    %v250 = vsel %vm245, %v236, 0
    %vm252 = vcmask 1043456
    %v254 = vsel %vm252, %v237, 0
    %256 = vmatprep.subr.mxu0 0.0
    %257 = vmatpush1.msra.mxu0 0.0
    %258 = vmatprep.subr.mxu0 0.0
    %259 = vmatpush1.msra.mxu0 0.0
    %260 = vmatprep.subr.mxu0 0.0
    %261 = vmatpush1.msra.mxu0 0.0
    %262 = vmatprep.subr.mxu0 0.0
    %263 = vmatpush1.msra.mxu0 0.0
    %264 = vmatprep.subr.mxu0 0.0
    %265 = vmatpush1.msra.mxu0 0.0
    %266 = vmatprep.subr.mxu0 0.0
    %267 = vmatpush1.msra.mxu0 0.0
    %268 = vmatprep.subr.mxu0 0.0
    %269 = vmatpush1.msra.mxu0 0.0
    %270 = vmatprep.subr.mxu0 0.0
    %271 = vmatpush1.msra.mxu0 0.0
    %272 = vmatprep.subr.mxu0 0.0
    %273 = vmatpush1.msra.mxu0 0.0
    %274 = vmatprep.subr.mxu0 0.0
    %275 = vmatpush1.msra.mxu0 0.0
    %276 = vmatprep.subr.mxu0 0.0
    %277 = vmatpush1.msra.mxu0 0.0
    %278 = vmatprep.subr.mxu0 0.0
    %279 = vmatpush1.msra.mxu0 0.0
    %280 = vmatprep.subr.mxu0 0.0
    %281 = vmatpush1.msra.mxu0 0.0
    %282 = vmatprep.subr.mxu0 0.0
    %283 = vmatpush1.msra.mxu0 0.0
    %284 = vmatprep.subr.mxu0 0.0
    %285 = vmatpush1.msra.mxu0 0.0
    %286 = vmatprep.subr.mxu0 0.0
    %287 = vmatpush1.msra.mxu0 %v254
    %288 = vmatprep.subr.mxu0 0.0
    %289 = vmatpush2.msra.mxu0 0.0
    %290 = vmatprep.subr.mxu0 0.0
    %291 = vmatpush2.msra.mxu0 0.0
    %292 = vmatprep.subr.mxu0 0.0
    %293 = vmatpush2.msra.mxu0 0.0
    %294 = vmatprep.subr.mxu0 0.0
    %295 = vmatpush2.msra.mxu0 0.0
    %296 = vmatprep.subr.mxu0 0.0
    %297 = vmatpush2.msra.mxu0 0.0
    %298 = vmatprep.subr.mxu0 0.0
    %299 = vmatpush2.msra.mxu0 0.0
    %300 = vmatprep.subr.mxu0 0.0
    %301 = vmatpush2.msra.mxu0 0.0
    %302 = vmatprep.subr.mxu0 0.0
    %303 = vmatpush2.msra.mxu0 0.0
    %304 = vmatprep.subr.mxu0 0.0
    %305 = vmatpush2.msra.mxu0 0.0
    %306 = vmatprep.subr.mxu0 0.0
    %307 = vmatpush2.msra.mxu0 0.0
    %308 = vmatprep.subr.mxu0 0.0
    %309 = vmatpush2.msra.mxu0 0.0
    %310 = vmatprep.subr.mxu0 0.0
    %311 = vmatpush2.msra.mxu0 0.0
    %312 = vmatprep.subr.mxu0 0.0
    %313 = vmatpush2.msra.mxu0 0.0
    %314 = vmatprep.subr.mxu0 0.0
    %315 = vmatpush2.msra.mxu0 0.0
    %316 = vmatprep.subr.mxu0 0.0
    %317 = vmatpush2.msra.mxu0 0.0
    %318 = vmatprep.subr.mxu0 0.0
    %319 = vmatpush2.msra.mxu0 0.0
    %320 = vmatprep.mubr.f32.mxu0 0.0
    %321 = vmatmul.mubr.f32.gmra.mxu0 %v247
    %v322 = vpop.f32.mrf.mxu0
    %v323 = vadd.f32 %v243, %v322
    %v324 = vpop.f32.mrf.mxu0
    %325 = vmatprep.mubr.f32.mxu0 0.0
    %326 = vmatmul.mubr.f32.gmra.mxu0 %v250
    %v327 = vpop.f32.mrf.mxu0
    %v328 = vadd.f32 %v243, %v327
    %v329 = vpop.f32.mrf.mxu0
    %330 = vdwg.mxu0
    %v331 = vld [vmem:[#allocation4] sm:$0xf]
    %v332 = vld [vmem:[%s8] sm:$0x1]
    %v334 = vlaneseq
    %v335 = vshrl.u32 %v334, 7
    %v336 = vsub.s32 0, %v335
    %v337 = vrot.slane %v332, %v336
    %v340 = vsel %vm252, %v331, 0
    %342 = vmatprep.subr.mxu0 0.0
    %343 = vmatpush1.msra.mxu0 0.0
    %344 = vmatprep.subr.mxu0 0.0
    %345 = vmatpush1.msra.mxu0 0.0
    %346 = vmatprep.subr.mxu0 0.0
    %347 = vmatpush1.msra.mxu0 0.0
    %348 = vmatprep.subr.mxu0 0.0
    %349 = vmatpush1.msra.mxu0 0.0
    %350 = vmatprep.subr.mxu0 0.0
    %351 = vmatpush1.msra.mxu0 0.0
    %352 = vmatprep.subr.mxu0 0.0
    %353 = vmatpush1.msra.mxu0 0.0
    %354 = vmatprep.subr.mxu0 0.0
    %355 = vmatpush1.msra.mxu0 0.0
    %356 = vmatprep.subr.mxu0 0.0
    %357 = vmatpush1.msra.mxu0 0.0
    %358 = vmatprep.subr.mxu0 0.0
    %359 = vmatpush1.msra.mxu0 0.0
    %360 = vmatprep.subr.mxu0 0.0
    %361 = vmatpush1.msra.mxu0 0.0
    %362 = vmatprep.subr.mxu0 0.0
    %363 = vmatpush1.msra.mxu0 0.0
    %364 = vmatprep.subr.mxu0 0.0
    %365 = vmatpush1.msra.mxu0 0.0
    %366 = vmatprep.subr.mxu0 0.0
    %367 = vmatpush1.msra.mxu0 0.0
    %368 = vmatprep.subr.mxu0 0.0
    %369 = vmatpush1.msra.mxu0 0.0
    %370 = vmatprep.subr.mxu0 0.0
    %371 = vmatpush1.msra.mxu0 0.0
    %372 = vmatprep.subr.mxu0 0.0
    %373 = vmatpush1.msra.mxu0 %v340
    %374 = vmatprep.subr.mxu0 0.0
    %375 = vmatpush2.msra.mxu0 0.0
    %376 = vmatprep.subr.mxu0 0.0
    %377 = vmatpush2.msra.mxu0 0.0
    %378 = vmatprep.subr.mxu0 0.0
    %379 = vmatpush2.msra.mxu0 0.0
    %380 = vmatprep.subr.mxu0 0.0
    %381 = vmatpush2.msra.mxu0 0.0
    %382 = vmatprep.subr.mxu0 0.0
    %383 = vmatpush2.msra.mxu0 0.0
    %384 = vmatprep.subr.mxu0 0.0
    %385 = vmatpush2.msra.mxu0 0.0
    %386 = vmatprep.subr.mxu0 0.0
    %387 = vmatpush2.msra.mxu0 0.0
    %388 = vmatprep.subr.mxu0 0.0
    %389 = vmatpush2.msra.mxu0 0.0
    %390 = vmatprep.subr.mxu0 0.0
    %391 = vmatpush2.msra.mxu0 0.0
    %392 = vmatprep.subr.mxu0 0.0
    %393 = vmatpush2.msra.mxu0 0.0
    %394 = vmatprep.subr.mxu0 0.0
    %395 = vmatpush2.msra.mxu0 0.0
    %396 = vmatprep.subr.mxu0 0.0
    %397 = vmatpush2.msra.mxu0 0.0
    %398 = vmatprep.subr.mxu0 0.0
    %399 = vmatpush2.msra.mxu0 0.0
    %400 = vmatprep.subr.mxu0 0.0
    %401 = vmatpush2.msra.mxu0 0.0
    %402 = vmatprep.subr.mxu0 0.0
    %403 = vmatpush2.msra.mxu0 0.0
    %404 = vmatprep.subr.mxu0 0.0
    %405 = vmatpush2.msra.mxu0 0.0
    %406 = vmatprep.mubr.f32.mxu0 0.0
    %407 = vmatmul.mubr.f32.gmra.mxu0 %v247
    %v408 = vpop.f32.mrf.mxu0
    %v409 = vadd.f32 %v337, %v408
    %v410 = vpop.f32.mrf.mxu0
    %411 = vmatprep.mubr.f32.mxu0 0.0
    %412 = vmatmul.mubr.f32.gmra.mxu0 %v250
    %v413 = vpop.f32.mrf.mxu0
    %v414 = vadd.f32 %v337, %v413
    %v415 = vpop.f32.mrf.mxu0
    %416 = vdwg.mxu0
    %v417 = vld [vmem:[#allocation6] sm:$0xf]
    %v418 = vld [vmem:[%s9] sm:$0x1]
    %v420 = vlaneseq
    %v421 = vshrl.u32 %v420, 7
    %v422 = vsub.s32 0, %v421
    %v423 = vrot.slane %v418, %v422
    %v426 = vsel %vm252, %v417, 0
    %428 = vmatprep.subr.mxu0 0.0
    %429 = vmatpush1.msra.mxu0 0.0
    %430 = vmatprep.subr.mxu0 0.0
    %431 = vmatpush1.msra.mxu0 0.0
    %432 = vmatprep.subr.mxu0 0.0
    %433 = vmatpush1.msra.mxu0 0.0
    %434 = vmatprep.subr.mxu0 0.0
    %435 = vmatpush1.msra.mxu0 0.0
    %436 = vmatprep.subr.mxu0 0.0
    %437 = vmatpush1.msra.mxu0 0.0
    %438 = vmatprep.subr.mxu0 0.0
    %439 = vmatpush1.msra.mxu0 0.0
    %440 = vmatprep.subr.mxu0 0.0
    %441 = vmatpush1.msra.mxu0 0.0
    %442 = vmatprep.subr.mxu0 0.0
    %443 = vmatpush1.msra.mxu0 0.0
    %444 = vmatprep.subr.mxu0 0.0
    %445 = vmatpush1.msra.mxu0 0.0
    %446 = vmatprep.subr.mxu0 0.0
    %447 = vmatpush1.msra.mxu0 0.0
    %448 = vmatprep.subr.mxu0 0.0
    %449 = vmatpush1.msra.mxu0 0.0
    %450 = vmatprep.subr.mxu0 0.0
    %451 = vmatpush1.msra.mxu0 0.0
    %452 = vmatprep.subr.mxu0 0.0
    %453 = vmatpush1.msra.mxu0 0.0
    %454 = vmatprep.subr.mxu0 0.0
    %455 = vmatpush1.msra.mxu0 0.0
    %456 = vmatprep.subr.mxu0 0.0
    %457 = vmatpush1.msra.mxu0 0.0
    %458 = vmatprep.subr.mxu0 0.0
    %459 = vmatpush1.msra.mxu0 %v426
    %460 = vmatprep.subr.mxu0 0.0
    %461 = vmatpush2.msra.mxu0 0.0
    %462 = vmatprep.subr.mxu0 0.0
    %463 = vmatpush2.msra.mxu0 0.0
    %464 = vmatprep.subr.mxu0 0.0
    %465 = vmatpush2.msra.mxu0 0.0
    %466 = vmatprep.subr.mxu0 0.0
    %467 = vmatpush2.msra.mxu0 0.0
    %468 = vmatprep.subr.mxu0 0.0
    %469 = vmatpush2.msra.mxu0 0.0
    %470 = vmatprep.subr.mxu0 0.0
    %471 = vmatpush2.msra.mxu0 0.0
    %472 = vmatprep.subr.mxu0 0.0
    %473 = vmatpush2.msra.mxu0 0.0
    %474 = vmatprep.subr.mxu0 0.0
    %475 = vmatpush2.msra.mxu0 0.0
    %476 = vmatprep.subr.mxu0 0.0
    %477 = vmatpush2.msra.mxu0 0.0
    %478 = vmatprep.subr.mxu0 0.0
    %479 = vmatpush2.msra.mxu0 0.0
    %480 = vmatprep.subr.mxu0 0.0
    %481 = vmatpush2.msra.mxu0 0.0
    %482 = vmatprep.subr.mxu0 0.0
    %483 = vmatpush2.msra.mxu0 0.0
    %484 = vmatprep.subr.mxu0 0.0
    %485 = vmatpush2.msra.mxu0 0.0
    %486 = vmatprep.subr.mxu0 0.0
    %487 = vmatpush2.msra.mxu0 0.0
    %488 = vmatprep.subr.mxu0 0.0
    %489 = vmatpush2.msra.mxu0 0.0
    %490 = vmatprep.subr.mxu0 0.0
    %491 = vmatpush2.msra.mxu0 0.0
    %492 = vmatprep.mubr.f32.mxu0 0.0
    %493 = vmatmul.mubr.f32.gmra.mxu0 %v247
    %v494 = vpop.f32.mrf.mxu0
    %v495 = vadd.f32 %v423, %v494
    %v496 = vpop.f32.mrf.mxu0
    %497 = vmatprep.mubr.f32.mxu0 0.0
    %498 = vmatmul.mubr.f32.gmra.mxu0 %v250
    %v499 = vpop.f32.mrf.mxu0
    %v500 = vadd.f32 %v423, %v499
    %v501 = vpop.f32.mrf.mxu0
    %502 = vdwg.mxu0
    %v503 = vld [vmem:[%s4] sm:$0xff]
    %v504 = vld [vmem:[%s4 + $0x8] sm:$0xff]
    %v505 = vld [vmem:[%s4 + $0x10] sm:$0xff]
    %v506 = vld [vmem:[%s4 + $0x18] sm:$0xff]
    %v507 = vld [vmem:[#allocation7] sm:$0xff]
    %v508 = vld [vmem:[#allocation7 + $0x8] sm:$0xff]
    %v509 = vld [vmem:[#allocation7 + $0x10] sm:$0xff]
    %v510 = vld [vmem:[#allocation7 + $0x18] sm:$0xff]
    %v511 = vld [vmem:[%s6] sm:$0xff]
    %v512 = vld [vmem:[%s6 + $0x8] sm:$0xff]
    %v513 = vld [vmem:[%s6 + $0x10] sm:$0xff]
    %v514 = vld [vmem:[%s6 + $0x18] sm:$0xff]
    %v515 = vld [vmem:[%s10] sm:$0x1]
    %v517 = vlaneseq
    %v518 = vshrl.u32 %v517, 7
    %v519 = vsub.s32 0, %v518
    %v520 = vrot.slane %v515, %v519
    %vm522 = vcmask 261120
    %v524 = vsel %vm522, 0.0, 0
    %526 = vmatprep.subr.mxu0 0.0
    %527 = vmatpush1.msra.mxu0 0.0
    %528 = vmatprep.subr.mxu0 0.0
    %529 = vmatpush1.msra.mxu0 0.0
    %530 = vmatprep.subr.mxu0 0.0
    %531 = vmatpush1.msra.mxu0 0.0
    %532 = vmatprep.subr.mxu0 0.0
    %533 = vmatpush1.msra.mxu0 0.0
    %534 = vmatprep.subr.mxu0 0.0
    %535 = vmatpush1.msra.mxu0 0.0
    %536 = vmatprep.subr.mxu0 0.0
    %537 = vmatpush1.msra.mxu0 0.0
    %538 = vmatprep.subr.mxu0 0.0
    %539 = vmatpush1.msra.mxu0 0.0
    %540 = vmatprep.subr.mxu0 0.0
    %541 = vmatpush1.msra.mxu0 0.0
    %542 = vmatprep.subr.mxu0 0.0
    %543 = vmatpush1.msra.mxu0 0.0
    %544 = vmatprep.subr.mxu0 0.0
    %545 = vmatpush1.msra.mxu0 0.0
    %546 = vmatprep.subr.mxu0 0.0
    %547 = vmatpush1.msra.mxu0 0.0
    %548 = vmatprep.subr.mxu0 0.0
    %549 = vmatpush1.msra.mxu0 0.0
    %550 = vmatprep.subr.mxu0 0.0
    %551 = vmatpush1.msra.mxu0 %v506
    %552 = vmatprep.subr.mxu0 0.0
    %553 = vmatpush1.msra.mxu0 %v505
    %554 = vmatprep.subr.mxu0 0.0
    %555 = vmatpush1.msra.mxu0 %v504
    %556 = vmatprep.subr.mxu0 0.0
    %557 = vmatpush1.msra.mxu0 %v503
    %558 = vmatprep.subr.mxu0 0.0
    %559 = vmatpush2.msra.mxu0 0.0
    %560 = vmatprep.subr.mxu0 0.0
    %561 = vmatpush2.msra.mxu0 0.0
    %562 = vmatprep.subr.mxu0 0.0
    %563 = vmatpush2.msra.mxu0 0.0
    %564 = vmatprep.subr.mxu0 0.0
    %565 = vmatpush2.msra.mxu0 0.0
    %566 = vmatprep.subr.mxu0 0.0
    %567 = vmatpush2.msra.mxu0 0.0
    %568 = vmatprep.subr.mxu0 0.0
    %569 = vmatpush2.msra.mxu0 0.0
    %570 = vmatprep.subr.mxu0 0.0
    %571 = vmatpush2.msra.mxu0 0.0
    %572 = vmatprep.subr.mxu0 0.0
    %573 = vmatpush2.msra.mxu0 0.0
    %574 = vmatprep.subr.mxu0 0.0
    %575 = vmatpush2.msra.mxu0 0.0
    %576 = vmatprep.subr.mxu0 0.0
    %577 = vmatpush2.msra.mxu0 0.0
    %578 = vmatprep.subr.mxu0 0.0
    %579 = vmatpush2.msra.mxu0 0.0
    %580 = vmatprep.subr.mxu0 0.0
    %581 = vmatpush2.msra.mxu0 0.0
    %582 = vmatprep.subr.mxu0 0.0
    %583 = vmatpush2.msra.mxu0 0.0
    %584 = vmatprep.subr.mxu0 0.0
    %585 = vmatpush2.msra.mxu0 0.0
    %586 = vmatprep.subr.mxu0 0.0
    %587 = vmatpush2.msra.mxu0 0.0
    %588 = vmatprep.subr.mxu0 0.0
    %589 = vmatpush2.msra.mxu0 0.0
    %590 = vmatprep.mubr.f32.mxu0 0.0
    %591 = vmatmul.mubr.f32.gmra.mxu0 %v524
    %v592 = vpop.f32.mrf.mxu0
    %v593 = vadd.f32 0.0, %v592
    %v594 = vpop.f32.mrf.mxu0
    %595 = vdwg.mxu0
    %v596 = vadd.f32 %v323, %v593
    %v597 = vxor.u32 %v596, 2147483648
    %v598 = vmul.f32 %v597, 1.442695
    %v599 = vpow.pop %v598
    %v600 = vadd.f32 %v599, 1.0
    %v601 = vrcp.pop %v600
    %v602 = vmul.f32 1.0, %v601
    %603 = vmatprep.subr.mxu0 0.0
    %604 = vmatpush1.msra.mxu0 0.0
    %605 = vmatprep.subr.mxu0 0.0
    %606 = vmatpush1.msra.mxu0 0.0
    %607 = vmatprep.subr.mxu0 0.0
    %608 = vmatpush1.msra.mxu0 0.0
    %609 = vmatprep.subr.mxu0 0.0
    %610 = vmatpush1.msra.mxu0 0.0
    %611 = vmatprep.subr.mxu0 0.0
    %612 = vmatpush1.msra.mxu0 0.0
    %613 = vmatprep.subr.mxu0 0.0
    %614 = vmatpush1.msra.mxu0 0.0
    %615 = vmatprep.subr.mxu0 0.0
    %616 = vmatpush1.msra.mxu0 0.0
    %617 = vmatprep.subr.mxu0 0.0
    %618 = vmatpush1.msra.mxu0 0.0
    %619 = vmatprep.subr.mxu0 0.0
    %620 = vmatpush1.msra.mxu0 0.0
    %621 = vmatprep.subr.mxu0 0.0
    %622 = vmatpush1.msra.mxu0 0.0
    %623 = vmatprep.subr.mxu0 0.0
    %624 = vmatpush1.msra.mxu0 0.0
    %625 = vmatprep.subr.mxu0 0.0
    %626 = vmatpush1.msra.mxu0 0.0
    %627 = vmatprep.subr.mxu0 0.0
    %628 = vmatpush1.msra.mxu0 %v510
    %629 = vmatprep.subr.mxu0 0.0
    %630 = vmatpush1.msra.mxu0 %v509
    %631 = vmatprep.subr.mxu0 0.0
    %632 = vmatpush1.msra.mxu0 %v508
    %633 = vmatprep.subr.mxu0 0.0
    %634 = vmatpush1.msra.mxu0 %v507
    %635 = vmatprep.subr.mxu0 0.0
    %636 = vmatpush2.msra.mxu0 0.0
    %637 = vmatprep.subr.mxu0 0.0
    %638 = vmatpush2.msra.mxu0 0.0
    %639 = vmatprep.subr.mxu0 0.0
    %640 = vmatpush2.msra.mxu0 0.0
    %641 = vmatprep.subr.mxu0 0.0
    %642 = vmatpush2.msra.mxu0 0.0
    %643 = vmatprep.subr.mxu0 0.0
    %644 = vmatpush2.msra.mxu0 0.0
    %645 = vmatprep.subr.mxu0 0.0
    %646 = vmatpush2.msra.mxu0 0.0
    %647 = vmatprep.subr.mxu0 0.0
    %648 = vmatpush2.msra.mxu0 0.0
    %649 = vmatprep.subr.mxu0 0.0
    %650 = vmatpush2.msra.mxu0 0.0
    %651 = vmatprep.subr.mxu0 0.0
    %652 = vmatpush2.msra.mxu0 0.0
    %653 = vmatprep.subr.mxu0 0.0
    %654 = vmatpush2.msra.mxu0 0.0
    %655 = vmatprep.subr.mxu0 0.0
    %656 = vmatpush2.msra.mxu0 0.0
    %657 = vmatprep.subr.mxu0 0.0
    %658 = vmatpush2.msra.mxu0 0.0
    %659 = vmatprep.subr.mxu0 0.0
    %660 = vmatpush2.msra.mxu0 0.0
    %661 = vmatprep.subr.mxu0 0.0
    %662 = vmatpush2.msra.mxu0 0.0
    %663 = vmatprep.subr.mxu0 0.0
    %664 = vmatpush2.msra.mxu0 0.0
    %665 = vmatprep.subr.mxu0 0.0
    %666 = vmatpush2.msra.mxu0 0.0
    %667 = vmatprep.mubr.f32.mxu0 0.0
    %668 = vmatmul.mubr.f32.gmra.mxu0 %v524
    %v669 = vpop.f32.mrf.mxu0
    %v670 = vadd.f32 0.0, %v669
    %v671 = vpop.f32.mrf.mxu0
    %672 = vdwg.mxu0
    %v673 = vadd.f32 %v409, %v670
    %v674 = vxor.u32 %v673, 2147483648
    %v675 = vmul.f32 %v674, 1.442695
    %v676 = vpow.pop %v675
    %v677 = vadd.f32 %v676, 1.0
    %v678 = vrcp.pop %v677
    %v679 = vmul.f32 1.0, %v678
    %680 = vmatprep.subr.mxu0 0.0
    %681 = vmatpush1.msra.mxu0 0.0
    %682 = vmatprep.subr.mxu0 0.0
    %683 = vmatpush1.msra.mxu0 0.0
    %684 = vmatprep.subr.mxu0 0.0
    %685 = vmatpush1.msra.mxu0 0.0
    %686 = vmatprep.subr.mxu0 0.0
    %687 = vmatpush1.msra.mxu0 0.0
    %688 = vmatprep.subr.mxu0 0.0
    %689 = vmatpush1.msra.mxu0 0.0
    %690 = vmatprep.subr.mxu0 0.0
    %691 = vmatpush1.msra.mxu0 0.0
    %692 = vmatprep.subr.mxu0 0.0
    %693 = vmatpush1.msra.mxu0 0.0
    %694 = vmatprep.subr.mxu0 0.0
    %695 = vmatpush1.msra.mxu0 0.0
    %696 = vmatprep.subr.mxu0 0.0
    %697 = vmatpush1.msra.mxu0 0.0
    %698 = vmatprep.subr.mxu0 0.0
    %699 = vmatpush1.msra.mxu0 0.0
    %700 = vmatprep.subr.mxu0 0.0
    %701 = vmatpush1.msra.mxu0 0.0
    %702 = vmatprep.subr.mxu0 0.0
    %703 = vmatpush1.msra.mxu0 0.0
    %704 = vmatprep.subr.mxu0 0.0
    %705 = vmatpush1.msra.mxu0 %v514
    %706 = vmatprep.subr.mxu0 0.0
    %707 = vmatpush1.msra.mxu0 %v513
    %708 = vmatprep.subr.mxu0 0.0
    %709 = vmatpush1.msra.mxu0 %v512
    %710 = vmatprep.subr.mxu0 0.0
    %711 = vmatpush1.msra.mxu0 %v511
    %712 = vmatprep.subr.mxu0 0.0
    %713 = vmatpush2.msra.mxu0 0.0
    %714 = vmatprep.subr.mxu0 0.0
    %715 = vmatpush2.msra.mxu0 0.0
    %716 = vmatprep.subr.mxu0 0.0
    %717 = vmatpush2.msra.mxu0 0.0
    %718 = vmatprep.subr.mxu0 0.0
    %719 = vmatpush2.msra.mxu0 0.0
    %720 = vmatprep.subr.mxu0 0.0
    %721 = vmatpush2.msra.mxu0 0.0
    %722 = vmatprep.subr.mxu0 0.0
    %723 = vmatpush2.msra.mxu0 0.0
    %724 = vmatprep.subr.mxu0 0.0
    %725 = vmatpush2.msra.mxu0 0.0
    %726 = vmatprep.subr.mxu0 0.0
    %727 = vmatpush2.msra.mxu0 0.0
    %728 = vmatprep.subr.mxu0 0.0
    %729 = vmatpush2.msra.mxu0 0.0
    %730 = vmatprep.subr.mxu0 0.0
    %731 = vmatpush2.msra.mxu0 0.0
    %732 = vmatprep.subr.mxu0 0.0
    %733 = vmatpush2.msra.mxu0 0.0
    %734 = vmatprep.subr.mxu0 0.0
    %735 = vmatpush2.msra.mxu0 0.0
    %736 = vmatprep.subr.mxu0 0.0
    %737 = vmatpush2.msra.mxu0 0.0
    %738 = vmatprep.subr.mxu0 0.0
    %739 = vmatpush2.msra.mxu0 0.0
    %740 = vmatprep.subr.mxu0 0.0
    %741 = vmatpush2.msra.mxu0 0.0
    %742 = vmatprep.subr.mxu0 0.0
    %743 = vmatpush2.msra.mxu0 0.0
    %744 = vmatprep.mubr.f32.mxu0 0.0
    %745 = vmatmul.mubr.f32.gmra.mxu0 %v524
    %v746 = vpop.f32.mrf.mxu0
    %v747 = vadd.f32 %v520, %v746
    %v748 = vpop.f32.mrf.mxu0
    %749 = vdwg.mxu0
    %v750 = vmul.f32 %v602, %v747
    %v751 = vadd.f32 %v495, %v750
    %v752 = vtanh.pop %v751
    %v753 = vsub.f32 1.0, %v679
    %v754 = vmul.f32 %v753, %v752
    %v755 = vmul.f32 %v679, 0.0
    %v756 = vadd.f32 %v754, %v755
    %v758 = vsel %vm522, %v756, 0
    %760 = vmatprep.subr.mxu0 0.0
    %761 = vmatpush1.msra.mxu0 0.0
    %762 = vmatprep.subr.mxu0 0.0
    %763 = vmatpush1.msra.mxu0 0.0
    %764 = vmatprep.subr.mxu0 0.0
    %765 = vmatpush1.msra.mxu0 0.0
    %766 = vmatprep.subr.mxu0 0.0
    %767 = vmatpush1.msra.mxu0 0.0
    %768 = vmatprep.subr.mxu0 0.0
    %769 = vmatpush1.msra.mxu0 0.0
    %770 = vmatprep.subr.mxu0 0.0
    %771 = vmatpush1.msra.mxu0 0.0
    %772 = vmatprep.subr.mxu0 0.0
    %773 = vmatpush1.msra.mxu0 0.0
    %774 = vmatprep.subr.mxu0 0.0
    %775 = vmatpush1.msra.mxu0 0.0
    %776 = vmatprep.subr.mxu0 0.0
    %777 = vmatpush1.msra.mxu0 0.0
    %778 = vmatprep.subr.mxu0 0.0
    %779 = vmatpush1.msra.mxu0 0.0
    %780 = vmatprep.subr.mxu0 0.0
    %781 = vmatpush1.msra.mxu0 0.0
    %782 = vmatprep.subr.mxu0 0.0
    %783 = vmatpush1.msra.mxu0 0.0
    %784 = vmatprep.subr.mxu0 0.0
    %785 = vmatpush1.msra.mxu0 %v506
    %786 = vmatprep.subr.mxu0 0.0
    %787 = vmatpush1.msra.mxu0 %v505
    %788 = vmatprep.subr.mxu0 0.0
    %789 = vmatpush1.msra.mxu0 %v504
    %790 = vmatprep.subr.mxu0 0.0
    %791 = vmatpush1.msra.mxu0 %v503
    %792 = vmatprep.subr.mxu0 0.0
    %793 = vmatpush2.msra.mxu0 0.0
    %794 = vmatprep.subr.mxu0 0.0
    %795 = vmatpush2.msra.mxu0 0.0
    %796 = vmatprep.subr.mxu0 0.0
    %797 = vmatpush2.msra.mxu0 0.0
    %798 = vmatprep.subr.mxu0 0.0
    %799 = vmatpush2.msra.mxu0 0.0
    %800 = vmatprep.subr.mxu0 0.0
    %801 = vmatpush2.msra.mxu0 0.0
    %802 = vmatprep.subr.mxu0 0.0
    %803 = vmatpush2.msra.mxu0 0.0
    %804 = vmatprep.subr.mxu0 0.0
    %805 = vmatpush2.msra.mxu0 0.0
    %806 = vmatprep.subr.mxu0 0.0
    %807 = vmatpush2.msra.mxu0 0.0
    %808 = vmatprep.subr.mxu0 0.0
    %809 = vmatpush2.msra.mxu0 0.0
    %810 = vmatprep.subr.mxu0 0.0
    %811 = vmatpush2.msra.mxu0 0.0
    %812 = vmatprep.subr.mxu0 0.0
    %813 = vmatpush2.msra.mxu0 0.0
    %814 = vmatprep.subr.mxu0 0.0
    %815 = vmatpush2.msra.mxu0 0.0
    %816 = vmatprep.subr.mxu0 0.0
    %817 = vmatpush2.msra.mxu0 0.0
    %818 = vmatprep.subr.mxu0 0.0
    %819 = vmatpush2.msra.mxu0 0.0
    %820 = vmatprep.subr.mxu0 0.0
    %821 = vmatpush2.msra.mxu0 0.0
    %822 = vmatprep.subr.mxu0 0.0
    %823 = vmatpush2.msra.mxu0 0.0
    %824 = vmatprep.mubr.f32.mxu0 0.0
    %825 = vmatmul.mubr.f32.gmra.mxu0 %v758
    %v826 = vpop.f32.mrf.mxu0
    %v827 = vadd.f32 0.0, %v826
    %v828 = vpop.f32.mrf.mxu0
    %829 = vdwg.mxu0
    %v831 = vrot.slane %v827, 6
    %v833 = vadd.f32 %v323, %v831
    %v834 = vxor.u32 %v833, 2147483648
    %v835 = vmul.f32 %v834, 1.442695
    %v836 = vpow.pop %v835
    %v837 = vadd.f32 %v836, 1.0
    %v838 = vrcp.pop %v837
    %v839 = vmul.f32 1.0, %v838
    %840 = vmatprep.subr.mxu0 0.0
    %841 = vmatpush1.msra.mxu0 0.0
    %842 = vmatprep.subr.mxu0 0.0
    %843 = vmatpush1.msra.mxu0 0.0
    %844 = vmatprep.subr.mxu0 0.0
    %845 = vmatpush1.msra.mxu0 0.0
    %846 = vmatprep.subr.mxu0 0.0
    %847 = vmatpush1.msra.mxu0 0.0
    %848 = vmatprep.subr.mxu0 0.0
    %849 = vmatpush1.msra.mxu0 0.0
    %850 = vmatprep.subr.mxu0 0.0
    %851 = vmatpush1.msra.mxu0 0.0
    %852 = vmatprep.subr.mxu0 0.0
    %853 = vmatpush1.msra.mxu0 0.0
    %854 = vmatprep.subr.mxu0 0.0
    %855 = vmatpush1.msra.mxu0 0.0
    %856 = vmatprep.subr.mxu0 0.0
    %857 = vmatpush1.msra.mxu0 0.0
    %858 = vmatprep.subr.mxu0 0.0
    %859 = vmatpush1.msra.mxu0 0.0
    %860 = vmatprep.subr.mxu0 0.0
    %861 = vmatpush1.msra.mxu0 0.0
    %862 = vmatprep.subr.mxu0 0.0
    %863 = vmatpush1.msra.mxu0 0.0
    %864 = vmatprep.subr.mxu0 0.0
    %865 = vmatpush1.msra.mxu0 %v510
    %866 = vmatprep.subr.mxu0 0.0
    %867 = vmatpush1.msra.mxu0 %v509
    %868 = vmatprep.subr.mxu0 0.0
    %869 = vmatpush1.msra.mxu0 %v508
    %870 = vmatprep.subr.mxu0 0.0
    %871 = vmatpush1.msra.mxu0 %v507
    %872 = vmatprep.subr.mxu0 0.0
    %873 = vmatpush2.msra.mxu0 0.0
    %874 = vmatprep.subr.mxu0 0.0
    %875 = vmatpush2.msra.mxu0 0.0
    %876 = vmatprep.subr.mxu0 0.0
    %877 = vmatpush2.msra.mxu0 0.0
    %878 = vmatprep.subr.mxu0 0.0
    %879 = vmatpush2.msra.mxu0 0.0
    %880 = vmatprep.subr.mxu0 0.0
    %881 = vmatpush2.msra.mxu0 0.0
    %882 = vmatprep.subr.mxu0 0.0
    %883 = vmatpush2.msra.mxu0 0.0
    %884 = vmatprep.subr.mxu0 0.0
    %885 = vmatpush2.msra.mxu0 0.0
    %886 = vmatprep.subr.mxu0 0.0
    %887 = vmatpush2.msra.mxu0 0.0
    %888 = vmatprep.subr.mxu0 0.0
    %889 = vmatpush2.msra.mxu0 0.0
    %890 = vmatprep.subr.mxu0 0.0
    %891 = vmatpush2.msra.mxu0 0.0
    %892 = vmatprep.subr.mxu0 0.0
    %893 = vmatpush2.msra.mxu0 0.0
    %894 = vmatprep.subr.mxu0 0.0
    %895 = vmatpush2.msra.mxu0 0.0
    %896 = vmatprep.subr.mxu0 0.0
    %897 = vmatpush2.msra.mxu0 0.0
    %898 = vmatprep.subr.mxu0 0.0
    %899 = vmatpush2.msra.mxu0 0.0
    %900 = vmatprep.subr.mxu0 0.0
    %901 = vmatpush2.msra.mxu0 0.0
    %902 = vmatprep.subr.mxu0 0.0
    %903 = vmatpush2.msra.mxu0 0.0
    %904 = vmatprep.mubr.f32.mxu0 0.0
    %905 = vmatmul.mubr.f32.gmra.mxu0 %v758
    %v906 = vpop.f32.mrf.mxu0
    %v907 = vadd.f32 0.0, %v906
    %v908 = vpop.f32.mrf.mxu0
    %909 = vdwg.mxu0
    %v911 = vrot.slane %v907, 6
    %v913 = vadd.f32 %v409, %v911
    %v914 = vxor.u32 %v913, 2147483648
    %v915 = vmul.f32 %v914, 1.442695
    %v916 = vpow.pop %v915
    %v917 = vadd.f32 %v916, 1.0
    %v918 = vrcp.pop %v917
    %v919 = vmul.f32 1.0, %v918
    %920 = vmatprep.subr.mxu0 0.0
    %921 = vmatpush1.msra.mxu0 0.0
    %922 = vmatprep.subr.mxu0 0.0
    %923 = vmatpush1.msra.mxu0 0.0
    %924 = vmatprep.subr.mxu0 0.0
    %925 = vmatpush1.msra.mxu0 0.0
    %926 = vmatprep.subr.mxu0 0.0
    %927 = vmatpush1.msra.mxu0 0.0
    %928 = vmatprep.subr.mxu0 0.0
    %929 = vmatpush1.msra.mxu0 0.0
    %930 = vmatprep.subr.mxu0 0.0
    %931 = vmatpush1.msra.mxu0 0.0
    %932 = vmatprep.subr.mxu0 0.0
    %933 = vmatpush1.msra.mxu0 0.0
    %934 = vmatprep.subr.mxu0 0.0
    %935 = vmatpush1.msra.mxu0 0.0
    %936 = vmatprep.subr.mxu0 0.0
    %937 = vmatpush1.msra.mxu0 0.0
    %938 = vmatprep.subr.mxu0 0.0
    %939 = vmatpush1.msra.mxu0 0.0
    %940 = vmatprep.subr.mxu0 0.0
    %941 = vmatpush1.msra.mxu0 0.0
    %942 = vmatprep.subr.mxu0 0.0
    %943 = vmatpush1.msra.mxu0 0.0
    %944 = vmatprep.subr.mxu0 0.0
    %945 = vmatpush1.msra.mxu0 %v514
    %946 = vmatprep.subr.mxu0 0.0
    %947 = vmatpush1.msra.mxu0 %v513
    %948 = vmatprep.subr.mxu0 0.0
    %949 = vmatpush1.msra.mxu0 %v512
    %950 = vmatprep.subr.mxu0 0.0
    %951 = vmatpush1.msra.mxu0 %v511
    %952 = vmatprep.subr.mxu0 0.0
    %953 = vmatpush2.msra.mxu0 0.0
    %954 = vmatprep.subr.mxu0 0.0
    %955 = vmatpush2.msra.mxu0 0.0
    %956 = vmatprep.subr.mxu0 0.0
    %957 = vmatpush2.msra.mxu0 0.0
    %958 = vmatprep.subr.mxu0 0.0
    %959 = vmatpush2.msra.mxu0 0.0
    %960 = vmatprep.subr.mxu0 0.0
    %961 = vmatpush2.msra.mxu0 0.0
    %962 = vmatprep.subr.mxu0 0.0
    %963 = vmatpush2.msra.mxu0 0.0
    %964 = vmatprep.subr.mxu0 0.0
    %965 = vmatpush2.msra.mxu0 0.0
    %966 = vmatprep.subr.mxu0 0.0
    %967 = vmatpush2.msra.mxu0 0.0
    %968 = vmatprep.subr.mxu0 0.0
    %969 = vmatpush2.msra.mxu0 0.0
    %970 = vmatprep.subr.mxu0 0.0
    %971 = vmatpush2.msra.mxu0 0.0
    %972 = vmatprep.subr.mxu0 0.0
    %973 = vmatpush2.msra.mxu0 0.0
    %974 = vmatprep.subr.mxu0 0.0
    %975 = vmatpush2.msra.mxu0 0.0
    %976 = vmatprep.subr.mxu0 0.0
    %977 = vmatpush2.msra.mxu0 0.0
    %978 = vmatprep.subr.mxu0 0.0
    %979 = vmatpush2.msra.mxu0 0.0
    %980 = vmatprep.subr.mxu0 0.0
    %981 = vmatpush2.msra.mxu0 0.0
    %982 = vmatprep.subr.mxu0 0.0
    %983 = vmatpush2.msra.mxu0 0.0
    %984 = vmatprep.mubr.f32.mxu0 0.0
    %985 = vmatmul.mubr.f32.gmra.mxu0 %v758
    %v986 = vpop.f32.mrf.mxu0
    %v987 = vadd.f32 %v520, %v986
    %v988 = vpop.f32.mrf.mxu0
    %989 = vdwg.mxu0
    %v991 = vrot.slane %v987, 6
    %v993 = vmul.f32 %v839, %v991
    %v994 = vadd.f32 %v495, %v993
    %v995 = vtanh.pop %v994
    %v996 = vsub.f32 1.0, %v919
    %v997 = vmul.f32 %v996, %v995
    %v998 = vrot.slane %v756, 6
    %v1000 = vmul.f32 %v919, %v998
    %v1001 = vadd.f32 %v997, %v1000
    %v1003 = vrot.slane %v1001, 2
    %v1004 = vsel %vm522, %v1003, 0
    %1006 = vmatprep.subr.mxu0 0.0
    %1007 = vmatpush1.msra.mxu0 0.0
    %1008 = vmatprep.subr.mxu0 0.0
    %1009 = vmatpush1.msra.mxu0 0.0
    %1010 = vmatprep.subr.mxu0 0.0
    %1011 = vmatpush1.msra.mxu0 0.0
    %1012 = vmatprep.subr.mxu0 0.0
    %1013 = vmatpush1.msra.mxu0 0.0
    %1014 = vmatprep.subr.mxu0 0.0
    %1015 = vmatpush1.msra.mxu0 0.0
    %1016 = vmatprep.subr.mxu0 0.0
    %1017 = vmatpush1.msra.mxu0 0.0
    %1018 = vmatprep.subr.mxu0 0.0
    %1019 = vmatpush1.msra.mxu0 0.0
    %1020 = vmatprep.subr.mxu0 0.0
    %1021 = vmatpush1.msra.mxu0 0.0
    %1022 = vmatprep.subr.mxu0 0.0
    %1023 = vmatpush1.msra.mxu0 0.0
    %1024 = vmatprep.subr.mxu0 0.0
    %1025 = vmatpush1.msra.mxu0 0.0
    %1026 = vmatprep.subr.mxu0 0.0
    %1027 = vmatpush1.msra.mxu0 0.0
    %1028 = vmatprep.subr.mxu0 0.0
    %1029 = vmatpush1.msra.mxu0 0.0
    %1030 = vmatprep.subr.mxu0 0.0
    %1031 = vmatpush1.msra.mxu0 %v506
    %1032 = vmatprep.subr.mxu0 0.0
    %1033 = vmatpush1.msra.mxu0 %v505
    %1034 = vmatprep.subr.mxu0 0.0
    %1035 = vmatpush1.msra.mxu0 %v504
    %1036 = vmatprep.subr.mxu0 0.0
    %1037 = vmatpush1.msra.mxu0 %v503
    %1038 = vmatprep.subr.mxu0 0.0
    %1039 = vmatpush2.msra.mxu0 0.0
    %1040 = vmatprep.subr.mxu0 0.0
    %1041 = vmatpush2.msra.mxu0 0.0
    %1042 = vmatprep.subr.mxu0 0.0
    %1043 = vmatpush2.msra.mxu0 0.0
    %1044 = vmatprep.subr.mxu0 0.0
    %1045 = vmatpush2.msra.mxu0 0.0
    %1046 = vmatprep.subr.mxu0 0.0
    %1047 = vmatpush2.msra.mxu0 0.0
    %1048 = vmatprep.subr.mxu0 0.0
    %1049 = vmatpush2.msra.mxu0 0.0
    %1050 = vmatprep.subr.mxu0 0.0
    %1051 = vmatpush2.msra.mxu0 0.0
    %1052 = vmatprep.subr.mxu0 0.0
    %1053 = vmatpush2.msra.mxu0 0.0
    %1054 = vmatprep.subr.mxu0 0.0
    %1055 = vmatpush2.msra.mxu0 0.0
    %1056 = vmatprep.subr.mxu0 0.0
    %1057 = vmatpush2.msra.mxu0 0.0
    %1058 = vmatprep.subr.mxu0 0.0
    %1059 = vmatpush2.msra.mxu0 0.0
    %1060 = vmatprep.subr.mxu0 0.0
    %1061 = vmatpush2.msra.mxu0 0.0
    %1062 = vmatprep.subr.mxu0 0.0
    %1063 = vmatpush2.msra.mxu0 0.0
    %1064 = vmatprep.subr.mxu0 0.0
    %1065 = vmatpush2.msra.mxu0 0.0
    %1066 = vmatprep.subr.mxu0 0.0
    %1067 = vmatpush2.msra.mxu0 0.0
    %1068 = vmatprep.subr.mxu0 0.0
    %1069 = vmatpush2.msra.mxu0 0.0
    %1070 = vmatprep.mubr.f32.mxu0 0.0
    %1071 = vmatmul.mubr.f32.gmra.mxu0 %v1004
    %v1072 = vpop.f32.mrf.mxu0
    %v1073 = vadd.f32 0.0, %v1072
    %v1074 = vpop.f32.mrf.mxu0
    %1075 = vdwg.mxu0
    %v1077 = vrot.slane %v1073, 4
    %v1079 = vadd.f32 %v323, %v1077
    %v1080 = vxor.u32 %v1079, 2147483648
    %v1081 = vmul.f32 %v1080, 1.442695
    %v1082 = vpow.pop %v1081
    %v1083 = vadd.f32 %v1082, 1.0
    %v1084 = vrcp.pop %v1083
    %v1085 = vmul.f32 1.0, %v1084
    %1086 = vmatprep.subr.mxu0 0.0
    %1087 = vmatpush1.msra.mxu0 0.0
    %1088 = vmatprep.subr.mxu0 0.0
    %1089 = vmatpush1.msra.mxu0 0.0
    %1090 = vmatprep.subr.mxu0 0.0
    %1091 = vmatpush1.msra.mxu0 0.0
    %1092 = vmatprep.subr.mxu0 0.0
    %1093 = vmatpush1.msra.mxu0 0.0
    %1094 = vmatprep.subr.mxu0 0.0
    %1095 = vmatpush1.msra.mxu0 0.0
    %1096 = vmatprep.subr.mxu0 0.0
    %1097 = vmatpush1.msra.mxu0 0.0
    %1098 = vmatprep.subr.mxu0 0.0
    %1099 = vmatpush1.msra.mxu0 0.0
    %1100 = vmatprep.subr.mxu0 0.0
    %1101 = vmatpush1.msra.mxu0 0.0
    %1102 = vmatprep.subr.mxu0 0.0
    %1103 = vmatpush1.msra.mxu0 0.0
    %1104 = vmatprep.subr.mxu0 0.0
    %1105 = vmatpush1.msra.mxu0 0.0
    %1106 = vmatprep.subr.mxu0 0.0
    %1107 = vmatpush1.msra.mxu0 0.0
    %1108 = vmatprep.subr.mxu0 0.0
    %1109 = vmatpush1.msra.mxu0 0.0
    %1110 = vmatprep.subr.mxu0 0.0
    %1111 = vmatpush1.msra.mxu0 %v510
    %1112 = vmatprep.subr.mxu0 0.0
    %1113 = vmatpush1.msra.mxu0 %v509
    %1114 = vmatprep.subr.mxu0 0.0
    %1115 = vmatpush1.msra.mxu0 %v508
    %1116 = vmatprep.subr.mxu0 0.0
    %1117 = vmatpush1.msra.mxu0 %v507
    %1118 = vmatprep.subr.mxu0 0.0
    %1119 = vmatpush2.msra.mxu0 0.0
    %1120 = vmatprep.subr.mxu0 0.0
    %1121 = vmatpush2.msra.mxu0 0.0
    %1122 = vmatprep.subr.mxu0 0.0
    %1123 = vmatpush2.msra.mxu0 0.0
    %1124 = vmatprep.subr.mxu0 0.0
    %1125 = vmatpush2.msra.mxu0 0.0
    %1126 = vmatprep.subr.mxu0 0.0
    %1127 = vmatpush2.msra.mxu0 0.0
    %1128 = vmatprep.subr.mxu0 0.0
    %1129 = vmatpush2.msra.mxu0 0.0
    %1130 = vmatprep.subr.mxu0 0.0
    %1131 = vmatpush2.msra.mxu0 0.0
    %1132 = vmatprep.subr.mxu0 0.0
    %1133 = vmatpush2.msra.mxu0 0.0
    %1134 = vmatprep.subr.mxu0 0.0
    %1135 = vmatpush2.msra.mxu0 0.0
    %1136 = vmatprep.subr.mxu0 0.0
    %1137 = vmatpush2.msra.mxu0 0.0
    %1138 = vmatprep.subr.mxu0 0.0
    %1139 = vmatpush2.msra.mxu0 0.0
    %1140 = vmatprep.subr.mxu0 0.0
    %1141 = vmatpush2.msra.mxu0 0.0
    %1142 = vmatprep.subr.mxu0 0.0
    %1143 = vmatpush2.msra.mxu0 0.0
    %1144 = vmatprep.subr.mxu0 0.0
    %1145 = vmatpush2.msra.mxu0 0.0
    %1146 = vmatprep.subr.mxu0 0.0
    %1147 = vmatpush2.msra.mxu0 0.0
    %1148 = vmatprep.subr.mxu0 0.0
    %1149 = vmatpush2.msra.mxu0 0.0
    %1150 = vmatprep.mubr.f32.mxu0 0.0
    %1151 = vmatmul.mubr.f32.gmra.mxu0 %v1004
    %v1152 = vpop.f32.mrf.mxu0
    %v1153 = vadd.f32 0.0, %v1152
    %v1154 = vpop.f32.mrf.mxu0
    %1155 = vdwg.mxu0
    %v1157 = vrot.slane %v1153, 4
    %v1159 = vadd.f32 %v409, %v1157
    %v1160 = vxor.u32 %v1159, 2147483648
    %v1161 = vmul.f32 %v1160, 1.442695
    %v1162 = vpow.pop %v1161
    %v1163 = vadd.f32 %v1162, 1.0
    %v1164 = vrcp.pop %v1163
    %v1165 = vmul.f32 1.0, %v1164
    %1166 = vmatprep.subr.mxu0 0.0
    %1167 = vmatpush1.msra.mxu0 0.0
    %1168 = vmatprep.subr.mxu0 0.0
    %1169 = vmatpush1.msra.mxu0 0.0
    %1170 = vmatprep.subr.mxu0 0.0
    %1171 = vmatpush1.msra.mxu0 0.0
    %1172 = vmatprep.subr.mxu0 0.0
    %1173 = vmatpush1.msra.mxu0 0.0
    %1174 = vmatprep.subr.mxu0 0.0
    %1175 = vmatpush1.msra.mxu0 0.0
    %1176 = vmatprep.subr.mxu0 0.0
    %1177 = vmatpush1.msra.mxu0 0.0
    %1178 = vmatprep.subr.mxu0 0.0
    %1179 = vmatpush1.msra.mxu0 0.0
    %1180 = vmatprep.subr.mxu0 0.0
    %1181 = vmatpush1.msra.mxu0 0.0
    %1182 = vmatprep.subr.mxu0 0.0
    %1183 = vmatpush1.msra.mxu0 0.0
    %1184 = vmatprep.subr.mxu0 0.0
    %1185 = vmatpush1.msra.mxu0 0.0
    %1186 = vmatprep.subr.mxu0 0.0
    %1187 = vmatpush1.msra.mxu0 0.0
    %1188 = vmatprep.subr.mxu0 0.0
    %1189 = vmatpush1.msra.mxu0 0.0
    %1190 = vmatprep.subr.mxu0 0.0
    %1191 = vmatpush1.msra.mxu0 %v514
    %1192 = vmatprep.subr.mxu0 0.0
    %1193 = vmatpush1.msra.mxu0 %v513
    %1194 = vmatprep.subr.mxu0 0.0
    %1195 = vmatpush1.msra.mxu0 %v512
    %1196 = vmatprep.subr.mxu0 0.0
    %1197 = vmatpush1.msra.mxu0 %v511
    %1198 = vmatprep.subr.mxu0 0.0
    %1199 = vmatpush2.msra.mxu0 0.0
    %1200 = vmatprep.subr.mxu0 0.0
    %1201 = vmatpush2.msra.mxu0 0.0
    %1202 = vmatprep.subr.mxu0 0.0
    %1203 = vmatpush2.msra.mxu0 0.0
    %1204 = vmatprep.subr.mxu0 0.0
    %1205 = vmatpush2.msra.mxu0 0.0
    %1206 = vmatprep.subr.mxu0 0.0
    %1207 = vmatpush2.msra.mxu0 0.0
    %1208 = vmatprep.subr.mxu0 0.0
    %1209 = vmatpush2.msra.mxu0 0.0
    %1210 = vmatprep.subr.mxu0 0.0
    %1211 = vmatpush2.msra.mxu0 0.0
    %1212 = vmatprep.subr.mxu0 0.0
    %1213 = vmatpush2.msra.mxu0 0.0
    %1214 = vmatprep.subr.mxu0 0.0
    %1215 = vmatpush2.msra.mxu0 0.0
    %1216 = vmatprep.subr.mxu0 0.0
    %1217 = vmatpush2.msra.mxu0 0.0
    %1218 = vmatprep.subr.mxu0 0.0
    %1219 = vmatpush2.msra.mxu0 0.0
    %1220 = vmatprep.subr.mxu0 0.0
    %1221 = vmatpush2.msra.mxu0 0.0
    %1222 = vmatprep.subr.mxu0 0.0
    %1223 = vmatpush2.msra.mxu0 0.0
    %1224 = vmatprep.subr.mxu0 0.0
    %1225 = vmatpush2.msra.mxu0 0.0
    %1226 = vmatprep.subr.mxu0 0.0
    %1227 = vmatpush2.msra.mxu0 0.0
    %1228 = vmatprep.subr.mxu0 0.0
    %1229 = vmatpush2.msra.mxu0 0.0
    %1230 = vmatprep.mubr.f32.mxu0 0.0
    %1231 = vmatmul.mubr.f32.gmra.mxu0 %v1004
    %v1232 = vpop.f32.mrf.mxu0
    %v1233 = vadd.f32 %v520, %v1232
    %v1234 = vpop.f32.mrf.mxu0
    %1235 = vdwg.mxu0
    %v1237 = vrot.slane %v1233, 4
    %v1239 = vmul.f32 %v1085, %v1237
    %v1240 = vadd.f32 %v495, %v1239
    %v1241 = vtanh.pop %v1240
    %v1242 = vsub.f32 1.0, %v1165
    %v1243 = vmul.f32 %v1242, %v1241
    %v1244 = vrot.slane %v1001, 6
    %v1246 = vmul.f32 %v1165, %v1244
    %v1247 = vadd.f32 %v1243, %v1246
    %v1249 = vrot.slane %v1247, 4
    %v1250 = vsel %vm522, %v1249, 0
    %1252 = vmatprep.subr.mxu0 0.0
    %1253 = vmatpush1.msra.mxu0 0.0
    %1254 = vmatprep.subr.mxu0 0.0
    %1255 = vmatpush1.msra.mxu0 0.0
    %1256 = vmatprep.subr.mxu0 0.0
    %1257 = vmatpush1.msra.mxu0 0.0
    %1258 = vmatprep.subr.mxu0 0.0
    %1259 = vmatpush1.msra.mxu0 0.0
    %1260 = vmatprep.subr.mxu0 0.0
    %1261 = vmatpush1.msra.mxu0 0.0
    %1262 = vmatprep.subr.mxu0 0.0
    %1263 = vmatpush1.msra.mxu0 0.0
    %1264 = vmatprep.subr.mxu0 0.0
    %1265 = vmatpush1.msra.mxu0 0.0
    %1266 = vmatprep.subr.mxu0 0.0
    %1267 = vmatpush1.msra.mxu0 0.0
    %1268 = vmatprep.subr.mxu0 0.0
    %1269 = vmatpush1.msra.mxu0 0.0
    %1270 = vmatprep.subr.mxu0 0.0
    %1271 = vmatpush1.msra.mxu0 0.0
    %1272 = vmatprep.subr.mxu0 0.0
    %1273 = vmatpush1.msra.mxu0 0.0
    %1274 = vmatprep.subr.mxu0 0.0
    %1275 = vmatpush1.msra.mxu0 0.0
    %1276 = vmatprep.subr.mxu0 0.0
    %1277 = vmatpush1.msra.mxu0 %v506
    %1278 = vmatprep.subr.mxu0 0.0
    %1279 = vmatpush1.msra.mxu0 %v505
    %1280 = vmatprep.subr.mxu0 0.0
    %1281 = vmatpush1.msra.mxu0 %v504
    %1282 = vmatprep.subr.mxu0 0.0
    %1283 = vmatpush1.msra.mxu0 %v503
    %1284 = vmatprep.subr.mxu0 0.0
    %1285 = vmatpush2.msra.mxu0 0.0
    %1286 = vmatprep.subr.mxu0 0.0
    %1287 = vmatpush2.msra.mxu0 0.0
    %1288 = vmatprep.subr.mxu0 0.0
    %1289 = vmatpush2.msra.mxu0 0.0
    %1290 = vmatprep.subr.mxu0 0.0
    %1291 = vmatpush2.msra.mxu0 0.0
    %1292 = vmatprep.subr.mxu0 0.0
    %1293 = vmatpush2.msra.mxu0 0.0
    %1294 = vmatprep.subr.mxu0 0.0
    %1295 = vmatpush2.msra.mxu0 0.0
    %1296 = vmatprep.subr.mxu0 0.0
    %1297 = vmatpush2.msra.mxu0 0.0
    %1298 = vmatprep.subr.mxu0 0.0
    %1299 = vmatpush2.msra.mxu0 0.0
    %1300 = vmatprep.subr.mxu0 0.0
    %1301 = vmatpush2.msra.mxu0 0.0
    %1302 = vmatprep.subr.mxu0 0.0
    %1303 = vmatpush2.msra.mxu0 0.0
    %1304 = vmatprep.subr.mxu0 0.0
    %1305 = vmatpush2.msra.mxu0 0.0
    %1306 = vmatprep.subr.mxu0 0.0
    %1307 = vmatpush2.msra.mxu0 0.0
    %1308 = vmatprep.subr.mxu0 0.0
    %1309 = vmatpush2.msra.mxu0 0.0
    %1310 = vmatprep.subr.mxu0 0.0
    %1311 = vmatpush2.msra.mxu0 0.0
    %1312 = vmatprep.subr.mxu0 0.0
    %1313 = vmatpush2.msra.mxu0 0.0
    %1314 = vmatprep.subr.mxu0 0.0
    %1315 = vmatpush2.msra.mxu0 0.0
    %1316 = vmatprep.mubr.f32.mxu0 0.0
    %1317 = vmatmul.mubr.f32.gmra.mxu0 %v1250
    %v1318 = vpop.f32.mrf.mxu0
    %v1319 = vadd.f32 0.0, %v1318
    %v1320 = vpop.f32.mrf.mxu0
    %1321 = vdwg.mxu0
    %v1323 = vrot.slane %v1319, 2
    %v1325 = vadd.f32 %v323, %v1323
    %v1326 = vxor.u32 %v1325, 2147483648
    %v1327 = vmul.f32 %v1326, 1.442695
    %v1328 = vpow.pop %v1327
    %v1329 = vadd.f32 %v1328, 1.0
    %v1330 = vrcp.pop %v1329
    %v1331 = vmul.f32 1.0, %v1330
    %1332 = vmatprep.subr.mxu0 0.0
    %1333 = vmatpush1.msra.mxu0 0.0
    %1334 = vmatprep.subr.mxu0 0.0
    %1335 = vmatpush1.msra.mxu0 0.0
    %1336 = vmatprep.subr.mxu0 0.0
    %1337 = vmatpush1.msra.mxu0 0.0
    %1338 = vmatprep.subr.mxu0 0.0
    %1339 = vmatpush1.msra.mxu0 0.0
    %1340 = vmatprep.subr.mxu0 0.0
    %1341 = vmatpush1.msra.mxu0 0.0
    %1342 = vmatprep.subr.mxu0 0.0
    %1343 = vmatpush1.msra.mxu0 0.0
    %1344 = vmatprep.subr.mxu0 0.0
    %1345 = vmatpush1.msra.mxu0 0.0
    %1346 = vmatprep.subr.mxu0 0.0
    %1347 = vmatpush1.msra.mxu0 0.0
    %1348 = vmatprep.subr.mxu0 0.0
    %1349 = vmatpush1.msra.mxu0 0.0
    %1350 = vmatprep.subr.mxu0 0.0
    %1351 = vmatpush1.msra.mxu0 0.0
    %1352 = vmatprep.subr.mxu0 0.0
    %1353 = vmatpush1.msra.mxu0 0.0
    %1354 = vmatprep.subr.mxu0 0.0
    %1355 = vmatpush1.msra.mxu0 0.0
    %1356 = vmatprep.subr.mxu0 0.0
    %1357 = vmatpush1.msra.mxu0 %v510
    %1358 = vmatprep.subr.mxu0 0.0
    %1359 = vmatpush1.msra.mxu0 %v509
    %1360 = vmatprep.subr.mxu0 0.0
    %1361 = vmatpush1.msra.mxu0 %v508
    %1362 = vmatprep.subr.mxu0 0.0
    %1363 = vmatpush1.msra.mxu0 %v507
    %1364 = vmatprep.subr.mxu0 0.0
    %1365 = vmatpush2.msra.mxu0 0.0
    %1366 = vmatprep.subr.mxu0 0.0
    %1367 = vmatpush2.msra.mxu0 0.0
    %1368 = vmatprep.subr.mxu0 0.0
    %1369 = vmatpush2.msra.mxu0 0.0
    %1370 = vmatprep.subr.mxu0 0.0
    %1371 = vmatpush2.msra.mxu0 0.0
    %1372 = vmatprep.subr.mxu0 0.0
    %1373 = vmatpush2.msra.mxu0 0.0
    %1374 = vmatprep.subr.mxu0 0.0
    %1375 = vmatpush2.msra.mxu0 0.0
    %1376 = vmatprep.subr.mxu0 0.0
    %1377 = vmatpush2.msra.mxu0 0.0
    %1378 = vmatprep.subr.mxu0 0.0
    %1379 = vmatpush2.msra.mxu0 0.0
    %1380 = vmatprep.subr.mxu0 0.0
    %1381 = vmatpush2.msra.mxu0 0.0
    %1382 = vmatprep.subr.mxu0 0.0
    %1383 = vmatpush2.msra.mxu0 0.0
    %1384 = vmatprep.subr.mxu0 0.0
    %1385 = vmatpush2.msra.mxu0 0.0
    %1386 = vmatprep.subr.mxu0 0.0
    %1387 = vmatpush2.msra.mxu0 0.0
    %1388 = vmatprep.subr.mxu0 0.0
    %1389 = vmatpush2.msra.mxu0 0.0
    %1390 = vmatprep.subr.mxu0 0.0
    %1391 = vmatpush2.msra.mxu0 0.0
    %1392 = vmatprep.subr.mxu0 0.0
    %1393 = vmatpush2.msra.mxu0 0.0
    %1394 = vmatprep.subr.mxu0 0.0
    %1395 = vmatpush2.msra.mxu0 0.0
    %1396 = vmatprep.mubr.f32.mxu0 0.0
    %1397 = vmatmul.mubr.f32.gmra.mxu0 %v1250
    %v1398 = vpop.f32.mrf.mxu0
    %v1399 = vadd.f32 0.0, %v1398
    %v1400 = vpop.f32.mrf.mxu0
    %1401 = vdwg.mxu0
    %v1403 = vrot.slane %v1399, 2
    %v1405 = vadd.f32 %v409, %v1403
    %v1406 = vxor.u32 %v1405, 2147483648
    %v1407 = vmul.f32 %v1406, 1.442695
    %v1408 = vpow.pop %v1407
    %v1409 = vadd.f32 %v1408, 1.0
    %v1410 = vrcp.pop %v1409
    %v1411 = vmul.f32 1.0, %v1410
    %1412 = vmatprep.subr.mxu0 0.0
    %1413 = vmatpush1.msra.mxu0 0.0
    %1414 = vmatprep.subr.mxu0 0.0
    %1415 = vmatpush1.msra.mxu0 0.0
    %1416 = vmatprep.subr.mxu0 0.0
    %1417 = vmatpush1.msra.mxu0 0.0
    %1418 = vmatprep.subr.mxu0 0.0
    %1419 = vmatpush1.msra.mxu0 0.0
    %1420 = vmatprep.subr.mxu0 0.0
    %1421 = vmatpush1.msra.mxu0 0.0
    %1422 = vmatprep.subr.mxu0 0.0
    %1423 = vmatpush1.msra.mxu0 0.0
    %1424 = vmatprep.subr.mxu0 0.0
    %1425 = vmatpush1.msra.mxu0 0.0
    %1426 = vmatprep.subr.mxu0 0.0
    %1427 = vmatpush1.msra.mxu0 0.0
    %1428 = vmatprep.subr.mxu0 0.0
    %1429 = vmatpush1.msra.mxu0 0.0
    %1430 = vmatprep.subr.mxu0 0.0
    %1431 = vmatpush1.msra.mxu0 0.0
    %1432 = vmatprep.subr.mxu0 0.0
    %1433 = vmatpush1.msra.mxu0 0.0
    %1434 = vmatprep.subr.mxu0 0.0
    %1435 = vmatpush1.msra.mxu0 0.0
    %1436 = vmatprep.subr.mxu0 0.0
    %1437 = vmatpush1.msra.mxu0 %v514
    %1438 = vmatprep.subr.mxu0 0.0
    %1439 = vmatpush1.msra.mxu0 %v513
    %1440 = vmatprep.subr.mxu0 0.0
    %1441 = vmatpush1.msra.mxu0 %v512
    %1442 = vmatprep.subr.mxu0 0.0
    %1443 = vmatpush1.msra.mxu0 %v511
    %1444 = vmatprep.subr.mxu0 0.0
    %1445 = vmatpush2.msra.mxu0 0.0
    %1446 = vmatprep.subr.mxu0 0.0
    %1447 = vmatpush2.msra.mxu0 0.0
    %1448 = vmatprep.subr.mxu0 0.0
    %1449 = vmatpush2.msra.mxu0 0.0
    %1450 = vmatprep.subr.mxu0 0.0
    %1451 = vmatpush2.msra.mxu0 0.0
    %1452 = vmatprep.subr.mxu0 0.0
    %1453 = vmatpush2.msra.mxu0 0.0
    %1454 = vmatprep.subr.mxu0 0.0
    %1455 = vmatpush2.msra.mxu0 0.0
    %1456 = vmatprep.subr.mxu0 0.0
    %1457 = vmatpush2.msra.mxu0 0.0
    %1458 = vmatprep.subr.mxu0 0.0
    %1459 = vmatpush2.msra.mxu0 0.0
    %1460 = vmatprep.subr.mxu0 0.0
    %1461 = vmatpush2.msra.mxu0 0.0
    %1462 = vmatprep.subr.mxu0 0.0
    %1463 = vmatpush2.msra.mxu0 0.0
    %1464 = vmatprep.subr.mxu0 0.0
    %1465 = vmatpush2.msra.mxu0 0.0
    %1466 = vmatprep.subr.mxu0 0.0
    %1467 = vmatpush2.msra.mxu0 0.0
    %1468 = vmatprep.subr.mxu0 0.0
    %1469 = vmatpush2.msra.mxu0 0.0
    %1470 = vmatprep.subr.mxu0 0.0
    %1471 = vmatpush2.msra.mxu0 0.0
    %1472 = vmatprep.subr.mxu0 0.0
    %1473 = vmatpush2.msra.mxu0 0.0
    %1474 = vmatprep.subr.mxu0 0.0
    %1475 = vmatpush2.msra.mxu0 0.0
    %1476 = vmatprep.mubr.f32.mxu0 0.0
    %1477 = vmatmul.mubr.f32.gmra.mxu0 %v1250
    %v1478 = vpop.f32.mrf.mxu0
    %v1479 = vadd.f32 %v520, %v1478
    %v1480 = vpop.f32.mrf.mxu0
    %1481 = vdwg.mxu0
    %v1483 = vrot.slane %v1479, 2
    %v1485 = vmul.f32 %v1331, %v1483
    %v1486 = vadd.f32 %v495, %v1485
    %v1487 = vtanh.pop %v1486
    %v1488 = vsub.f32 1.0, %v1411
    %v1489 = vmul.f32 %v1488, %v1487
    %v1490 = vrot.slane %v1247, 6
    %v1492 = vmul.f32 %v1411, %v1490
    %v1493 = vadd.f32 %v1489, %v1492
    %v1495 = vrot.slane %v1493, 6
    %v1496 = vsel %vm522, %v1495, 0
    %1498 = vmatprep.subr.mxu0 0.0
    %1499 = vmatpush1.msra.mxu0 0.0
    %1500 = vmatprep.subr.mxu0 0.0
    %1501 = vmatpush1.msra.mxu0 0.0
    %1502 = vmatprep.subr.mxu0 0.0
    %1503 = vmatpush1.msra.mxu0 0.0
    %1504 = vmatprep.subr.mxu0 0.0
    %1505 = vmatpush1.msra.mxu0 0.0
    %1506 = vmatprep.subr.mxu0 0.0
    %1507 = vmatpush1.msra.mxu0 0.0
    %1508 = vmatprep.subr.mxu0 0.0
    %1509 = vmatpush1.msra.mxu0 0.0
    %1510 = vmatprep.subr.mxu0 0.0
    %1511 = vmatpush1.msra.mxu0 0.0
    %1512 = vmatprep.subr.mxu0 0.0
    %1513 = vmatpush1.msra.mxu0 0.0
    %1514 = vmatprep.subr.mxu0 0.0
    %1515 = vmatpush1.msra.mxu0 0.0
    %1516 = vmatprep.subr.mxu0 0.0
    %1517 = vmatpush1.msra.mxu0 0.0
    %1518 = vmatprep.subr.mxu0 0.0
    %1519 = vmatpush1.msra.mxu0 0.0
    %1520 = vmatprep.subr.mxu0 0.0
    %1521 = vmatpush1.msra.mxu0 0.0
    %1522 = vmatprep.subr.mxu0 0.0
    %1523 = vmatpush1.msra.mxu0 %v506
    %1524 = vmatprep.subr.mxu0 0.0
    %1525 = vmatpush1.msra.mxu0 %v505
    %1526 = vmatprep.subr.mxu0 0.0
    %1527 = vmatpush1.msra.mxu0 %v504
    %1528 = vmatprep.subr.mxu0 0.0
    %1529 = vmatpush1.msra.mxu0 %v503
    %1530 = vmatprep.subr.mxu0 0.0
    %1531 = vmatpush2.msra.mxu0 0.0
    %1532 = vmatprep.subr.mxu0 0.0
    %1533 = vmatpush2.msra.mxu0 0.0
    %1534 = vmatprep.subr.mxu0 0.0
    %1535 = vmatpush2.msra.mxu0 0.0
    %1536 = vmatprep.subr.mxu0 0.0
    %1537 = vmatpush2.msra.mxu0 0.0
    %1538 = vmatprep.subr.mxu0 0.0
    %1539 = vmatpush2.msra.mxu0 0.0
    %1540 = vmatprep.subr.mxu0 0.0
    %1541 = vmatpush2.msra.mxu0 0.0
    %1542 = vmatprep.subr.mxu0 0.0
    %1543 = vmatpush2.msra.mxu0 0.0
    %1544 = vmatprep.subr.mxu0 0.0
    %1545 = vmatpush2.msra.mxu0 0.0
    %1546 = vmatprep.subr.mxu0 0.0
    %1547 = vmatpush2.msra.mxu0 0.0
    %1548 = vmatprep.subr.mxu0 0.0
    %1549 = vmatpush2.msra.mxu0 0.0
    %1550 = vmatprep.subr.mxu0 0.0
    %1551 = vmatpush2.msra.mxu0 0.0
    %1552 = vmatprep.subr.mxu0 0.0
    %1553 = vmatpush2.msra.mxu0 0.0
    %1554 = vmatprep.subr.mxu0 0.0
    %1555 = vmatpush2.msra.mxu0 0.0
    %1556 = vmatprep.subr.mxu0 0.0
    %1557 = vmatpush2.msra.mxu0 0.0
    %1558 = vmatprep.subr.mxu0 0.0
    %1559 = vmatpush2.msra.mxu0 0.0
    %1560 = vmatprep.subr.mxu0 0.0
    %1561 = vmatpush2.msra.mxu0 0.0
    %1562 = vmatprep.mubr.f32.mxu0 0.0
    %1563 = vmatmul.mubr.f32.gmra.mxu0 %v1496
    %v1564 = vpop.f32.mrf.mxu0
    %v1565 = vadd.f32 0.0, %v1564
    %v1566 = vpop.f32.mrf.mxu0
    %1567 = vdwg.mxu0
    %v1568 = vadd.f32 %v328, %v1565
    %v1569 = vxor.u32 %v1568, 2147483648
    %v1570 = vmul.f32 %v1569, 1.442695
    %v1571 = vpow.pop %v1570
    %v1572 = vadd.f32 %v1571, 1.0
    %v1573 = vrcp.pop %v1572
    %v1574 = vmul.f32 1.0, %v1573
    %1575 = vmatprep.subr.mxu0 0.0
    %1576 = vmatpush1.msra.mxu0 0.0
    %1577 = vmatprep.subr.mxu0 0.0
    %1578 = vmatpush1.msra.mxu0 0.0
    %1579 = vmatprep.subr.mxu0 0.0
    %1580 = vmatpush1.msra.mxu0 0.0
    %1581 = vmatprep.subr.mxu0 0.0
    %1582 = vmatpush1.msra.mxu0 0.0
    %1583 = vmatprep.subr.mxu0 0.0
    %1584 = vmatpush1.msra.mxu0 0.0
    %1585 = vmatprep.subr.mxu0 0.0
    %1586 = vmatpush1.msra.mxu0 0.0
    %1587 = vmatprep.subr.mxu0 0.0
    %1588 = vmatpush1.msra.mxu0 0.0
    %1589 = vmatprep.subr.mxu0 0.0
    %1590 = vmatpush1.msra.mxu0 0.0
    %1591 = vmatprep.subr.mxu0 0.0
    %1592 = vmatpush1.msra.mxu0 0.0
    %1593 = vmatprep.subr.mxu0 0.0
    %1594 = vmatpush1.msra.mxu0 0.0
    %1595 = vmatprep.subr.mxu0 0.0
    %1596 = vmatpush1.msra.mxu0 0.0
    %1597 = vmatprep.subr.mxu0 0.0
    %1598 = vmatpush1.msra.mxu0 0.0
    %1599 = vmatprep.subr.mxu0 0.0
    %1600 = vmatpush1.msra.mxu0 %v510
    %1601 = vmatprep.subr.mxu0 0.0
    %1602 = vmatpush1.msra.mxu0 %v509
    %1603 = vmatprep.subr.mxu0 0.0
    %1604 = vmatpush1.msra.mxu0 %v508
    %1605 = vmatprep.subr.mxu0 0.0
    %1606 = vmatpush1.msra.mxu0 %v507
    %1607 = vmatprep.subr.mxu0 0.0
    %1608 = vmatpush2.msra.mxu0 0.0
    %1609 = vmatprep.subr.mxu0 0.0
    %1610 = vmatpush2.msra.mxu0 0.0
    %1611 = vmatprep.subr.mxu0 0.0
    %1612 = vmatpush2.msra.mxu0 0.0
    %1613 = vmatprep.subr.mxu0 0.0
    %1614 = vmatpush2.msra.mxu0 0.0
    %1615 = vmatprep.subr.mxu0 0.0
    %1616 = vmatpush2.msra.mxu0 0.0
    %1617 = vmatprep.subr.mxu0 0.0
    %1618 = vmatpush2.msra.mxu0 0.0
    %1619 = vmatprep.subr.mxu0 0.0
    %1620 = vmatpush2.msra.mxu0 0.0
    %1621 = vmatprep.subr.mxu0 0.0
    %1622 = vmatpush2.msra.mxu0 0.0
    %1623 = vmatprep.subr.mxu0 0.0
    %1624 = vmatpush2.msra.mxu0 0.0
    %1625 = vmatprep.subr.mxu0 0.0
    %1626 = vmatpush2.msra.mxu0 0.0
    %1627 = vmatprep.subr.mxu0 0.0
    %1628 = vmatpush2.msra.mxu0 0.0
    %1629 = vmatprep.subr.mxu0 0.0
    %1630 = vmatpush2.msra.mxu0 0.0
    %1631 = vmatprep.subr.mxu0 0.0
    %1632 = vmatpush2.msra.mxu0 0.0
    %1633 = vmatprep.subr.mxu0 0.0
    %1634 = vmatpush2.msra.mxu0 0.0
    %1635 = vmatprep.subr.mxu0 0.0
    %1636 = vmatpush2.msra.mxu0 0.0
    %1637 = vmatprep.subr.mxu0 0.0
    %1638 = vmatpush2.msra.mxu0 0.0
    %1639 = vmatprep.mubr.f32.mxu0 0.0
    %1640 = vmatmul.mubr.f32.gmra.mxu0 %v1496
    %v1641 = vpop.f32.mrf.mxu0
    %v1642 = vadd.f32 0.0, %v1641
    %v1643 = vpop.f32.mrf.mxu0
    %1644 = vdwg.mxu0
    %v1645 = vadd.f32 %v414, %v1642
    %v1646 = vxor.u32 %v1645, 2147483648
    %v1647 = vmul.f32 %v1646, 1.442695
    %v1648 = vpow.pop %v1647
    %v1649 = vadd.f32 %v1648, 1.0
    %v1650 = vrcp.pop %v1649
    %v1651 = vmul.f32 1.0, %v1650
    %1652 = vmatprep.subr.mxu0 0.0
    %1653 = vmatpush1.msra.mxu0 0.0
    %1654 = vmatprep.subr.mxu0 0.0
    %1655 = vmatpush1.msra.mxu0 0.0
    %1656 = vmatprep.subr.mxu0 0.0
    %1657 = vmatpush1.msra.mxu0 0.0
    %1658 = vmatprep.subr.mxu0 0.0
    %1659 = vmatpush1.msra.mxu0 0.0
    %1660 = vmatprep.subr.mxu0 0.0
    %1661 = vmatpush1.msra.mxu0 0.0
    %1662 = vmatprep.subr.mxu0 0.0
    %1663 = vmatpush1.msra.mxu0 0.0
    %1664 = vmatprep.subr.mxu0 0.0
    %1665 = vmatpush1.msra.mxu0 0.0
    %1666 = vmatprep.subr.mxu0 0.0
    %1667 = vmatpush1.msra.mxu0 0.0
    %1668 = vmatprep.subr.mxu0 0.0
    %1669 = vmatpush1.msra.mxu0 0.0
    %1670 = vmatprep.subr.mxu0 0.0
    %1671 = vmatpush1.msra.mxu0 0.0
    %1672 = vmatprep.subr.mxu0 0.0
    %1673 = vmatpush1.msra.mxu0 0.0
    %1674 = vmatprep.subr.mxu0 0.0
    %1675 = vmatpush1.msra.mxu0 0.0
    %1676 = vmatprep.subr.mxu0 0.0
    %1677 = vmatpush1.msra.mxu0 %v514
    %1678 = vmatprep.subr.mxu0 0.0
    %1679 = vmatpush1.msra.mxu0 %v513
    %1680 = vmatprep.subr.mxu0 0.0
    %1681 = vmatpush1.msra.mxu0 %v512
    %1682 = vmatprep.subr.mxu0 0.0
    %1683 = vmatpush1.msra.mxu0 %v511
    %1684 = vmatprep.subr.mxu0 0.0
    %1685 = vmatpush2.msra.mxu0 0.0
    %1686 = vmatprep.subr.mxu0 0.0
    %1687 = vmatpush2.msra.mxu0 0.0
    %1688 = vmatprep.subr.mxu0 0.0
    %1689 = vmatpush2.msra.mxu0 0.0
    %1690 = vmatprep.subr.mxu0 0.0
    %1691 = vmatpush2.msra.mxu0 0.0
    %1692 = vmatprep.subr.mxu0 0.0
    %1693 = vmatpush2.msra.mxu0 0.0
    %1694 = vmatprep.subr.mxu0 0.0
    %1695 = vmatpush2.msra.mxu0 0.0
    %1696 = vmatprep.subr.mxu0 0.0
    %1697 = vmatpush2.msra.mxu0 0.0
    %1698 = vmatprep.subr.mxu0 0.0
    %1699 = vmatpush2.msra.mxu0 0.0
    %1700 = vmatprep.subr.mxu0 0.0
    %1701 = vmatpush2.msra.mxu0 0.0
    %1702 = vmatprep.subr.mxu0 0.0
    %1703 = vmatpush2.msra.mxu0 0.0
    %1704 = vmatprep.subr.mxu0 0.0
    %1705 = vmatpush2.msra.mxu0 0.0
    %1706 = vmatprep.subr.mxu0 0.0
    %1707 = vmatpush2.msra.mxu0 0.0
    %1708 = vmatprep.subr.mxu0 0.0
    %1709 = vmatpush2.msra.mxu0 0.0
    %1710 = vmatprep.subr.mxu0 0.0
    %1711 = vmatpush2.msra.mxu0 0.0
    %1712 = vmatprep.subr.mxu0 0.0
    %1713 = vmatpush2.msra.mxu0 0.0
    %1714 = vmatprep.subr.mxu0 0.0
    %1715 = vmatpush2.msra.mxu0 0.0
    %1716 = vmatprep.mubr.f32.mxu0 0.0
    %1717 = vmatmul.mubr.f32.gmra.mxu0 %v1496
    %v1718 = vpop.f32.mrf.mxu0
    %v1719 = vadd.f32 %v520, %v1718
    %v1720 = vpop.f32.mrf.mxu0
    %1721 = vdwg.mxu0
    %v1722 = vmul.f32 %v1574, %v1719
    %v1723 = vadd.f32 %v500, %v1722
    %v1724 = vtanh.pop %v1723
    %v1725 = vsub.f32 1.0, %v1651
    %v1726 = vmul.f32 %v1725, %v1724
    %v1728 = vmul.f32 %v1651, %v1495
    %v1729 = vadd.f32 %v1726, %v1728
    %v1731 = vsel %vm522, %v1729, 0
    %1733 = vmatprep.subr.mxu0 0.0
    %1734 = vmatpush1.msra.mxu0 0.0
    %1735 = vmatprep.subr.mxu0 0.0
    %1736 = vmatpush1.msra.mxu0 0.0
    %1737 = vmatprep.subr.mxu0 0.0
    %1738 = vmatpush1.msra.mxu0 0.0
    %1739 = vmatprep.subr.mxu0 0.0
    %1740 = vmatpush1.msra.mxu0 0.0
    %1741 = vmatprep.subr.mxu0 0.0
    %1742 = vmatpush1.msra.mxu0 0.0
    %1743 = vmatprep.subr.mxu0 0.0
    %1744 = vmatpush1.msra.mxu0 0.0
    %1745 = vmatprep.subr.mxu0 0.0
    %1746 = vmatpush1.msra.mxu0 0.0
    %1747 = vmatprep.subr.mxu0 0.0
    %1748 = vmatpush1.msra.mxu0 0.0
    %1749 = vmatprep.subr.mxu0 0.0
    %1750 = vmatpush1.msra.mxu0 0.0
    %1751 = vmatprep.subr.mxu0 0.0
    %1752 = vmatpush1.msra.mxu0 0.0
    %1753 = vmatprep.subr.mxu0 0.0
    %1754 = vmatpush1.msra.mxu0 0.0
    %1755 = vmatprep.subr.mxu0 0.0
    %1756 = vmatpush1.msra.mxu0 0.0
    %1757 = vmatprep.subr.mxu0 0.0
    %1758 = vmatpush1.msra.mxu0 %v506
    %1759 = vmatprep.subr.mxu0 0.0
    %1760 = vmatpush1.msra.mxu0 %v505
    %1761 = vmatprep.subr.mxu0 0.0
    %1762 = vmatpush1.msra.mxu0 %v504
    %1763 = vmatprep.subr.mxu0 0.0
    %1764 = vmatpush1.msra.mxu0 %v503
    %1765 = vmatprep.subr.mxu0 0.0
    %1766 = vmatpush2.msra.mxu0 0.0
    %1767 = vmatprep.subr.mxu0 0.0
    %1768 = vmatpush2.msra.mxu0 0.0
    %1769 = vmatprep.subr.mxu0 0.0
    %1770 = vmatpush2.msra.mxu0 0.0
    %1771 = vmatprep.subr.mxu0 0.0
    %1772 = vmatpush2.msra.mxu0 0.0
    %1773 = vmatprep.subr.mxu0 0.0
    %1774 = vmatpush2.msra.mxu0 0.0
    %1775 = vmatprep.subr.mxu0 0.0
    %1776 = vmatpush2.msra.mxu0 0.0
    %1777 = vmatprep.subr.mxu0 0.0
    %1778 = vmatpush2.msra.mxu0 0.0
    %1779 = vmatprep.subr.mxu0 0.0
    %1780 = vmatpush2.msra.mxu0 0.0
    %1781 = vmatprep.subr.mxu0 0.0
    %1782 = vmatpush2.msra.mxu0 0.0
    %1783 = vmatprep.subr.mxu0 0.0
    %1784 = vmatpush2.msra.mxu0 0.0
    %1785 = vmatprep.subr.mxu0 0.0
    %1786 = vmatpush2.msra.mxu0 0.0
    %1787 = vmatprep.subr.mxu0 0.0
    %1788 = vmatpush2.msra.mxu0 0.0
    %1789 = vmatprep.subr.mxu0 0.0
    %1790 = vmatpush2.msra.mxu0 0.0
    %1791 = vmatprep.subr.mxu0 0.0
    %1792 = vmatpush2.msra.mxu0 0.0
    %1793 = vmatprep.subr.mxu0 0.0
    %1794 = vmatpush2.msra.mxu0 0.0
    %1795 = vmatprep.subr.mxu0 0.0
    %1796 = vmatpush2.msra.mxu0 0.0
    %1797 = vmatprep.mubr.f32.mxu0 0.0
    %1798 = vmatmul.mubr.f32.gmra.mxu0 %v1731
    %v1799 = vpop.f32.mrf.mxu0
    %v1800 = vadd.f32 0.0, %v1799
    %v1801 = vpop.f32.mrf.mxu0
    %1802 = vdwg.mxu0
    %v1804 = vrot.slane %v1800, 6
    %v1806 = vadd.f32 %v328, %v1804
    %v1807 = vxor.u32 %v1806, 2147483648
    %v1808 = vmul.f32 %v1807, 1.442695
    %v1809 = vpow.pop %v1808
    %v1810 = vadd.f32 %v1809, 1.0
    %v1811 = vrcp.pop %v1810
    %v1812 = vmul.f32 1.0, %v1811
    %1813 = vmatprep.subr.mxu0 0.0
    %1814 = vmatpush1.msra.mxu0 0.0
    %1815 = vmatprep.subr.mxu0 0.0
    %1816 = vmatpush1.msra.mxu0 0.0
    %1817 = vmatprep.subr.mxu0 0.0
    %1818 = vmatpush1.msra.mxu0 0.0
    %1819 = vmatprep.subr.mxu0 0.0
    %1820 = vmatpush1.msra.mxu0 0.0
    %1821 = vmatprep.subr.mxu0 0.0
    %1822 = vmatpush1.msra.mxu0 0.0
    %1823 = vmatprep.subr.mxu0 0.0
    %1824 = vmatpush1.msra.mxu0 0.0
    %1825 = vmatprep.subr.mxu0 0.0
    %1826 = vmatpush1.msra.mxu0 0.0
    %1827 = vmatprep.subr.mxu0 0.0
    %1828 = vmatpush1.msra.mxu0 0.0
    %1829 = vmatprep.subr.mxu0 0.0
    %1830 = vmatpush1.msra.mxu0 0.0
    %1831 = vmatprep.subr.mxu0 0.0
    %1832 = vmatpush1.msra.mxu0 0.0
    %1833 = vmatprep.subr.mxu0 0.0
    %1834 = vmatpush1.msra.mxu0 0.0
    %1835 = vmatprep.subr.mxu0 0.0
    %1836 = vmatpush1.msra.mxu0 0.0
    %1837 = vmatprep.subr.mxu0 0.0
    %1838 = vmatpush1.msra.mxu0 %v510
    %1839 = vmatprep.subr.mxu0 0.0
    %1840 = vmatpush1.msra.mxu0 %v509
    %1841 = vmatprep.subr.mxu0 0.0
    %1842 = vmatpush1.msra.mxu0 %v508
    %1843 = vmatprep.subr.mxu0 0.0
    %1844 = vmatpush1.msra.mxu0 %v507
    %1845 = vmatprep.subr.mxu0 0.0
    %1846 = vmatpush2.msra.mxu0 0.0
    %1847 = vmatprep.subr.mxu0 0.0
    %1848 = vmatpush2.msra.mxu0 0.0
    %1849 = vmatprep.subr.mxu0 0.0
    %1850 = vmatpush2.msra.mxu0 0.0
    %1851 = vmatprep.subr.mxu0 0.0
    %1852 = vmatpush2.msra.mxu0 0.0
    %1853 = vmatprep.subr.mxu0 0.0
    %1854 = vmatpush2.msra.mxu0 0.0
    %1855 = vmatprep.subr.mxu0 0.0
    %1856 = vmatpush2.msra.mxu0 0.0
    %1857 = vmatprep.subr.mxu0 0.0
    %1858 = vmatpush2.msra.mxu0 0.0
    %1859 = vmatprep.subr.mxu0 0.0
    %1860 = vmatpush2.msra.mxu0 0.0
    %1861 = vmatprep.subr.mxu0 0.0
    %1862 = vmatpush2.msra.mxu0 0.0
    %1863 = vmatprep.subr.mxu0 0.0
    %1864 = vmatpush2.msra.mxu0 0.0
    %1865 = vmatprep.subr.mxu0 0.0
    %1866 = vmatpush2.msra.mxu0 0.0
    %1867 = vmatprep.subr.mxu0 0.0
    %1868 = vmatpush2.msra.mxu0 0.0
    %1869 = vmatprep.subr.mxu0 0.0
    %1870 = vmatpush2.msra.mxu0 0.0
    %1871 = vmatprep.subr.mxu0 0.0
    %1872 = vmatpush2.msra.mxu0 0.0
    %1873 = vmatprep.subr.mxu0 0.0
    %1874 = vmatpush2.msra.mxu0 0.0
    %1875 = vmatprep.subr.mxu0 0.0
    %1876 = vmatpush2.msra.mxu0 0.0
    %1877 = vmatprep.mubr.f32.mxu0 0.0
    %1878 = vmatmul.mubr.f32.gmra.mxu0 %v1731
    %v1879 = vpop.f32.mrf.mxu0
    %v1880 = vadd.f32 0.0, %v1879
    %v1881 = vpop.f32.mrf.mxu0
    %1882 = vdwg.mxu0
    %v1884 = vrot.slane %v1880, 6
    %v1886 = vadd.f32 %v414, %v1884
    %v1887 = vxor.u32 %v1886, 2147483648
    %v1888 = vmul.f32 %v1887, 1.442695
    %v1889 = vpow.pop %v1888
    %v1890 = vadd.f32 %v1889, 1.0
    %v1891 = vrcp.pop %v1890
    %v1892 = vmul.f32 1.0, %v1891
    %1893 = vmatprep.subr.mxu0 0.0
    %1894 = vmatpush1.msra.mxu0 0.0
    %1895 = vmatprep.subr.mxu0 0.0
    %1896 = vmatpush1.msra.mxu0 0.0
    %1897 = vmatprep.subr.mxu0 0.0
    %1898 = vmatpush1.msra.mxu0 0.0
    %1899 = vmatprep.subr.mxu0 0.0
    %1900 = vmatpush1.msra.mxu0 0.0
    %1901 = vmatprep.subr.mxu0 0.0
    %1902 = vmatpush1.msra.mxu0 0.0
    %1903 = vmatprep.subr.mxu0 0.0
    %1904 = vmatpush1.msra.mxu0 0.0
    %1905 = vmatprep.subr.mxu0 0.0
    %1906 = vmatpush1.msra.mxu0 0.0
    %1907 = vmatprep.subr.mxu0 0.0
    %1908 = vmatpush1.msra.mxu0 0.0
    %1909 = vmatprep.subr.mxu0 0.0
    %1910 = vmatpush1.msra.mxu0 0.0
    %1911 = vmatprep.subr.mxu0 0.0
    %1912 = vmatpush1.msra.mxu0 0.0
    %1913 = vmatprep.subr.mxu0 0.0
    %1914 = vmatpush1.msra.mxu0 0.0
    %1915 = vmatprep.subr.mxu0 0.0
    %1916 = vmatpush1.msra.mxu0 0.0
    %1917 = vmatprep.subr.mxu0 0.0
    %1918 = vmatpush1.msra.mxu0 %v514
    %1919 = vmatprep.subr.mxu0 0.0
    %1920 = vmatpush1.msra.mxu0 %v513
    %1921 = vmatprep.subr.mxu0 0.0
    %1922 = vmatpush1.msra.mxu0 %v512
    %1923 = vmatprep.subr.mxu0 0.0
    %1924 = vmatpush1.msra.mxu0 %v511
    %1925 = vmatprep.subr.mxu0 0.0
    %1926 = vmatpush2.msra.mxu0 0.0
    %1927 = vmatprep.subr.mxu0 0.0
    %1928 = vmatpush2.msra.mxu0 0.0
    %1929 = vmatprep.subr.mxu0 0.0
    %1930 = vmatpush2.msra.mxu0 0.0
    %1931 = vmatprep.subr.mxu0 0.0
    %1932 = vmatpush2.msra.mxu0 0.0
    %1933 = vmatprep.subr.mxu0 0.0
    %1934 = vmatpush2.msra.mxu0 0.0
    %1935 = vmatprep.subr.mxu0 0.0
    %1936 = vmatpush2.msra.mxu0 0.0
    %1937 = vmatprep.subr.mxu0 0.0
    %1938 = vmatpush2.msra.mxu0 0.0
    %1939 = vmatprep.subr.mxu0 0.0
    %1940 = vmatpush2.msra.mxu0 0.0
    %1941 = vmatprep.subr.mxu0 0.0
    %1942 = vmatpush2.msra.mxu0 0.0
    %1943 = vmatprep.subr.mxu0 0.0
    %1944 = vmatpush2.msra.mxu0 0.0
    %1945 = vmatprep.subr.mxu0 0.0
    %1946 = vmatpush2.msra.mxu0 0.0
    %1947 = vmatprep.subr.mxu0 0.0
    %1948 = vmatpush2.msra.mxu0 0.0
    %1949 = vmatprep.subr.mxu0 0.0
    %1950 = vmatpush2.msra.mxu0 0.0
    %1951 = vmatprep.subr.mxu0 0.0
    %1952 = vmatpush2.msra.mxu0 0.0
    %1953 = vmatprep.subr.mxu0 0.0
    %1954 = vmatpush2.msra.mxu0 0.0
    %1955 = vmatprep.subr.mxu0 0.0
    %1956 = vmatpush2.msra.mxu0 0.0
    %1957 = vmatprep.mubr.f32.mxu0 0.0
    %1958 = vmatmul.mubr.f32.gmra.mxu0 %v1731
    %v1959 = vpop.f32.mrf.mxu0
    %v1960 = vadd.f32 %v520, %v1959
    %v1961 = vpop.f32.mrf.mxu0
    %1962 = vdwg.mxu0
    %v1964 = vrot.slane %v1960, 6
    %v1966 = vmul.f32 %v1812, %v1964
    %v1967 = vadd.f32 %v500, %v1966
    %v1968 = vtanh.pop %v1967
    %v1969 = vsub.f32 1.0, %v1892
    %v1970 = vmul.f32 %v1969, %v1968
    %v1971 = vrot.slane %v1729, 6
    %v1973 = vmul.f32 %v1892, %v1971
    %v1974 = vadd.f32 %v1970, %v1973
    %v1976 = vrot.slane %v1974, 2
    %v1977 = vsel %vm522, %v1976, 0
    %1979 = vmatprep.subr.mxu0 0.0
    %1980 = vmatpush1.msra.mxu0 0.0
    %1981 = vmatprep.subr.mxu0 0.0
    %1982 = vmatpush1.msra.mxu0 0.0
    %1983 = vmatprep.subr.mxu0 0.0
    %1984 = vmatpush1.msra.mxu0 0.0
    %1985 = vmatprep.subr.mxu0 0.0
    %1986 = vmatpush1.msra.mxu0 0.0
    %1987 = vmatprep.subr.mxu0 0.0
    %1988 = vmatpush1.msra.mxu0 0.0
    %1989 = vmatprep.subr.mxu0 0.0
    %1990 = vmatpush1.msra.mxu0 0.0
    %1991 = vmatprep.subr.mxu0 0.0
    %1992 = vmatpush1.msra.mxu0 0.0
    %1993 = vmatprep.subr.mxu0 0.0
    %1994 = vmatpush1.msra.mxu0 0.0
    %1995 = vmatprep.subr.mxu0 0.0
    %1996 = vmatpush1.msra.mxu0 0.0
    %1997 = vmatprep.subr.mxu0 0.0
    %1998 = vmatpush1.msra.mxu0 0.0
    %1999 = vmatprep.subr.mxu0 0.0
    %2000 = vmatpush1.msra.mxu0 0.0
    %2001 = vmatprep.subr.mxu0 0.0
    %2002 = vmatpush1.msra.mxu0 0.0
    %2003 = vmatprep.subr.mxu0 0.0
    %2004 = vmatpush1.msra.mxu0 %v506
    %2005 = vmatprep.subr.mxu0 0.0
    %2006 = vmatpush1.msra.mxu0 %v505
    %2007 = vmatprep.subr.mxu0 0.0
    %2008 = vmatpush1.msra.mxu0 %v504
    %2009 = vmatprep.subr.mxu0 0.0
    %2010 = vmatpush1.msra.mxu0 %v503
    %2011 = vmatprep.subr.mxu0 0.0
    %2012 = vmatpush2.msra.mxu0 0.0
    %2013 = vmatprep.subr.mxu0 0.0
    %2014 = vmatpush2.msra.mxu0 0.0
    %2015 = vmatprep.subr.mxu0 0.0
    %2016 = vmatpush2.msra.mxu0 0.0
    %2017 = vmatprep.subr.mxu0 0.0
    %2018 = vmatpush2.msra.mxu0 0.0
    %2019 = vmatprep.subr.mxu0 0.0
    %2020 = vmatpush2.msra.mxu0 0.0
    %2021 = vmatprep.subr.mxu0 0.0
    %2022 = vmatpush2.msra.mxu0 0.0
    %2023 = vmatprep.subr.mxu0 0.0
    %2024 = vmatpush2.msra.mxu0 0.0
    %2025 = vmatprep.subr.mxu0 0.0
    %2026 = vmatpush2.msra.mxu0 0.0
    %2027 = vmatprep.subr.mxu0 0.0
    %2028 = vmatpush2.msra.mxu0 0.0
    %2029 = vmatprep.subr.mxu0 0.0
    %2030 = vmatpush2.msra.mxu0 0.0
    %2031 = vmatprep.subr.mxu0 0.0
    %2032 = vmatpush2.msra.mxu0 0.0
    %2033 = vmatprep.subr.mxu0 0.0
    %2034 = vmatpush2.msra.mxu0 0.0
    %2035 = vmatprep.subr.mxu0 0.0
    %2036 = vmatpush2.msra.mxu0 0.0
    %2037 = vmatprep.subr.mxu0 0.0
    %2038 = vmatpush2.msra.mxu0 0.0
    %2039 = vmatprep.subr.mxu0 0.0
    %2040 = vmatpush2.msra.mxu0 0.0
    %2041 = vmatprep.subr.mxu0 0.0
    %2042 = vmatpush2.msra.mxu0 0.0
    %2043 = vmatprep.mubr.f32.mxu0 0.0
    %2044 = vmatmul.mubr.f32.gmra.mxu0 %v1977
    %v2045 = vpop.f32.mrf.mxu0
    %v2046 = vadd.f32 0.0, %v2045
    %v2047 = vpop.f32.mrf.mxu0
    %2048 = vdwg.mxu0
    %v2050 = vrot.slane %v2046, 4
    %v2052 = vadd.f32 %v328, %v2050
    %v2053 = vxor.u32 %v2052, 2147483648
    %v2054 = vmul.f32 %v2053, 1.442695
    %v2055 = vpow.pop %v2054
    %v2056 = vadd.f32 %v2055, 1.0
    %v2057 = vrcp.pop %v2056
    %v2058 = vmul.f32 1.0, %v2057
    %2059 = vmatprep.subr.mxu0 0.0
    %2060 = vmatpush1.msra.mxu0 0.0
    %2061 = vmatprep.subr.mxu0 0.0
    %2062 = vmatpush1.msra.mxu0 0.0
    %2063 = vmatprep.subr.mxu0 0.0
    %2064 = vmatpush1.msra.mxu0 0.0
    %2065 = vmatprep.subr.mxu0 0.0
    %2066 = vmatpush1.msra.mxu0 0.0
    %2067 = vmatprep.subr.mxu0 0.0
    %2068 = vmatpush1.msra.mxu0 0.0
    %2069 = vmatprep.subr.mxu0 0.0
    %2070 = vmatpush1.msra.mxu0 0.0
    %2071 = vmatprep.subr.mxu0 0.0
    %2072 = vmatpush1.msra.mxu0 0.0
    %2073 = vmatprep.subr.mxu0 0.0
    %2074 = vmatpush1.msra.mxu0 0.0
    %2075 = vmatprep.subr.mxu0 0.0
    %2076 = vmatpush1.msra.mxu0 0.0
    %2077 = vmatprep.subr.mxu0 0.0
    %2078 = vmatpush1.msra.mxu0 0.0
    %2079 = vmatprep.subr.mxu0 0.0
    %2080 = vmatpush1.msra.mxu0 0.0
    %2081 = vmatprep.subr.mxu0 0.0
    %2082 = vmatpush1.msra.mxu0 0.0
    %2083 = vmatprep.subr.mxu0 0.0
    %2084 = vmatpush1.msra.mxu0 %v510
    %2085 = vmatprep.subr.mxu0 0.0
    %2086 = vmatpush1.msra.mxu0 %v509
    %2087 = vmatprep.subr.mxu0 0.0
    %2088 = vmatpush1.msra.mxu0 %v508
    %2089 = vmatprep.subr.mxu0 0.0
    %2090 = vmatpush1.msra.mxu0 %v507
    %2091 = vmatprep.subr.mxu0 0.0
    %2092 = vmatpush2.msra.mxu0 0.0
    %2093 = vmatprep.subr.mxu0 0.0
    %2094 = vmatpush2.msra.mxu0 0.0
    %2095 = vmatprep.subr.mxu0 0.0
    %2096 = vmatpush2.msra.mxu0 0.0
    %2097 = vmatprep.subr.mxu0 0.0
    %2098 = vmatpush2.msra.mxu0 0.0
    %2099 = vmatprep.subr.mxu0 0.0
    %2100 = vmatpush2.msra.mxu0 0.0
    %2101 = vmatprep.subr.mxu0 0.0
    %2102 = vmatpush2.msra.mxu0 0.0
    %2103 = vmatprep.subr.mxu0 0.0
    %2104 = vmatpush2.msra.mxu0 0.0
    %2105 = vmatprep.subr.mxu0 0.0
    %2106 = vmatpush2.msra.mxu0 0.0
    %2107 = vmatprep.subr.mxu0 0.0
    %2108 = vmatpush2.msra.mxu0 0.0
    %2109 = vmatprep.subr.mxu0 0.0
    %2110 = vmatpush2.msra.mxu0 0.0
    %2111 = vmatprep.subr.mxu0 0.0
    %2112 = vmatpush2.msra.mxu0 0.0
    %2113 = vmatprep.subr.mxu0 0.0
    %2114 = vmatpush2.msra.mxu0 0.0
    %2115 = vmatprep.subr.mxu0 0.0
    %2116 = vmatpush2.msra.mxu0 0.0
    %2117 = vmatprep.subr.mxu0 0.0
    %2118 = vmatpush2.msra.mxu0 0.0
    %2119 = vmatprep.subr.mxu0 0.0
    %2120 = vmatpush2.msra.mxu0 0.0
    %2121 = vmatprep.subr.mxu0 0.0
    %2122 = vmatpush2.msra.mxu0 0.0
    %2123 = vmatprep.mubr.f32.mxu0 0.0
    %2124 = vmatmul.mubr.f32.gmra.mxu0 %v1977
    %v2125 = vpop.f32.mrf.mxu0
    %v2126 = vadd.f32 0.0, %v2125
    %v2127 = vpop.f32.mrf.mxu0
    %2128 = vdwg.mxu0
    %v2130 = vrot.slane %v2126, 4
    %v2132 = vadd.f32 %v414, %v2130
    %v2133 = vxor.u32 %v2132, 2147483648
    %v2134 = vmul.f32 %v2133, 1.442695
    %v2135 = vpow.pop %v2134
    %v2136 = vadd.f32 %v2135, 1.0
    %v2137 = vrcp.pop %v2136
    %v2138 = vmul.f32 1.0, %v2137
    %2139 = vmatprep.subr.mxu0 0.0
    %2140 = vmatpush1.msra.mxu0 0.0
    %2141 = vmatprep.subr.mxu0 0.0
    %2142 = vmatpush1.msra.mxu0 0.0
    %2143 = vmatprep.subr.mxu0 0.0
    %2144 = vmatpush1.msra.mxu0 0.0
    %2145 = vmatprep.subr.mxu0 0.0
    %2146 = vmatpush1.msra.mxu0 0.0
    %2147 = vmatprep.subr.mxu0 0.0
    %2148 = vmatpush1.msra.mxu0 0.0
    %2149 = vmatprep.subr.mxu0 0.0
    %2150 = vmatpush1.msra.mxu0 0.0
    %2151 = vmatprep.subr.mxu0 0.0
    %2152 = vmatpush1.msra.mxu0 0.0
    %2153 = vmatprep.subr.mxu0 0.0
    %2154 = vmatpush1.msra.mxu0 0.0
    %2155 = vmatprep.subr.mxu0 0.0
    %2156 = vmatpush1.msra.mxu0 0.0
    %2157 = vmatprep.subr.mxu0 0.0
    %2158 = vmatpush1.msra.mxu0 0.0
    %2159 = vmatprep.subr.mxu0 0.0
    %2160 = vmatpush1.msra.mxu0 0.0
    %2161 = vmatprep.subr.mxu0 0.0
    %2162 = vmatpush1.msra.mxu0 0.0
    %2163 = vmatprep.subr.mxu0 0.0
    %2164 = vmatpush1.msra.mxu0 %v514
    %2165 = vmatprep.subr.mxu0 0.0
    %2166 = vmatpush1.msra.mxu0 %v513
    %2167 = vmatprep.subr.mxu0 0.0
    %2168 = vmatpush1.msra.mxu0 %v512
    %2169 = vmatprep.subr.mxu0 0.0
    %2170 = vmatpush1.msra.mxu0 %v511
    %2171 = vmatprep.subr.mxu0 0.0
    %2172 = vmatpush2.msra.mxu0 0.0
    %2173 = vmatprep.subr.mxu0 0.0
    %2174 = vmatpush2.msra.mxu0 0.0
    %2175 = vmatprep.subr.mxu0 0.0
    %2176 = vmatpush2.msra.mxu0 0.0
    %2177 = vmatprep.subr.mxu0 0.0
    %2178 = vmatpush2.msra.mxu0 0.0
    %2179 = vmatprep.subr.mxu0 0.0
    %2180 = vmatpush2.msra.mxu0 0.0
    %2181 = vmatprep.subr.mxu0 0.0
    %2182 = vmatpush2.msra.mxu0 0.0
    %2183 = vmatprep.subr.mxu0 0.0
    %2184 = vmatpush2.msra.mxu0 0.0
    %2185 = vmatprep.subr.mxu0 0.0
    %2186 = vmatpush2.msra.mxu0 0.0
    %2187 = vmatprep.subr.mxu0 0.0
    %2188 = vmatpush2.msra.mxu0 0.0
    %2189 = vmatprep.subr.mxu0 0.0
    %2190 = vmatpush2.msra.mxu0 0.0
    %2191 = vmatprep.subr.mxu0 0.0
    %2192 = vmatpush2.msra.mxu0 0.0
    %2193 = vmatprep.subr.mxu0 0.0
    %2194 = vmatpush2.msra.mxu0 0.0
    %2195 = vmatprep.subr.mxu0 0.0
    %2196 = vmatpush2.msra.mxu0 0.0
    %2197 = vmatprep.subr.mxu0 0.0
    %2198 = vmatpush2.msra.mxu0 0.0
    %2199 = vmatprep.subr.mxu0 0.0
    %2200 = vmatpush2.msra.mxu0 0.0
    %2201 = vmatprep.subr.mxu0 0.0
    %2202 = vmatpush2.msra.mxu0 0.0
    %2203 = vmatprep.mubr.f32.mxu0 0.0
    %2204 = vmatmul.mubr.f32.gmra.mxu0 %v1977
    %v2205 = vpop.f32.mrf.mxu0
    %v2206 = vadd.f32 %v520, %v2205
    %v2207 = vpop.f32.mrf.mxu0
    %2208 = vdwg.mxu0
    %v2210 = vrot.slane %v2206, 4
    %v2212 = vmul.f32 %v2058, %v2210
    %v2213 = vadd.f32 %v500, %v2212
    %v2214 = vtanh.pop %v2213
    %v2215 = vsub.f32 1.0, %v2138
    %v2216 = vmul.f32 %v2215, %v2214
    %v2217 = vrot.slane %v1974, 6
    %v2219 = vmul.f32 %v2138, %v2217
    %v2220 = vadd.f32 %v2216, %v2219
    %v2222 = vrot.slane %v2220, 4
    %v2223 = vsel %vm522, %v2222, 0
    %2225 = vmatprep.subr.mxu0 0.0
    %2226 = vmatpush1.msra.mxu0 0.0
    %2227 = vmatprep.subr.mxu0 0.0
    %2228 = vmatpush1.msra.mxu0 0.0
    %2229 = vmatprep.subr.mxu0 0.0
    %2230 = vmatpush1.msra.mxu0 0.0
    %2231 = vmatprep.subr.mxu0 0.0
    %2232 = vmatpush1.msra.mxu0 0.0
    %2233 = vmatprep.subr.mxu0 0.0
    %2234 = vmatpush1.msra.mxu0 0.0
    %2235 = vmatprep.subr.mxu0 0.0
    %2236 = vmatpush1.msra.mxu0 0.0
    %2237 = vmatprep.subr.mxu0 0.0
    %2238 = vmatpush1.msra.mxu0 0.0
    %2239 = vmatprep.subr.mxu0 0.0
    %2240 = vmatpush1.msra.mxu0 0.0
    %2241 = vmatprep.subr.mxu0 0.0
    %2242 = vmatpush1.msra.mxu0 0.0
    %2243 = vmatprep.subr.mxu0 0.0
    %2244 = vmatpush1.msra.mxu0 0.0
    %2245 = vmatprep.subr.mxu0 0.0
    %2246 = vmatpush1.msra.mxu0 0.0
    %2247 = vmatprep.subr.mxu0 0.0
    %2248 = vmatpush1.msra.mxu0 0.0
    %2249 = vmatprep.subr.mxu0 0.0
    %2250 = vmatpush1.msra.mxu0 %v506
    %2251 = vmatprep.subr.mxu0 0.0
    %2252 = vmatpush1.msra.mxu0 %v505
    %2253 = vmatprep.subr.mxu0 0.0
    %2254 = vmatpush1.msra.mxu0 %v504
    %2255 = vmatprep.subr.mxu0 0.0
    %2256 = vmatpush1.msra.mxu0 %v503
    %2257 = vmatprep.subr.mxu0 0.0
    %2258 = vmatpush2.msra.mxu0 0.0
    %2259 = vmatprep.subr.mxu0 0.0
    %2260 = vmatpush2.msra.mxu0 0.0
    %2261 = vmatprep.subr.mxu0 0.0
    %2262 = vmatpush2.msra.mxu0 0.0
    %2263 = vmatprep.subr.mxu0 0.0
    %2264 = vmatpush2.msra.mxu0 0.0
    %2265 = vmatprep.subr.mxu0 0.0
    %2266 = vmatpush2.msra.mxu0 0.0
    %2267 = vmatprep.subr.mxu0 0.0
    %2268 = vmatpush2.msra.mxu0 0.0
    %2269 = vmatprep.subr.mxu0 0.0
    %2270 = vmatpush2.msra.mxu0 0.0
    %2271 = vmatprep.subr.mxu0 0.0
    %2272 = vmatpush2.msra.mxu0 0.0
    %2273 = vmatprep.subr.mxu0 0.0
    %2274 = vmatpush2.msra.mxu0 0.0
    %2275 = vmatprep.subr.mxu0 0.0
    %2276 = vmatpush2.msra.mxu0 0.0
    %2277 = vmatprep.subr.mxu0 0.0
    %2278 = vmatpush2.msra.mxu0 0.0
    %2279 = vmatprep.subr.mxu0 0.0
    %2280 = vmatpush2.msra.mxu0 0.0
    %2281 = vmatprep.subr.mxu0 0.0
    %2282 = vmatpush2.msra.mxu0 0.0
    %2283 = vmatprep.subr.mxu0 0.0
    %2284 = vmatpush2.msra.mxu0 0.0
    %2285 = vmatprep.subr.mxu0 0.0
    %2286 = vmatpush2.msra.mxu0 0.0
    %2287 = vmatprep.subr.mxu0 0.0
    %2288 = vmatpush2.msra.mxu0 0.0
    %2289 = vmatprep.mubr.f32.mxu0 0.0
    %2290 = vmatmul.mubr.f32.gmra.mxu0 %v2223
    %v2291 = vpop.f32.mrf.mxu0
    %v2292 = vadd.f32 0.0, %v2291
    %v2293 = vpop.f32.mrf.mxu0
    %2294 = vdwg.mxu0
    %v2296 = vrot.slane %v2292, 2
    %v2298 = vadd.f32 %v328, %v2296
    %v2299 = vxor.u32 %v2298, 2147483648
    %v2300 = vmul.f32 %v2299, 1.442695
    %v2301 = vpow.pop %v2300
    %v2302 = vadd.f32 %v2301, 1.0
    %v2303 = vrcp.pop %v2302
    %v2304 = vmul.f32 1.0, %v2303
    %2305 = vmatprep.subr.mxu0 0.0
    %2306 = vmatpush1.msra.mxu0 0.0
    %2307 = vmatprep.subr.mxu0 0.0
    %2308 = vmatpush1.msra.mxu0 0.0
    %2309 = vmatprep.subr.mxu0 0.0
    %2310 = vmatpush1.msra.mxu0 0.0
    %2311 = vmatprep.subr.mxu0 0.0
    %2312 = vmatpush1.msra.mxu0 0.0
    %2313 = vmatprep.subr.mxu0 0.0
    %2314 = vmatpush1.msra.mxu0 0.0
    %2315 = vmatprep.subr.mxu0 0.0
    %2316 = vmatpush1.msra.mxu0 0.0
    %2317 = vmatprep.subr.mxu0 0.0
    %2318 = vmatpush1.msra.mxu0 0.0
    %2319 = vmatprep.subr.mxu0 0.0
    %2320 = vmatpush1.msra.mxu0 0.0
    %2321 = vmatprep.subr.mxu0 0.0
    %2322 = vmatpush1.msra.mxu0 0.0
    %2323 = vmatprep.subr.mxu0 0.0
    %2324 = vmatpush1.msra.mxu0 0.0
    %2325 = vmatprep.subr.mxu0 0.0
    %2326 = vmatpush1.msra.mxu0 0.0
    %2327 = vmatprep.subr.mxu0 0.0
    %2328 = vmatpush1.msra.mxu0 0.0
    %2329 = vmatprep.subr.mxu0 0.0
    %2330 = vmatpush1.msra.mxu0 %v510
    %2331 = vmatprep.subr.mxu0 0.0
    %2332 = vmatpush1.msra.mxu0 %v509
    %2333 = vmatprep.subr.mxu0 0.0
    %2334 = vmatpush1.msra.mxu0 %v508
    %2335 = vmatprep.subr.mxu0 0.0
    %2336 = vmatpush1.msra.mxu0 %v507
    %2337 = vmatprep.subr.mxu0 0.0
    %2338 = vmatpush2.msra.mxu0 0.0
    %2339 = vmatprep.subr.mxu0 0.0
    %2340 = vmatpush2.msra.mxu0 0.0
    %2341 = vmatprep.subr.mxu0 0.0
    %2342 = vmatpush2.msra.mxu0 0.0
    %2343 = vmatprep.subr.mxu0 0.0
    %2344 = vmatpush2.msra.mxu0 0.0
    %2345 = vmatprep.subr.mxu0 0.0
    %2346 = vmatpush2.msra.mxu0 0.0
    %2347 = vmatprep.subr.mxu0 0.0
    %2348 = vmatpush2.msra.mxu0 0.0
    %2349 = vmatprep.subr.mxu0 0.0
    %2350 = vmatpush2.msra.mxu0 0.0
    %2351 = vmatprep.subr.mxu0 0.0
    %2352 = vmatpush2.msra.mxu0 0.0
    %2353 = vmatprep.subr.mxu0 0.0
    %2354 = vmatpush2.msra.mxu0 0.0
    %2355 = vmatprep.subr.mxu0 0.0
    %2356 = vmatpush2.msra.mxu0 0.0
    %2357 = vmatprep.subr.mxu0 0.0
    %2358 = vmatpush2.msra.mxu0 0.0
    %2359 = vmatprep.subr.mxu0 0.0
    %2360 = vmatpush2.msra.mxu0 0.0
    %2361 = vmatprep.subr.mxu0 0.0
    %2362 = vmatpush2.msra.mxu0 0.0
    %2363 = vmatprep.subr.mxu0 0.0
    %2364 = vmatpush2.msra.mxu0 0.0
    %2365 = vmatprep.subr.mxu0 0.0
    %2366 = vmatpush2.msra.mxu0 0.0
    %2367 = vmatprep.subr.mxu0 0.0
    %2368 = vmatpush2.msra.mxu0 0.0
    %2369 = vmatprep.mubr.f32.mxu0 0.0
    %2370 = vmatmul.mubr.f32.gmra.mxu0 %v2223
    %v2371 = vpop.f32.mrf.mxu0
    %v2372 = vadd.f32 0.0, %v2371
    %v2373 = vpop.f32.mrf.mxu0
    %2374 = vdwg.mxu0
    %v2376 = vrot.slane %v2372, 2
    %v2378 = vadd.f32 %v414, %v2376
    %v2379 = vxor.u32 %v2378, 2147483648
    %v2380 = vmul.f32 %v2379, 1.442695
    %v2381 = vpow.pop %v2380
    %v2382 = vadd.f32 %v2381, 1.0
    %v2383 = vrcp.pop %v2382
    %v2384 = vmul.f32 1.0, %v2383
    %2385 = vmatprep.subr.mxu0 0.0
    %2386 = vmatpush1.msra.mxu0 0.0
    %2387 = vmatprep.subr.mxu0 0.0
    %2388 = vmatpush1.msra.mxu0 0.0
    %2389 = vmatprep.subr.mxu0 0.0
    %2390 = vmatpush1.msra.mxu0 0.0
    %2391 = vmatprep.subr.mxu0 0.0
    %2392 = vmatpush1.msra.mxu0 0.0
    %2393 = vmatprep.subr.mxu0 0.0
    %2394 = vmatpush1.msra.mxu0 0.0
    %2395 = vmatprep.subr.mxu0 0.0
    %2396 = vmatpush1.msra.mxu0 0.0
    %2397 = vmatprep.subr.mxu0 0.0
    %2398 = vmatpush1.msra.mxu0 0.0
    %2399 = vmatprep.subr.mxu0 0.0
    %2400 = vmatpush1.msra.mxu0 0.0
    %2401 = vmatprep.subr.mxu0 0.0
    %2402 = vmatpush1.msra.mxu0 0.0
    %2403 = vmatprep.subr.mxu0 0.0
    %2404 = vmatpush1.msra.mxu0 0.0
    %2405 = vmatprep.subr.mxu0 0.0
    %2406 = vmatpush1.msra.mxu0 0.0
    %2407 = vmatprep.subr.mxu0 0.0
    %2408 = vmatpush1.msra.mxu0 0.0
    %2409 = vmatprep.subr.mxu0 0.0
    %2410 = vmatpush1.msra.mxu0 %v514
    %2411 = vmatprep.subr.mxu0 0.0
    %2412 = vmatpush1.msra.mxu0 %v513
    %2413 = vmatprep.subr.mxu0 0.0
    %2414 = vmatpush1.msra.mxu0 %v512
    %2415 = vmatprep.subr.mxu0 0.0
    %2416 = vmatpush1.msra.mxu0 %v511
    %2417 = vmatprep.subr.mxu0 0.0
    %2418 = vmatpush2.msra.mxu0 0.0
    %2419 = vmatprep.subr.mxu0 0.0
    %2420 = vmatpush2.msra.mxu0 0.0
    %2421 = vmatprep.subr.mxu0 0.0
    %2422 = vmatpush2.msra.mxu0 0.0
    %2423 = vmatprep.subr.mxu0 0.0
    %2424 = vmatpush2.msra.mxu0 0.0
    %2425 = vmatprep.subr.mxu0 0.0
    %2426 = vmatpush2.msra.mxu0 0.0
    %2427 = vmatprep.subr.mxu0 0.0
    %2428 = vmatpush2.msra.mxu0 0.0
    %2429 = vmatprep.subr.mxu0 0.0
    %2430 = vmatpush2.msra.mxu0 0.0
    %2431 = vmatprep.subr.mxu0 0.0
    %2432 = vmatpush2.msra.mxu0 0.0
    %2433 = vmatprep.subr.mxu0 0.0
    %2434 = vmatpush2.msra.mxu0 0.0
    %2435 = vmatprep.subr.mxu0 0.0
    %2436 = vmatpush2.msra.mxu0 0.0
    %2437 = vmatprep.subr.mxu0 0.0
    %2438 = vmatpush2.msra.mxu0 0.0
    %2439 = vmatprep.subr.mxu0 0.0
    %2440 = vmatpush2.msra.mxu0 0.0
    %2441 = vmatprep.subr.mxu0 0.0
    %2442 = vmatpush2.msra.mxu0 0.0
    %2443 = vmatprep.subr.mxu0 0.0
    %2444 = vmatpush2.msra.mxu0 0.0
    %2445 = vmatprep.subr.mxu0 0.0
    %2446 = vmatpush2.msra.mxu0 0.0
    %2447 = vmatprep.subr.mxu0 0.0
    %2448 = vmatpush2.msra.mxu0 0.0
    %2449 = vmatprep.mubr.f32.mxu0 0.0
    %2450 = vmatmul.mubr.f32.gmra.mxu0 %v2223
    %v2451 = vpop.f32.mrf.mxu0
    %v2452 = vadd.f32 %v520, %v2451
    %v2453 = vpop.f32.mrf.mxu0
    %2454 = vdwg.mxu0
    %v2456 = vrot.slane %v2452, 2
    %v2458 = vmul.f32 %v2304, %v2456
    %v2459 = vadd.f32 %v500, %v2458
    %v2460 = vtanh.pop %v2459
    %v2461 = vsub.f32 1.0, %v2384
    %v2462 = vmul.f32 %v2461, %v2460
    %v2463 = vrot.slane %v2220, 6
    %v2465 = vmul.f32 %v2384, %v2463
    %v2466 = vadd.f32 %v2462, %v2465
    %vm2467 = vcmask 1041408
    %v2468 = vsel %vm2467, %v756, %v1001
    %v2469 = vsel %vm252, %v2468, %v1247
    %vm2470 = vcmask 1045504
    %v2471 = vsel %vm2470, %v2469, %v1493
    %v2472 = vsel %vm2467, %v1729, %v1974
    %v2473 = vsel %vm252, %v2472, %v2220
    %v2474 = vsel %vm2470, %v2473, %v2466
    %v2475 = vld [vmem:[#allocation10] sm:$0xff]
    %v2476 = vld [vmem:[#allocation10 + $0x8] sm:$0xff]
    %v2477 = vld [vmem:[#allocation10 + $0x10] sm:$0xff]
    %v2478 = vld [vmem:[#allocation10 + $0x18] sm:$0xff]
    %v2479 = vld [vmem:[%s17] sm:$0x1]
    %v2481 = vlaneseq
    %v2482 = vshrl.u32 %v2481, 7
    %v2483 = vsub.s32 0, %v2482
    %v2484 = vrot.slane %v2479, %v2483
    %v2487 = vsel %vm522, %v2471, 0
    %v2490 = vsel %vm522, %v2474, 0
    %2492 = vmatprep.subr.mxu0 0.0
    %2493 = vmatpush1.msra.mxu0 0.0
    %2494 = vmatprep.subr.mxu0 0.0
    %2495 = vmatpush1.msra.mxu0 0.0
    %2496 = vmatprep.subr.mxu0 0.0
    %2497 = vmatpush1.msra.mxu0 0.0
    %2498 = vmatprep.subr.mxu0 0.0
    %2499 = vmatpush1.msra.mxu0 0.0
    %2500 = vmatprep.subr.mxu0 0.0
    %2501 = vmatpush1.msra.mxu0 0.0
    %2502 = vmatprep.subr.mxu0 0.0
    %2503 = vmatpush1.msra.mxu0 0.0
    %2504 = vmatprep.subr.mxu0 0.0
    %2505 = vmatpush1.msra.mxu0 0.0
    %2506 = vmatprep.subr.mxu0 0.0
    %2507 = vmatpush1.msra.mxu0 0.0
    %2508 = vmatprep.subr.mxu0 0.0
    %2509 = vmatpush1.msra.mxu0 0.0
    %2510 = vmatprep.subr.mxu0 0.0
    %2511 = vmatpush1.msra.mxu0 0.0
    %2512 = vmatprep.subr.mxu0 0.0
    %2513 = vmatpush1.msra.mxu0 0.0
    %2514 = vmatprep.subr.mxu0 0.0
    %2515 = vmatpush1.msra.mxu0 0.0
    %2516 = vmatprep.subr.mxu0 0.0
    %2517 = vmatpush1.msra.mxu0 %v2478
    %2518 = vmatprep.subr.mxu0 0.0
    %2519 = vmatpush1.msra.mxu0 %v2477
    %2520 = vmatprep.subr.mxu0 0.0
    %2521 = vmatpush1.msra.mxu0 %v2476
    %2522 = vmatprep.subr.mxu0 0.0
    %2523 = vmatpush1.msra.mxu0 %v2475
    %2524 = vmatprep.subr.mxu0 0.0
    %2525 = vmatpush2.msra.mxu0 0.0
    %2526 = vmatprep.subr.mxu0 0.0
    %2527 = vmatpush2.msra.mxu0 0.0
    %2528 = vmatprep.subr.mxu0 0.0
    %2529 = vmatpush2.msra.mxu0 0.0
    %2530 = vmatprep.subr.mxu0 0.0
    %2531 = vmatpush2.msra.mxu0 0.0
    %2532 = vmatprep.subr.mxu0 0.0
    %2533 = vmatpush2.msra.mxu0 0.0
    %2534 = vmatprep.subr.mxu0 0.0
    %2535 = vmatpush2.msra.mxu0 0.0
    %2536 = vmatprep.subr.mxu0 0.0
    %2537 = vmatpush2.msra.mxu0 0.0
    %2538 = vmatprep.subr.mxu0 0.0
    %2539 = vmatpush2.msra.mxu0 0.0
    %2540 = vmatprep.subr.mxu0 0.0
    %2541 = vmatpush2.msra.mxu0 0.0
    %2542 = vmatprep.subr.mxu0 0.0
    %2543 = vmatpush2.msra.mxu0 0.0
    %2544 = vmatprep.subr.mxu0 0.0
    %2545 = vmatpush2.msra.mxu0 0.0
    %2546 = vmatprep.subr.mxu0 0.0
    %2547 = vmatpush2.msra.mxu0 0.0
    %2548 = vmatprep.subr.mxu0 0.0
    %2549 = vmatpush2.msra.mxu0 0.0
    %2550 = vmatprep.subr.mxu0 0.0
    %2551 = vmatpush2.msra.mxu0 0.0
    %2552 = vmatprep.subr.mxu0 0.0
    %2553 = vmatpush2.msra.mxu0 0.0
    %2554 = vmatprep.subr.mxu0 0.0
    %2555 = vmatpush2.msra.mxu0 0.0
    %2556 = vmatprep.mubr.f32.mxu0 0.0
    %2557 = vmatmul.mubr.f32.gmra.mxu0 %v2487
    %v2558 = vpop.f32.mrf.mxu0
    %v2559 = vadd.f32 %v2484, %v2558
    %v2560 = vpop.f32.mrf.mxu0
    %2561 = vmatprep.mubr.f32.mxu0 0.0
    %2562 = vmatmul.mubr.f32.gmra.mxu0 %v2490
    %v2563 = vpop.f32.mrf.mxu0
    %v2564 = vadd.f32 %v2484, %v2563
    %v2565 = vpop.f32.mrf.mxu0
    %2566 = vdwg.mxu0
    %v2567 = vld [vmem:[#allocation12] sm:$0xff]
    %v2568 = vld [vmem:[#allocation12 + $0x8] sm:$0xff]
    %v2569 = vld [vmem:[#allocation12 + $0x10] sm:$0xff]
    %v2570 = vld [vmem:[#allocation12 + $0x18] sm:$0xff]
    %v2571 = vld [vmem:[%s18] sm:$0x1]
    %v2573 = vlaneseq
    %v2574 = vshrl.u32 %v2573, 7
    %v2575 = vsub.s32 0, %v2574
    %v2576 = vrot.slane %v2571, %v2575
    %2578 = vmatprep.subr.mxu0 0.0
    %2579 = vmatpush1.msra.mxu0 0.0
    %2580 = vmatprep.subr.mxu0 0.0
    %2581 = vmatpush1.msra.mxu0 0.0
    %2582 = vmatprep.subr.mxu0 0.0
    %2583 = vmatpush1.msra.mxu0 0.0
    %2584 = vmatprep.subr.mxu0 0.0
    %2585 = vmatpush1.msra.mxu0 0.0
    %2586 = vmatprep.subr.mxu0 0.0
    %2587 = vmatpush1.msra.mxu0 0.0
    %2588 = vmatprep.subr.mxu0 0.0
    %2589 = vmatpush1.msra.mxu0 0.0
    %2590 = vmatprep.subr.mxu0 0.0
    %2591 = vmatpush1.msra.mxu0 0.0
    %2592 = vmatprep.subr.mxu0 0.0
    %2593 = vmatpush1.msra.mxu0 0.0
    %2594 = vmatprep.subr.mxu0 0.0
    %2595 = vmatpush1.msra.mxu0 0.0
    %2596 = vmatprep.subr.mxu0 0.0
    %2597 = vmatpush1.msra.mxu0 0.0
    %2598 = vmatprep.subr.mxu0 0.0
    %2599 = vmatpush1.msra.mxu0 0.0
    %2600 = vmatprep.subr.mxu0 0.0
    %2601 = vmatpush1.msra.mxu0 0.0
    %2602 = vmatprep.subr.mxu0 0.0
    %2603 = vmatpush1.msra.mxu0 %v2570
    %2604 = vmatprep.subr.mxu0 0.0
    %2605 = vmatpush1.msra.mxu0 %v2569
    %2606 = vmatprep.subr.mxu0 0.0
    %2607 = vmatpush1.msra.mxu0 %v2568
    %2608 = vmatprep.subr.mxu0 0.0
    %2609 = vmatpush1.msra.mxu0 %v2567
    %2610 = vmatprep.subr.mxu0 0.0
    %2611 = vmatpush2.msra.mxu0 0.0
    %2612 = vmatprep.subr.mxu0 0.0
    %2613 = vmatpush2.msra.mxu0 0.0
    %2614 = vmatprep.subr.mxu0 0.0
    %2615 = vmatpush2.msra.mxu0 0.0
    %2616 = vmatprep.subr.mxu0 0.0
    %2617 = vmatpush2.msra.mxu0 0.0
    %2618 = vmatprep.subr.mxu0 0.0
    %2619 = vmatpush2.msra.mxu0 0.0
    %2620 = vmatprep.subr.mxu0 0.0
    %2621 = vmatpush2.msra.mxu0 0.0
    %2622 = vmatprep.subr.mxu0 0.0
    %2623 = vmatpush2.msra.mxu0 0.0
    %2624 = vmatprep.subr.mxu0 0.0
    %2625 = vmatpush2.msra.mxu0 0.0
    %2626 = vmatprep.subr.mxu0 0.0
    %2627 = vmatpush2.msra.mxu0 0.0
    %2628 = vmatprep.subr.mxu0 0.0
    %2629 = vmatpush2.msra.mxu0 0.0
    %2630 = vmatprep.subr.mxu0 0.0
    %2631 = vmatpush2.msra.mxu0 0.0
    %2632 = vmatprep.subr.mxu0 0.0
    %2633 = vmatpush2.msra.mxu0 0.0
    %2634 = vmatprep.subr.mxu0 0.0
    %2635 = vmatpush2.msra.mxu0 0.0
    %2636 = vmatprep.subr.mxu0 0.0
    %2637 = vmatpush2.msra.mxu0 0.0
    %2638 = vmatprep.subr.mxu0 0.0
    %2639 = vmatpush2.msra.mxu0 0.0
    %2640 = vmatprep.subr.mxu0 0.0
    %2641 = vmatpush2.msra.mxu0 0.0
    %2642 = vmatprep.mubr.f32.mxu0 0.0
    %2643 = vmatmul.mubr.f32.gmra.mxu0 %v2487
    %v2644 = vpop.f32.mrf.mxu0
    %v2645 = vadd.f32 %v2576, %v2644
    %v2646 = vpop.f32.mrf.mxu0
    %2647 = vmatprep.mubr.f32.mxu0 0.0
    %2648 = vmatmul.mubr.f32.gmra.mxu0 %v2490
    %v2649 = vpop.f32.mrf.mxu0
    %v2650 = vadd.f32 %v2576, %v2649
    %v2651 = vpop.f32.mrf.mxu0
    %2652 = vdwg.mxu0
    %v2653 = vld [vmem:[#allocation13] sm:$0xff]
    %v2654 = vld [vmem:[#allocation13 + $0x8] sm:$0xff]
    %v2655 = vld [vmem:[#allocation13 + $0x10] sm:$0xff]
    %v2656 = vld [vmem:[#allocation13 + $0x18] sm:$0xff]
    %v2657 = vld [vmem:[%s19] sm:$0x1]
    %v2659 = vlaneseq
    %v2660 = vshrl.u32 %v2659, 7
    %v2661 = vsub.s32 0, %v2660
    %v2662 = vrot.slane %v2657, %v2661
    %2664 = vmatprep.subr.mxu0 0.0
    %2665 = vmatpush1.msra.mxu0 0.0
    %2666 = vmatprep.subr.mxu0 0.0
    %2667 = vmatpush1.msra.mxu0 0.0
    %2668 = vmatprep.subr.mxu0 0.0
    %2669 = vmatpush1.msra.mxu0 0.0
    %2670 = vmatprep.subr.mxu0 0.0
    %2671 = vmatpush1.msra.mxu0 0.0
    %2672 = vmatprep.subr.mxu0 0.0
    %2673 = vmatpush1.msra.mxu0 0.0
    %2674 = vmatprep.subr.mxu0 0.0
    %2675 = vmatpush1.msra.mxu0 0.0
    %2676 = vmatprep.subr.mxu0 0.0
    %2677 = vmatpush1.msra.mxu0 0.0
    %2678 = vmatprep.subr.mxu0 0.0
    %2679 = vmatpush1.msra.mxu0 0.0
    %2680 = vmatprep.subr.mxu0 0.0
    %2681 = vmatpush1.msra.mxu0 0.0
    %2682 = vmatprep.subr.mxu0 0.0
    %2683 = vmatpush1.msra.mxu0 0.0
    %2684 = vmatprep.subr.mxu0 0.0
    %2685 = vmatpush1.msra.mxu0 0.0
    %2686 = vmatprep.subr.mxu0 0.0
    %2687 = vmatpush1.msra.mxu0 0.0
    %2688 = vmatprep.subr.mxu0 0.0
    %2689 = vmatpush1.msra.mxu0 %v2656
    %2690 = vmatprep.subr.mxu0 0.0
    %2691 = vmatpush1.msra.mxu0 %v2655
    %2692 = vmatprep.subr.mxu0 0.0
    %2693 = vmatpush1.msra.mxu0 %v2654
    %2694 = vmatprep.subr.mxu0 0.0
    %2695 = vmatpush1.msra.mxu0 %v2653
    %2696 = vmatprep.subr.mxu0 0.0
    %2697 = vmatpush2.msra.mxu0 0.0
    %2698 = vmatprep.subr.mxu0 0.0
    %2699 = vmatpush2.msra.mxu0 0.0
    %2700 = vmatprep.subr.mxu0 0.0
    %2701 = vmatpush2.msra.mxu0 0.0
    %2702 = vmatprep.subr.mxu0 0.0
    %2703 = vmatpush2.msra.mxu0 0.0
    %2704 = vmatprep.subr.mxu0 0.0
    %2705 = vmatpush2.msra.mxu0 0.0
    %2706 = vmatprep.subr.mxu0 0.0
    %2707 = vmatpush2.msra.mxu0 0.0
    %2708 = vmatprep.subr.mxu0 0.0
    %2709 = vmatpush2.msra.mxu0 0.0
    %2710 = vmatprep.subr.mxu0 0.0
    %2711 = vmatpush2.msra.mxu0 0.0
    %2712 = vmatprep.subr.mxu0 0.0
    %2713 = vmatpush2.msra.mxu0 0.0
    %2714 = vmatprep.subr.mxu0 0.0
    %2715 = vmatpush2.msra.mxu0 0.0
    %2716 = vmatprep.subr.mxu0 0.0
    %2717 = vmatpush2.msra.mxu0 0.0
    %2718 = vmatprep.subr.mxu0 0.0
    %2719 = vmatpush2.msra.mxu0 0.0
    %2720 = vmatprep.subr.mxu0 0.0
    %2721 = vmatpush2.msra.mxu0 0.0
    %2722 = vmatprep.subr.mxu0 0.0
    %2723 = vmatpush2.msra.mxu0 0.0
    %2724 = vmatprep.subr.mxu0 0.0
    %2725 = vmatpush2.msra.mxu0 0.0
    %2726 = vmatprep.subr.mxu0 0.0
    %2727 = vmatpush2.msra.mxu0 0.0
    %2728 = vmatprep.mubr.f32.mxu0 0.0
    %2729 = vmatmul.mubr.f32.gmra.mxu0 %v2487
    %v2730 = vpop.f32.mrf.mxu0
    %v2731 = vadd.f32 %v2662, %v2730
    %v2732 = vpop.f32.mrf.mxu0
    %2733 = vmatprep.mubr.f32.mxu0 0.0
    %2734 = vmatmul.mubr.f32.gmra.mxu0 %v2490
    %v2735 = vpop.f32.mrf.mxu0
    %v2736 = vadd.f32 %v2662, %v2735
    %v2737 = vpop.f32.mrf.mxu0
    %2738 = vdwg.mxu0
    %v2739 = vld [vmem:[#allocation15] sm:$0xff]
    %v2740 = vld [vmem:[#allocation15 + $0x8] sm:$0xff]
    %v2741 = vld [vmem:[#allocation15 + $0x10] sm:$0xff]
    %v2742 = vld [vmem:[#allocation15 + $0x18] sm:$0xff]
    %v2743 = vld [vmem:[#allocation16] sm:$0xff]
    %v2744 = vld [vmem:[#allocation16 + $0x8] sm:$0xff]
    %v2745 = vld [vmem:[#allocation16 + $0x10] sm:$0xff]
    %v2746 = vld [vmem:[#allocation16 + $0x18] sm:$0xff]
    %v2747 = vld [vmem:[#allocation18] sm:$0xff]
    %v2748 = vld [vmem:[#allocation18 + $0x8] sm:$0xff]
    %v2749 = vld [vmem:[#allocation18 + $0x10] sm:$0xff]
    %v2750 = vld [vmem:[#allocation18 + $0x18] sm:$0xff]
    %v2751 = vld [vmem:[%s20] sm:$0x1]
    %v2753 = vlaneseq
    %v2754 = vshrl.u32 %v2753, 7
    %v2755 = vsub.s32 0, %v2754
    %v2756 = vrot.slane %v2751, %v2755
    %2758 = vmatprep.subr.mxu0 0.0
    %2759 = vmatpush1.msra.mxu0 0.0
    %2760 = vmatprep.subr.mxu0 0.0
    %2761 = vmatpush1.msra.mxu0 0.0
    %2762 = vmatprep.subr.mxu0 0.0
    %2763 = vmatpush1.msra.mxu0 0.0
    %2764 = vmatprep.subr.mxu0 0.0
    %2765 = vmatpush1.msra.mxu0 0.0
    %2766 = vmatprep.subr.mxu0 0.0
    %2767 = vmatpush1.msra.mxu0 0.0
    %2768 = vmatprep.subr.mxu0 0.0
    %2769 = vmatpush1.msra.mxu0 0.0
    %2770 = vmatprep.subr.mxu0 0.0
    %2771 = vmatpush1.msra.mxu0 0.0
    %2772 = vmatprep.subr.mxu0 0.0
    %2773 = vmatpush1.msra.mxu0 0.0
    %2774 = vmatprep.subr.mxu0 0.0
    %2775 = vmatpush1.msra.mxu0 0.0
    %2776 = vmatprep.subr.mxu0 0.0
    %2777 = vmatpush1.msra.mxu0 0.0
    %2778 = vmatprep.subr.mxu0 0.0
    %2779 = vmatpush1.msra.mxu0 0.0
    %2780 = vmatprep.subr.mxu0 0.0
    %2781 = vmatpush1.msra.mxu0 0.0
    %2782 = vmatprep.subr.mxu0 0.0
    %2783 = vmatpush1.msra.mxu0 %v2742
    %2784 = vmatprep.subr.mxu0 0.0
    %2785 = vmatpush1.msra.mxu0 %v2741
    %2786 = vmatprep.subr.mxu0 0.0
    %2787 = vmatpush1.msra.mxu0 %v2740
    %2788 = vmatprep.subr.mxu0 0.0
    %2789 = vmatpush1.msra.mxu0 %v2739
    %2790 = vmatprep.subr.mxu0 0.0
    %2791 = vmatpush2.msra.mxu0 0.0
    %2792 = vmatprep.subr.mxu0 0.0
    %2793 = vmatpush2.msra.mxu0 0.0
    %2794 = vmatprep.subr.mxu0 0.0
    %2795 = vmatpush2.msra.mxu0 0.0
    %2796 = vmatprep.subr.mxu0 0.0
    %2797 = vmatpush2.msra.mxu0 0.0
    %2798 = vmatprep.subr.mxu0 0.0
    %2799 = vmatpush2.msra.mxu0 0.0
    %2800 = vmatprep.subr.mxu0 0.0
    %2801 = vmatpush2.msra.mxu0 0.0
    %2802 = vmatprep.subr.mxu0 0.0
    %2803 = vmatpush2.msra.mxu0 0.0
    %2804 = vmatprep.subr.mxu0 0.0
    %2805 = vmatpush2.msra.mxu0 0.0
    %2806 = vmatprep.subr.mxu0 0.0
    %2807 = vmatpush2.msra.mxu0 0.0
    %2808 = vmatprep.subr.mxu0 0.0
    %2809 = vmatpush2.msra.mxu0 0.0
    %2810 = vmatprep.subr.mxu0 0.0
    %2811 = vmatpush2.msra.mxu0 0.0
    %2812 = vmatprep.subr.mxu0 0.0
    %2813 = vmatpush2.msra.mxu0 0.0
    %2814 = vmatprep.subr.mxu0 0.0
    %2815 = vmatpush2.msra.mxu0 0.0
    %2816 = vmatprep.subr.mxu0 0.0
    %2817 = vmatpush2.msra.mxu0 0.0
    %2818 = vmatprep.subr.mxu0 0.0
    %2819 = vmatpush2.msra.mxu0 0.0
    %2820 = vmatprep.subr.mxu0 0.0
    %2821 = vmatpush2.msra.mxu0 0.0
    %2822 = vmatprep.mubr.f32.mxu0 0.0
    %2823 = vmatmul.mubr.f32.gmra.mxu0 %v524
    %v2824 = vpop.f32.mrf.mxu0
    %v2825 = vadd.f32 0.0, %v2824
    %v2826 = vpop.f32.mrf.mxu0
    %2827 = vdwg.mxu0
    %v2828 = vadd.f32 %v2559, %v2825
    %v2829 = vxor.u32 %v2828, 2147483648
    %v2830 = vmul.f32 %v2829, 1.442695
    %v2831 = vpow.pop %v2830
    %v2832 = vadd.f32 %v2831, 1.0
    %v2833 = vrcp.pop %v2832
    %v2834 = vmul.f32 1.0, %v2833
    %2835 = vmatprep.subr.mxu0 0.0
    %2836 = vmatpush1.msra.mxu0 0.0
    %2837 = vmatprep.subr.mxu0 0.0
    %2838 = vmatpush1.msra.mxu0 0.0
    %2839 = vmatprep.subr.mxu0 0.0
    %2840 = vmatpush1.msra.mxu0 0.0
    %2841 = vmatprep.subr.mxu0 0.0
    %2842 = vmatpush1.msra.mxu0 0.0
    %2843 = vmatprep.subr.mxu0 0.0
    %2844 = vmatpush1.msra.mxu0 0.0
    %2845 = vmatprep.subr.mxu0 0.0
    %2846 = vmatpush1.msra.mxu0 0.0
    %2847 = vmatprep.subr.mxu0 0.0
    %2848 = vmatpush1.msra.mxu0 0.0
    %2849 = vmatprep.subr.mxu0 0.0
    %2850 = vmatpush1.msra.mxu0 0.0
    %2851 = vmatprep.subr.mxu0 0.0
    %2852 = vmatpush1.msra.mxu0 0.0
    %2853 = vmatprep.subr.mxu0 0.0
    %2854 = vmatpush1.msra.mxu0 0.0
    %2855 = vmatprep.subr.mxu0 0.0
    %2856 = vmatpush1.msra.mxu0 0.0
    %2857 = vmatprep.subr.mxu0 0.0
    %2858 = vmatpush1.msra.mxu0 0.0
    %2859 = vmatprep.subr.mxu0 0.0
    %2860 = vmatpush1.msra.mxu0 %v2746
    %2861 = vmatprep.subr.mxu0 0.0
    %2862 = vmatpush1.msra.mxu0 %v2745
    %2863 = vmatprep.subr.mxu0 0.0
    %2864 = vmatpush1.msra.mxu0 %v2744
    %2865 = vmatprep.subr.mxu0 0.0
    %2866 = vmatpush1.msra.mxu0 %v2743
    %2867 = vmatprep.subr.mxu0 0.0
    %2868 = vmatpush2.msra.mxu0 0.0
    %2869 = vmatprep.subr.mxu0 0.0
    %2870 = vmatpush2.msra.mxu0 0.0
    %2871 = vmatprep.subr.mxu0 0.0
    %2872 = vmatpush2.msra.mxu0 0.0
    %2873 = vmatprep.subr.mxu0 0.0
    %2874 = vmatpush2.msra.mxu0 0.0
    %2875 = vmatprep.subr.mxu0 0.0
    %2876 = vmatpush2.msra.mxu0 0.0
    %2877 = vmatprep.subr.mxu0 0.0
    %2878 = vmatpush2.msra.mxu0 0.0
    %2879 = vmatprep.subr.mxu0 0.0
    %2880 = vmatpush2.msra.mxu0 0.0
    %2881 = vmatprep.subr.mxu0 0.0
    %2882 = vmatpush2.msra.mxu0 0.0
    %2883 = vmatprep.subr.mxu0 0.0
    %2884 = vmatpush2.msra.mxu0 0.0
    %2885 = vmatprep.subr.mxu0 0.0
    %2886 = vmatpush2.msra.mxu0 0.0
    %2887 = vmatprep.subr.mxu0 0.0
    %2888 = vmatpush2.msra.mxu0 0.0
    %2889 = vmatprep.subr.mxu0 0.0
    %2890 = vmatpush2.msra.mxu0 0.0
    %2891 = vmatprep.subr.mxu0 0.0
    %2892 = vmatpush2.msra.mxu0 0.0
    %2893 = vmatprep.subr.mxu0 0.0
    %2894 = vmatpush2.msra.mxu0 0.0
    %2895 = vmatprep.subr.mxu0 0.0
    %2896 = vmatpush2.msra.mxu0 0.0
    %2897 = vmatprep.subr.mxu0 0.0
    %2898 = vmatpush2.msra.mxu0 0.0
    %2899 = vmatprep.mubr.f32.mxu0 0.0
    %2900 = vmatmul.mubr.f32.gmra.mxu0 %v524
    %v2901 = vpop.f32.mrf.mxu0
    %v2902 = vadd.f32 0.0, %v2901
    %v2903 = vpop.f32.mrf.mxu0
    %2904 = vdwg.mxu0
    %v2905 = vadd.f32 %v2645, %v2902
    %v2906 = vxor.u32 %v2905, 2147483648
    %v2907 = vmul.f32 %v2906, 1.442695
    %v2908 = vpow.pop %v2907
    %v2909 = vadd.f32 %v2908, 1.0
    %v2910 = vrcp.pop %v2909
    %v2911 = vmul.f32 1.0, %v2910
    %2912 = vmatprep.subr.mxu0 0.0
    %2913 = vmatpush1.msra.mxu0 0.0
    %2914 = vmatprep.subr.mxu0 0.0
    %2915 = vmatpush1.msra.mxu0 0.0
    %2916 = vmatprep.subr.mxu0 0.0
    %2917 = vmatpush1.msra.mxu0 0.0
    %2918 = vmatprep.subr.mxu0 0.0
    %2919 = vmatpush1.msra.mxu0 0.0
    %2920 = vmatprep.subr.mxu0 0.0
    %2921 = vmatpush1.msra.mxu0 0.0
    %2922 = vmatprep.subr.mxu0 0.0
    %2923 = vmatpush1.msra.mxu0 0.0
    %2924 = vmatprep.subr.mxu0 0.0
    %2925 = vmatpush1.msra.mxu0 0.0
    %2926 = vmatprep.subr.mxu0 0.0
    %2927 = vmatpush1.msra.mxu0 0.0
    %2928 = vmatprep.subr.mxu0 0.0
    %2929 = vmatpush1.msra.mxu0 0.0
    %2930 = vmatprep.subr.mxu0 0.0
    %2931 = vmatpush1.msra.mxu0 0.0
    %2932 = vmatprep.subr.mxu0 0.0
    %2933 = vmatpush1.msra.mxu0 0.0
    %2934 = vmatprep.subr.mxu0 0.0
    %2935 = vmatpush1.msra.mxu0 0.0
    %2936 = vmatprep.subr.mxu0 0.0
    %2937 = vmatpush1.msra.mxu0 %v2750
    %2938 = vmatprep.subr.mxu0 0.0
    %2939 = vmatpush1.msra.mxu0 %v2749
    %2940 = vmatprep.subr.mxu0 0.0
    %2941 = vmatpush1.msra.mxu0 %v2748
    %2942 = vmatprep.subr.mxu0 0.0
    %2943 = vmatpush1.msra.mxu0 %v2747
    %2944 = vmatprep.subr.mxu0 0.0
    %2945 = vmatpush2.msra.mxu0 0.0
    %2946 = vmatprep.subr.mxu0 0.0
    %2947 = vmatpush2.msra.mxu0 0.0
    %2948 = vmatprep.subr.mxu0 0.0
    %2949 = vmatpush2.msra.mxu0 0.0
    %2950 = vmatprep.subr.mxu0 0.0
    %2951 = vmatpush2.msra.mxu0 0.0
    %2952 = vmatprep.subr.mxu0 0.0
    %2953 = vmatpush2.msra.mxu0 0.0
    %2954 = vmatprep.subr.mxu0 0.0
    %2955 = vmatpush2.msra.mxu0 0.0
    %2956 = vmatprep.subr.mxu0 0.0
    %2957 = vmatpush2.msra.mxu0 0.0
    %2958 = vmatprep.subr.mxu0 0.0
    %2959 = vmatpush2.msra.mxu0 0.0
    %2960 = vmatprep.subr.mxu0 0.0
    %2961 = vmatpush2.msra.mxu0 0.0
    %2962 = vmatprep.subr.mxu0 0.0
    %2963 = vmatpush2.msra.mxu0 0.0
    %2964 = vmatprep.subr.mxu0 0.0
    %2965 = vmatpush2.msra.mxu0 0.0
    %2966 = vmatprep.subr.mxu0 0.0
    %2967 = vmatpush2.msra.mxu0 0.0
    %2968 = vmatprep.subr.mxu0 0.0
    %2969 = vmatpush2.msra.mxu0 0.0
    %2970 = vmatprep.subr.mxu0 0.0
    %2971 = vmatpush2.msra.mxu0 0.0
    %2972 = vmatprep.subr.mxu0 0.0
    %2973 = vmatpush2.msra.mxu0 0.0
    %2974 = vmatprep.subr.mxu0 0.0
    %2975 = vmatpush2.msra.mxu0 0.0
    %2976 = vmatprep.mubr.f32.mxu0 0.0
    %2977 = vmatmul.mubr.f32.gmra.mxu0 %v524
    %v2978 = vpop.f32.mrf.mxu0
    %v2979 = vadd.f32 %v2756, %v2978
    %v2980 = vpop.f32.mrf.mxu0
    %2981 = vdwg.mxu0
    %v2982 = vmul.f32 %v2834, %v2979
    %v2983 = vadd.f32 %v2731, %v2982
    %v2984 = vtanh.pop %v2983
    %v2985 = vsub.f32 1.0, %v2911
    %v2986 = vmul.f32 %v2985, %v2984
    %v2987 = vmul.f32 %v2911, 0.0
    %v2988 = vadd.f32 %v2986, %v2987
    %v2990 = vsel %vm522, %v2988, 0
    %2992 = vmatprep.subr.mxu0 0.0
    %2993 = vmatpush1.msra.mxu0 0.0
    %2994 = vmatprep.subr.mxu0 0.0
    %2995 = vmatpush1.msra.mxu0 0.0
    %2996 = vmatprep.subr.mxu0 0.0
    %2997 = vmatpush1.msra.mxu0 0.0
    %2998 = vmatprep.subr.mxu0 0.0
    %2999 = vmatpush1.msra.mxu0 0.0
    %3000 = vmatprep.subr.mxu0 0.0
    %3001 = vmatpush1.msra.mxu0 0.0
    %3002 = vmatprep.subr.mxu0 0.0
    %3003 = vmatpush1.msra.mxu0 0.0
    %3004 = vmatprep.subr.mxu0 0.0
    %3005 = vmatpush1.msra.mxu0 0.0
    %3006 = vmatprep.subr.mxu0 0.0
    %3007 = vmatpush1.msra.mxu0 0.0
    %3008 = vmatprep.subr.mxu0 0.0
    %3009 = vmatpush1.msra.mxu0 0.0
    %3010 = vmatprep.subr.mxu0 0.0
    %3011 = vmatpush1.msra.mxu0 0.0
    %3012 = vmatprep.subr.mxu0 0.0
    %3013 = vmatpush1.msra.mxu0 0.0
    %3014 = vmatprep.subr.mxu0 0.0
    %3015 = vmatpush1.msra.mxu0 0.0
    %3016 = vmatprep.subr.mxu0 0.0
    %3017 = vmatpush1.msra.mxu0 %v2742
    %3018 = vmatprep.subr.mxu0 0.0
    %3019 = vmatpush1.msra.mxu0 %v2741
    %3020 = vmatprep.subr.mxu0 0.0
    %3021 = vmatpush1.msra.mxu0 %v2740
    %3022 = vmatprep.subr.mxu0 0.0
    %3023 = vmatpush1.msra.mxu0 %v2739
    %3024 = vmatprep.subr.mxu0 0.0
    %3025 = vmatpush2.msra.mxu0 0.0
    %3026 = vmatprep.subr.mxu0 0.0
    %3027 = vmatpush2.msra.mxu0 0.0
    %3028 = vmatprep.subr.mxu0 0.0
    %3029 = vmatpush2.msra.mxu0 0.0
    %3030 = vmatprep.subr.mxu0 0.0
    %3031 = vmatpush2.msra.mxu0 0.0
    %3032 = vmatprep.subr.mxu0 0.0
    %3033 = vmatpush2.msra.mxu0 0.0
    %3034 = vmatprep.subr.mxu0 0.0
    %3035 = vmatpush2.msra.mxu0 0.0
    %3036 = vmatprep.subr.mxu0 0.0
    %3037 = vmatpush2.msra.mxu0 0.0
    %3038 = vmatprep.subr.mxu0 0.0
    %3039 = vmatpush2.msra.mxu0 0.0
    %3040 = vmatprep.subr.mxu0 0.0
    %3041 = vmatpush2.msra.mxu0 0.0
    %3042 = vmatprep.subr.mxu0 0.0
    %3043 = vmatpush2.msra.mxu0 0.0
    %3044 = vmatprep.subr.mxu0 0.0
    %3045 = vmatpush2.msra.mxu0 0.0
    %3046 = vmatprep.subr.mxu0 0.0
    %3047 = vmatpush2.msra.mxu0 0.0
    %3048 = vmatprep.subr.mxu0 0.0
    %3049 = vmatpush2.msra.mxu0 0.0
    %3050 = vmatprep.subr.mxu0 0.0
    %3051 = vmatpush2.msra.mxu0 0.0
    %3052 = vmatprep.subr.mxu0 0.0
    %3053 = vmatpush2.msra.mxu0 0.0
    %3054 = vmatprep.subr.mxu0 0.0
    %3055 = vmatpush2.msra.mxu0 0.0
    %3056 = vmatprep.mubr.f32.mxu0 0.0
    %3057 = vmatmul.mubr.f32.gmra.mxu0 %v2990
    %v3058 = vpop.f32.mrf.mxu0
    %v3059 = vadd.f32 0.0, %v3058
    %v3060 = vpop.f32.mrf.mxu0
    %3061 = vdwg.mxu0
    %v3063 = vrot.slane %v3059, 6
    %v3065 = vadd.f32 %v2559, %v3063
    %v3066 = vxor.u32 %v3065, 2147483648
    %v3067 = vmul.f32 %v3066, 1.442695
    %v3068 = vpow.pop %v3067
    %v3069 = vadd.f32 %v3068, 1.0
    %v3070 = vrcp.pop %v3069
    %v3071 = vmul.f32 1.0, %v3070
    %3072 = vmatprep.subr.mxu0 0.0
    %3073 = vmatpush1.msra.mxu0 0.0
    %3074 = vmatprep.subr.mxu0 0.0
    %3075 = vmatpush1.msra.mxu0 0.0
    %3076 = vmatprep.subr.mxu0 0.0
    %3077 = vmatpush1.msra.mxu0 0.0
    %3078 = vmatprep.subr.mxu0 0.0
    %3079 = vmatpush1.msra.mxu0 0.0
    %3080 = vmatprep.subr.mxu0 0.0
    %3081 = vmatpush1.msra.mxu0 0.0
    %3082 = vmatprep.subr.mxu0 0.0
    %3083 = vmatpush1.msra.mxu0 0.0
    %3084 = vmatprep.subr.mxu0 0.0
    %3085 = vmatpush1.msra.mxu0 0.0
    %3086 = vmatprep.subr.mxu0 0.0
    %3087 = vmatpush1.msra.mxu0 0.0
    %3088 = vmatprep.subr.mxu0 0.0
    %3089 = vmatpush1.msra.mxu0 0.0
    %3090 = vmatprep.subr.mxu0 0.0
    %3091 = vmatpush1.msra.mxu0 0.0
    %3092 = vmatprep.subr.mxu0 0.0
    %3093 = vmatpush1.msra.mxu0 0.0
    %3094 = vmatprep.subr.mxu0 0.0
    %3095 = vmatpush1.msra.mxu0 0.0
    %3096 = vmatprep.subr.mxu0 0.0
    %3097 = vmatpush1.msra.mxu0 %v2746
    %3098 = vmatprep.subr.mxu0 0.0
    %3099 = vmatpush1.msra.mxu0 %v2745
    %3100 = vmatprep.subr.mxu0 0.0
    %3101 = vmatpush1.msra.mxu0 %v2744
    %3102 = vmatprep.subr.mxu0 0.0
    %3103 = vmatpush1.msra.mxu0 %v2743
    %3104 = vmatprep.subr.mxu0 0.0
    %3105 = vmatpush2.msra.mxu0 0.0
    %3106 = vmatprep.subr.mxu0 0.0
    %3107 = vmatpush2.msra.mxu0 0.0
    %3108 = vmatprep.subr.mxu0 0.0
    %3109 = vmatpush2.msra.mxu0 0.0
    %3110 = vmatprep.subr.mxu0 0.0
    %3111 = vmatpush2.msra.mxu0 0.0
    %3112 = vmatprep.subr.mxu0 0.0
    %3113 = vmatpush2.msra.mxu0 0.0
    %3114 = vmatprep.subr.mxu0 0.0
    %3115 = vmatpush2.msra.mxu0 0.0
    %3116 = vmatprep.subr.mxu0 0.0
    %3117 = vmatpush2.msra.mxu0 0.0
    %3118 = vmatprep.subr.mxu0 0.0
    %3119 = vmatpush2.msra.mxu0 0.0
    %3120 = vmatprep.subr.mxu0 0.0
    %3121 = vmatpush2.msra.mxu0 0.0
    %3122 = vmatprep.subr.mxu0 0.0
    %3123 = vmatpush2.msra.mxu0 0.0
    %3124 = vmatprep.subr.mxu0 0.0
    %3125 = vmatpush2.msra.mxu0 0.0
    %3126 = vmatprep.subr.mxu0 0.0
    %3127 = vmatpush2.msra.mxu0 0.0
    %3128 = vmatprep.subr.mxu0 0.0
    %3129 = vmatpush2.msra.mxu0 0.0
    %3130 = vmatprep.subr.mxu0 0.0
    %3131 = vmatpush2.msra.mxu0 0.0
    %3132 = vmatprep.subr.mxu0 0.0
    %3133 = vmatpush2.msra.mxu0 0.0
    %3134 = vmatprep.subr.mxu0 0.0
    %3135 = vmatpush2.msra.mxu0 0.0
    %3136 = vmatprep.mubr.f32.mxu0 0.0
    %3137 = vmatmul.mubr.f32.gmra.mxu0 %v2990
    %v3138 = vpop.f32.mrf.mxu0
    %v3139 = vadd.f32 0.0, %v3138
    %v3140 = vpop.f32.mrf.mxu0
    %3141 = vdwg.mxu0
    %v3143 = vrot.slane %v3139, 6
    %v3145 = vadd.f32 %v2645, %v3143
    %v3146 = vxor.u32 %v3145, 2147483648
    %v3147 = vmul.f32 %v3146, 1.442695
    %v3148 = vpow.pop %v3147
    %v3149 = vadd.f32 %v3148, 1.0
    %v3150 = vrcp.pop %v3149
    %v3151 = vmul.f32 1.0, %v3150
    %3152 = vmatprep.subr.mxu0 0.0
    %3153 = vmatpush1.msra.mxu0 0.0
    %3154 = vmatprep.subr.mxu0 0.0
    %3155 = vmatpush1.msra.mxu0 0.0
    %3156 = vmatprep.subr.mxu0 0.0
    %3157 = vmatpush1.msra.mxu0 0.0
    %3158 = vmatprep.subr.mxu0 0.0
    %3159 = vmatpush1.msra.mxu0 0.0
    %3160 = vmatprep.subr.mxu0 0.0
    %3161 = vmatpush1.msra.mxu0 0.0
    %3162 = vmatprep.subr.mxu0 0.0
    %3163 = vmatpush1.msra.mxu0 0.0
    %3164 = vmatprep.subr.mxu0 0.0
    %3165 = vmatpush1.msra.mxu0 0.0
    %3166 = vmatprep.subr.mxu0 0.0
    %3167 = vmatpush1.msra.mxu0 0.0
    %3168 = vmatprep.subr.mxu0 0.0
    %3169 = vmatpush1.msra.mxu0 0.0
    %3170 = vmatprep.subr.mxu0 0.0
    %3171 = vmatpush1.msra.mxu0 0.0
    %3172 = vmatprep.subr.mxu0 0.0
    %3173 = vmatpush1.msra.mxu0 0.0
    %3174 = vmatprep.subr.mxu0 0.0
    %3175 = vmatpush1.msra.mxu0 0.0
    %3176 = vmatprep.subr.mxu0 0.0
    %3177 = vmatpush1.msra.mxu0 %v2750
    %3178 = vmatprep.subr.mxu0 0.0
    %3179 = vmatpush1.msra.mxu0 %v2749
    %3180 = vmatprep.subr.mxu0 0.0
    %3181 = vmatpush1.msra.mxu0 %v2748
    %3182 = vmatprep.subr.mxu0 0.0
    %3183 = vmatpush1.msra.mxu0 %v2747
    %3184 = vmatprep.subr.mxu0 0.0
    %3185 = vmatpush2.msra.mxu0 0.0
    %3186 = vmatprep.subr.mxu0 0.0
    %3187 = vmatpush2.msra.mxu0 0.0
    %3188 = vmatprep.subr.mxu0 0.0
    %3189 = vmatpush2.msra.mxu0 0.0
    %3190 = vmatprep.subr.mxu0 0.0
    %3191 = vmatpush2.msra.mxu0 0.0
    %3192 = vmatprep.subr.mxu0 0.0
    %3193 = vmatpush2.msra.mxu0 0.0
    %3194 = vmatprep.subr.mxu0 0.0
    %3195 = vmatpush2.msra.mxu0 0.0
    %3196 = vmatprep.subr.mxu0 0.0
    %3197 = vmatpush2.msra.mxu0 0.0
    %3198 = vmatprep.subr.mxu0 0.0
    %3199 = vmatpush2.msra.mxu0 0.0
    %3200 = vmatprep.subr.mxu0 0.0
    %3201 = vmatpush2.msra.mxu0 0.0
    %3202 = vmatprep.subr.mxu0 0.0
    %3203 = vmatpush2.msra.mxu0 0.0
    %3204 = vmatprep.subr.mxu0 0.0
    %3205 = vmatpush2.msra.mxu0 0.0
    %3206 = vmatprep.subr.mxu0 0.0
    %3207 = vmatpush2.msra.mxu0 0.0
    %3208 = vmatprep.subr.mxu0 0.0
    %3209 = vmatpush2.msra.mxu0 0.0
    %3210 = vmatprep.subr.mxu0 0.0
    %3211 = vmatpush2.msra.mxu0 0.0
    %3212 = vmatprep.subr.mxu0 0.0
    %3213 = vmatpush2.msra.mxu0 0.0
    %3214 = vmatprep.subr.mxu0 0.0
    %3215 = vmatpush2.msra.mxu0 0.0
    %3216 = vmatprep.mubr.f32.mxu0 0.0
    %3217 = vmatmul.mubr.f32.gmra.mxu0 %v2990
    %v3218 = vpop.f32.mrf.mxu0
    %v3219 = vadd.f32 %v2756, %v3218
    %v3220 = vpop.f32.mrf.mxu0
    %3221 = vdwg.mxu0
    %v3223 = vrot.slane %v3219, 6
    %v3225 = vmul.f32 %v3071, %v3223
    %v3226 = vadd.f32 %v2731, %v3225
    %v3227 = vtanh.pop %v3226
    %v3228 = vsub.f32 1.0, %v3151
    %v3229 = vmul.f32 %v3228, %v3227
    %v3230 = vrot.slane %v2988, 6
    %v3232 = vmul.f32 %v3151, %v3230
    %v3233 = vadd.f32 %v3229, %v3232
    %v3235 = vrot.slane %v3233, 2
    %v3236 = vsel %vm522, %v3235, 0
    %3238 = vmatprep.subr.mxu0 0.0
    %3239 = vmatpush1.msra.mxu0 0.0
    %3240 = vmatprep.subr.mxu0 0.0
    %3241 = vmatpush1.msra.mxu0 0.0
    %3242 = vmatprep.subr.mxu0 0.0
    %3243 = vmatpush1.msra.mxu0 0.0
    %3244 = vmatprep.subr.mxu0 0.0
    %3245 = vmatpush1.msra.mxu0 0.0
    %3246 = vmatprep.subr.mxu0 0.0
    %3247 = vmatpush1.msra.mxu0 0.0
    %3248 = vmatprep.subr.mxu0 0.0
    %3249 = vmatpush1.msra.mxu0 0.0
    %3250 = vmatprep.subr.mxu0 0.0
    %3251 = vmatpush1.msra.mxu0 0.0
    %3252 = vmatprep.subr.mxu0 0.0
    %3253 = vmatpush1.msra.mxu0 0.0
    %3254 = vmatprep.subr.mxu0 0.0
    %3255 = vmatpush1.msra.mxu0 0.0
    %3256 = vmatprep.subr.mxu0 0.0
    %3257 = vmatpush1.msra.mxu0 0.0
    %3258 = vmatprep.subr.mxu0 0.0
    %3259 = vmatpush1.msra.mxu0 0.0
    %3260 = vmatprep.subr.mxu0 0.0
    %3261 = vmatpush1.msra.mxu0 0.0
    %3262 = vmatprep.subr.mxu0 0.0
    %3263 = vmatpush1.msra.mxu0 %v2742
    %3264 = vmatprep.subr.mxu0 0.0
    %3265 = vmatpush1.msra.mxu0 %v2741
    %3266 = vmatprep.subr.mxu0 0.0
    %3267 = vmatpush1.msra.mxu0 %v2740
    %3268 = vmatprep.subr.mxu0 0.0
    %3269 = vmatpush1.msra.mxu0 %v2739
    %3270 = vmatprep.subr.mxu0 0.0
    %3271 = vmatpush2.msra.mxu0 0.0
    %3272 = vmatprep.subr.mxu0 0.0
    %3273 = vmatpush2.msra.mxu0 0.0
    %3274 = vmatprep.subr.mxu0 0.0
    %3275 = vmatpush2.msra.mxu0 0.0
    %3276 = vmatprep.subr.mxu0 0.0
    %3277 = vmatpush2.msra.mxu0 0.0
    %3278 = vmatprep.subr.mxu0 0.0
    %3279 = vmatpush2.msra.mxu0 0.0
    %3280 = vmatprep.subr.mxu0 0.0
    %3281 = vmatpush2.msra.mxu0 0.0
    %3282 = vmatprep.subr.mxu0 0.0
    %3283 = vmatpush2.msra.mxu0 0.0
    %3284 = vmatprep.subr.mxu0 0.0
    %3285 = vmatpush2.msra.mxu0 0.0
    %3286 = vmatprep.subr.mxu0 0.0
    %3287 = vmatpush2.msra.mxu0 0.0
    %3288 = vmatprep.subr.mxu0 0.0
    %3289 = vmatpush2.msra.mxu0 0.0
    %3290 = vmatprep.subr.mxu0 0.0
    %3291 = vmatpush2.msra.mxu0 0.0
    %3292 = vmatprep.subr.mxu0 0.0
    %3293 = vmatpush2.msra.mxu0 0.0
    %3294 = vmatprep.subr.mxu0 0.0
    %3295 = vmatpush2.msra.mxu0 0.0
    %3296 = vmatprep.subr.mxu0 0.0
    %3297 = vmatpush2.msra.mxu0 0.0
    %3298 = vmatprep.subr.mxu0 0.0
    %3299 = vmatpush2.msra.mxu0 0.0
    %3300 = vmatprep.subr.mxu0 0.0
    %3301 = vmatpush2.msra.mxu0 0.0
    %3302 = vmatprep.mubr.f32.mxu0 0.0
    %3303 = vmatmul.mubr.f32.gmra.mxu0 %v3236
    %v3304 = vpop.f32.mrf.mxu0
    %v3305 = vadd.f32 0.0, %v3304
    %v3306 = vpop.f32.mrf.mxu0
    %3307 = vdwg.mxu0
    %v3309 = vrot.slane %v3305, 4
    %v3311 = vadd.f32 %v2559, %v3309
    %v3312 = vxor.u32 %v3311, 2147483648
    %v3313 = vmul.f32 %v3312, 1.442695
    %v3314 = vpow.pop %v3313
    %v3315 = vadd.f32 %v3314, 1.0
    %v3316 = vrcp.pop %v3315
    %v3317 = vmul.f32 1.0, %v3316
    %3318 = vmatprep.subr.mxu0 0.0
    %3319 = vmatpush1.msra.mxu0 0.0
    %3320 = vmatprep.subr.mxu0 0.0
    %3321 = vmatpush1.msra.mxu0 0.0
    %3322 = vmatprep.subr.mxu0 0.0
    %3323 = vmatpush1.msra.mxu0 0.0
    %3324 = vmatprep.subr.mxu0 0.0
    %3325 = vmatpush1.msra.mxu0 0.0
    %3326 = vmatprep.subr.mxu0 0.0
    %3327 = vmatpush1.msra.mxu0 0.0
    %3328 = vmatprep.subr.mxu0 0.0
    %3329 = vmatpush1.msra.mxu0 0.0
    %3330 = vmatprep.subr.mxu0 0.0
    %3331 = vmatpush1.msra.mxu0 0.0
    %3332 = vmatprep.subr.mxu0 0.0
    %3333 = vmatpush1.msra.mxu0 0.0
    %3334 = vmatprep.subr.mxu0 0.0
    %3335 = vmatpush1.msra.mxu0 0.0
    %3336 = vmatprep.subr.mxu0 0.0
    %3337 = vmatpush1.msra.mxu0 0.0
    %3338 = vmatprep.subr.mxu0 0.0
    %3339 = vmatpush1.msra.mxu0 0.0
    %3340 = vmatprep.subr.mxu0 0.0
    %3341 = vmatpush1.msra.mxu0 0.0
    %3342 = vmatprep.subr.mxu0 0.0
    %3343 = vmatpush1.msra.mxu0 %v2746
    %3344 = vmatprep.subr.mxu0 0.0
    %3345 = vmatpush1.msra.mxu0 %v2745
    %3346 = vmatprep.subr.mxu0 0.0
    %3347 = vmatpush1.msra.mxu0 %v2744
    %3348 = vmatprep.subr.mxu0 0.0
    %3349 = vmatpush1.msra.mxu0 %v2743
    %3350 = vmatprep.subr.mxu0 0.0
    %3351 = vmatpush2.msra.mxu0 0.0
    %3352 = vmatprep.subr.mxu0 0.0
    %3353 = vmatpush2.msra.mxu0 0.0
    %3354 = vmatprep.subr.mxu0 0.0
    %3355 = vmatpush2.msra.mxu0 0.0
    %3356 = vmatprep.subr.mxu0 0.0
    %3357 = vmatpush2.msra.mxu0 0.0
    %3358 = vmatprep.subr.mxu0 0.0
    %3359 = vmatpush2.msra.mxu0 0.0
    %3360 = vmatprep.subr.mxu0 0.0
    %3361 = vmatpush2.msra.mxu0 0.0
    %3362 = vmatprep.subr.mxu0 0.0
    %3363 = vmatpush2.msra.mxu0 0.0
    %3364 = vmatprep.subr.mxu0 0.0
    %3365 = vmatpush2.msra.mxu0 0.0
    %3366 = vmatprep.subr.mxu0 0.0
    %3367 = vmatpush2.msra.mxu0 0.0
    %3368 = vmatprep.subr.mxu0 0.0
    %3369 = vmatpush2.msra.mxu0 0.0
    %3370 = vmatprep.subr.mxu0 0.0
    %3371 = vmatpush2.msra.mxu0 0.0
    %3372 = vmatprep.subr.mxu0 0.0
    %3373 = vmatpush2.msra.mxu0 0.0
    %3374 = vmatprep.subr.mxu0 0.0
    %3375 = vmatpush2.msra.mxu0 0.0
    %3376 = vmatprep.subr.mxu0 0.0
    %3377 = vmatpush2.msra.mxu0 0.0
    %3378 = vmatprep.subr.mxu0 0.0
    %3379 = vmatpush2.msra.mxu0 0.0
    %3380 = vmatprep.subr.mxu0 0.0
    %3381 = vmatpush2.msra.mxu0 0.0
    %3382 = vmatprep.mubr.f32.mxu0 0.0
    %3383 = vmatmul.mubr.f32.gmra.mxu0 %v3236
    %v3384 = vpop.f32.mrf.mxu0
    %v3385 = vadd.f32 0.0, %v3384
    %v3386 = vpop.f32.mrf.mxu0
    %3387 = vdwg.mxu0
    %v3389 = vrot.slane %v3385, 4
    %v3391 = vadd.f32 %v2645, %v3389
    %v3392 = vxor.u32 %v3391, 2147483648
    %v3393 = vmul.f32 %v3392, 1.442695
    %v3394 = vpow.pop %v3393
    %v3395 = vadd.f32 %v3394, 1.0
    %v3396 = vrcp.pop %v3395
    %v3397 = vmul.f32 1.0, %v3396
    %3398 = vmatprep.subr.mxu0 0.0
    %3399 = vmatpush1.msra.mxu0 0.0
    %3400 = vmatprep.subr.mxu0 0.0
    %3401 = vmatpush1.msra.mxu0 0.0
    %3402 = vmatprep.subr.mxu0 0.0
    %3403 = vmatpush1.msra.mxu0 0.0
    %3404 = vmatprep.subr.mxu0 0.0
    %3405 = vmatpush1.msra.mxu0 0.0
    %3406 = vmatprep.subr.mxu0 0.0
    %3407 = vmatpush1.msra.mxu0 0.0
    %3408 = vmatprep.subr.mxu0 0.0
    %3409 = vmatpush1.msra.mxu0 0.0
    %3410 = vmatprep.subr.mxu0 0.0
    %3411 = vmatpush1.msra.mxu0 0.0
    %3412 = vmatprep.subr.mxu0 0.0
    %3413 = vmatpush1.msra.mxu0 0.0
    %3414 = vmatprep.subr.mxu0 0.0
    %3415 = vmatpush1.msra.mxu0 0.0
    %3416 = vmatprep.subr.mxu0 0.0
    %3417 = vmatpush1.msra.mxu0 0.0
    %3418 = vmatprep.subr.mxu0 0.0
    %3419 = vmatpush1.msra.mxu0 0.0
    %3420 = vmatprep.subr.mxu0 0.0
    %3421 = vmatpush1.msra.mxu0 0.0
    %3422 = vmatprep.subr.mxu0 0.0
    %3423 = vmatpush1.msra.mxu0 %v2750
    %3424 = vmatprep.subr.mxu0 0.0
    %3425 = vmatpush1.msra.mxu0 %v2749
    %3426 = vmatprep.subr.mxu0 0.0
    %3427 = vmatpush1.msra.mxu0 %v2748
    %3428 = vmatprep.subr.mxu0 0.0
    %3429 = vmatpush1.msra.mxu0 %v2747
    %3430 = vmatprep.subr.mxu0 0.0
    %3431 = vmatpush2.msra.mxu0 0.0
    %3432 = vmatprep.subr.mxu0 0.0
    %3433 = vmatpush2.msra.mxu0 0.0
    %3434 = vmatprep.subr.mxu0 0.0
    %3435 = vmatpush2.msra.mxu0 0.0
    %3436 = vmatprep.subr.mxu0 0.0
    %3437 = vmatpush2.msra.mxu0 0.0
    %3438 = vmatprep.subr.mxu0 0.0
    %3439 = vmatpush2.msra.mxu0 0.0
    %3440 = vmatprep.subr.mxu0 0.0
    %3441 = vmatpush2.msra.mxu0 0.0
    %3442 = vmatprep.subr.mxu0 0.0
    %3443 = vmatpush2.msra.mxu0 0.0
    %3444 = vmatprep.subr.mxu0 0.0
    %3445 = vmatpush2.msra.mxu0 0.0
    %3446 = vmatprep.subr.mxu0 0.0
    %3447 = vmatpush2.msra.mxu0 0.0
    %3448 = vmatprep.subr.mxu0 0.0
    %3449 = vmatpush2.msra.mxu0 0.0
    %3450 = vmatprep.subr.mxu0 0.0
    %3451 = vmatpush2.msra.mxu0 0.0
    %3452 = vmatprep.subr.mxu0 0.0
    %3453 = vmatpush2.msra.mxu0 0.0
    %3454 = vmatprep.subr.mxu0 0.0
    %3455 = vmatpush2.msra.mxu0 0.0
    %3456 = vmatprep.subr.mxu0 0.0
    %3457 = vmatpush2.msra.mxu0 0.0
    %3458 = vmatprep.subr.mxu0 0.0
    %3459 = vmatpush2.msra.mxu0 0.0
    %3460 = vmatprep.subr.mxu0 0.0
    %3461 = vmatpush2.msra.mxu0 0.0
    %3462 = vmatprep.mubr.f32.mxu0 0.0
    %3463 = vmatmul.mubr.f32.gmra.mxu0 %v3236
    %v3464 = vpop.f32.mrf.mxu0
    %v3465 = vadd.f32 %v2756, %v3464
    %v3466 = vpop.f32.mrf.mxu0
    %3467 = vdwg.mxu0
    %v3469 = vrot.slane %v3465, 4
    %v3471 = vmul.f32 %v3317, %v3469
    %v3472 = vadd.f32 %v2731, %v3471
    %v3473 = vtanh.pop %v3472
    %v3474 = vsub.f32 1.0, %v3397
    %v3475 = vmul.f32 %v3474, %v3473
    %v3476 = vrot.slane %v3233, 6
    %v3478 = vmul.f32 %v3397, %v3476
    %v3479 = vadd.f32 %v3475, %v3478
    %v3481 = vrot.slane %v3479, 4
    %v3482 = vsel %vm522, %v3481, 0
    %3484 = vmatprep.subr.mxu0 0.0
    %3485 = vmatpush1.msra.mxu0 0.0
    %3486 = vmatprep.subr.mxu0 0.0
    %3487 = vmatpush1.msra.mxu0 0.0
    %3488 = vmatprep.subr.mxu0 0.0
    %3489 = vmatpush1.msra.mxu0 0.0
    %3490 = vmatprep.subr.mxu0 0.0
    %3491 = vmatpush1.msra.mxu0 0.0
    %3492 = vmatprep.subr.mxu0 0.0
    %3493 = vmatpush1.msra.mxu0 0.0
    %3494 = vmatprep.subr.mxu0 0.0
    %3495 = vmatpush1.msra.mxu0 0.0
    %3496 = vmatprep.subr.mxu0 0.0
    %3497 = vmatpush1.msra.mxu0 0.0
    %3498 = vmatprep.subr.mxu0 0.0
    %3499 = vmatpush1.msra.mxu0 0.0
    %3500 = vmatprep.subr.mxu0 0.0
    %3501 = vmatpush1.msra.mxu0 0.0
    %3502 = vmatprep.subr.mxu0 0.0
    %3503 = vmatpush1.msra.mxu0 0.0
    %3504 = vmatprep.subr.mxu0 0.0
    %3505 = vmatpush1.msra.mxu0 0.0
    %3506 = vmatprep.subr.mxu0 0.0
    %3507 = vmatpush1.msra.mxu0 0.0
    %3508 = vmatprep.subr.mxu0 0.0
    %3509 = vmatpush1.msra.mxu0 %v2742
    %3510 = vmatprep.subr.mxu0 0.0
    %3511 = vmatpush1.msra.mxu0 %v2741
    %3512 = vmatprep.subr.mxu0 0.0
    %3513 = vmatpush1.msra.mxu0 %v2740
    %3514 = vmatprep.subr.mxu0 0.0
    %3515 = vmatpush1.msra.mxu0 %v2739
    %3516 = vmatprep.subr.mxu0 0.0
    %3517 = vmatpush2.msra.mxu0 0.0
    %3518 = vmatprep.subr.mxu0 0.0
    %3519 = vmatpush2.msra.mxu0 0.0
    %3520 = vmatprep.subr.mxu0 0.0
    %3521 = vmatpush2.msra.mxu0 0.0
    %3522 = vmatprep.subr.mxu0 0.0
    %3523 = vmatpush2.msra.mxu0 0.0
    %3524 = vmatprep.subr.mxu0 0.0
    %3525 = vmatpush2.msra.mxu0 0.0
    %3526 = vmatprep.subr.mxu0 0.0
    %3527 = vmatpush2.msra.mxu0 0.0
    %3528 = vmatprep.subr.mxu0 0.0
    %3529 = vmatpush2.msra.mxu0 0.0
    %3530 = vmatprep.subr.mxu0 0.0
    %3531 = vmatpush2.msra.mxu0 0.0
    %3532 = vmatprep.subr.mxu0 0.0
    %3533 = vmatpush2.msra.mxu0 0.0
    %3534 = vmatprep.subr.mxu0 0.0
    %3535 = vmatpush2.msra.mxu0 0.0
    %3536 = vmatprep.subr.mxu0 0.0
    %3537 = vmatpush2.msra.mxu0 0.0
    %3538 = vmatprep.subr.mxu0 0.0
    %3539 = vmatpush2.msra.mxu0 0.0
    %3540 = vmatprep.subr.mxu0 0.0
    %3541 = vmatpush2.msra.mxu0 0.0
    %3542 = vmatprep.subr.mxu0 0.0
    %3543 = vmatpush2.msra.mxu0 0.0
    %3544 = vmatprep.subr.mxu0 0.0
    %3545 = vmatpush2.msra.mxu0 0.0
    %3546 = vmatprep.subr.mxu0 0.0
    %3547 = vmatpush2.msra.mxu0 0.0
    %3548 = vmatprep.mubr.f32.mxu0 0.0
    %3549 = vmatmul.mubr.f32.gmra.mxu0 %v3482
    %v3550 = vpop.f32.mrf.mxu0
    %v3551 = vadd.f32 0.0, %v3550
    %v3552 = vpop.f32.mrf.mxu0
    %3553 = vdwg.mxu0
    %v3555 = vrot.slane %v3551, 2
    %v3557 = vadd.f32 %v2559, %v3555
    %v3558 = vxor.u32 %v3557, 2147483648
    %v3559 = vmul.f32 %v3558, 1.442695
    %v3560 = vpow.pop %v3559
    %v3561 = vadd.f32 %v3560, 1.0
    %v3562 = vrcp.pop %v3561
    %v3563 = vmul.f32 1.0, %v3562
    %3564 = vmatprep.subr.mxu0 0.0
    %3565 = vmatpush1.msra.mxu0 0.0
    %3566 = vmatprep.subr.mxu0 0.0
    %3567 = vmatpush1.msra.mxu0 0.0
    %3568 = vmatprep.subr.mxu0 0.0
    %3569 = vmatpush1.msra.mxu0 0.0
    %3570 = vmatprep.subr.mxu0 0.0
    %3571 = vmatpush1.msra.mxu0 0.0
    %3572 = vmatprep.subr.mxu0 0.0
    %3573 = vmatpush1.msra.mxu0 0.0
    %3574 = vmatprep.subr.mxu0 0.0
    %3575 = vmatpush1.msra.mxu0 0.0
    %3576 = vmatprep.subr.mxu0 0.0
    %3577 = vmatpush1.msra.mxu0 0.0
    %3578 = vmatprep.subr.mxu0 0.0
    %3579 = vmatpush1.msra.mxu0 0.0
    %3580 = vmatprep.subr.mxu0 0.0
    %3581 = vmatpush1.msra.mxu0 0.0
    %3582 = vmatprep.subr.mxu0 0.0
    %3583 = vmatpush1.msra.mxu0 0.0
    %3584 = vmatprep.subr.mxu0 0.0
    %3585 = vmatpush1.msra.mxu0 0.0
    %3586 = vmatprep.subr.mxu0 0.0
    %3587 = vmatpush1.msra.mxu0 0.0
    %3588 = vmatprep.subr.mxu0 0.0
    %3589 = vmatpush1.msra.mxu0 %v2746
    %3590 = vmatprep.subr.mxu0 0.0
    %3591 = vmatpush1.msra.mxu0 %v2745
    %3592 = vmatprep.subr.mxu0 0.0
    %3593 = vmatpush1.msra.mxu0 %v2744
    %3594 = vmatprep.subr.mxu0 0.0
    %3595 = vmatpush1.msra.mxu0 %v2743
    %3596 = vmatprep.subr.mxu0 0.0
    %3597 = vmatpush2.msra.mxu0 0.0
    %3598 = vmatprep.subr.mxu0 0.0
    %3599 = vmatpush2.msra.mxu0 0.0
    %3600 = vmatprep.subr.mxu0 0.0
    %3601 = vmatpush2.msra.mxu0 0.0
    %3602 = vmatprep.subr.mxu0 0.0
    %3603 = vmatpush2.msra.mxu0 0.0
    %3604 = vmatprep.subr.mxu0 0.0
    %3605 = vmatpush2.msra.mxu0 0.0
    %3606 = vmatprep.subr.mxu0 0.0
    %3607 = vmatpush2.msra.mxu0 0.0
    %3608 = vmatprep.subr.mxu0 0.0
    %3609 = vmatpush2.msra.mxu0 0.0
    %3610 = vmatprep.subr.mxu0 0.0
    %3611 = vmatpush2.msra.mxu0 0.0
    %3612 = vmatprep.subr.mxu0 0.0
    %3613 = vmatpush2.msra.mxu0 0.0
    %3614 = vmatprep.subr.mxu0 0.0
    %3615 = vmatpush2.msra.mxu0 0.0
    %3616 = vmatprep.subr.mxu0 0.0
    %3617 = vmatpush2.msra.mxu0 0.0
    %3618 = vmatprep.subr.mxu0 0.0
    %3619 = vmatpush2.msra.mxu0 0.0
    %3620 = vmatprep.subr.mxu0 0.0
    %3621 = vmatpush2.msra.mxu0 0.0
    %3622 = vmatprep.subr.mxu0 0.0
    %3623 = vmatpush2.msra.mxu0 0.0
    %3624 = vmatprep.subr.mxu0 0.0
    %3625 = vmatpush2.msra.mxu0 0.0
    %3626 = vmatprep.subr.mxu0 0.0
    %3627 = vmatpush2.msra.mxu0 0.0
    %3628 = vmatprep.mubr.f32.mxu0 0.0
    %3629 = vmatmul.mubr.f32.gmra.mxu0 %v3482
    %v3630 = vpop.f32.mrf.mxu0
    %v3631 = vadd.f32 0.0, %v3630
    %v3632 = vpop.f32.mrf.mxu0
    %3633 = vdwg.mxu0
    %v3635 = vrot.slane %v3631, 2
    %v3637 = vadd.f32 %v2645, %v3635
    %v3638 = vxor.u32 %v3637, 2147483648
    %v3639 = vmul.f32 %v3638, 1.442695
    %v3640 = vpow.pop %v3639
    %v3641 = vadd.f32 %v3640, 1.0
    %v3642 = vrcp.pop %v3641
    %v3643 = vmul.f32 1.0, %v3642
    %3644 = vmatprep.subr.mxu0 0.0
    %3645 = vmatpush1.msra.mxu0 0.0
    %3646 = vmatprep.subr.mxu0 0.0
    %3647 = vmatpush1.msra.mxu0 0.0
    %3648 = vmatprep.subr.mxu0 0.0
    %3649 = vmatpush1.msra.mxu0 0.0
    %3650 = vmatprep.subr.mxu0 0.0
    %3651 = vmatpush1.msra.mxu0 0.0
    %3652 = vmatprep.subr.mxu0 0.0
    %3653 = vmatpush1.msra.mxu0 0.0
    %3654 = vmatprep.subr.mxu0 0.0
    %3655 = vmatpush1.msra.mxu0 0.0
    %3656 = vmatprep.subr.mxu0 0.0
    %3657 = vmatpush1.msra.mxu0 0.0
    %3658 = vmatprep.subr.mxu0 0.0
    %3659 = vmatpush1.msra.mxu0 0.0
    %3660 = vmatprep.subr.mxu0 0.0
    %3661 = vmatpush1.msra.mxu0 0.0
    %3662 = vmatprep.subr.mxu0 0.0
    %3663 = vmatpush1.msra.mxu0 0.0
    %3664 = vmatprep.subr.mxu0 0.0
    %3665 = vmatpush1.msra.mxu0 0.0
    %3666 = vmatprep.subr.mxu0 0.0
    %3667 = vmatpush1.msra.mxu0 0.0
    %3668 = vmatprep.subr.mxu0 0.0
    %3669 = vmatpush1.msra.mxu0 %v2750
    %3670 = vmatprep.subr.mxu0 0.0
    %3671 = vmatpush1.msra.mxu0 %v2749
    %3672 = vmatprep.subr.mxu0 0.0
    %3673 = vmatpush1.msra.mxu0 %v2748
    %3674 = vmatprep.subr.mxu0 0.0
    %3675 = vmatpush1.msra.mxu0 %v2747
    %3676 = vmatprep.subr.mxu0 0.0
    %3677 = vmatpush2.msra.mxu0 0.0
    %3678 = vmatprep.subr.mxu0 0.0
    %3679 = vmatpush2.msra.mxu0 0.0
    %3680 = vmatprep.subr.mxu0 0.0
    %3681 = vmatpush2.msra.mxu0 0.0
    %3682 = vmatprep.subr.mxu0 0.0
    %3683 = vmatpush2.msra.mxu0 0.0
    %3684 = vmatprep.subr.mxu0 0.0
    %3685 = vmatpush2.msra.mxu0 0.0
    %3686 = vmatprep.subr.mxu0 0.0
    %3687 = vmatpush2.msra.mxu0 0.0
    %3688 = vmatprep.subr.mxu0 0.0
    %3689 = vmatpush2.msra.mxu0 0.0
    %3690 = vmatprep.subr.mxu0 0.0
    %3691 = vmatpush2.msra.mxu0 0.0
    %3692 = vmatprep.subr.mxu0 0.0
    %3693 = vmatpush2.msra.mxu0 0.0
    %3694 = vmatprep.subr.mxu0 0.0
    %3695 = vmatpush2.msra.mxu0 0.0
    %3696 = vmatprep.subr.mxu0 0.0
    %3697 = vmatpush2.msra.mxu0 0.0
    %3698 = vmatprep.subr.mxu0 0.0
    %3699 = vmatpush2.msra.mxu0 0.0
    %3700 = vmatprep.subr.mxu0 0.0
    %3701 = vmatpush2.msra.mxu0 0.0
    %3702 = vmatprep.subr.mxu0 0.0
    %3703 = vmatpush2.msra.mxu0 0.0
    %3704 = vmatprep.subr.mxu0 0.0
    %3705 = vmatpush2.msra.mxu0 0.0
    %3706 = vmatprep.subr.mxu0 0.0
    %3707 = vmatpush2.msra.mxu0 0.0
    %3708 = vmatprep.mubr.f32.mxu0 0.0
    %3709 = vmatmul.mubr.f32.gmra.mxu0 %v3482
    %v3710 = vpop.f32.mrf.mxu0
    %v3711 = vadd.f32 %v2756, %v3710
    %v3712 = vpop.f32.mrf.mxu0
    %3713 = vdwg.mxu0
    %v3715 = vrot.slane %v3711, 2
    %v3717 = vmul.f32 %v3563, %v3715
    %v3718 = vadd.f32 %v2731, %v3717
    %v3719 = vtanh.pop %v3718
    %v3720 = vsub.f32 1.0, %v3643
    %v3721 = vmul.f32 %v3720, %v3719
    %v3722 = vrot.slane %v3479, 6
    %v3724 = vmul.f32 %v3643, %v3722
    %v3725 = vadd.f32 %v3721, %v3724
    %v3727 = vrot.slane %v3725, 6
    %v3728 = vsel %vm522, %v3727, 0
    %3730 = vmatprep.subr.mxu0 0.0
    %3731 = vmatpush1.msra.mxu0 0.0
    %3732 = vmatprep.subr.mxu0 0.0
    %3733 = vmatpush1.msra.mxu0 0.0
    %3734 = vmatprep.subr.mxu0 0.0
    %3735 = vmatpush1.msra.mxu0 0.0
    %3736 = vmatprep.subr.mxu0 0.0
    %3737 = vmatpush1.msra.mxu0 0.0
    %3738 = vmatprep.subr.mxu0 0.0
    %3739 = vmatpush1.msra.mxu0 0.0
    %3740 = vmatprep.subr.mxu0 0.0
    %3741 = vmatpush1.msra.mxu0 0.0
    %3742 = vmatprep.subr.mxu0 0.0
    %3743 = vmatpush1.msra.mxu0 0.0
    %3744 = vmatprep.subr.mxu0 0.0
    %3745 = vmatpush1.msra.mxu0 0.0
    %3746 = vmatprep.subr.mxu0 0.0
    %3747 = vmatpush1.msra.mxu0 0.0
    %3748 = vmatprep.subr.mxu0 0.0
    %3749 = vmatpush1.msra.mxu0 0.0
    %3750 = vmatprep.subr.mxu0 0.0
    %3751 = vmatpush1.msra.mxu0 0.0
    %3752 = vmatprep.subr.mxu0 0.0
    %3753 = vmatpush1.msra.mxu0 0.0
    %3754 = vmatprep.subr.mxu0 0.0
    %3755 = vmatpush1.msra.mxu0 %v2742
    %3756 = vmatprep.subr.mxu0 0.0
    %3757 = vmatpush1.msra.mxu0 %v2741
    %3758 = vmatprep.subr.mxu0 0.0
    %3759 = vmatpush1.msra.mxu0 %v2740
    %3760 = vmatprep.subr.mxu0 0.0
    %3761 = vmatpush1.msra.mxu0 %v2739
    %3762 = vmatprep.subr.mxu0 0.0
    %3763 = vmatpush2.msra.mxu0 0.0
    %3764 = vmatprep.subr.mxu0 0.0
    %3765 = vmatpush2.msra.mxu0 0.0
    %3766 = vmatprep.subr.mxu0 0.0
    %3767 = vmatpush2.msra.mxu0 0.0
    %3768 = vmatprep.subr.mxu0 0.0
    %3769 = vmatpush2.msra.mxu0 0.0
    %3770 = vmatprep.subr.mxu0 0.0
    %3771 = vmatpush2.msra.mxu0 0.0
    %3772 = vmatprep.subr.mxu0 0.0
    %3773 = vmatpush2.msra.mxu0 0.0
    %3774 = vmatprep.subr.mxu0 0.0
    %3775 = vmatpush2.msra.mxu0 0.0
    %3776 = vmatprep.subr.mxu0 0.0
    %3777 = vmatpush2.msra.mxu0 0.0
    %3778 = vmatprep.subr.mxu0 0.0
    %3779 = vmatpush2.msra.mxu0 0.0
    %3780 = vmatprep.subr.mxu0 0.0
    %3781 = vmatpush2.msra.mxu0 0.0
    %3782 = vmatprep.subr.mxu0 0.0
    %3783 = vmatpush2.msra.mxu0 0.0
    %3784 = vmatprep.subr.mxu0 0.0
    %3785 = vmatpush2.msra.mxu0 0.0
    %3786 = vmatprep.subr.mxu0 0.0
    %3787 = vmatpush2.msra.mxu0 0.0
    %3788 = vmatprep.subr.mxu0 0.0
    %3789 = vmatpush2.msra.mxu0 0.0
    %3790 = vmatprep.subr.mxu0 0.0
    %3791 = vmatpush2.msra.mxu0 0.0
    %3792 = vmatprep.subr.mxu0 0.0
    %3793 = vmatpush2.msra.mxu0 0.0
    %3794 = vmatprep.mubr.f32.mxu0 0.0
    %3795 = vmatmul.mubr.f32.gmra.mxu0 %v3728
    %v3796 = vpop.f32.mrf.mxu0
    %v3797 = vadd.f32 0.0, %v3796
    %v3798 = vpop.f32.mrf.mxu0
    %3799 = vdwg.mxu0
    %v3800 = vadd.f32 %v2564, %v3797
    %v3801 = vxor.u32 %v3800, 2147483648
    %v3802 = vmul.f32 %v3801, 1.442695
    %v3803 = vpow.pop %v3802
    %v3804 = vadd.f32 %v3803, 1.0
    %v3805 = vrcp.pop %v3804
    %v3806 = vmul.f32 1.0, %v3805
    %3807 = vmatprep.subr.mxu0 0.0
    %3808 = vmatpush1.msra.mxu0 0.0
    %3809 = vmatprep.subr.mxu0 0.0
    %3810 = vmatpush1.msra.mxu0 0.0
    %3811 = vmatprep.subr.mxu0 0.0
    %3812 = vmatpush1.msra.mxu0 0.0
    %3813 = vmatprep.subr.mxu0 0.0
    %3814 = vmatpush1.msra.mxu0 0.0
    %3815 = vmatprep.subr.mxu0 0.0
    %3816 = vmatpush1.msra.mxu0 0.0
    %3817 = vmatprep.subr.mxu0 0.0
    %3818 = vmatpush1.msra.mxu0 0.0
    %3819 = vmatprep.subr.mxu0 0.0
    %3820 = vmatpush1.msra.mxu0 0.0
    %3821 = vmatprep.subr.mxu0 0.0
    %3822 = vmatpush1.msra.mxu0 0.0
    %3823 = vmatprep.subr.mxu0 0.0
    %3824 = vmatpush1.msra.mxu0 0.0
    %3825 = vmatprep.subr.mxu0 0.0
    %3826 = vmatpush1.msra.mxu0 0.0
    %3827 = vmatprep.subr.mxu0 0.0
    %3828 = vmatpush1.msra.mxu0 0.0
    %3829 = vmatprep.subr.mxu0 0.0
    %3830 = vmatpush1.msra.mxu0 0.0
    %3831 = vmatprep.subr.mxu0 0.0
    %3832 = vmatpush1.msra.mxu0 %v2746
    %3833 = vmatprep.subr.mxu0 0.0
    %3834 = vmatpush1.msra.mxu0 %v2745
    %3835 = vmatprep.subr.mxu0 0.0
    %3836 = vmatpush1.msra.mxu0 %v2744
    %3837 = vmatprep.subr.mxu0 0.0
    %3838 = vmatpush1.msra.mxu0 %v2743
    %3839 = vmatprep.subr.mxu0 0.0
    %3840 = vmatpush2.msra.mxu0 0.0
    %3841 = vmatprep.subr.mxu0 0.0
    %3842 = vmatpush2.msra.mxu0 0.0
    %3843 = vmatprep.subr.mxu0 0.0
    %3844 = vmatpush2.msra.mxu0 0.0
    %3845 = vmatprep.subr.mxu0 0.0
    %3846 = vmatpush2.msra.mxu0 0.0
    %3847 = vmatprep.subr.mxu0 0.0
    %3848 = vmatpush2.msra.mxu0 0.0
    %3849 = vmatprep.subr.mxu0 0.0
    %3850 = vmatpush2.msra.mxu0 0.0
    %3851 = vmatprep.subr.mxu0 0.0
    %3852 = vmatpush2.msra.mxu0 0.0
    %3853 = vmatprep.subr.mxu0 0.0
    %3854 = vmatpush2.msra.mxu0 0.0
    %3855 = vmatprep.subr.mxu0 0.0
    %3856 = vmatpush2.msra.mxu0 0.0
    %3857 = vmatprep.subr.mxu0 0.0
    %3858 = vmatpush2.msra.mxu0 0.0
    %3859 = vmatprep.subr.mxu0 0.0
    %3860 = vmatpush2.msra.mxu0 0.0
    %3861 = vmatprep.subr.mxu0 0.0
    %3862 = vmatpush2.msra.mxu0 0.0
    %3863 = vmatprep.subr.mxu0 0.0
    %3864 = vmatpush2.msra.mxu0 0.0
    %3865 = vmatprep.subr.mxu0 0.0
    %3866 = vmatpush2.msra.mxu0 0.0
    %3867 = vmatprep.subr.mxu0 0.0
    %3868 = vmatpush2.msra.mxu0 0.0
    %3869 = vmatprep.subr.mxu0 0.0
    %3870 = vmatpush2.msra.mxu0 0.0
    %3871 = vmatprep.mubr.f32.mxu0 0.0
    %3872 = vmatmul.mubr.f32.gmra.mxu0 %v3728
    %v3873 = vpop.f32.mrf.mxu0
    %v3874 = vadd.f32 0.0, %v3873
    %v3875 = vpop.f32.mrf.mxu0
    %3876 = vdwg.mxu0
    %v3877 = vadd.f32 %v2650, %v3874
    %v3878 = vxor.u32 %v3877, 2147483648
    %v3879 = vmul.f32 %v3878, 1.442695
    %v3880 = vpow.pop %v3879
    %v3881 = vadd.f32 %v3880, 1.0
    %v3882 = vrcp.pop %v3881
    %v3883 = vmul.f32 1.0, %v3882
    %3884 = vmatprep.subr.mxu0 0.0
    %3885 = vmatpush1.msra.mxu0 0.0
    %3886 = vmatprep.subr.mxu0 0.0
    %3887 = vmatpush1.msra.mxu0 0.0
    %3888 = vmatprep.subr.mxu0 0.0
    %3889 = vmatpush1.msra.mxu0 0.0
    %3890 = vmatprep.subr.mxu0 0.0
    %3891 = vmatpush1.msra.mxu0 0.0
    %3892 = vmatprep.subr.mxu0 0.0
    %3893 = vmatpush1.msra.mxu0 0.0
    %3894 = vmatprep.subr.mxu0 0.0
    %3895 = vmatpush1.msra.mxu0 0.0
    %3896 = vmatprep.subr.mxu0 0.0
    %3897 = vmatpush1.msra.mxu0 0.0
    %3898 = vmatprep.subr.mxu0 0.0
    %3899 = vmatpush1.msra.mxu0 0.0
    %3900 = vmatprep.subr.mxu0 0.0
    %3901 = vmatpush1.msra.mxu0 0.0
    %3902 = vmatprep.subr.mxu0 0.0
    %3903 = vmatpush1.msra.mxu0 0.0
    %3904 = vmatprep.subr.mxu0 0.0
    %3905 = vmatpush1.msra.mxu0 0.0
    %3906 = vmatprep.subr.mxu0 0.0
    %3907 = vmatpush1.msra.mxu0 0.0
    %3908 = vmatprep.subr.mxu0 0.0
    %3909 = vmatpush1.msra.mxu0 %v2750
    %3910 = vmatprep.subr.mxu0 0.0
    %3911 = vmatpush1.msra.mxu0 %v2749
    %3912 = vmatprep.subr.mxu0 0.0
    %3913 = vmatpush1.msra.mxu0 %v2748
    %3914 = vmatprep.subr.mxu0 0.0
    %3915 = vmatpush1.msra.mxu0 %v2747
    %3916 = vmatprep.subr.mxu0 0.0
    %3917 = vmatpush2.msra.mxu0 0.0
    %3918 = vmatprep.subr.mxu0 0.0
    %3919 = vmatpush2.msra.mxu0 0.0
    %3920 = vmatprep.subr.mxu0 0.0
    %3921 = vmatpush2.msra.mxu0 0.0
    %3922 = vmatprep.subr.mxu0 0.0
    %3923 = vmatpush2.msra.mxu0 0.0
    %3924 = vmatprep.subr.mxu0 0.0
    %3925 = vmatpush2.msra.mxu0 0.0
    %3926 = vmatprep.subr.mxu0 0.0
    %3927 = vmatpush2.msra.mxu0 0.0
    %3928 = vmatprep.subr.mxu0 0.0
    %3929 = vmatpush2.msra.mxu0 0.0
    %3930 = vmatprep.subr.mxu0 0.0
    %3931 = vmatpush2.msra.mxu0 0.0
    %3932 = vmatprep.subr.mxu0 0.0
    %3933 = vmatpush2.msra.mxu0 0.0
    %3934 = vmatprep.subr.mxu0 0.0
    %3935 = vmatpush2.msra.mxu0 0.0
    %3936 = vmatprep.subr.mxu0 0.0
    %3937 = vmatpush2.msra.mxu0 0.0
    %3938 = vmatprep.subr.mxu0 0.0
    %3939 = vmatpush2.msra.mxu0 0.0
    %3940 = vmatprep.subr.mxu0 0.0
    %3941 = vmatpush2.msra.mxu0 0.0
    %3942 = vmatprep.subr.mxu0 0.0
    %3943 = vmatpush2.msra.mxu0 0.0
    %3944 = vmatprep.subr.mxu0 0.0
    %3945 = vmatpush2.msra.mxu0 0.0
    %3946 = vmatprep.subr.mxu0 0.0
    %3947 = vmatpush2.msra.mxu0 0.0
    %3948 = vmatprep.mubr.f32.mxu0 0.0
    %3949 = vmatmul.mubr.f32.gmra.mxu0 %v3728
    %v3950 = vpop.f32.mrf.mxu0
    %v3951 = vadd.f32 %v2756, %v3950
    %v3952 = vpop.f32.mrf.mxu0
    %3953 = vdwg.mxu0
    %v3954 = vmul.f32 %v3806, %v3951
    %v3955 = vadd.f32 %v2736, %v3954
    %v3956 = vtanh.pop %v3955
    %v3957 = vsub.f32 1.0, %v3883
    %v3958 = vmul.f32 %v3957, %v3956
    %v3960 = vmul.f32 %v3883, %v3727
    %v3961 = vadd.f32 %v3958, %v3960
    %v3963 = vsel %vm522, %v3961, 0
    %3965 = vmatprep.subr.mxu0 0.0
    %3966 = vmatpush1.msra.mxu0 0.0
    %3967 = vmatprep.subr.mxu0 0.0
    %3968 = vmatpush1.msra.mxu0 0.0
    %3969 = vmatprep.subr.mxu0 0.0
    %3970 = vmatpush1.msra.mxu0 0.0
    %3971 = vmatprep.subr.mxu0 0.0
    %3972 = vmatpush1.msra.mxu0 0.0
    %3973 = vmatprep.subr.mxu0 0.0
    %3974 = vmatpush1.msra.mxu0 0.0
    %3975 = vmatprep.subr.mxu0 0.0
    %3976 = vmatpush1.msra.mxu0 0.0
    %3977 = vmatprep.subr.mxu0 0.0
    %3978 = vmatpush1.msra.mxu0 0.0
    %3979 = vmatprep.subr.mxu0 0.0
    %3980 = vmatpush1.msra.mxu0 0.0
    %3981 = vmatprep.subr.mxu0 0.0
    %3982 = vmatpush1.msra.mxu0 0.0
    %3983 = vmatprep.subr.mxu0 0.0
    %3984 = vmatpush1.msra.mxu0 0.0
    %3985 = vmatprep.subr.mxu0 0.0
    %3986 = vmatpush1.msra.mxu0 0.0
    %3987 = vmatprep.subr.mxu0 0.0
    %3988 = vmatpush1.msra.mxu0 0.0
    %3989 = vmatprep.subr.mxu0 0.0
    %3990 = vmatpush1.msra.mxu0 %v2742
    %3991 = vmatprep.subr.mxu0 0.0
    %3992 = vmatpush1.msra.mxu0 %v2741
    %3993 = vmatprep.subr.mxu0 0.0
    %3994 = vmatpush1.msra.mxu0 %v2740
    %3995 = vmatprep.subr.mxu0 0.0
    %3996 = vmatpush1.msra.mxu0 %v2739
    %3997 = vmatprep.subr.mxu0 0.0
    %3998 = vmatpush2.msra.mxu0 0.0
    %3999 = vmatprep.subr.mxu0 0.0
    %4000 = vmatpush2.msra.mxu0 0.0
    %4001 = vmatprep.subr.mxu0 0.0
    %4002 = vmatpush2.msra.mxu0 0.0
    %4003 = vmatprep.subr.mxu0 0.0
    %4004 = vmatpush2.msra.mxu0 0.0
    %4005 = vmatprep.subr.mxu0 0.0
    %4006 = vmatpush2.msra.mxu0 0.0
    %4007 = vmatprep.subr.mxu0 0.0
    %4008 = vmatpush2.msra.mxu0 0.0
    %4009 = vmatprep.subr.mxu0 0.0
    %4010 = vmatpush2.msra.mxu0 0.0
    %4011 = vmatprep.subr.mxu0 0.0
    %4012 = vmatpush2.msra.mxu0 0.0
    %4013 = vmatprep.subr.mxu0 0.0
    %4014 = vmatpush2.msra.mxu0 0.0
    %4015 = vmatprep.subr.mxu0 0.0
    %4016 = vmatpush2.msra.mxu0 0.0
    %4017 = vmatprep.subr.mxu0 0.0
    %4018 = vmatpush2.msra.mxu0 0.0
    %4019 = vmatprep.subr.mxu0 0.0
    %4020 = vmatpush2.msra.mxu0 0.0
    %4021 = vmatprep.subr.mxu0 0.0
    %4022 = vmatpush2.msra.mxu0 0.0
    %4023 = vmatprep.subr.mxu0 0.0
    %4024 = vmatpush2.msra.mxu0 0.0
    %4025 = vmatprep.subr.mxu0 0.0
    %4026 = vmatpush2.msra.mxu0 0.0
    %4027 = vmatprep.subr.mxu0 0.0
    %4028 = vmatpush2.msra.mxu0 0.0
    %4029 = vmatprep.mubr.f32.mxu0 0.0
    %4030 = vmatmul.mubr.f32.gmra.mxu0 %v3963
    %v4031 = vpop.f32.mrf.mxu0
    %v4032 = vadd.f32 0.0, %v4031
    %v4033 = vpop.f32.mrf.mxu0
    %4034 = vdwg.mxu0
    %v4036 = vrot.slane %v4032, 6
    %v4038 = vadd.f32 %v2564, %v4036
    %v4039 = vxor.u32 %v4038, 2147483648
    %v4040 = vmul.f32 %v4039, 1.442695
    %v4041 = vpow.pop %v4040
    %v4042 = vadd.f32 %v4041, 1.0
    %v4043 = vrcp.pop %v4042
    %v4044 = vmul.f32 1.0, %v4043
    %4045 = vmatprep.subr.mxu0 0.0
    %4046 = vmatpush1.msra.mxu0 0.0
    %4047 = vmatprep.subr.mxu0 0.0
    %4048 = vmatpush1.msra.mxu0 0.0
    %4049 = vmatprep.subr.mxu0 0.0
    %4050 = vmatpush1.msra.mxu0 0.0
    %4051 = vmatprep.subr.mxu0 0.0
    %4052 = vmatpush1.msra.mxu0 0.0
    %4053 = vmatprep.subr.mxu0 0.0
    %4054 = vmatpush1.msra.mxu0 0.0
    %4055 = vmatprep.subr.mxu0 0.0
    %4056 = vmatpush1.msra.mxu0 0.0
    %4057 = vmatprep.subr.mxu0 0.0
    %4058 = vmatpush1.msra.mxu0 0.0
    %4059 = vmatprep.subr.mxu0 0.0
    %4060 = vmatpush1.msra.mxu0 0.0
    %4061 = vmatprep.subr.mxu0 0.0
    %4062 = vmatpush1.msra.mxu0 0.0
    %4063 = vmatprep.subr.mxu0 0.0
    %4064 = vmatpush1.msra.mxu0 0.0
    %4065 = vmatprep.subr.mxu0 0.0
    %4066 = vmatpush1.msra.mxu0 0.0
    %4067 = vmatprep.subr.mxu0 0.0
    %4068 = vmatpush1.msra.mxu0 0.0
    %4069 = vmatprep.subr.mxu0 0.0
    %4070 = vmatpush1.msra.mxu0 %v2746
    %4071 = vmatprep.subr.mxu0 0.0
    %4072 = vmatpush1.msra.mxu0 %v2745
    %4073 = vmatprep.subr.mxu0 0.0
    %4074 = vmatpush1.msra.mxu0 %v2744
    %4075 = vmatprep.subr.mxu0 0.0
    %4076 = vmatpush1.msra.mxu0 %v2743
    %4077 = vmatprep.subr.mxu0 0.0
    %4078 = vmatpush2.msra.mxu0 0.0
    %4079 = vmatprep.subr.mxu0 0.0
    %4080 = vmatpush2.msra.mxu0 0.0
    %4081 = vmatprep.subr.mxu0 0.0
    %4082 = vmatpush2.msra.mxu0 0.0
    %4083 = vmatprep.subr.mxu0 0.0
    %4084 = vmatpush2.msra.mxu0 0.0
    %4085 = vmatprep.subr.mxu0 0.0
    %4086 = vmatpush2.msra.mxu0 0.0
    %4087 = vmatprep.subr.mxu0 0.0
    %4088 = vmatpush2.msra.mxu0 0.0
    %4089 = vmatprep.subr.mxu0 0.0
    %4090 = vmatpush2.msra.mxu0 0.0
    %4091 = vmatprep.subr.mxu0 0.0
    %4092 = vmatpush2.msra.mxu0 0.0
    %4093 = vmatprep.subr.mxu0 0.0
    %4094 = vmatpush2.msra.mxu0 0.0
    %4095 = vmatprep.subr.mxu0 0.0
    %4096 = vmatpush2.msra.mxu0 0.0
    %4097 = vmatprep.subr.mxu0 0.0
    %4098 = vmatpush2.msra.mxu0 0.0
    %4099 = vmatprep.subr.mxu0 0.0
    %4100 = vmatpush2.msra.mxu0 0.0
    %4101 = vmatprep.subr.mxu0 0.0
    %4102 = vmatpush2.msra.mxu0 0.0
    %4103 = vmatprep.subr.mxu0 0.0
    %4104 = vmatpush2.msra.mxu0 0.0
    %4105 = vmatprep.subr.mxu0 0.0
    %4106 = vmatpush2.msra.mxu0 0.0
    %4107 = vmatprep.subr.mxu0 0.0
    %4108 = vmatpush2.msra.mxu0 0.0
    %4109 = vmatprep.mubr.f32.mxu0 0.0
    %4110 = vmatmul.mubr.f32.gmra.mxu0 %v3963
    %v4111 = vpop.f32.mrf.mxu0
    %v4112 = vadd.f32 0.0, %v4111
    %v4113 = vpop.f32.mrf.mxu0
    %4114 = vdwg.mxu0
    %v4116 = vrot.slane %v4112, 6
    %v4118 = vadd.f32 %v2650, %v4116
    %v4119 = vxor.u32 %v4118, 2147483648
    %v4120 = vmul.f32 %v4119, 1.442695
    %v4121 = vpow.pop %v4120
    %v4122 = vadd.f32 %v4121, 1.0
    %v4123 = vrcp.pop %v4122
    %v4124 = vmul.f32 1.0, %v4123
    %4125 = vmatprep.subr.mxu0 0.0
    %4126 = vmatpush1.msra.mxu0 0.0
    %4127 = vmatprep.subr.mxu0 0.0
    %4128 = vmatpush1.msra.mxu0 0.0
    %4129 = vmatprep.subr.mxu0 0.0
    %4130 = vmatpush1.msra.mxu0 0.0
    %4131 = vmatprep.subr.mxu0 0.0
    %4132 = vmatpush1.msra.mxu0 0.0
    %4133 = vmatprep.subr.mxu0 0.0
    %4134 = vmatpush1.msra.mxu0 0.0
    %4135 = vmatprep.subr.mxu0 0.0
    %4136 = vmatpush1.msra.mxu0 0.0
    %4137 = vmatprep.subr.mxu0 0.0
    %4138 = vmatpush1.msra.mxu0 0.0
    %4139 = vmatprep.subr.mxu0 0.0
    %4140 = vmatpush1.msra.mxu0 0.0
    %4141 = vmatprep.subr.mxu0 0.0
    %4142 = vmatpush1.msra.mxu0 0.0
    %4143 = vmatprep.subr.mxu0 0.0
    %4144 = vmatpush1.msra.mxu0 0.0
    %4145 = vmatprep.subr.mxu0 0.0
    %4146 = vmatpush1.msra.mxu0 0.0
    %4147 = vmatprep.subr.mxu0 0.0
    %4148 = vmatpush1.msra.mxu0 0.0
    %4149 = vmatprep.subr.mxu0 0.0
    %4150 = vmatpush1.msra.mxu0 %v2750
    %4151 = vmatprep.subr.mxu0 0.0
    %4152 = vmatpush1.msra.mxu0 %v2749
    %4153 = vmatprep.subr.mxu0 0.0
    %4154 = vmatpush1.msra.mxu0 %v2748
    %4155 = vmatprep.subr.mxu0 0.0
    %4156 = vmatpush1.msra.mxu0 %v2747
    %4157 = vmatprep.subr.mxu0 0.0
    %4158 = vmatpush2.msra.mxu0 0.0
    %4159 = vmatprep.subr.mxu0 0.0
    %4160 = vmatpush2.msra.mxu0 0.0
    %4161 = vmatprep.subr.mxu0 0.0
    %4162 = vmatpush2.msra.mxu0 0.0
    %4163 = vmatprep.subr.mxu0 0.0
    %4164 = vmatpush2.msra.mxu0 0.0
    %4165 = vmatprep.subr.mxu0 0.0
    %4166 = vmatpush2.msra.mxu0 0.0
    %4167 = vmatprep.subr.mxu0 0.0
    %4168 = vmatpush2.msra.mxu0 0.0
    %4169 = vmatprep.subr.mxu0 0.0
    %4170 = vmatpush2.msra.mxu0 0.0
    %4171 = vmatprep.subr.mxu0 0.0
    %4172 = vmatpush2.msra.mxu0 0.0
    %4173 = vmatprep.subr.mxu0 0.0
    %4174 = vmatpush2.msra.mxu0 0.0
    %4175 = vmatprep.subr.mxu0 0.0
    %4176 = vmatpush2.msra.mxu0 0.0
    %4177 = vmatprep.subr.mxu0 0.0
    %4178 = vmatpush2.msra.mxu0 0.0
    %4179 = vmatprep.subr.mxu0 0.0
    %4180 = vmatpush2.msra.mxu0 0.0
    %4181 = vmatprep.subr.mxu0 0.0
    %4182 = vmatpush2.msra.mxu0 0.0
    %4183 = vmatprep.subr.mxu0 0.0
    %4184 = vmatpush2.msra.mxu0 0.0
    %4185 = vmatprep.subr.mxu0 0.0
    %4186 = vmatpush2.msra.mxu0 0.0
    %4187 = vmatprep.subr.mxu0 0.0
    %4188 = vmatpush2.msra.mxu0 0.0
    %4189 = vmatprep.mubr.f32.mxu0 0.0
    %4190 = vmatmul.mubr.f32.gmra.mxu0 %v3963
    %v4191 = vpop.f32.mrf.mxu0
    %v4192 = vadd.f32 %v2756, %v4191
    %v4193 = vpop.f32.mrf.mxu0
    %4194 = vdwg.mxu0
    %v4196 = vrot.slane %v4192, 6
    %v4198 = vmul.f32 %v4044, %v4196
    %v4199 = vadd.f32 %v2736, %v4198
    %v4200 = vtanh.pop %v4199
    %v4201 = vsub.f32 1.0, %v4124
    %v4202 = vmul.f32 %v4201, %v4200
    %v4203 = vrot.slane %v3961, 6
    %v4205 = vmul.f32 %v4124, %v4203
    %v4206 = vadd.f32 %v4202, %v4205
    %v4208 = vrot.slane %v4206, 2
    %v4209 = vsel %vm522, %v4208, 0
    %4211 = vmatprep.subr.mxu0 0.0
    %4212 = vmatpush1.msra.mxu0 0.0
    %4213 = vmatprep.subr.mxu0 0.0
    %4214 = vmatpush1.msra.mxu0 0.0
    %4215 = vmatprep.subr.mxu0 0.0
    %4216 = vmatpush1.msra.mxu0 0.0
    %4217 = vmatprep.subr.mxu0 0.0
    %4218 = vmatpush1.msra.mxu0 0.0
    %4219 = vmatprep.subr.mxu0 0.0
    %4220 = vmatpush1.msra.mxu0 0.0
    %4221 = vmatprep.subr.mxu0 0.0
    %4222 = vmatpush1.msra.mxu0 0.0
    %4223 = vmatprep.subr.mxu0 0.0
    %4224 = vmatpush1.msra.mxu0 0.0
    %4225 = vmatprep.subr.mxu0 0.0
    %4226 = vmatpush1.msra.mxu0 0.0
    %4227 = vmatprep.subr.mxu0 0.0
    %4228 = vmatpush1.msra.mxu0 0.0
    %4229 = vmatprep.subr.mxu0 0.0
    %4230 = vmatpush1.msra.mxu0 0.0
    %4231 = vmatprep.subr.mxu0 0.0
    %4232 = vmatpush1.msra.mxu0 0.0
    %4233 = vmatprep.subr.mxu0 0.0
    %4234 = vmatpush1.msra.mxu0 0.0
    %4235 = vmatprep.subr.mxu0 0.0
    %4236 = vmatpush1.msra.mxu0 %v2742
    %4237 = vmatprep.subr.mxu0 0.0
    %4238 = vmatpush1.msra.mxu0 %v2741
    %4239 = vmatprep.subr.mxu0 0.0
    %4240 = vmatpush1.msra.mxu0 %v2740
    %4241 = vmatprep.subr.mxu0 0.0
    %4242 = vmatpush1.msra.mxu0 %v2739
    %4243 = vmatprep.subr.mxu0 0.0
    %4244 = vmatpush2.msra.mxu0 0.0
    %4245 = vmatprep.subr.mxu0 0.0
    %4246 = vmatpush2.msra.mxu0 0.0
    %4247 = vmatprep.subr.mxu0 0.0
    %4248 = vmatpush2.msra.mxu0 0.0
    %4249 = vmatprep.subr.mxu0 0.0
    %4250 = vmatpush2.msra.mxu0 0.0
    %4251 = vmatprep.subr.mxu0 0.0
    %4252 = vmatpush2.msra.mxu0 0.0
    %4253 = vmatprep.subr.mxu0 0.0
    %4254 = vmatpush2.msra.mxu0 0.0
    %4255 = vmatprep.subr.mxu0 0.0
    %4256 = vmatpush2.msra.mxu0 0.0
    %4257 = vmatprep.subr.mxu0 0.0
    %4258 = vmatpush2.msra.mxu0 0.0
    %4259 = vmatprep.subr.mxu0 0.0
    %4260 = vmatpush2.msra.mxu0 0.0
    %4261 = vmatprep.subr.mxu0 0.0
    %4262 = vmatpush2.msra.mxu0 0.0
    %4263 = vmatprep.subr.mxu0 0.0
    %4264 = vmatpush2.msra.mxu0 0.0
    %4265 = vmatprep.subr.mxu0 0.0
    %4266 = vmatpush2.msra.mxu0 0.0
    %4267 = vmatprep.subr.mxu0 0.0
    %4268 = vmatpush2.msra.mxu0 0.0
    %4269 = vmatprep.subr.mxu0 0.0
    %4270 = vmatpush2.msra.mxu0 0.0
    %4271 = vmatprep.subr.mxu0 0.0
    %4272 = vmatpush2.msra.mxu0 0.0
    %4273 = vmatprep.subr.mxu0 0.0
    %4274 = vmatpush2.msra.mxu0 0.0
    %4275 = vmatprep.mubr.f32.mxu0 0.0
    %4276 = vmatmul.mubr.f32.gmra.mxu0 %v4209
    %v4277 = vpop.f32.mrf.mxu0
    %v4278 = vadd.f32 0.0, %v4277
    %v4279 = vpop.f32.mrf.mxu0
    %4280 = vdwg.mxu0
    %v4282 = vrot.slane %v4278, 4
    %v4284 = vadd.f32 %v2564, %v4282
    %v4285 = vxor.u32 %v4284, 2147483648
    %v4286 = vmul.f32 %v4285, 1.442695
    %v4287 = vpow.pop %v4286
    %v4288 = vadd.f32 %v4287, 1.0
    %v4289 = vrcp.pop %v4288
    %v4290 = vmul.f32 1.0, %v4289
    %4291 = vmatprep.subr.mxu0 0.0
    %4292 = vmatpush1.msra.mxu0 0.0
    %4293 = vmatprep.subr.mxu0 0.0
    %4294 = vmatpush1.msra.mxu0 0.0
    %4295 = vmatprep.subr.mxu0 0.0
    %4296 = vmatpush1.msra.mxu0 0.0
    %4297 = vmatprep.subr.mxu0 0.0
    %4298 = vmatpush1.msra.mxu0 0.0
    %4299 = vmatprep.subr.mxu0 0.0
    %4300 = vmatpush1.msra.mxu0 0.0
    %4301 = vmatprep.subr.mxu0 0.0
    %4302 = vmatpush1.msra.mxu0 0.0
    %4303 = vmatprep.subr.mxu0 0.0
    %4304 = vmatpush1.msra.mxu0 0.0
    %4305 = vmatprep.subr.mxu0 0.0
    %4306 = vmatpush1.msra.mxu0 0.0
    %4307 = vmatprep.subr.mxu0 0.0
    %4308 = vmatpush1.msra.mxu0 0.0
    %4309 = vmatprep.subr.mxu0 0.0
    %4310 = vmatpush1.msra.mxu0 0.0
    %4311 = vmatprep.subr.mxu0 0.0
    %4312 = vmatpush1.msra.mxu0 0.0
    %4313 = vmatprep.subr.mxu0 0.0
    %4314 = vmatpush1.msra.mxu0 0.0
    %4315 = vmatprep.subr.mxu0 0.0
    %4316 = vmatpush1.msra.mxu0 %v2746
    %4317 = vmatprep.subr.mxu0 0.0
    %4318 = vmatpush1.msra.mxu0 %v2745
    %4319 = vmatprep.subr.mxu0 0.0
    %4320 = vmatpush1.msra.mxu0 %v2744
    %4321 = vmatprep.subr.mxu0 0.0
    %4322 = vmatpush1.msra.mxu0 %v2743
    %4323 = vmatprep.subr.mxu0 0.0
    %4324 = vmatpush2.msra.mxu0 0.0
    %4325 = vmatprep.subr.mxu0 0.0
    %4326 = vmatpush2.msra.mxu0 0.0
    %4327 = vmatprep.subr.mxu0 0.0
    %4328 = vmatpush2.msra.mxu0 0.0
    %4329 = vmatprep.subr.mxu0 0.0
    %4330 = vmatpush2.msra.mxu0 0.0
    %4331 = vmatprep.subr.mxu0 0.0
    %4332 = vmatpush2.msra.mxu0 0.0
    %4333 = vmatprep.subr.mxu0 0.0
    %4334 = vmatpush2.msra.mxu0 0.0
    %4335 = vmatprep.subr.mxu0 0.0
    %4336 = vmatpush2.msra.mxu0 0.0
    %4337 = vmatprep.subr.mxu0 0.0
    %4338 = vmatpush2.msra.mxu0 0.0
    %4339 = vmatprep.subr.mxu0 0.0
    %4340 = vmatpush2.msra.mxu0 0.0
    %4341 = vmatprep.subr.mxu0 0.0
    %4342 = vmatpush2.msra.mxu0 0.0
    %4343 = vmatprep.subr.mxu0 0.0
    %4344 = vmatpush2.msra.mxu0 0.0
    %4345 = vmatprep.subr.mxu0 0.0
    %4346 = vmatpush2.msra.mxu0 0.0
    %4347 = vmatprep.subr.mxu0 0.0
    %4348 = vmatpush2.msra.mxu0 0.0
    %4349 = vmatprep.subr.mxu0 0.0
    %4350 = vmatpush2.msra.mxu0 0.0
    %4351 = vmatprep.subr.mxu0 0.0
    %4352 = vmatpush2.msra.mxu0 0.0
    %4353 = vmatprep.subr.mxu0 0.0
    %4354 = vmatpush2.msra.mxu0 0.0
    %4355 = vmatprep.mubr.f32.mxu0 0.0
    %4356 = vmatmul.mubr.f32.gmra.mxu0 %v4209
    %v4357 = vpop.f32.mrf.mxu0
    %v4358 = vadd.f32 0.0, %v4357
    %v4359 = vpop.f32.mrf.mxu0
    %4360 = vdwg.mxu0
    %v4362 = vrot.slane %v4358, 4
    %v4364 = vadd.f32 %v2650, %v4362
    %v4365 = vxor.u32 %v4364, 2147483648
    %v4366 = vmul.f32 %v4365, 1.442695
    %v4367 = vpow.pop %v4366
    %v4368 = vadd.f32 %v4367, 1.0
    %v4369 = vrcp.pop %v4368
    %v4370 = vmul.f32 1.0, %v4369
    %4371 = vmatprep.subr.mxu0 0.0
    %4372 = vmatpush1.msra.mxu0 0.0
    %4373 = vmatprep.subr.mxu0 0.0
    %4374 = vmatpush1.msra.mxu0 0.0
    %4375 = vmatprep.subr.mxu0 0.0
    %4376 = vmatpush1.msra.mxu0 0.0
    %4377 = vmatprep.subr.mxu0 0.0
    %4378 = vmatpush1.msra.mxu0 0.0
    %4379 = vmatprep.subr.mxu0 0.0
    %4380 = vmatpush1.msra.mxu0 0.0
    %4381 = vmatprep.subr.mxu0 0.0
    %4382 = vmatpush1.msra.mxu0 0.0
    %4383 = vmatprep.subr.mxu0 0.0
    %4384 = vmatpush1.msra.mxu0 0.0
    %4385 = vmatprep.subr.mxu0 0.0
    %4386 = vmatpush1.msra.mxu0 0.0
    %4387 = vmatprep.subr.mxu0 0.0
    %4388 = vmatpush1.msra.mxu0 0.0
    %4389 = vmatprep.subr.mxu0 0.0
    %4390 = vmatpush1.msra.mxu0 0.0
    %4391 = vmatprep.subr.mxu0 0.0
    %4392 = vmatpush1.msra.mxu0 0.0
    %4393 = vmatprep.subr.mxu0 0.0
    %4394 = vmatpush1.msra.mxu0 0.0
    %4395 = vmatprep.subr.mxu0 0.0
    %4396 = vmatpush1.msra.mxu0 %v2750
    %4397 = vmatprep.subr.mxu0 0.0
    %4398 = vmatpush1.msra.mxu0 %v2749
    %4399 = vmatprep.subr.mxu0 0.0
    %4400 = vmatpush1.msra.mxu0 %v2748
    %4401 = vmatprep.subr.mxu0 0.0
    %4402 = vmatpush1.msra.mxu0 %v2747
    %4403 = vmatprep.subr.mxu0 0.0
    %4404 = vmatpush2.msra.mxu0 0.0
    %4405 = vmatprep.subr.mxu0 0.0
    %4406 = vmatpush2.msra.mxu0 0.0
    %4407 = vmatprep.subr.mxu0 0.0
    %4408 = vmatpush2.msra.mxu0 0.0
    %4409 = vmatprep.subr.mxu0 0.0
    %4410 = vmatpush2.msra.mxu0 0.0
    %4411 = vmatprep.subr.mxu0 0.0
    %4412 = vmatpush2.msra.mxu0 0.0
    %4413 = vmatprep.subr.mxu0 0.0
    %4414 = vmatpush2.msra.mxu0 0.0
    %4415 = vmatprep.subr.mxu0 0.0
    %4416 = vmatpush2.msra.mxu0 0.0
    %4417 = vmatprep.subr.mxu0 0.0
    %4418 = vmatpush2.msra.mxu0 0.0
    %4419 = vmatprep.subr.mxu0 0.0
    %4420 = vmatpush2.msra.mxu0 0.0
    %4421 = vmatprep.subr.mxu0 0.0
    %4422 = vmatpush2.msra.mxu0 0.0
    %4423 = vmatprep.subr.mxu0 0.0
    %4424 = vmatpush2.msra.mxu0 0.0
    %4425 = vmatprep.subr.mxu0 0.0
    %4426 = vmatpush2.msra.mxu0 0.0
    %4427 = vmatprep.subr.mxu0 0.0
    %4428 = vmatpush2.msra.mxu0 0.0
    %4429 = vmatprep.subr.mxu0 0.0
    %4430 = vmatpush2.msra.mxu0 0.0
    %4431 = vmatprep.subr.mxu0 0.0
    %4432 = vmatpush2.msra.mxu0 0.0
    %4433 = vmatprep.subr.mxu0 0.0
    %4434 = vmatpush2.msra.mxu0 0.0
    %4435 = vmatprep.mubr.f32.mxu0 0.0
    %4436 = vmatmul.mubr.f32.gmra.mxu0 %v4209
    %v4437 = vpop.f32.mrf.mxu0
    %v4438 = vadd.f32 %v2756, %v4437
    %v4439 = vpop.f32.mrf.mxu0
    %4440 = vdwg.mxu0
    %v4442 = vrot.slane %v4438, 4
    %v4444 = vmul.f32 %v4290, %v4442
    %v4445 = vadd.f32 %v2736, %v4444
    %v4446 = vtanh.pop %v4445
    %v4447 = vsub.f32 1.0, %v4370
    %v4448 = vmul.f32 %v4447, %v4446
    %v4449 = vrot.slane %v4206, 6
    %v4451 = vmul.f32 %v4370, %v4449
    %v4452 = vadd.f32 %v4448, %v4451
    %v4454 = vrot.slane %v4452, 4
    %v4455 = vsel %vm522, %v4454, 0
    %4457 = vmatprep.subr.mxu0 0.0
    %4458 = vmatpush1.msra.mxu0 0.0
    %4459 = vmatprep.subr.mxu0 0.0
    %4460 = vmatpush1.msra.mxu0 0.0
    %4461 = vmatprep.subr.mxu0 0.0
    %4462 = vmatpush1.msra.mxu0 0.0
    %4463 = vmatprep.subr.mxu0 0.0
    %4464 = vmatpush1.msra.mxu0 0.0
    %4465 = vmatprep.subr.mxu0 0.0
    %4466 = vmatpush1.msra.mxu0 0.0
    %4467 = vmatprep.subr.mxu0 0.0
    %4468 = vmatpush1.msra.mxu0 0.0
    %4469 = vmatprep.subr.mxu0 0.0
    %4470 = vmatpush1.msra.mxu0 0.0
    %4471 = vmatprep.subr.mxu0 0.0
    %4472 = vmatpush1.msra.mxu0 0.0
    %4473 = vmatprep.subr.mxu0 0.0
    %4474 = vmatpush1.msra.mxu0 0.0
    %4475 = vmatprep.subr.mxu0 0.0
    %4476 = vmatpush1.msra.mxu0 0.0
    %4477 = vmatprep.subr.mxu0 0.0
    %4478 = vmatpush1.msra.mxu0 0.0
    %4479 = vmatprep.subr.mxu0 0.0
    %4480 = vmatpush1.msra.mxu0 0.0
    %4481 = vmatprep.subr.mxu0 0.0
    %4482 = vmatpush1.msra.mxu0 %v2742
    %4483 = vmatprep.subr.mxu0 0.0
    %4484 = vmatpush1.msra.mxu0 %v2741
    %4485 = vmatprep.subr.mxu0 0.0
    %4486 = vmatpush1.msra.mxu0 %v2740
    %4487 = vmatprep.subr.mxu0 0.0
    %4488 = vmatpush1.msra.mxu0 %v2739
    %4489 = vmatprep.subr.mxu0 0.0
    %4490 = vmatpush2.msra.mxu0 0.0
    %4491 = vmatprep.subr.mxu0 0.0
    %4492 = vmatpush2.msra.mxu0 0.0
    %4493 = vmatprep.subr.mxu0 0.0
    %4494 = vmatpush2.msra.mxu0 0.0
    %4495 = vmatprep.subr.mxu0 0.0
    %4496 = vmatpush2.msra.mxu0 0.0
    %4497 = vmatprep.subr.mxu0 0.0
    %4498 = vmatpush2.msra.mxu0 0.0
    %4499 = vmatprep.subr.mxu0 0.0
    %4500 = vmatpush2.msra.mxu0 0.0
    %4501 = vmatprep.subr.mxu0 0.0
    %4502 = vmatpush2.msra.mxu0 0.0
    %4503 = vmatprep.subr.mxu0 0.0
    %4504 = vmatpush2.msra.mxu0 0.0
    %4505 = vmatprep.subr.mxu0 0.0
    %4506 = vmatpush2.msra.mxu0 0.0
    %4507 = vmatprep.subr.mxu0 0.0
    %4508 = vmatpush2.msra.mxu0 0.0
    %4509 = vmatprep.subr.mxu0 0.0
    %4510 = vmatpush2.msra.mxu0 0.0
    %4511 = vmatprep.subr.mxu0 0.0
    %4512 = vmatpush2.msra.mxu0 0.0
    %4513 = vmatprep.subr.mxu0 0.0
    %4514 = vmatpush2.msra.mxu0 0.0
    %4515 = vmatprep.subr.mxu0 0.0
    %4516 = vmatpush2.msra.mxu0 0.0
    %4517 = vmatprep.subr.mxu0 0.0
    %4518 = vmatpush2.msra.mxu0 0.0
    %4519 = vmatprep.subr.mxu0 0.0
    %4520 = vmatpush2.msra.mxu0 0.0
    %4521 = vmatprep.mubr.f32.mxu0 0.0
    %4522 = vmatmul.mubr.f32.gmra.mxu0 %v4455
    %v4523 = vpop.f32.mrf.mxu0
    %v4524 = vadd.f32 0.0, %v4523
    %v4525 = vpop.f32.mrf.mxu0
    %4526 = vdwg.mxu0
    %v4528 = vrot.slane %v4524, 2
    %v4530 = vadd.f32 %v2564, %v4528
    %v4531 = vxor.u32 %v4530, 2147483648
    %v4532 = vmul.f32 %v4531, 1.442695
    %v4533 = vpow.pop %v4532
    %v4534 = vadd.f32 %v4533, 1.0
    %v4535 = vrcp.pop %v4534
    %v4536 = vmul.f32 1.0, %v4535
    %4537 = vmatprep.subr.mxu0 0.0
    %4538 = vmatpush1.msra.mxu0 0.0
    %4539 = vmatprep.subr.mxu0 0.0
    %4540 = vmatpush1.msra.mxu0 0.0
    %4541 = vmatprep.subr.mxu0 0.0
    %4542 = vmatpush1.msra.mxu0 0.0
    %4543 = vmatprep.subr.mxu0 0.0
    %4544 = vmatpush1.msra.mxu0 0.0
    %4545 = vmatprep.subr.mxu0 0.0
    %4546 = vmatpush1.msra.mxu0 0.0
    %4547 = vmatprep.subr.mxu0 0.0
    %4548 = vmatpush1.msra.mxu0 0.0
    %4549 = vmatprep.subr.mxu0 0.0
    %4550 = vmatpush1.msra.mxu0 0.0
    %4551 = vmatprep.subr.mxu0 0.0
    %4552 = vmatpush1.msra.mxu0 0.0
    %4553 = vmatprep.subr.mxu0 0.0
    %4554 = vmatpush1.msra.mxu0 0.0
    %4555 = vmatprep.subr.mxu0 0.0
    %4556 = vmatpush1.msra.mxu0 0.0
    %4557 = vmatprep.subr.mxu0 0.0
    %4558 = vmatpush1.msra.mxu0 0.0
    %4559 = vmatprep.subr.mxu0 0.0
    %4560 = vmatpush1.msra.mxu0 0.0
    %4561 = vmatprep.subr.mxu0 0.0
    %4562 = vmatpush1.msra.mxu0 %v2746
    %4563 = vmatprep.subr.mxu0 0.0
    %4564 = vmatpush1.msra.mxu0 %v2745
    %4565 = vmatprep.subr.mxu0 0.0
    %4566 = vmatpush1.msra.mxu0 %v2744
    %4567 = vmatprep.subr.mxu0 0.0
    %4568 = vmatpush1.msra.mxu0 %v2743
    %4569 = vmatprep.subr.mxu0 0.0
    %4570 = vmatpush2.msra.mxu0 0.0
    %4571 = vmatprep.subr.mxu0 0.0
    %4572 = vmatpush2.msra.mxu0 0.0
    %4573 = vmatprep.subr.mxu0 0.0
    %4574 = vmatpush2.msra.mxu0 0.0
    %4575 = vmatprep.subr.mxu0 0.0
    %4576 = vmatpush2.msra.mxu0 0.0
    %4577 = vmatprep.subr.mxu0 0.0
    %4578 = vmatpush2.msra.mxu0 0.0
    %4579 = vmatprep.subr.mxu0 0.0
    %4580 = vmatpush2.msra.mxu0 0.0
    %4581 = vmatprep.subr.mxu0 0.0
    %4582 = vmatpush2.msra.mxu0 0.0
    %4583 = vmatprep.subr.mxu0 0.0
    %4584 = vmatpush2.msra.mxu0 0.0
    %4585 = vmatprep.subr.mxu0 0.0
    %4586 = vmatpush2.msra.mxu0 0.0
    %4587 = vmatprep.subr.mxu0 0.0
    %4588 = vmatpush2.msra.mxu0 0.0
    %4589 = vmatprep.subr.mxu0 0.0
    %4590 = vmatpush2.msra.mxu0 0.0
    %4591 = vmatprep.subr.mxu0 0.0
    %4592 = vmatpush2.msra.mxu0 0.0
    %4593 = vmatprep.subr.mxu0 0.0
    %4594 = vmatpush2.msra.mxu0 0.0
    %4595 = vmatprep.subr.mxu0 0.0
    %4596 = vmatpush2.msra.mxu0 0.0
    %4597 = vmatprep.subr.mxu0 0.0
    %4598 = vmatpush2.msra.mxu0 0.0
    %4599 = vmatprep.subr.mxu0 0.0
    %4600 = vmatpush2.msra.mxu0 0.0
    %4601 = vmatprep.mubr.f32.mxu0 0.0
    %4602 = vmatmul.mubr.f32.gmra.mxu0 %v4455
    %v4603 = vpop.f32.mrf.mxu0
    %v4604 = vadd.f32 0.0, %v4603
    %v4605 = vpop.f32.mrf.mxu0
    %4606 = vdwg.mxu0
    %v4608 = vrot.slane %v4604, 2
    %v4610 = vadd.f32 %v2650, %v4608
    %v4611 = vxor.u32 %v4610, 2147483648
    %v4612 = vmul.f32 %v4611, 1.442695
    %v4613 = vpow.pop %v4612
    %v4614 = vadd.f32 %v4613, 1.0
    %v4615 = vrcp.pop %v4614
    %v4616 = vmul.f32 1.0, %v4615
    %4617 = vmatprep.subr.mxu0 0.0
    %4618 = vmatpush1.msra.mxu0 0.0
    %4619 = vmatprep.subr.mxu0 0.0
    %4620 = vmatpush1.msra.mxu0 0.0
    %4621 = vmatprep.subr.mxu0 0.0
    %4622 = vmatpush1.msra.mxu0 0.0
    %4623 = vmatprep.subr.mxu0 0.0
    %4624 = vmatpush1.msra.mxu0 0.0
    %4625 = vmatprep.subr.mxu0 0.0
    %4626 = vmatpush1.msra.mxu0 0.0
    %4627 = vmatprep.subr.mxu0 0.0
    %4628 = vmatpush1.msra.mxu0 0.0
    %4629 = vmatprep.subr.mxu0 0.0
    %4630 = vmatpush1.msra.mxu0 0.0
    %4631 = vmatprep.subr.mxu0 0.0
    %4632 = vmatpush1.msra.mxu0 0.0
    %4633 = vmatprep.subr.mxu0 0.0
    %4634 = vmatpush1.msra.mxu0 0.0
    %4635 = vmatprep.subr.mxu0 0.0
    %4636 = vmatpush1.msra.mxu0 0.0
    %4637 = vmatprep.subr.mxu0 0.0
    %4638 = vmatpush1.msra.mxu0 0.0
    %4639 = vmatprep.subr.mxu0 0.0
    %4640 = vmatpush1.msra.mxu0 0.0
    %4641 = vmatprep.subr.mxu0 0.0
    %4642 = vmatpush1.msra.mxu0 %v2750
    %4643 = vmatprep.subr.mxu0 0.0
    %4644 = vmatpush1.msra.mxu0 %v2749
    %4645 = vmatprep.subr.mxu0 0.0
    %4646 = vmatpush1.msra.mxu0 %v2748
    %4647 = vmatprep.subr.mxu0 0.0
    %4648 = vmatpush1.msra.mxu0 %v2747
    %4649 = vmatprep.subr.mxu0 0.0
    %4650 = vmatpush2.msra.mxu0 0.0
    %4651 = vmatprep.subr.mxu0 0.0
    %4652 = vmatpush2.msra.mxu0 0.0
    %4653 = vmatprep.subr.mxu0 0.0
    %4654 = vmatpush2.msra.mxu0 0.0
    %4655 = vmatprep.subr.mxu0 0.0
    %4656 = vmatpush2.msra.mxu0 0.0
    %4657 = vmatprep.subr.mxu0 0.0
    %4658 = vmatpush2.msra.mxu0 0.0
    %4659 = vmatprep.subr.mxu0 0.0
    %4660 = vmatpush2.msra.mxu0 0.0
    %4661 = vmatprep.subr.mxu0 0.0
    %4662 = vmatpush2.msra.mxu0 0.0
    %4663 = vmatprep.subr.mxu0 0.0
    %4664 = vmatpush2.msra.mxu0 0.0
    %4665 = vmatprep.subr.mxu0 0.0
    %4666 = vmatpush2.msra.mxu0 0.0
    %4667 = vmatprep.subr.mxu0 0.0
    %4668 = vmatpush2.msra.mxu0 0.0
    %4669 = vmatprep.subr.mxu0 0.0
    %4670 = vmatpush2.msra.mxu0 0.0
    %4671 = vmatprep.subr.mxu0 0.0
    %4672 = vmatpush2.msra.mxu0 0.0
    %4673 = vmatprep.subr.mxu0 0.0
    %4674 = vmatpush2.msra.mxu0 0.0
    %4675 = vmatprep.subr.mxu0 0.0
    %4676 = vmatpush2.msra.mxu0 0.0
    %4677 = vmatprep.subr.mxu0 0.0
    %4678 = vmatpush2.msra.mxu0 0.0
    %4679 = vmatprep.subr.mxu0 0.0
    %4680 = vmatpush2.msra.mxu0 0.0
    %4681 = vmatprep.mubr.f32.mxu0 0.0
    %4682 = vmatmul.mubr.f32.gmra.mxu0 %v4455
    %v4683 = vpop.f32.mrf.mxu0
    %v4684 = vadd.f32 %v2756, %v4683
    %v4685 = vpop.f32.mrf.mxu0
    %4686 = vdwg.mxu0
    %v4688 = vrot.slane %v4684, 2
    %v4690 = vmul.f32 %v4536, %v4688
    %v4691 = vadd.f32 %v2736, %v4690
    %v4692 = vtanh.pop %v4691
    %v4693 = vsub.f32 1.0, %v4616
    %v4694 = vmul.f32 %v4693, %v4692
    %v4695 = vrot.slane %v4452, 6
    %v4697 = vmul.f32 %v4616, %v4695
    %v4698 = vadd.f32 %v4694, %v4697
    %v4699 = vsel %vm2467, %v2988, %v3233
    %v4700 = vsel %vm252, %v4699, %v3479
    %v4701 = vsel %vm2470, %v4700, %v3725
    %v4702 = vsel %vm2467, %v3961, %v4206
    %v4703 = vsel %vm252, %v4702, %v4452
    %v4704 = vsel %vm2470, %v4703, %v4698
    %v4705 = vld [vmem:[%s22] sm:$0x1]
    %v4707 = vlaneseq
    %v4708 = vshrl.u32 %v4707, 7
    %v4709 = vsub.s32 0, %v4708
    %v4710 = vrot.slane %v4705, %v4709
    %v4713 = vrot.slane %v4704, 7
    %vm4715 = vcmask 1040384
    %v4716 = vsel %vm4715, %v4701, %v4713
    %v4717 = vld [vmem:[#allocation19] sm:$0xff]
    %v4718 = vld [vmem:[#allocation19 + $0x8] sm:$0xff]
    %v4719 = vld [vmem:[#allocation19 + $0x10] sm:$0xff]
    %v4720 = vld [vmem:[#allocation19 + $0x18] sm:$0xff]
    %v4722 = vsel %vm522, %v4716, 0
    %4724 = vmatprep.subr.mxu0 0.0
    %4725 = vmatpush1.msra.mxu0 0.0
    %4726 = vmatprep.subr.mxu0 0.0
    %4727 = vmatpush1.msra.mxu0 0.0
    %4728 = vmatprep.subr.mxu0 0.0
    %4729 = vmatpush1.msra.mxu0 0.0
    %4730 = vmatprep.subr.mxu0 0.0
    %4731 = vmatpush1.msra.mxu0 0.0
    %4732 = vmatprep.subr.mxu0 0.0
    %4733 = vmatpush1.msra.mxu0 0.0
    %4734 = vmatprep.subr.mxu0 0.0
    %4735 = vmatpush1.msra.mxu0 0.0
    %4736 = vmatprep.subr.mxu0 0.0
    %4737 = vmatpush1.msra.mxu0 0.0
    %4738 = vmatprep.subr.mxu0 0.0
    %4739 = vmatpush1.msra.mxu0 0.0
    %4740 = vmatprep.subr.mxu0 0.0
    %4741 = vmatpush1.msra.mxu0 0.0
    %4742 = vmatprep.subr.mxu0 0.0
    %4743 = vmatpush1.msra.mxu0 0.0
    %4744 = vmatprep.subr.mxu0 0.0
    %4745 = vmatpush1.msra.mxu0 0.0
    %4746 = vmatprep.subr.mxu0 0.0
    %4747 = vmatpush1.msra.mxu0 0.0
    %4748 = vmatprep.subr.mxu0 0.0
    %4749 = vmatpush1.msra.mxu0 %v4720
    %4750 = vmatprep.subr.mxu0 0.0
    %4751 = vmatpush1.msra.mxu0 %v4719
    %4752 = vmatprep.subr.mxu0 0.0
    %4753 = vmatpush1.msra.mxu0 %v4718
    %4754 = vmatprep.subr.mxu0 0.0
    %4755 = vmatpush1.msra.mxu0 %v4717
    %4756 = vmatprep.subr.mxu0 0.0
    %4757 = vmatpush2.msra.mxu0 0.0
    %4758 = vmatprep.subr.mxu0 0.0
    %4759 = vmatpush2.msra.mxu0 0.0
    %4760 = vmatprep.subr.mxu0 0.0
    %4761 = vmatpush2.msra.mxu0 0.0
    %4762 = vmatprep.subr.mxu0 0.0
    %4763 = vmatpush2.msra.mxu0 0.0
    %4764 = vmatprep.subr.mxu0 0.0
    %4765 = vmatpush2.msra.mxu0 0.0
    %4766 = vmatprep.subr.mxu0 0.0
    %4767 = vmatpush2.msra.mxu0 0.0
    %4768 = vmatprep.subr.mxu0 0.0
    %4769 = vmatpush2.msra.mxu0 0.0
    %4770 = vmatprep.subr.mxu0 0.0
    %4771 = vmatpush2.msra.mxu0 0.0
    %4772 = vmatprep.subr.mxu0 0.0
    %4773 = vmatpush2.msra.mxu0 0.0
    %4774 = vmatprep.subr.mxu0 0.0
    %4775 = vmatpush2.msra.mxu0 0.0
    %4776 = vmatprep.subr.mxu0 0.0
    %4777 = vmatpush2.msra.mxu0 0.0
    %4778 = vmatprep.subr.mxu0 0.0
    %4779 = vmatpush2.msra.mxu0 0.0
    %4780 = vmatprep.subr.mxu0 0.0
    %4781 = vmatpush2.msra.mxu0 0.0
    %4782 = vmatprep.subr.mxu0 0.0
    %4783 = vmatpush2.msra.mxu0 0.0
    %4784 = vmatprep.subr.mxu0 0.0
    %4785 = vmatpush2.msra.mxu0 0.0
    %4786 = vmatprep.subr.mxu0 0.0
    %4787 = vmatpush2.msra.mxu0 0.0
    %4788 = vmatprep.mubr.f32.mxu0 0.0
    %4789 = vmatmul.mubr.f32.gmra.mxu0 %v4722
    %v4790 = vpop.f32.mrf.mxu0
    %v4791 = vadd.f32 0.0, %v4790
    %v4792 = vpop.f32.mrf.mxu0
    %4793 = vdwg.mxu0
    %v4794 = vadd.f32 %v4710, %v4791
    %v4796 = vrot.slane %v4701, 1
    %v4798 = vsel %vm4715, %v4796, %v4704
    %s4799 = scalar_lea.vmem [#allocation19], 32
    %v4800 = vld [vmem:[%s4799] sm:$0xff]
    %v4801 = vld [vmem:[%s4799 + $0x8] sm:$0xff]
    %v4802 = vld [vmem:[%s4799 + $0x10] sm:$0xff]
    %v4803 = vld [vmem:[%s4799 + $0x18] sm:$0xff]
    %v4805 = vsel %vm522, %v4798, 0
    %4807 = vmatprep.subr.mxu0 0.0
    %4808 = vmatpush1.msra.mxu0 0.0
    %4809 = vmatprep.subr.mxu0 0.0
    %4810 = vmatpush1.msra.mxu0 0.0
    %4811 = vmatprep.subr.mxu0 0.0
    %4812 = vmatpush1.msra.mxu0 0.0
    %4813 = vmatprep.subr.mxu0 0.0
    %4814 = vmatpush1.msra.mxu0 0.0
    %4815 = vmatprep.subr.mxu0 0.0
    %4816 = vmatpush1.msra.mxu0 0.0
    %4817 = vmatprep.subr.mxu0 0.0
    %4818 = vmatpush1.msra.mxu0 0.0
    %4819 = vmatprep.subr.mxu0 0.0
    %4820 = vmatpush1.msra.mxu0 0.0
    %4821 = vmatprep.subr.mxu0 0.0
    %4822 = vmatpush1.msra.mxu0 0.0
    %4823 = vmatprep.subr.mxu0 0.0
    %4824 = vmatpush1.msra.mxu0 0.0
    %4825 = vmatprep.subr.mxu0 0.0
    %4826 = vmatpush1.msra.mxu0 0.0
    %4827 = vmatprep.subr.mxu0 0.0
    %4828 = vmatpush1.msra.mxu0 0.0
    %4829 = vmatprep.subr.mxu0 0.0
    %4830 = vmatpush1.msra.mxu0 0.0
    %4831 = vmatprep.subr.mxu0 0.0
    %4832 = vmatpush1.msra.mxu0 %v4803
    %4833 = vmatprep.subr.mxu0 0.0
    %4834 = vmatpush1.msra.mxu0 %v4802
    %4835 = vmatprep.subr.mxu0 0.0
    %4836 = vmatpush1.msra.mxu0 %v4801
    %4837 = vmatprep.subr.mxu0 0.0
    %4838 = vmatpush1.msra.mxu0 %v4800
    %4839 = vmatprep.subr.mxu0 0.0
    %4840 = vmatpush2.msra.mxu0 0.0
    %4841 = vmatprep.subr.mxu0 0.0
    %4842 = vmatpush2.msra.mxu0 0.0
    %4843 = vmatprep.subr.mxu0 0.0
    %4844 = vmatpush2.msra.mxu0 0.0
    %4845 = vmatprep.subr.mxu0 0.0
    %4846 = vmatpush2.msra.mxu0 0.0
    %4847 = vmatprep.subr.mxu0 0.0
    %4848 = vmatpush2.msra.mxu0 0.0
    %4849 = vmatprep.subr.mxu0 0.0
    %4850 = vmatpush2.msra.mxu0 0.0
    %4851 = vmatprep.subr.mxu0 0.0
    %4852 = vmatpush2.msra.mxu0 0.0
    %4853 = vmatprep.subr.mxu0 0.0
    %4854 = vmatpush2.msra.mxu0 0.0
    %4855 = vmatprep.subr.mxu0 0.0
    %4856 = vmatpush2.msra.mxu0 0.0
    %4857 = vmatprep.subr.mxu0 0.0
    %4858 = vmatpush2.msra.mxu0 0.0
    %4859 = vmatprep.subr.mxu0 0.0
    %4860 = vmatpush2.msra.mxu0 0.0
    %4861 = vmatprep.subr.mxu0 0.0
    %4862 = vmatpush2.msra.mxu0 0.0
    %4863 = vmatprep.subr.mxu0 0.0
    %4864 = vmatpush2.msra.mxu0 0.0
    %4865 = vmatprep.subr.mxu0 0.0
    %4866 = vmatpush2.msra.mxu0 0.0
    %4867 = vmatprep.subr.mxu0 0.0
    %4868 = vmatpush2.msra.mxu0 0.0
    %4869 = vmatprep.subr.mxu0 0.0
    %4870 = vmatpush2.msra.mxu0 0.0
    %4871 = vmatprep.mubr.f32.mxu0 0.0
    %4872 = vmatmul.mubr.f32.gmra.mxu0 %v4805
    %v4873 = vpop.f32.mrf.mxu0
    %v4874 = vadd.f32 0.0, %v4873
    %v4875 = vpop.f32.mrf.mxu0
    %4876 = vdwg.mxu0
    %v4877 = vadd.f32 %v4794, %v4874
    %v4878 = vrot.slane %v4701, 2
    %v4880 = vrot.slane %v4704, 1
    %v4882 = vsel %vm4715, %v4878, %v4880
    %s4883 = scalar_lea.vmem [#allocation19], 64
    %v4884 = vld [vmem:[%s4883] sm:$0xff]
    %v4885 = vld [vmem:[%s4883 + $0x8] sm:$0xff]
    %v4886 = vld [vmem:[%s4883 + $0x10] sm:$0xff]
    %v4887 = vld [vmem:[%s4883 + $0x18] sm:$0xff]
    %v4889 = vsel %vm522, %v4882, 0
    %4891 = vmatprep.subr.mxu0 0.0
    %4892 = vmatpush1.msra.mxu0 0.0
    %4893 = vmatprep.subr.mxu0 0.0
    %4894 = vmatpush1.msra.mxu0 0.0
    %4895 = vmatprep.subr.mxu0 0.0
    %4896 = vmatpush1.msra.mxu0 0.0
    %4897 = vmatprep.subr.mxu0 0.0
    %4898 = vmatpush1.msra.mxu0 0.0
    %4899 = vmatprep.subr.mxu0 0.0
    %4900 = vmatpush1.msra.mxu0 0.0
    %4901 = vmatprep.subr.mxu0 0.0
    %4902 = vmatpush1.msra.mxu0 0.0
    %4903 = vmatprep.subr.mxu0 0.0
    %4904 = vmatpush1.msra.mxu0 0.0
    %4905 = vmatprep.subr.mxu0 0.0
    %4906 = vmatpush1.msra.mxu0 0.0
    %4907 = vmatprep.subr.mxu0 0.0
    %4908 = vmatpush1.msra.mxu0 0.0
    %4909 = vmatprep.subr.mxu0 0.0
    %4910 = vmatpush1.msra.mxu0 0.0
    %4911 = vmatprep.subr.mxu0 0.0
    %4912 = vmatpush1.msra.mxu0 0.0
    %4913 = vmatprep.subr.mxu0 0.0
    %4914 = vmatpush1.msra.mxu0 0.0
    %4915 = vmatprep.subr.mxu0 0.0
    %4916 = vmatpush1.msra.mxu0 %v4887
    %4917 = vmatprep.subr.mxu0 0.0
    %4918 = vmatpush1.msra.mxu0 %v4886
    %4919 = vmatprep.subr.mxu0 0.0
    %4920 = vmatpush1.msra.mxu0 %v4885
    %4921 = vmatprep.subr.mxu0 0.0
    %4922 = vmatpush1.msra.mxu0 %v4884
    %4923 = vmatprep.subr.mxu0 0.0
    %4924 = vmatpush2.msra.mxu0 0.0
    %4925 = vmatprep.subr.mxu0 0.0
    %4926 = vmatpush2.msra.mxu0 0.0
    %4927 = vmatprep.subr.mxu0 0.0
    %4928 = vmatpush2.msra.mxu0 0.0
    %4929 = vmatprep.subr.mxu0 0.0
    %4930 = vmatpush2.msra.mxu0 0.0
    %4931 = vmatprep.subr.mxu0 0.0
    %4932 = vmatpush2.msra.mxu0 0.0
    %4933 = vmatprep.subr.mxu0 0.0
    %4934 = vmatpush2.msra.mxu0 0.0
    %4935 = vmatprep.subr.mxu0 0.0
    %4936 = vmatpush2.msra.mxu0 0.0
    %4937 = vmatprep.subr.mxu0 0.0
    %4938 = vmatpush2.msra.mxu0 0.0
    %4939 = vmatprep.subr.mxu0 0.0
    %4940 = vmatpush2.msra.mxu0 0.0
    %4941 = vmatprep.subr.mxu0 0.0
    %4942 = vmatpush2.msra.mxu0 0.0
    %4943 = vmatprep.subr.mxu0 0.0
    %4944 = vmatpush2.msra.mxu0 0.0
    %4945 = vmatprep.subr.mxu0 0.0
    %4946 = vmatpush2.msra.mxu0 0.0
    %4947 = vmatprep.subr.mxu0 0.0
    %4948 = vmatpush2.msra.mxu0 0.0
    %4949 = vmatprep.subr.mxu0 0.0
    %4950 = vmatpush2.msra.mxu0 0.0
    %4951 = vmatprep.subr.mxu0 0.0
    %4952 = vmatpush2.msra.mxu0 0.0
    %4953 = vmatprep.subr.mxu0 0.0
    %4954 = vmatpush2.msra.mxu0 0.0
    %4955 = vmatprep.mubr.f32.mxu0 0.0
    %4956 = vmatmul.mubr.f32.gmra.mxu0 %v4889
    %v4957 = vpop.f32.mrf.mxu0
    %v4958 = vadd.f32 0.0, %v4957
    %v4959 = vpop.f32.mrf.mxu0
    %4960 = vdwg.mxu0
    %v4961 = vadd.f32 %v4877, %v4958
    %v4962 = vrot.slane %v4701, 3
    %v4964 = vrot.slane %v4704, 2
    %v4966 = vsel %vm4715, %v4962, %v4964
    %s4967 = scalar_lea.vmem [#allocation19], 96
    %v4968 = vld [vmem:[%s4967] sm:$0xff]
    %v4969 = vld [vmem:[%s4967 + $0x8] sm:$0xff]
    %v4970 = vld [vmem:[%s4967 + $0x10] sm:$0xff]
    %v4971 = vld [vmem:[%s4967 + $0x18] sm:$0xff]
    %v4973 = vsel %vm522, %v4966, 0
    %4975 = vmatprep.subr.mxu0 0.0
    %4976 = vmatpush1.msra.mxu0 0.0
    %4977 = vmatprep.subr.mxu0 0.0
    %4978 = vmatpush1.msra.mxu0 0.0
    %4979 = vmatprep.subr.mxu0 0.0
    %4980 = vmatpush1.msra.mxu0 0.0
    %4981 = vmatprep.subr.mxu0 0.0
    %4982 = vmatpush1.msra.mxu0 0.0
    %4983 = vmatprep.subr.mxu0 0.0
    %4984 = vmatpush1.msra.mxu0 0.0
    %4985 = vmatprep.subr.mxu0 0.0
    %4986 = vmatpush1.msra.mxu0 0.0
    %4987 = vmatprep.subr.mxu0 0.0
    %4988 = vmatpush1.msra.mxu0 0.0
    %4989 = vmatprep.subr.mxu0 0.0
    %4990 = vmatpush1.msra.mxu0 0.0
    %4991 = vmatprep.subr.mxu0 0.0
    %4992 = vmatpush1.msra.mxu0 0.0
    %4993 = vmatprep.subr.mxu0 0.0
    %4994 = vmatpush1.msra.mxu0 0.0
    %4995 = vmatprep.subr.mxu0 0.0
    %4996 = vmatpush1.msra.mxu0 0.0
    %4997 = vmatprep.subr.mxu0 0.0
    %4998 = vmatpush1.msra.mxu0 0.0
    %4999 = vmatprep.subr.mxu0 0.0
    %5000 = vmatpush1.msra.mxu0 %v4971
    %5001 = vmatprep.subr.mxu0 0.0
    %5002 = vmatpush1.msra.mxu0 %v4970
    %5003 = vmatprep.subr.mxu0 0.0
    %5004 = vmatpush1.msra.mxu0 %v4969
    %5005 = vmatprep.subr.mxu0 0.0
    %5006 = vmatpush1.msra.mxu0 %v4968
    %5007 = vmatprep.subr.mxu0 0.0
    %5008 = vmatpush2.msra.mxu0 0.0
    %5009 = vmatprep.subr.mxu0 0.0
    %5010 = vmatpush2.msra.mxu0 0.0
    %5011 = vmatprep.subr.mxu0 0.0
    %5012 = vmatpush2.msra.mxu0 0.0
    %5013 = vmatprep.subr.mxu0 0.0
    %5014 = vmatpush2.msra.mxu0 0.0
    %5015 = vmatprep.subr.mxu0 0.0
    %5016 = vmatpush2.msra.mxu0 0.0
    %5017 = vmatprep.subr.mxu0 0.0
    %5018 = vmatpush2.msra.mxu0 0.0
    %5019 = vmatprep.subr.mxu0 0.0
    %5020 = vmatpush2.msra.mxu0 0.0
    %5021 = vmatprep.subr.mxu0 0.0
    %5022 = vmatpush2.msra.mxu0 0.0
    %5023 = vmatprep.subr.mxu0 0.0
    %5024 = vmatpush2.msra.mxu0 0.0
    %5025 = vmatprep.subr.mxu0 0.0
    %5026 = vmatpush2.msra.mxu0 0.0
    %5027 = vmatprep.subr.mxu0 0.0
    %5028 = vmatpush2.msra.mxu0 0.0
    %5029 = vmatprep.subr.mxu0 0.0
    %5030 = vmatpush2.msra.mxu0 0.0
    %5031 = vmatprep.subr.mxu0 0.0
    %5032 = vmatpush2.msra.mxu0 0.0
    %5033 = vmatprep.subr.mxu0 0.0
    %5034 = vmatpush2.msra.mxu0 0.0
    %5035 = vmatprep.subr.mxu0 0.0
    %5036 = vmatpush2.msra.mxu0 0.0
    %5037 = vmatprep.subr.mxu0 0.0
    %5038 = vmatpush2.msra.mxu0 0.0
    %5039 = vmatprep.mubr.f32.mxu0 0.0
    %5040 = vmatmul.mubr.f32.gmra.mxu0 %v4973
    %v5041 = vpop.f32.mrf.mxu0
    %v5042 = vadd.f32 0.0, %v5041
    %v5043 = vpop.f32.mrf.mxu0
    %5044 = vdwg.mxu0
    %v5045 = vadd.f32 %v4961, %v5042
    %v5046 = vrot.slane %v4701, 4
    %v5048 = vrot.slane %v4704, 3
    %v5050 = vsel %vm4715, %v5046, %v5048
    %s5051 = scalar_lea.vmem [#allocation19], 128
    %v5052 = vld [vmem:[%s5051] sm:$0xff]
    %v5053 = vld [vmem:[%s5051 + $0x8] sm:$0xff]
    %v5054 = vld [vmem:[%s5051 + $0x10] sm:$0xff]
    %v5055 = vld [vmem:[%s5051 + $0x18] sm:$0xff]
    %v5057 = vsel %vm522, %v5050, 0
    %5059 = vmatprep.subr.mxu0 0.0
    %5060 = vmatpush1.msra.mxu0 0.0
    %5061 = vmatprep.subr.mxu0 0.0
    %5062 = vmatpush1.msra.mxu0 0.0
    %5063 = vmatprep.subr.mxu0 0.0
    %5064 = vmatpush1.msra.mxu0 0.0
    %5065 = vmatprep.subr.mxu0 0.0
    %5066 = vmatpush1.msra.mxu0 0.0
    %5067 = vmatprep.subr.mxu0 0.0
    %5068 = vmatpush1.msra.mxu0 0.0
    %5069 = vmatprep.subr.mxu0 0.0
    %5070 = vmatpush1.msra.mxu0 0.0
    %5071 = vmatprep.subr.mxu0 0.0
    %5072 = vmatpush1.msra.mxu0 0.0
    %5073 = vmatprep.subr.mxu0 0.0
    %5074 = vmatpush1.msra.mxu0 0.0
    %5075 = vmatprep.subr.mxu0 0.0
    %5076 = vmatpush1.msra.mxu0 0.0
    %5077 = vmatprep.subr.mxu0 0.0
    %5078 = vmatpush1.msra.mxu0 0.0
    %5079 = vmatprep.subr.mxu0 0.0
    %5080 = vmatpush1.msra.mxu0 0.0
    %5081 = vmatprep.subr.mxu0 0.0
    %5082 = vmatpush1.msra.mxu0 0.0
    %5083 = vmatprep.subr.mxu0 0.0
    %5084 = vmatpush1.msra.mxu0 %v5055
    %5085 = vmatprep.subr.mxu0 0.0
    %5086 = vmatpush1.msra.mxu0 %v5054
    %5087 = vmatprep.subr.mxu0 0.0
    %5088 = vmatpush1.msra.mxu0 %v5053
    %5089 = vmatprep.subr.mxu0 0.0
    %5090 = vmatpush1.msra.mxu0 %v5052
    %5091 = vmatprep.subr.mxu0 0.0
    %5092 = vmatpush2.msra.mxu0 0.0
    %5093 = vmatprep.subr.mxu0 0.0
    %5094 = vmatpush2.msra.mxu0 0.0
    %5095 = vmatprep.subr.mxu0 0.0
    %5096 = vmatpush2.msra.mxu0 0.0
    %5097 = vmatprep.subr.mxu0 0.0
    %5098 = vmatpush2.msra.mxu0 0.0
    %5099 = vmatprep.subr.mxu0 0.0
    %5100 = vmatpush2.msra.mxu0 0.0
    %5101 = vmatprep.subr.mxu0 0.0
    %5102 = vmatpush2.msra.mxu0 0.0
    %5103 = vmatprep.subr.mxu0 0.0
    %5104 = vmatpush2.msra.mxu0 0.0
    %5105 = vmatprep.subr.mxu0 0.0
    %5106 = vmatpush2.msra.mxu0 0.0
    %5107 = vmatprep.subr.mxu0 0.0
    %5108 = vmatpush2.msra.mxu0 0.0
    %5109 = vmatprep.subr.mxu0 0.0
    %5110 = vmatpush2.msra.mxu0 0.0
    %5111 = vmatprep.subr.mxu0 0.0
    %5112 = vmatpush2.msra.mxu0 0.0
    %5113 = vmatprep.subr.mxu0 0.0
    %5114 = vmatpush2.msra.mxu0 0.0
    %5115 = vmatprep.subr.mxu0 0.0
    %5116 = vmatpush2.msra.mxu0 0.0
    %5117 = vmatprep.subr.mxu0 0.0
    %5118 = vmatpush2.msra.mxu0 0.0
    %5119 = vmatprep.subr.mxu0 0.0
    %5120 = vmatpush2.msra.mxu0 0.0
    %5121 = vmatprep.subr.mxu0 0.0
    %5122 = vmatpush2.msra.mxu0 0.0
    %5123 = vmatprep.mubr.f32.mxu0 0.0
    %5124 = vmatmul.mubr.f32.gmra.mxu0 %v5057
    %v5125 = vpop.f32.mrf.mxu0
    %v5126 = vadd.f32 0.0, %v5125
    %v5127 = vpop.f32.mrf.mxu0
    %5128 = vdwg.mxu0
    %v5129 = vadd.f32 %v5045, %v5126
    %v5130 = vrot.slane %v4701, 5
    %v5132 = vrot.slane %v4704, 4
    %v5134 = vsel %vm4715, %v5130, %v5132
    %s5135 = scalar_lea.vmem [#allocation19], 160
    %v5136 = vld [vmem:[%s5135] sm:$0xff]
    %v5137 = vld [vmem:[%s5135 + $0x8] sm:$0xff]
    %v5138 = vld [vmem:[%s5135 + $0x10] sm:$0xff]
    %v5139 = vld [vmem:[%s5135 + $0x18] sm:$0xff]
    %v5141 = vsel %vm522, %v5134, 0
    %5143 = vmatprep.subr.mxu0 0.0
    %5144 = vmatpush1.msra.mxu0 0.0
    %5145 = vmatprep.subr.mxu0 0.0
    %5146 = vmatpush1.msra.mxu0 0.0
    %5147 = vmatprep.subr.mxu0 0.0
    %5148 = vmatpush1.msra.mxu0 0.0
    %5149 = vmatprep.subr.mxu0 0.0
    %5150 = vmatpush1.msra.mxu0 0.0
    %5151 = vmatprep.subr.mxu0 0.0
    %5152 = vmatpush1.msra.mxu0 0.0
    %5153 = vmatprep.subr.mxu0 0.0
    %5154 = vmatpush1.msra.mxu0 0.0
    %5155 = vmatprep.subr.mxu0 0.0
    %5156 = vmatpush1.msra.mxu0 0.0
    %5157 = vmatprep.subr.mxu0 0.0
    %5158 = vmatpush1.msra.mxu0 0.0
    %5159 = vmatprep.subr.mxu0 0.0
    %5160 = vmatpush1.msra.mxu0 0.0
    %5161 = vmatprep.subr.mxu0 0.0
    %5162 = vmatpush1.msra.mxu0 0.0
    %5163 = vmatprep.subr.mxu0 0.0
    %5164 = vmatpush1.msra.mxu0 0.0
    %5165 = vmatprep.subr.mxu0 0.0
    %5166 = vmatpush1.msra.mxu0 0.0
    %5167 = vmatprep.subr.mxu0 0.0
    %5168 = vmatpush1.msra.mxu0 %v5139
    %5169 = vmatprep.subr.mxu0 0.0
    %5170 = vmatpush1.msra.mxu0 %v5138
    %5171 = vmatprep.subr.mxu0 0.0
    %5172 = vmatpush1.msra.mxu0 %v5137
    %5173 = vmatprep.subr.mxu0 0.0
    %5174 = vmatpush1.msra.mxu0 %v5136
    %5175 = vmatprep.subr.mxu0 0.0
    %5176 = vmatpush2.msra.mxu0 0.0
    %5177 = vmatprep.subr.mxu0 0.0
    %5178 = vmatpush2.msra.mxu0 0.0
    %5179 = vmatprep.subr.mxu0 0.0
    %5180 = vmatpush2.msra.mxu0 0.0
    %5181 = vmatprep.subr.mxu0 0.0
    %5182 = vmatpush2.msra.mxu0 0.0
    %5183 = vmatprep.subr.mxu0 0.0
    %5184 = vmatpush2.msra.mxu0 0.0
    %5185 = vmatprep.subr.mxu0 0.0
    %5186 = vmatpush2.msra.mxu0 0.0
    %5187 = vmatprep.subr.mxu0 0.0
    %5188 = vmatpush2.msra.mxu0 0.0
    %5189 = vmatprep.subr.mxu0 0.0
    %5190 = vmatpush2.msra.mxu0 0.0
    %5191 = vmatprep.subr.mxu0 0.0
    %5192 = vmatpush2.msra.mxu0 0.0
    %5193 = vmatprep.subr.mxu0 0.0
    %5194 = vmatpush2.msra.mxu0 0.0
    %5195 = vmatprep.subr.mxu0 0.0
    %5196 = vmatpush2.msra.mxu0 0.0
    %5197 = vmatprep.subr.mxu0 0.0
    %5198 = vmatpush2.msra.mxu0 0.0
    %5199 = vmatprep.subr.mxu0 0.0
    %5200 = vmatpush2.msra.mxu0 0.0
    %5201 = vmatprep.subr.mxu0 0.0
    %5202 = vmatpush2.msra.mxu0 0.0
    %5203 = vmatprep.subr.mxu0 0.0
    %5204 = vmatpush2.msra.mxu0 0.0
    %5205 = vmatprep.subr.mxu0 0.0
    %5206 = vmatpush2.msra.mxu0 0.0
    %5207 = vmatprep.mubr.f32.mxu0 0.0
    %5208 = vmatmul.mubr.f32.gmra.mxu0 %v5141
    %v5209 = vpop.f32.mrf.mxu0
    %v5210 = vadd.f32 0.0, %v5209
    %v5211 = vpop.f32.mrf.mxu0
    %5212 = vdwg.mxu0
    %v5213 = vadd.f32 %v5129, %v5210
    %v5214 = vrot.slane %v4701, 6
    %v5216 = vrot.slane %v4704, 5
    %v5218 = vsel %vm4715, %v5214, %v5216
    %s5219 = scalar_lea.vmem [#allocation19], 192
    %v5220 = vld [vmem:[%s5219] sm:$0xff]
    %v5221 = vld [vmem:[%s5219 + $0x8] sm:$0xff]
    %v5222 = vld [vmem:[%s5219 + $0x10] sm:$0xff]
    %v5223 = vld [vmem:[%s5219 + $0x18] sm:$0xff]
    %v5225 = vsel %vm522, %v5218, 0
    %5227 = vmatprep.subr.mxu0 0.0
    %5228 = vmatpush1.msra.mxu0 0.0
    %5229 = vmatprep.subr.mxu0 0.0
    %5230 = vmatpush1.msra.mxu0 0.0
    %5231 = vmatprep.subr.mxu0 0.0
    %5232 = vmatpush1.msra.mxu0 0.0
    %5233 = vmatprep.subr.mxu0 0.0
    %5234 = vmatpush1.msra.mxu0 0.0
    %5235 = vmatprep.subr.mxu0 0.0
    %5236 = vmatpush1.msra.mxu0 0.0
    %5237 = vmatprep.subr.mxu0 0.0
    %5238 = vmatpush1.msra.mxu0 0.0
    %5239 = vmatprep.subr.mxu0 0.0
    %5240 = vmatpush1.msra.mxu0 0.0
    %5241 = vmatprep.subr.mxu0 0.0
    %5242 = vmatpush1.msra.mxu0 0.0
    %5243 = vmatprep.subr.mxu0 0.0
    %5244 = vmatpush1.msra.mxu0 0.0
    %5245 = vmatprep.subr.mxu0 0.0
    %5246 = vmatpush1.msra.mxu0 0.0
    %5247 = vmatprep.subr.mxu0 0.0
    %5248 = vmatpush1.msra.mxu0 0.0
    %5249 = vmatprep.subr.mxu0 0.0
    %5250 = vmatpush1.msra.mxu0 0.0
    %5251 = vmatprep.subr.mxu0 0.0
    %5252 = vmatpush1.msra.mxu0 %v5223
    %5253 = vmatprep.subr.mxu0 0.0
    %5254 = vmatpush1.msra.mxu0 %v5222
    %5255 = vmatprep.subr.mxu0 0.0
    %5256 = vmatpush1.msra.mxu0 %v5221
    %5257 = vmatprep.subr.mxu0 0.0
    %5258 = vmatpush1.msra.mxu0 %v5220
    %5259 = vmatprep.subr.mxu0 0.0
    %5260 = vmatpush2.msra.mxu0 0.0
    %5261 = vmatprep.subr.mxu0 0.0
    %5262 = vmatpush2.msra.mxu0 0.0
    %5263 = vmatprep.subr.mxu0 0.0
    %5264 = vmatpush2.msra.mxu0 0.0
    %5265 = vmatprep.subr.mxu0 0.0
    %5266 = vmatpush2.msra.mxu0 0.0
    %5267 = vmatprep.subr.mxu0 0.0
    %5268 = vmatpush2.msra.mxu0 0.0
    %5269 = vmatprep.subr.mxu0 0.0
    %5270 = vmatpush2.msra.mxu0 0.0
    %5271 = vmatprep.subr.mxu0 0.0
    %5272 = vmatpush2.msra.mxu0 0.0
    %5273 = vmatprep.subr.mxu0 0.0
    %5274 = vmatpush2.msra.mxu0 0.0
    %5275 = vmatprep.subr.mxu0 0.0
    %5276 = vmatpush2.msra.mxu0 0.0
    %5277 = vmatprep.subr.mxu0 0.0
    %5278 = vmatpush2.msra.mxu0 0.0
    %5279 = vmatprep.subr.mxu0 0.0
    %5280 = vmatpush2.msra.mxu0 0.0
    %5281 = vmatprep.subr.mxu0 0.0
    %5282 = vmatpush2.msra.mxu0 0.0
    %5283 = vmatprep.subr.mxu0 0.0
    %5284 = vmatpush2.msra.mxu0 0.0
    %5285 = vmatprep.subr.mxu0 0.0
    %5286 = vmatpush2.msra.mxu0 0.0
    %5287 = vmatprep.subr.mxu0 0.0
    %5288 = vmatpush2.msra.mxu0 0.0
    %5289 = vmatprep.subr.mxu0 0.0
    %5290 = vmatpush2.msra.mxu0 0.0
    %5291 = vmatprep.mubr.f32.mxu0 0.0
    %5292 = vmatmul.mubr.f32.gmra.mxu0 %v5225
    %v5293 = vpop.f32.mrf.mxu0
    %v5294 = vadd.f32 0.0, %v5293
    %v5295 = vpop.f32.mrf.mxu0
    %5296 = vdwg.mxu0
    %v5297 = vadd.f32 %v5213, %v5294
    %v5298 = vrot.slane %v4701, 7
    %v5300 = vrot.slane %v4704, 6
    %v5302 = vsel %vm4715, %v5298, %v5300
    %s5303 = scalar_lea.vmem [#allocation19], 224
    %v5304 = vld [vmem:[%s5303] sm:$0xff]
    %v5305 = vld [vmem:[%s5303 + $0x8] sm:$0xff]
    %v5306 = vld [vmem:[%s5303 + $0x10] sm:$0xff]
    %v5307 = vld [vmem:[%s5303 + $0x18] sm:$0xff]
    %v5309 = vsel %vm522, %v5302, 0
    %5311 = vmatprep.subr.mxu0 0.0
    %5312 = vmatpush1.msra.mxu0 0.0
    %5313 = vmatprep.subr.mxu0 0.0
    %5314 = vmatpush1.msra.mxu0 0.0
    %5315 = vmatprep.subr.mxu0 0.0
    %5316 = vmatpush1.msra.mxu0 0.0
    %5317 = vmatprep.subr.mxu0 0.0
    %5318 = vmatpush1.msra.mxu0 0.0
    %5319 = vmatprep.subr.mxu0 0.0
    %5320 = vmatpush1.msra.mxu0 0.0
    %5321 = vmatprep.subr.mxu0 0.0
    %5322 = vmatpush1.msra.mxu0 0.0
    %5323 = vmatprep.subr.mxu0 0.0
    %5324 = vmatpush1.msra.mxu0 0.0
    %5325 = vmatprep.subr.mxu0 0.0
    %5326 = vmatpush1.msra.mxu0 0.0
    %5327 = vmatprep.subr.mxu0 0.0
    %5328 = vmatpush1.msra.mxu0 0.0
    %5329 = vmatprep.subr.mxu0 0.0
    %5330 = vmatpush1.msra.mxu0 0.0
    %5331 = vmatprep.subr.mxu0 0.0
    %5332 = vmatpush1.msra.mxu0 0.0
    %5333 = vmatprep.subr.mxu0 0.0
    %5334 = vmatpush1.msra.mxu0 0.0
    %5335 = vmatprep.subr.mxu0 0.0
    %5336 = vmatpush1.msra.mxu0 %v5307
    %5337 = vmatprep.subr.mxu0 0.0
    %5338 = vmatpush1.msra.mxu0 %v5306
    %5339 = vmatprep.subr.mxu0 0.0
    %5340 = vmatpush1.msra.mxu0 %v5305
    %5341 = vmatprep.subr.mxu0 0.0
    %5342 = vmatpush1.msra.mxu0 %v5304
    %5343 = vmatprep.subr.mxu0 0.0
    %5344 = vmatpush2.msra.mxu0 0.0
    %5345 = vmatprep.subr.mxu0 0.0
    %5346 = vmatpush2.msra.mxu0 0.0
    %5347 = vmatprep.subr.mxu0 0.0
    %5348 = vmatpush2.msra.mxu0 0.0
    %5349 = vmatprep.subr.mxu0 0.0
    %5350 = vmatpush2.msra.mxu0 0.0
    %5351 = vmatprep.subr.mxu0 0.0
    %5352 = vmatpush2.msra.mxu0 0.0
    %5353 = vmatprep.subr.mxu0 0.0
    %5354 = vmatpush2.msra.mxu0 0.0
    %5355 = vmatprep.subr.mxu0 0.0
    %5356 = vmatpush2.msra.mxu0 0.0
    %5357 = vmatprep.subr.mxu0 0.0
    %5358 = vmatpush2.msra.mxu0 0.0
    %5359 = vmatprep.subr.mxu0 0.0
    %5360 = vmatpush2.msra.mxu0 0.0
    %5361 = vmatprep.subr.mxu0 0.0
    %5362 = vmatpush2.msra.mxu0 0.0
    %5363 = vmatprep.subr.mxu0 0.0
    %5364 = vmatpush2.msra.mxu0 0.0
    %5365 = vmatprep.subr.mxu0 0.0
    %5366 = vmatpush2.msra.mxu0 0.0
    %5367 = vmatprep.subr.mxu0 0.0
    %5368 = vmatpush2.msra.mxu0 0.0
    %5369 = vmatprep.subr.mxu0 0.0
    %5370 = vmatpush2.msra.mxu0 0.0
    %5371 = vmatprep.subr.mxu0 0.0
    %5372 = vmatpush2.msra.mxu0 0.0
    %5373 = vmatprep.subr.mxu0 0.0
    %5374 = vmatpush2.msra.mxu0 0.0
    %5375 = vmatprep.mubr.f32.mxu0 0.0
    %5376 = vmatmul.mubr.f32.gmra.mxu0 %v5309
    %v5377 = vpop.f32.mrf.mxu0
    %v5378 = vadd.f32 0.0, %v5377
    %v5379 = vpop.f32.mrf.mxu0
    %5380 = vdwg.mxu0
    %v5381 = vadd.f32 %v5297, %v5378
    %v5383 = vrot.slane %v5381, 7
    %5384 = vrot.lane.b32.xlu0 %v5383, 96
    %v5385 = vpop.permute.xlu0 %5384
    %v5387 = vrot.slane %v5381, 6
    %5388 = vrot.lane.b32.xlu0 %v5387, 64
    %v5389 = vpop.permute.xlu0 %5388
    %v5391 = vrot.slane %v5381, 5
    %5392 = vrot.lane.b32.xlu0 %v5391, 32
    %v5393 = vpop.permute.xlu0 %5392
    %v5396 = vrot.slane %v5381, 4
    %5397 = vrot.lane.b32.xlu0 %v5396, 96
    %v5398 = vpop.permute.xlu0 %5397
    %v5400 = vrot.slane %v5381, 3
    %5401 = vrot.lane.b32.xlu0 %v5400, 64
    %v5402 = vpop.permute.xlu0 %5401
    %v5404 = vrot.slane %v5381, 2
    %5405 = vrot.lane.b32.xlu0 %v5404, 32
    %v5406 = vpop.permute.xlu0 %5405
    %v5408 = vsel %vm4715, %v5381, %v5385
    %v5409 = vsel %vm2467, %v5408, %v5389
    %vm5410 = vcmask 1042432
    %v5411 = vsel %vm5410, %v5409, %v5393
    %v5412 = vsel %vm252, %v5411, %v5391
    %vm5413 = vcmask 1044480
    %v5414 = vsel %vm5413, %v5412, %v5398
    %v5415 = vsel %vm2470, %v5414, %v5402
    %vm5416 = vcmask 1046528
    %v5417 = vsel %vm5416, %v5415, %v5406
    %v5418 = vld [vmem:[%s23] sm:$0xff]
    %v5419 = vld [vmem:[%s23 + $0x8] sm:$0xff]
    %v5420 = vld [vmem:[%s23 + $0x10] sm:$0xff]
    %v5421 = vld [vmem:[%s23 + $0x18] sm:$0xff]
    %v5422 = vld [vmem:[%s24] sm:$0x1]
    %v5424 = vlaneseq
    %v5425 = vshrl.u32 %v5424, 7
    %v5426 = vsub.s32 0, %v5425
    %v5427 = vrot.slane %v5422, %v5426
    %v5430 = vsel %vm522, %v5417, 0
    %5432 = vmatprep.subr.mxu0 0.0
    %5433 = vmatpush1.msra.mxu0 0.0
    %5434 = vmatprep.subr.mxu0 0.0
    %5435 = vmatpush1.msra.mxu0 0.0
    %5436 = vmatprep.subr.mxu0 0.0
    %5437 = vmatpush1.msra.mxu0 0.0
    %5438 = vmatprep.subr.mxu0 0.0
    %5439 = vmatpush1.msra.mxu0 0.0
    %5440 = vmatprep.subr.mxu0 0.0
    %5441 = vmatpush1.msra.mxu0 0.0
    %5442 = vmatprep.subr.mxu0 0.0
    %5443 = vmatpush1.msra.mxu0 0.0
    %5444 = vmatprep.subr.mxu0 0.0
    %5445 = vmatpush1.msra.mxu0 0.0
    %5446 = vmatprep.subr.mxu0 0.0
    %5447 = vmatpush1.msra.mxu0 0.0
    %5448 = vmatprep.subr.mxu0 0.0
    %5449 = vmatpush1.msra.mxu0 0.0
    %5450 = vmatprep.subr.mxu0 0.0
    %5451 = vmatpush1.msra.mxu0 0.0
    %5452 = vmatprep.subr.mxu0 0.0
    %5453 = vmatpush1.msra.mxu0 0.0
    %5454 = vmatprep.subr.mxu0 0.0
    %5455 = vmatpush1.msra.mxu0 0.0
    %5456 = vmatprep.subr.mxu0 0.0
    %5457 = vmatpush1.msra.mxu0 %v5421
    %5458 = vmatprep.subr.mxu0 0.0
    %5459 = vmatpush1.msra.mxu0 %v5420
    %5460 = vmatprep.subr.mxu0 0.0
    %5461 = vmatpush1.msra.mxu0 %v5419
    %5462 = vmatprep.subr.mxu0 0.0
    %5463 = vmatpush1.msra.mxu0 %v5418
    %5464 = vmatprep.subr.mxu0 0.0
    %5465 = vmatpush2.msra.mxu0 0.0
    %5466 = vmatprep.subr.mxu0 0.0
    %5467 = vmatpush2.msra.mxu0 0.0
    %5468 = vmatprep.subr.mxu0 0.0
    %5469 = vmatpush2.msra.mxu0 0.0
    %5470 = vmatprep.subr.mxu0 0.0
    %5471 = vmatpush2.msra.mxu0 0.0
    %5472 = vmatprep.subr.mxu0 0.0
    %5473 = vmatpush2.msra.mxu0 0.0
    %5474 = vmatprep.subr.mxu0 0.0
    %5475 = vmatpush2.msra.mxu0 0.0
    %5476 = vmatprep.subr.mxu0 0.0
    %5477 = vmatpush2.msra.mxu0 0.0
    %5478 = vmatprep.subr.mxu0 0.0
    %5479 = vmatpush2.msra.mxu0 0.0
    %5480 = vmatprep.subr.mxu0 0.0
    %5481 = vmatpush2.msra.mxu0 0.0
    %5482 = vmatprep.subr.mxu0 0.0
    %5483 = vmatpush2.msra.mxu0 0.0
    %5484 = vmatprep.subr.mxu0 0.0
    %5485 = vmatpush2.msra.mxu0 0.0
    %5486 = vmatprep.subr.mxu0 0.0
    %5487 = vmatpush2.msra.mxu0 0.0
    %5488 = vmatprep.subr.mxu0 0.0
    %5489 = vmatpush2.msra.mxu0 0.0
    %5490 = vmatprep.subr.mxu0 0.0
    %5491 = vmatpush2.msra.mxu0 0.0
    %5492 = vmatprep.subr.mxu0 0.0
    %5493 = vmatpush2.msra.mxu0 0.0
    %5494 = vmatprep.subr.mxu0 0.0
    %5495 = vmatpush2.msra.mxu0 0.0
    %5496 = vmatprep.mubr.f32.mxu0 0.0
    %5497 = vmatmul.mubr.f32.gmra.mxu0 %v5430
    %v5498 = vpop.f32.mrf.mxu0
    %v5499 = vadd.f32 %v5427, %v5498
    %v5500 = vpop.f32.mrf.mxu0
    %5501 = vdwg.mxu0
    %vm5502 = vcmask 15360
    %5503 = vst.msk [vmem:[%s25] sm:$0xff] %vm5502, %v5499
    // Predicated region
    $region150: #{tpu_custom_call.1} parent=1 // pred_check
      _
    $region151: #{tpu_custom_call.1} parent=1 // pred_check_branch
      %5505 = sbr.rel (0) target = $region153
    $region152: #{tpu_custom_call.1} parent=1 // pred_region
      _
    $region153: #{tpu_custom_call.1} parent=1 // pred_fallthru
      _
    // Predicated region
    $region154: #{tpu_custom_call.1} parent=1 // pred_check
      _
    $region155: #{tpu_custom_call.1} parent=1 // pred_check_branch
      %5507 = sbr.rel (0) target = $region157
    $region156: #{tpu_custom_call.1} parent=1 // pred_region
      _
    $region157: #{tpu_custom_call.1} parent=1 // pred_fallthru
      _
    %5508 = vsyncpa [#allocation3], 1
    %5509 = vsyncpa [#allocation5], 1
    %5510 = vsyncpa [#allocation8], 1
    %5511 = vsyncpa [#allocation11], 1
    %5512 = vsyncpa [#allocation14], 1
    %5513 = vsyncpa [#allocation17], 1
    %5514 = vsyncpa [#allocation20], 1

</llo_original>
